<compile_context>
chip_gen: v7x
topology: tpu7x:2x2x1
jax: 0.10.0
libtpu: 0.0.40
codegen_flags: <defaults>
</compile_context>

<pallas_src>
import math
import numpy as np
import jax
import jax.numpy as jnp
from jax import lax
from jax.experimental import pallas as pl
from jax.experimental.pallas import tpu as pltpu

# ----------------------------- config (SwinConfig-like) -----------------------------
B = 2                   # batch
H = W = 8               # input_resolution
C = 32                  # dim
NH = 4                  # num_heads
HD = C // NH            # head dim
WS = 4                  # window_size
SHIFT = WS // 2         # shift for odd blocks
N = WS * WS             # tokens per window
NWIN = (H // WS) * (W // WS)   # windows per image
TOK = H * W             # tokens per image
MLP_RATIO = 4.0
FF = int(MLP_RATIO * C)
EPS = 1e-5
DEPTH = 2
SCALE = 1.0 / math.sqrt(HD)
NEG = -1e9              # additive "off-window" mask (underflows to exactly 0 after exp)
M = B * TOK             # 128: batch folded into the matmul M dimension
NHTOK = NH * TOK        # 256: head-stacked key/value rows


def gelu_exact(x):
    # exact (erf) GELU, matching torch.nn.functional.gelu default
    return 0.5 * x * (1.0 + lax.erf(x * (1.0 / math.sqrt(2.0))))


# ----------------------------- static tables (numpy, built once) -----------------------------
def _relative_position_index(ws):
    coords = np.stack(np.meshgrid(np.arange(ws), np.arange(ws), indexing='ij'))
    flat = coords.reshape(2, -1)
    rel = flat[:, :, None] - flat[:, None, :]
    rel = rel.transpose(1, 2, 0).astype(np.int64)
    rel[:, :, 0] += ws - 1
    rel[:, :, 1] += ws - 1
    rel[:, :, 0] *= 2 * ws - 1
    return rel.sum(-1)                                    # (N, N)


REL_IDX = _relative_position_index(WS)


def _shift_mask_np(h, w, ws, shift):
    img = np.zeros((1, h, w, 1), np.float32)
    slices = (slice(0, -ws), slice(-ws, -shift), slice(-shift, None))
    cnt = 0
    for hs in slices:
        for wcs in slices:
            img[:, hs, wcs, :] = cnt
            cnt += 1
    m = img.reshape(1, h // ws, ws, w // ws, ws, 1).transpose(0, 1, 3, 2, 4, 5)
    m = m.reshape(-1, ws * ws)
    am = m[:, None, :] - m[:, :, None]
    return np.where(am != 0, -100.0, 0.0).astype(np.float32)   # (NWIN, N, N)


def _permutation_np(shift):
    # P[dst, src]: dst = (roll by -shift, then window_partition) row index, src = token-order index
    P = np.zeros((TOK, TOK), np.float32)
    for wh in range(H // WS):
        for ww in range(W // WS):
            for r in range(WS):
                for c in range(WS):
                    dst = (wh * (W // WS) + ww) * N + r * WS + c
                    sh = (wh * WS + r + shift) % H
                    sw = (ww * WS + c + shift) % W
                    P[dst, sh * W + sw] = 1.0
    return P


def _base_mask_np(shift):
    # block-diagonal window mask (+ SW-MSA shift mask), shared by all heads: (TOK, TOK), permuted coords
    m = np.full((TOK, TOK), NEG, np.float32)
    sm = _shift_mask_np(H, W, WS, shift) if shift > 0 else None
    for w in range(NWIN):
        blk = np.zeros((N, N), np.float32) if shift == 0 else sm[w]
        m[w * N:(w + 1) * N, w * N:(w + 1) * N] = blk
    return m


PERM_NP = np.stack([_permutation_np(0), _permutation_np(SHIFT)]).astype(np.float32)   # (DEPTH, TOK, TOK)
BASE_MASK_NP = np.stack([_base_mask_np(0), _base_mask_np(SHIFT)])                      # (DEPTH, TOK, TOK)

# per-head output-channel masks (NH, 1, C)
HEAD_MASK_NP = np.zeros((NH, 1, C), np.float32)
for _h in range(NH):
    HEAD_MASK_NP[_h, 0, _h * HD:(_h + 1) * HD] = 1.0

# per-head exp-sum selector + broadcast onto that head's output-channel block:
# SUMEXP[h*TOK + j, c] = 1  iff  channel c belongs to head h
SUMEXP_NP = np.zeros((NHTOK, C), np.float32)
for _h in range(NH):
    SUMEXP_NP[_h * TOK:(_h + 1) * TOK, _h * HD:(_h + 1) * HD] = 1.0


# ----------------------------- fused Pallas stage kernel -----------------------------
def swin_stage_kernel(x_ref, hm_ref, sumexp_ref,
                      ln1w_ref, ln1b_ref, wqkv_ref, bqkv_ref, wo_ref, bo_ref,
                      ln2w_ref, ln2b_ref, w1_ref, b1_ref, w2_ref, b2_ref, bias_ref,
                      o_ref):
    f32, bf16 = jnp.float32, jnp.bfloat16
    h = x_ref[...]                                          # (M, C) residual stream, f32
    hm = [hm_ref[hh] for hh in range(NH)]                   # NH x (1, C) channel masks
    sumexp = sumexp_ref[...]                                 # (NHTOK, C) bf16

    for l in range(DEPTH):                                   # static unroll over the 2 SwinLayers
        # --- layernorm_before (per token, whole batch at once) ---
        mu = jnp.mean(h, axis=-1, keepdims=True)
        var = jnp.mean((h - mu) ** 2, axis=-1, keepdims=True)
        xn = (h - mu) * lax.rsqrt(var + EPS) * ln1w_ref[l] + ln1b_ref[l]

        # --- fused QKV projection over the whole batch (M=128 rows); no permutation needed,
        #     the window/shift relabeling is folded into the attention bias ---
        qkv = jnp.dot(xn.astype(bf16), wqkv_ref[l],
                      preferred_element_type=f32) + bqkv_ref[l]              # (M, 3C) f32
        q = qkv[:, :C]                                                       # (pre-scaled by 1/sqrt(hd))
        k = qkv[:, C:2 * C]
        v = qkv[:, 2 * C:]

        bias_l = bias_ref[l]                                                 # (TOK, NHTOK) bf16

        # --- attention per image (64-row slabs); all windows & heads in one score matmul ---
        ctx_imgs = []
        for b in range(B):
            qb = q[b * TOK:(b + 1) * TOK]                                    # (TOK, C)
            kimg = k[b * TOK:(b + 1) * TOK]
            vimg = v[b * TOK:(b + 1) * TOK]
            # per-head channel-masked K/V stacked along sublanes: row hh*TOK+j <-> (head hh, token j)
            kbs = jnp.concatenate([kimg * hm[hh] for hh in range(NH)], axis=0).astype(bf16)
            vbs = jnp.concatenate([vimg * hm[hh] for hh in range(NH)], axis=0).astype(bf16)

            s = lax.dot_general(qb.astype(bf16), kbs, (((1,), (1,)), ((), ())),
                                preferred_element_type=f32)                  # (TOK, NHTOK)
            sb = s + bias_l        # rel-pos bias + shift mask + window mask, permutation-folded

            # shared per-row max across heads (mathematically exact; off-window -1e9 entries -> exp 0)
            m_row = jnp.max(sb, axis=-1, keepdims=True)
            e = jnp.exp(sb - m_row)                                          # (TOK, NHTOK) f32
            e16 = e.astype(bf16)

            # unnormalized context: masked-V stack puts every head on its own channel block
            ctx_raw = jnp.dot(e16, vbs, preferred_element_type=f32)          # (TOK, C)
            # per-head softmax denominators, broadcast onto head channel blocks, via one 0/1 matmul
            denom = jnp.dot(e16, sumexp, preferred_element_type=f32) + 1e-30  # (TOK, C)
            ctx_imgs.append(ctx_raw * pl.reciprocal(denom, approx=True))

        ctx = jnp.concatenate(ctx_imgs, axis=0)                              # (M, C)
        attn = jnp.dot(ctx.astype(bf16), wo_ref[l], preferred_element_type=f32) + bo_ref[l]

        # --- first residual (window reverse / reverse shift already folded away) ---
        h = h + attn

        # --- layernorm_after + MLP + second residual (whole batch at once) ---
        mu2 = jnp.mean(h, axis=-1, keepdims=True)
        var2 = jnp.mean((h - mu2) ** 2, axis=-1, keepdims=True)
        y = (h - mu2) * lax.rsqrt(var2 + EPS) * ln2w_ref[l] + ln2b_ref[l]
        inter = gelu_exact(jnp.dot(y.astype(bf16), w1_ref[l],
                                   preferred_element_type=f32) + b1_ref[l])
        h = h + jnp.dot(inter.astype(bf16), w2_ref[l], preferred_element_type=f32) + b2_ref[l]

    o_ref[...] = h


def _block_full(shape):
    nd = len(shape)
    return pl.BlockSpec(shape, lambda b: (0,) * nd)


@jax.jit
def _stage_forward(hidden, params):
    f32, bf16 = jnp.float32, jnp.bfloat16
    stk = lambda name: jnp.stack([p[name] for p in params])

    # fused QKV weights / biases per layer; fold 1/sqrt(head_dim) into the Q projection (exact)
    def fused_qkv(p):
        w = jnp.concatenate([p['wq'] * SCALE, p['wk'], p['wv']], axis=1)
        b = jnp.concatenate([p['bq'] * SCALE, p['bk'], p['bv']], axis=1)
        return w, b

    qkv_wb = [fused_qkv(p) for p in params]
    wqkv = jnp.stack([w for w, _ in qkv_wb]).astype(bf16)
    bqkv = jnp.stack([b for _, b in qkv_wb])

    # per-layer additive attention bias in TOKEN order: the (shift + window_partition)
    # permutation P is conjugated into the bias offline: bias_tok = P^T @ bias_perm @ P per head.
    def layer_bias(p, l):
        rel = p['rel_table'][REL_IDX.reshape(-1)].reshape(N, N, NH).transpose(2, 0, 1)   # (NH, N, N)
        rel_full = jnp.tile(rel, (1, NWIN, NWIN))                                        # (NH, TOK, TOK)
        b_perm = rel_full + BASE_MASK_NP[l]                                              # permuted coords
        Pm = PERM_NP[l]
        b_tok = jnp.einsum('ai,hab,bj->hij', Pm, b_perm, Pm)                             # P^T B P
        return b_tok.transpose(1, 0, 2).reshape(TOK, NH * TOK)                           # (TOK, NHTOK)

    bias = jnp.stack([layer_bias(params[l], l) for l in range(DEPTH)]).astype(bf16)

    hm = jnp.asarray(HEAD_MASK_NP)
    sumexp = jnp.asarray(SUMEXP_NP).astype(bf16)

    x2d = hidden.reshape(M, C)     # fold batch into the matmul M dimension (M = B*TOK = 128)

    out2d = pl.pallas_call(
        swin_stage_kernel,
        out_shape=jax.ShapeDtypeStruct((M, C), jnp.float32),
        grid=(1,),
        in_specs=[
            pl.BlockSpec((M, C), lambda b: (0, 0)),           # residual stream, whole batch
            _block_full((NH, 1, C)),                          # per-head channel masks
            _block_full((NHTOK, C)),                          # per-head sum selector/expander
            _block_full((DEPTH, 1, C)),                       # ln1 gamma
            _block_full((DEPTH, 1, C)),                       # ln1 beta
            _block_full((DEPTH, C, 3 * C)),                   # Wqkv (fused, bf16, Q pre-scaled)
            _block_full((DEPTH, 1, 3 * C)),                   # bqkv (fused)
            _block_full((DEPTH, C, C)),                       # Wo (bf16)
            _block_full((DEPTH, 1, C)),                       # bo
            _block_full((DEPTH, 1, C)),                       # ln2 gamma
            _block_full((DEPTH, 1, C)),                       # ln2 beta
            _block_full((DEPTH, C, FF)),                      # W1 (bf16)
            _block_full((DEPTH, 1, FF)),                      # b1
            _block_full((DEPTH, FF, C)),                      # W2 (bf16)
            _block_full((DEPTH, 1, C)),                       # b2
            _block_full((DEPTH, TOK, NHTOK)),                 # fused, permutation-folded bias (bf16)
        ],
        out_specs=pl.BlockSpec((M, C), lambda b: (0, 0)),
        compiler_params=pltpu.CompilerParams(dimension_semantics=("arbitrary",)),
    )(x2d, hm, sumexp,
      stk('ln1_w'), stk('ln1_b'), wqkv, bqkv,
      jnp.stack([p['wo'] for p in params]).astype(bf16), stk('bo'),
      stk('ln2_w'), stk('ln2_b'),
      jnp.stack([p['w1'] for p in params]).astype(bf16), stk('b1'),
      jnp.stack([p['w2'] for p in params]).astype(bf16), stk('b2'),
      bias)

    return out2d.reshape(B, TOK, C)


def swin_stage_pallas(hidden, params):
    # TODO(synk): downsample (SwinPatchMerging) path not instantiated; module built with downsample=None
    out = _stage_forward(hidden, params)
    hidden_before_downsampling = out
    output_dimensions = (H, W, H, W)
    return out, hidden_before_downsampling, output_dimensions


# ----------------------------- pure-JAX reference (matches PyTorch semantics) -----------------------------
def window_partition(x, ws):
    b, h, w, c = x.shape
    x = x.reshape(b, h // ws, ws, w // ws, ws, c)
    return x.transpose(0, 1, 3, 2, 4, 5).reshape(-1, ws, ws, c)


def window_reverse(wins, ws, h, w):
    c = wins.shape[-1]
    x = wins.reshape(-1, h // ws, w // ws, ws, ws, c)
    return x.transpose(0, 1, 3, 2, 4, 5).reshape(-1, h, w, c)


def _ln(x, w, b):
    mean = jnp.mean(x, axis=-1, keepdims=True)
    var = jnp.mean((x - mean) ** 2, axis=-1, keepdims=True)
    return (x - mean) / jnp.sqrt(var + EPS) * w + b


def ref_layer(hidden, p, shift, shifted_mask_tiled):
    shortcut = hidden
    x = _ln(hidden, p['ln1_w'], p['ln1_b']).reshape(B, H, W, C)
    if shift > 0:
        x = jnp.roll(x, shift=(-shift, -shift), axis=(1, 2))
    wins = window_partition(x, WS).reshape(-1, N, C)
    q = wins @ p['wq'] + p['bq']
    k = wins @ p['wk'] + p['bk']
    v = wins @ p['wv'] + p['bv']
    nw = wins.shape[0]
    qh = q.reshape(nw, N, NH, HD).transpose(0, 2, 1, 3)
    kh = k.reshape(nw, N, NH, HD).transpose(0, 2, 1, 3)
    vh = v.reshape(nw, N, NH, HD).transpose(0, 2, 1, 3)
    scores = jnp.einsum('whnd,whmd->whnm', qh, kh) * SCALE
    rel_bias = p['rel_table'][REL_IDX.reshape(-1)].reshape(N, N, NH).transpose(2, 0, 1)
    scores = scores + rel_bias[None]
    if shift > 0:
        scores = scores + shifted_mask_tiled[:, None, :, :]
    probs = jax.nn.softmax(scores, axis=-1)
    ctx = jnp.einsum('whnm,whmd->whnd', probs, vh).transpose(0, 2, 1, 3).reshape(nw, N, C)
    attn_out = ctx @ p['wo'] + p['bo']
    aw = attn_out.reshape(-1, WS, WS, C)
    x = window_reverse(aw, WS, H, W)
    if shift > 0:
        x = jnp.roll(x, shift=(shift, shift), axis=(1, 2))
    hidden = shortcut + x.reshape(B, H * W, C)
    y = _ln(hidden, p['ln2_w'], p['ln2_b'])
    inter = gelu_exact(y @ p['w1'] + p['b1'])
    return hidden + inter @ p['w2'] + p['b2']


def ref_stage(hidden, params):
    shifted_mask = jnp.tile(jnp.asarray(_shift_mask_np(H, W, WS, SHIFT)), (B, 1, 1))
    for i in range(DEPTH):
        shift = 0 if i % 2 == 0 else SHIFT
        hidden = ref_layer(hidden, params[i], shift, shifted_mask)
    return hidden


# ----------------------------- params & main -----------------------------
def init_layer_params(key):
    ks = jax.random.split(key, 18)
    s = 0.02
    return {
        'ln1_w': 1.0 + 0.1 * jax.random.normal(ks[0], (1, C), jnp.float32),
        'ln1_b': 0.1 * jax.random.normal(ks[1], (1, C), jnp.float32),
        'wq': s * jax.random.normal(ks[2], (C, C), jnp.float32),
        'bq': s * jax.random.normal(ks[3], (1, C), jnp.float32),
        'wk': s * jax.random.normal(ks[4], (C, C), jnp.float32),
        'bk': s * jax.random.normal(ks[5], (1, C), jnp.float32),
        'wv': s * jax.random.normal(ks[6], (C, C), jnp.float32),
        'bv': s * jax.random.normal(ks[7], (1, C), jnp.float32),
        'rel_table': s * jax.random.normal(ks[8], ((2 * WS - 1) * (2 * WS - 1), NH), jnp.float32),
        'wo': s * jax.random.normal(ks[9], (C, C), jnp.float32),
        'bo': s * jax.random.normal(ks[10], (1, C), jnp.float32),
        'ln2_w': 1.0 + 0.1 * jax.random.normal(ks[11], (1, C), jnp.float32),
        'ln2_b': 0.1 * jax.random.normal(ks[12], (1, C), jnp.float32),
        'w1': s * jax.random.normal(ks[13], (C, FF), jnp.float32),
        'b1': s * jax.random.normal(ks[14], (1, FF), jnp.float32),
        'w2': s * jax.random.normal(ks[15], (FF, C), jnp.float32),
        'b2': s * jax.random.normal(ks[16], (1, C), jnp.float32),
    }


if __name__ == "__main__":
    root = jax.random.PRNGKey(0)
    kx, k0, k1 = jax.random.split(root, 3)
    hidden_states = jax.random.normal(kx, (B, H * W, C), jnp.float32)
    params = [init_layer_params(k0), init_layer_params(k1)]

    out, out_before_ds, out_dims = swin_stage_pallas(hidden_states, params)
    out = jax.block_until_ready(out)

    ref = jax.block_until_ready(ref_stage(hidden_states, params))
    np.testing.assert_allclose(np.asarray(out), np.asarray(ref), rtol=1e-2, atol=1e-2)
    assert out_dims == (H, W, H, W)
    print("KERNEL_OK")
</pallas_src>

<mosaic_0001>
module attributes {stable_mosaic.version = 11 : i64} {
  func.func @swin_stage_kernel(%arg0: i32, %arg1: memref<128x32xf32, #tpu.memory_space<vmem>>, %arg2: memref<4x1x32xf32, #tpu.memory_space<vmem>>, %arg3: memref<256x32xbf16, #tpu.memory_space<vmem>>, %arg4: memref<2x1x32xf32, #tpu.memory_space<vmem>>, %arg5: memref<2x1x32xf32, #tpu.memory_space<vmem>>, %arg6: memref<2x32x96xbf16, #tpu.memory_space<vmem>>, %arg7: memref<2x1x96xf32, #tpu.memory_space<vmem>>, %arg8: memref<2x32x32xbf16, #tpu.memory_space<vmem>>, %arg9: memref<2x1x32xf32, #tpu.memory_space<vmem>>, %arg10: memref<2x1x32xf32, #tpu.memory_space<vmem>>, %arg11: memref<2x1x32xf32, #tpu.memory_space<vmem>>, %arg12: memref<2x32x128xbf16, #tpu.memory_space<vmem>>, %arg13: memref<2x1x128xf32, #tpu.memory_space<vmem>>, %arg14: memref<2x128x32xbf16, #tpu.memory_space<vmem>>, %arg15: memref<2x1x32xf32, #tpu.memory_space<vmem>>, %arg16: memref<2x64x256xbf16, #tpu.memory_space<vmem>>, %arg17: memref<128x32xf32, #tpu.memory_space<vmem>>) attributes {dimension_semantics = [#tpu.dimension_semantics<arbitrary>], iteration_bounds = array<i64: 1>, scalar_prefetch = 0 : i64, scratch_operands = 0 : i64, tpu.core_type = #tpu.core_type<tc>, window_params = [{pipeline_mode = #tpu.pipeline_mode<synchronous>, transform_indices = @transform_0, window_bounds = array<i64: 128, 32>}, {pipeline_mode = #tpu.pipeline_mode<synchronous>, transform_indices = @transform_1, window_bounds = array<i64: 4, 1, 32>}, {pipeline_mode = #tpu.pipeline_mode<synchronous>, transform_indices = @transform_2, window_bounds = array<i64: 256, 32>}, {pipeline_mode = #tpu.pipeline_mode<synchronous>, transform_indices = @transform_3, window_bounds = array<i64: 2, 1, 32>}, {pipeline_mode = #tpu.pipeline_mode<synchronous>, transform_indices = @transform_4, window_bounds = array<i64: 2, 1, 32>}, {pipeline_mode = #tpu.pipeline_mode<synchronous>, transform_indices = @transform_5, window_bounds = array<i64: 2, 32, 96>}, {pipeline_mode = #tpu.pipeline_mode<synchronous>, transform_indices = @transform_6, window_bounds = array<i64: 2, 1, 96>}, {pipeline_mode = #tpu.pipeline_mode<synchronous>, transform_indices = @transform_7, window_bounds = array<i64: 2, 32, 32>}, {pipeline_mode = #tpu.pipeline_mode<synchronous>, transform_indices = @transform_8, window_bounds = array<i64: 2, 1, 32>}, {pipeline_mode = #tpu.pipeline_mode<synchronous>, transform_indices = @transform_9, window_bounds = array<i64: 2, 1, 32>}, {pipeline_mode = #tpu.pipeline_mode<synchronous>, transform_indices = @transform_10, window_bounds = array<i64: 2, 1, 32>}, {pipeline_mode = #tpu.pipeline_mode<synchronous>, transform_indices = @transform_11, window_bounds = array<i64: 2, 32, 128>}, {pipeline_mode = #tpu.pipeline_mode<synchronous>, transform_indices = @transform_12, window_bounds = array<i64: 2, 1, 128>}, {pipeline_mode = #tpu.pipeline_mode<synchronous>, transform_indices = @transform_13, window_bounds = array<i64: 2, 128, 32>}, {pipeline_mode = #tpu.pipeline_mode<synchronous>, transform_indices = @transform_14, window_bounds = array<i64: 2, 1, 32>}, {pipeline_mode = #tpu.pipeline_mode<synchronous>, transform_indices = @transform_15, window_bounds = array<i64: 2, 64, 256>}, {pipeline_mode = #tpu.pipeline_mode<synchronous>, transform_indices = @transform_16, window_bounds = array<i64: 128, 32>}]} {
    %c0 = arith.constant 0 : index
    %c0_0 = arith.constant 0 : index
    %0 = vector.load %arg1[%c0, %c0_0] : memref<128x32xf32, #tpu.memory_space<vmem>>, vector<128x32xf32>
    %c0_1 = arith.constant 0 : index
    %c0_2 = arith.constant 0 : index
    %c0_3 = arith.constant 0 : index
    %1 = vector.load %arg2[%c0_1, %c0_2, %c0_3] : memref<4x1x32xf32, #tpu.memory_space<vmem>>, vector<1x1x32xf32>
    %2 = vector.shape_cast %1 : vector<1x1x32xf32> to vector<1x32xf32>
    %c1 = arith.constant 1 : index
    %c0_4 = arith.constant 0 : index
    %c0_5 = arith.constant 0 : index
    %3 = vector.load %arg2[%c1, %c0_4, %c0_5] : memref<4x1x32xf32, #tpu.memory_space<vmem>>, vector<1x1x32xf32>
    %4 = vector.shape_cast %3 : vector<1x1x32xf32> to vector<1x32xf32>
    %c2 = arith.constant 2 : index
    %c0_6 = arith.constant 0 : index
    %c0_7 = arith.constant 0 : index
    %5 = vector.load %arg2[%c2, %c0_6, %c0_7] : memref<4x1x32xf32, #tpu.memory_space<vmem>>, vector<1x1x32xf32>
    %6 = vector.shape_cast %5 : vector<1x1x32xf32> to vector<1x32xf32>
    %c3 = arith.constant 3 : index
    %c0_8 = arith.constant 0 : index
    %c0_9 = arith.constant 0 : index
    %7 = vector.load %arg2[%c3, %c0_8, %c0_9] : memref<4x1x32xf32, #tpu.memory_space<vmem>>, vector<1x1x32xf32>
    %8 = vector.shape_cast %7 : vector<1x1x32xf32> to vector<1x32xf32>
    %c0_10 = arith.constant 0 : index
    %c0_11 = arith.constant 0 : index
    %9 = vector.load %arg3[%c0_10, %c0_11] : memref<256x32xbf16, #tpu.memory_space<vmem>>, vector<256x32xbf16>
    %cst = arith.constant dense<0.000000e+00> : vector<128xf32>
    %10 = vector.multi_reduction <add>, %0, %cst [1] : vector<128x32xf32> to vector<128xf32>
    %11 = vector.shape_cast %10 : vector<128xf32> to vector<128x1xf32>
    %cst_12 = arith.constant 3.200000e+01 : f32
    %12 = vector.broadcast %cst_12 : f32 to vector<128x1xf32>
    %13 = arith.divf %11, %12 : vector<128x1xf32>
    %14 = vector.broadcast %13 : vector<128x1xf32> to vector<128x32xf32>
    %15 = arith.subf %0, %14 : vector<128x32xf32>
    %16 = arith.mulf %15, %15 : vector<128x32xf32>
    %cst_13 = arith.constant dense<0.000000e+00> : vector<128xf32>
    %17 = vector.multi_reduction <add>, %16, %cst_13 [1] : vector<128x32xf32> to vector<128xf32>
    %18 = vector.shape_cast %17 : vector<128xf32> to vector<128x1xf32>
    %cst_14 = arith.constant 3.200000e+01 : f32
    %19 = vector.broadcast %cst_14 : f32 to vector<128x1xf32>
    %20 = arith.divf %18, %19 : vector<128x1xf32>
    %21 = vector.broadcast %13 : vector<128x1xf32> to vector<128x32xf32>
    %22 = arith.subf %0, %21 : vector<128x32xf32>
    %cst_15 = arith.constant 9.99999974E-6 : f32
    %23 = vector.broadcast %cst_15 : f32 to vector<128x1xf32>
    %24 = arith.addf %20, %23 : vector<128x1xf32>
    %25 = math.rsqrt %24 : vector<128x1xf32>
    %26 = vector.broadcast %25 : vector<128x1xf32> to vector<128x32xf32>
    %27 = arith.mulf %22, %26 : vector<128x32xf32>
    %c0_16 = arith.constant 0 : index
    %c0_17 = arith.constant 0 : index
    %c0_18 = arith.constant 0 : index
    %28 = vector.load %arg4[%c0_16, %c0_17, %c0_18] : memref<2x1x32xf32, #tpu.memory_space<vmem>>, vector<1x1x32xf32>
    %29 = vector.shape_cast %28 : vector<1x1x32xf32> to vector<1x32xf32>
    %30 = vector.broadcast %29 : vector<1x32xf32> to vector<128x32xf32>
    %31 = arith.mulf %27, %30 : vector<128x32xf32>
    %c0_19 = arith.constant 0 : index
    %c0_20 = arith.constant 0 : index
    %c0_21 = arith.constant 0 : index
    %32 = vector.load %arg5[%c0_19, %c0_20, %c0_21] : memref<2x1x32xf32, #tpu.memory_space<vmem>>, vector<1x1x32xf32>
    %33 = vector.shape_cast %32 : vector<1x1x32xf32> to vector<1x32xf32>
    %34 = vector.broadcast %33 : vector<1x32xf32> to vector<128x32xf32>
    %35 = arith.addf %31, %34 : vector<128x32xf32>
    %36 = arith.truncf %35 : vector<128x32xf32> to vector<128x32xbf16>
    %c0_22 = arith.constant 0 : index
    %c0_23 = arith.constant 0 : index
    %c0_24 = arith.constant 0 : index
    %37 = vector.load %arg6[%c0_22, %c0_23, %c0_24] : memref<2x32x96xbf16, #tpu.memory_space<vmem>>, vector<1x32x96xbf16>
    %38 = vector.shape_cast %37 : vector<1x32x96xbf16> to vector<32x96xbf16>
    %cst_25 = arith.constant dense<0.000000e+00> : vector<128x96xf32>
    %39 = tpu.matmul %36, %38, %cst_25 {dimension_numbers = #tpu.dot_dimension_numbers<[1], [0], [0], [1], [0, 0, 1, 1], [], []>} : vector<128x32xbf16>, vector<32x96xbf16>, vector<128x96xf32> -> vector<128x96xf32>
    %c0_26 = arith.constant 0 : index
    %c0_27 = arith.constant 0 : index
    %c0_28 = arith.constant 0 : index
    %40 = vector.load %arg7[%c0_26, %c0_27, %c0_28] : memref<2x1x96xf32, #tpu.memory_space<vmem>>, vector<1x1x96xf32>
    %41 = vector.shape_cast %40 : vector<1x1x96xf32> to vector<1x96xf32>
    %42 = vector.broadcast %41 : vector<1x96xf32> to vector<128x96xf32>
    %43 = arith.addf %39, %42 : vector<128x96xf32>
    %44 = vector.extract_strided_slice %43 {offsets = [0, 0], sizes = [128, 32], strides = [1, 1]} : vector<128x96xf32> to vector<128x32xf32>
    %45 = vector.extract_strided_slice %43 {offsets = [0, 32], sizes = [128, 32], strides = [1, 1]} : vector<128x96xf32> to vector<128x32xf32>
    %46 = vector.extract_strided_slice %43 {offsets = [0, 64], sizes = [128, 32], strides = [1, 1]} : vector<128x96xf32> to vector<128x32xf32>
    %c0_29 = arith.constant 0 : index
    %c0_30 = arith.constant 0 : index
    %c0_31 = arith.constant 0 : index
    %47 = vector.load %arg16[%c0_29, %c0_30, %c0_31] : memref<2x64x256xbf16, #tpu.memory_space<vmem>>, vector<1x64x256xbf16>
    %48 = vector.shape_cast %47 : vector<1x64x256xbf16> to vector<64x256xbf16>
    %49 = vector.extract_strided_slice %44 {offsets = [0, 0], sizes = [64, 32], strides = [1, 1]} : vector<128x32xf32> to vector<64x32xf32>
    %50 = vector.extract_strided_slice %45 {offsets = [0, 0], sizes = [64, 32], strides = [1, 1]} : vector<128x32xf32> to vector<64x32xf32>
    %51 = vector.extract_strided_slice %46 {offsets = [0, 0], sizes = [64, 32], strides = [1, 1]} : vector<128x32xf32> to vector<64x32xf32>
    %52 = vector.broadcast %2 : vector<1x32xf32> to vector<64x32xf32>
    %53 = arith.mulf %50, %52 : vector<64x32xf32>
    %54 = vector.broadcast %4 : vector<1x32xf32> to vector<64x32xf32>
    %55 = arith.mulf %50, %54 : vector<64x32xf32>
    %56 = vector.broadcast %6 : vector<1x32xf32> to vector<64x32xf32>
    %57 = arith.mulf %50, %56 : vector<64x32xf32>
    %58 = vector.broadcast %8 : vector<1x32xf32> to vector<64x32xf32>
    %59 = arith.mulf %50, %58 : vector<64x32xf32>
    %60 = tpu.concatenate %53, %55, %57, %59 in 0 : vector<64x32xf32>, vector<64x32xf32>, vector<64x32xf32>, vector<64x32xf32> -> vector<256x32xf32>
    %61 = arith.truncf %60 : vector<256x32xf32> to vector<256x32xbf16>
    %62 = vector.broadcast %2 : vector<1x32xf32> to vector<64x32xf32>
    %63 = arith.mulf %51, %62 : vector<64x32xf32>
    %64 = vector.broadcast %4 : vector<1x32xf32> to vector<64x32xf32>
    %65 = arith.mulf %51, %64 : vector<64x32xf32>
    %66 = vector.broadcast %6 : vector<1x32xf32> to vector<64x32xf32>
    %67 = arith.mulf %51, %66 : vector<64x32xf32>
    %68 = vector.broadcast %8 : vector<1x32xf32> to vector<64x32xf32>
    %69 = arith.mulf %51, %68 : vector<64x32xf32>
    %70 = tpu.concatenate %63, %65, %67, %69 in 0 : vector<64x32xf32>, vector<64x32xf32>, vector<64x32xf32>, vector<64x32xf32> -> vector<256x32xf32>
    %71 = arith.truncf %70 : vector<256x32xf32> to vector<256x32xbf16>
    %72 = arith.truncf %49 : vector<64x32xf32> to vector<64x32xbf16>
    %cst_32 = arith.constant dense<0.000000e+00> : vector<64x256xf32>
    %73 = tpu.matmul %72, %61, %cst_32 {dimension_numbers = #tpu.dot_dimension_numbers<[1], [1], [0], [0], [0, 0, 1, 0], [], []>} : vector<64x32xbf16>, vector<256x32xbf16>, vector<64x256xf32> -> vector<64x256xf32>
    %74 = arith.extf %48 : vector<64x256xbf16> to vector<64x256xf32>
    %75 = arith.addf %73, %74 : vector<64x256xf32>
    %cst_33 = arith.constant dense<0xFF800000> : vector<64xf32>
    %76 = vector.multi_reduction <maximumf>, %75, %cst_33 [1] : vector<64x256xf32> to vector<64xf32>
    %77 = vector.shape_cast %76 : vector<64xf32> to vector<64x1xf32>
    %78 = vector.broadcast %77 : vector<64x1xf32> to vector<64x256xf32>
    %79 = arith.subf %75, %78 : vector<64x256xf32>
    %80 = math.exp %79 : vector<64x256xf32>
    %81 = arith.truncf %80 : vector<64x256xf32> to vector<64x256xbf16>
    %cst_34 = arith.constant dense<0.000000e+00> : vector<64x32xf32>
    %82 = tpu.matmul %81, %71, %cst_34 {dimension_numbers = #tpu.dot_dimension_numbers<[1], [0], [0], [1], [0, 0, 1, 1], [], []>} : vector<64x256xbf16>, vector<256x32xbf16>, vector<64x32xf32> -> vector<64x32xf32>
    %cst_35 = arith.constant dense<0.000000e+00> : vector<64x32xf32>
    %83 = tpu.matmul %81, %9, %cst_35 {dimension_numbers = #tpu.dot_dimension_numbers<[1], [0], [0], [1], [0, 0, 1, 1], [], []>} : vector<64x256xbf16>, vector<256x32xbf16>, vector<64x32xf32> -> vector<64x32xf32>
    %cst_36 = arith.constant 1.000000e-30 : f32
    %84 = vector.broadcast %cst_36 : f32 to vector<64x32xf32>
    %85 = arith.addf %83, %84 : vector<64x32xf32>
    %86 = tpu.reciprocal %85 {approx = true} : vector<64x32xf32> -> vector<64x32xf32>
    %87 = arith.mulf %82, %86 : vector<64x32xf32>
    %88 = vector.extract_strided_slice %44 {offsets = [64, 0], sizes = [64, 32], strides = [1, 1]} : vector<128x32xf32> to vector<64x32xf32>
    %89 = vector.extract_strided_slice %45 {offsets = [64, 0], sizes = [64, 32], strides = [1, 1]} : vector<128x32xf32> to vector<64x32xf32>
    %90 = vector.extract_strided_slice %46 {offsets = [64, 0], sizes = [64, 32], strides = [1, 1]} : vector<128x32xf32> to vector<64x32xf32>
    %91 = vector.broadcast %2 : vector<1x32xf32> to vector<64x32xf32>
    %92 = arith.mulf %89, %91 : vector<64x32xf32>
    %93 = vector.broadcast %4 : vector<1x32xf32> to vector<64x32xf32>
    %94 = arith.mulf %89, %93 : vector<64x32xf32>
    %95 = vector.broadcast %6 : vector<1x32xf32> to vector<64x32xf32>
    %96 = arith.mulf %89, %95 : vector<64x32xf32>
    %97 = vector.broadcast %8 : vector<1x32xf32> to vector<64x32xf32>
    %98 = arith.mulf %89, %97 : vector<64x32xf32>
    %99 = tpu.concatenate %92, %94, %96, %98 in 0 : vector<64x32xf32>, vector<64x32xf32>, vector<64x32xf32>, vector<64x32xf32> -> vector<256x32xf32>
    %100 = arith.truncf %99 : vector<256x32xf32> to vector<256x32xbf16>
    %101 = vector.broadcast %2 : vector<1x32xf32> to vector<64x32xf32>
    %102 = arith.mulf %90, %101 : vector<64x32xf32>
    %103 = vector.broadcast %4 : vector<1x32xf32> to vector<64x32xf32>
    %104 = arith.mulf %90, %103 : vector<64x32xf32>
    %105 = vector.broadcast %6 : vector<1x32xf32> to vector<64x32xf32>
    %106 = arith.mulf %90, %105 : vector<64x32xf32>
    %107 = vector.broadcast %8 : vector<1x32xf32> to vector<64x32xf32>
    %108 = arith.mulf %90, %107 : vector<64x32xf32>
    %109 = tpu.concatenate %102, %104, %106, %108 in 0 : vector<64x32xf32>, vector<64x32xf32>, vector<64x32xf32>, vector<64x32xf32> -> vector<256x32xf32>
    %110 = arith.truncf %109 : vector<256x32xf32> to vector<256x32xbf16>
    %111 = arith.truncf %88 : vector<64x32xf32> to vector<64x32xbf16>
    %cst_37 = arith.constant dense<0.000000e+00> : vector<64x256xf32>
    %112 = tpu.matmul %111, %100, %cst_37 {dimension_numbers = #tpu.dot_dimension_numbers<[1], [1], [0], [0], [0, 0, 1, 0], [], []>} : vector<64x32xbf16>, vector<256x32xbf16>, vector<64x256xf32> -> vector<64x256xf32>
    %113 = arith.extf %48 : vector<64x256xbf16> to vector<64x256xf32>
    %114 = arith.addf %112, %113 : vector<64x256xf32>
    %cst_38 = arith.constant dense<0xFF800000> : vector<64xf32>
    %115 = vector.multi_reduction <maximumf>, %114, %cst_38 [1] : vector<64x256xf32> to vector<64xf32>
    %116 = vector.shape_cast %115 : vector<64xf32> to vector<64x1xf32>
    %117 = vector.broadcast %116 : vector<64x1xf32> to vector<64x256xf32>
    %118 = arith.subf %114, %117 : vector<64x256xf32>
    %119 = math.exp %118 : vector<64x256xf32>
    %120 = arith.truncf %119 : vector<64x256xf32> to vector<64x256xbf16>
    %cst_39 = arith.constant dense<0.000000e+00> : vector<64x32xf32>
    %121 = tpu.matmul %120, %110, %cst_39 {dimension_numbers = #tpu.dot_dimension_numbers<[1], [0], [0], [1], [0, 0, 1, 1], [], []>} : vector<64x256xbf16>, vector<256x32xbf16>, vector<64x32xf32> -> vector<64x32xf32>
    %cst_40 = arith.constant dense<0.000000e+00> : vector<64x32xf32>
    %122 = tpu.matmul %120, %9, %cst_40 {dimension_numbers = #tpu.dot_dimension_numbers<[1], [0], [0], [1], [0, 0, 1, 1], [], []>} : vector<64x256xbf16>, vector<256x32xbf16>, vector<64x32xf32> -> vector<64x32xf32>
    %cst_41 = arith.constant 1.000000e-30 : f32
    %123 = vector.broadcast %cst_41 : f32 to vector<64x32xf32>
    %124 = arith.addf %122, %123 : vector<64x32xf32>
    %125 = tpu.reciprocal %124 {approx = true} : vector<64x32xf32> -> vector<64x32xf32>
    %126 = arith.mulf %121, %125 : vector<64x32xf32>
    %127 = tpu.concatenate %87, %126 in 0 : vector<64x32xf32>, vector<64x32xf32> -> vector<128x32xf32>
    %128 = arith.truncf %127 : vector<128x32xf32> to vector<128x32xbf16>
    %c0_42 = arith.constant 0 : index
    %c0_43 = arith.constant 0 : index
    %c0_44 = arith.constant 0 : index
    %129 = vector.load %arg8[%c0_42, %c0_43, %c0_44] : memref<2x32x32xbf16, #tpu.memory_space<vmem>>, vector<1x32x32xbf16>
    %130 = vector.shape_cast %129 : vector<1x32x32xbf16> to vector<32x32xbf16>
    %cst_45 = arith.constant dense<0.000000e+00> : vector<128x32xf32>
    %131 = tpu.matmul %128, %130, %cst_45 {dimension_numbers = #tpu.dot_dimension_numbers<[1], [0], [0], [1], [0, 0, 1, 1], [], []>} : vector<128x32xbf16>, vector<32x32xbf16>, vector<128x32xf32> -> vector<128x32xf32>
    %c0_46 = arith.constant 0 : index
    %c0_47 = arith.constant 0 : index
    %c0_48 = arith.constant 0 : index
    %132 = vector.load %arg9[%c0_46, %c0_47, %c0_48] : memref<2x1x32xf32, #tpu.memory_space<vmem>>, vector<1x1x32xf32>
    %133 = vector.shape_cast %132 : vector<1x1x32xf32> to vector<1x32xf32>
    %134 = vector.broadcast %133 : vector<1x32xf32> to vector<128x32xf32>
    %135 = arith.addf %131, %134 : vector<128x32xf32>
    %136 = arith.addf %0, %135 : vector<128x32xf32>
    %cst_49 = arith.constant dense<0.000000e+00> : vector<128xf32>
    %137 = vector.multi_reduction <add>, %136, %cst_49 [1] : vector<128x32xf32> to vector<128xf32>
    %138 = vector.shape_cast %137 : vector<128xf32> to vector<128x1xf32>
    %cst_50 = arith.constant 3.200000e+01 : f32
    %139 = vector.broadcast %cst_50 : f32 to vector<128x1xf32>
    %140 = arith.divf %138, %139 : vector<128x1xf32>
    %141 = vector.broadcast %140 : vector<128x1xf32> to vector<128x32xf32>
    %142 = arith.subf %136, %141 : vector<128x32xf32>
    %143 = arith.mulf %142, %142 : vector<128x32xf32>
    %cst_51 = arith.constant dense<0.000000e+00> : vector<128xf32>
    %144 = vector.multi_reduction <add>, %143, %cst_51 [1] : vector<128x32xf32> to vector<128xf32>
    %145 = vector.shape_cast %144 : vector<128xf32> to vector<128x1xf32>
    %cst_52 = arith.constant 3.200000e+01 : f32
    %146 = vector.broadcast %cst_52 : f32 to vector<128x1xf32>
    %147 = arith.divf %145, %146 : vector<128x1xf32>
    %148 = vector.broadcast %140 : vector<128x1xf32> to vector<128x32xf32>
    %149 = arith.subf %136, %148 : vector<128x32xf32>
    %cst_53 = arith.constant 9.99999974E-6 : f32
    %150 = vector.broadcast %cst_53 : f32 to vector<128x1xf32>
    %151 = arith.addf %147, %150 : vector<128x1xf32>
    %152 = math.rsqrt %151 : vector<128x1xf32>
    %153 = vector.broadcast %152 : vector<128x1xf32> to vector<128x32xf32>
    %154 = arith.mulf %149, %153 : vector<128x32xf32>
    %c0_54 = arith.constant 0 : index
    %c0_55 = arith.constant 0 : index
    %c0_56 = arith.constant 0 : index
    %155 = vector.load %arg10[%c0_54, %c0_55, %c0_56] : memref<2x1x32xf32, #tpu.memory_space<vmem>>, vector<1x1x32xf32>
    %156 = vector.shape_cast %155 : vector<1x1x32xf32> to vector<1x32xf32>
    %157 = vector.broadcast %156 : vector<1x32xf32> to vector<128x32xf32>
    %158 = arith.mulf %154, %157 : vector<128x32xf32>
    %c0_57 = arith.constant 0 : index
    %c0_58 = arith.constant 0 : index
    %c0_59 = arith.constant 0 : index
    %159 = vector.load %arg11[%c0_57, %c0_58, %c0_59] : memref<2x1x32xf32, #tpu.memory_space<vmem>>, vector<1x1x32xf32>
    %160 = vector.shape_cast %159 : vector<1x1x32xf32> to vector<1x32xf32>
    %161 = vector.broadcast %160 : vector<1x32xf32> to vector<128x32xf32>
    %162 = arith.addf %158, %161 : vector<128x32xf32>
    %163 = arith.truncf %162 : vector<128x32xf32> to vector<128x32xbf16>
    %c0_60 = arith.constant 0 : index
    %c0_61 = arith.constant 0 : index
    %c0_62 = arith.constant 0 : index
    %164 = vector.load %arg12[%c0_60, %c0_61, %c0_62] : memref<2x32x128xbf16, #tpu.memory_space<vmem>>, vector<1x32x128xbf16>
    %165 = vector.shape_cast %164 : vector<1x32x128xbf16> to vector<32x128xbf16>
    %cst_63 = arith.constant dense<0.000000e+00> : vector<128x128xf32>
    %166 = tpu.matmul %163, %165, %cst_63 {dimension_numbers = #tpu.dot_dimension_numbers<[1], [0], [0], [1], [0, 0, 1, 1], [], []>} : vector<128x32xbf16>, vector<32x128xbf16>, vector<128x128xf32> -> vector<128x128xf32>
    %c0_64 = arith.constant 0 : index
    %c0_65 = arith.constant 0 : index
    %c0_66 = arith.constant 0 : index
    %167 = vector.load %arg13[%c0_64, %c0_65, %c0_66] : memref<2x1x128xf32, #tpu.memory_space<vmem>>, vector<1x1x128xf32>
    %168 = vector.shape_cast %167 : vector<1x1x128xf32> to vector<1x128xf32>
    %169 = vector.broadcast %168 : vector<1x128xf32> to vector<128x128xf32>
    %170 = arith.addf %166, %169 : vector<128x128xf32>
    %cst_67 = arith.constant 5.000000e-01 : f32
    %171 = vector.broadcast %cst_67 : f32 to vector<128x128xf32>
    %172 = arith.mulf %171, %170 : vector<128x128xf32>
    %cst_68 = arith.constant 0.707106769 : f32
    %173 = vector.broadcast %cst_68 : f32 to vector<128x128xf32>
    %174 = arith.mulf %170, %173 : vector<128x128xf32>
    %175 = math.erf %174 : vector<128x128xf32>
    %cst_69 = arith.constant 1.000000e+00 : f32
    %176 = vector.broadcast %cst_69 : f32 to vector<128x128xf32>
    %177 = arith.addf %176, %175 : vector<128x128xf32>
    %178 = arith.mulf %172, %177 : vector<128x128xf32>
    %179 = arith.truncf %178 : vector<128x128xf32> to vector<128x128xbf16>
    %c0_70 = arith.constant 0 : index
    %c0_71 = arith.constant 0 : index
    %c0_72 = arith.constant 0 : index
    %180 = vector.load %arg14[%c0_70, %c0_71, %c0_72] : memref<2x128x32xbf16, #tpu.memory_space<vmem>>, vector<1x128x32xbf16>
    %181 = vector.shape_cast %180 : vector<1x128x32xbf16> to vector<128x32xbf16>
    %cst_73 = arith.constant dense<0.000000e+00> : vector<128x32xf32>
    %182 = tpu.matmul %179, %181, %cst_73 {dimension_numbers = #tpu.dot_dimension_numbers<[1], [0], [0], [1], [0, 0, 1, 1], [], []>} : vector<128x128xbf16>, vector<128x32xbf16>, vector<128x32xf32> -> vector<128x32xf32>
    %183 = arith.addf %136, %182 : vector<128x32xf32>
    %c0_74 = arith.constant 0 : index
    %c0_75 = arith.constant 0 : index
    %c0_76 = arith.constant 0 : index
    %184 = vector.load %arg15[%c0_74, %c0_75, %c0_76] : memref<2x1x32xf32, #tpu.memory_space<vmem>>, vector<1x1x32xf32>
    %185 = vector.shape_cast %184 : vector<1x1x32xf32> to vector<1x32xf32>
    %186 = vector.broadcast %185 : vector<1x32xf32> to vector<128x32xf32>
    %187 = arith.addf %183, %186 : vector<128x32xf32>
    %cst_77 = arith.constant dense<0.000000e+00> : vector<128xf32>
    %188 = vector.multi_reduction <add>, %187, %cst_77 [1] : vector<128x32xf32> to vector<128xf32>
    %189 = vector.shape_cast %188 : vector<128xf32> to vector<128x1xf32>
    %cst_78 = arith.constant 3.200000e+01 : f32
    %190 = vector.broadcast %cst_78 : f32 to vector<128x1xf32>
    %191 = arith.divf %189, %190 : vector<128x1xf32>
    %192 = vector.broadcast %191 : vector<128x1xf32> to vector<128x32xf32>
    %193 = arith.subf %187, %192 : vector<128x32xf32>
    %194 = arith.mulf %193, %193 : vector<128x32xf32>
    %cst_79 = arith.constant dense<0.000000e+00> : vector<128xf32>
    %195 = vector.multi_reduction <add>, %194, %cst_79 [1] : vector<128x32xf32> to vector<128xf32>
    %196 = vector.shape_cast %195 : vector<128xf32> to vector<128x1xf32>
    %cst_80 = arith.constant 3.200000e+01 : f32
    %197 = vector.broadcast %cst_80 : f32 to vector<128x1xf32>
    %198 = arith.divf %196, %197 : vector<128x1xf32>
    %199 = vector.broadcast %191 : vector<128x1xf32> to vector<128x32xf32>
    %200 = arith.subf %187, %199 : vector<128x32xf32>
    %cst_81 = arith.constant 9.99999974E-6 : f32
    %201 = vector.broadcast %cst_81 : f32 to vector<128x1xf32>
    %202 = arith.addf %198, %201 : vector<128x1xf32>
    %203 = math.rsqrt %202 : vector<128x1xf32>
    %204 = vector.broadcast %203 : vector<128x1xf32> to vector<128x32xf32>
    %205 = arith.mulf %200, %204 : vector<128x32xf32>
    %c1_82 = arith.constant 1 : index
    %c0_83 = arith.constant 0 : index
    %c0_84 = arith.constant 0 : index
    %206 = vector.load %arg4[%c1_82, %c0_83, %c0_84] : memref<2x1x32xf32, #tpu.memory_space<vmem>>, vector<1x1x32xf32>
    %207 = vector.shape_cast %206 : vector<1x1x32xf32> to vector<1x32xf32>
    %208 = vector.broadcast %207 : vector<1x32xf32> to vector<128x32xf32>
    %209 = arith.mulf %205, %208 : vector<128x32xf32>
    %c1_85 = arith.constant 1 : index
    %c0_86 = arith.constant 0 : index
    %c0_87 = arith.constant 0 : index
    %210 = vector.load %arg5[%c1_85, %c0_86, %c0_87] : memref<2x1x32xf32, #tpu.memory_space<vmem>>, vector<1x1x32xf32>
    %211 = vector.shape_cast %210 : vector<1x1x32xf32> to vector<1x32xf32>
    %212 = vector.broadcast %211 : vector<1x32xf32> to vector<128x32xf32>
    %213 = arith.addf %209, %212 : vector<128x32xf32>
    %214 = arith.truncf %213 : vector<128x32xf32> to vector<128x32xbf16>
    %c1_88 = arith.constant 1 : index
    %c0_89 = arith.constant 0 : index
    %c0_90 = arith.constant 0 : index
    %215 = vector.load %arg6[%c1_88, %c0_89, %c0_90] : memref<2x32x96xbf16, #tpu.memory_space<vmem>>, vector<1x32x96xbf16>
    %216 = vector.shape_cast %215 : vector<1x32x96xbf16> to vector<32x96xbf16>
    %cst_91 = arith.constant dense<0.000000e+00> : vector<128x96xf32>
    %217 = tpu.matmul %214, %216, %cst_91 {dimension_numbers = #tpu.dot_dimension_numbers<[1], [0], [0], [1], [0, 0, 1, 1], [], []>} : vector<128x32xbf16>, vector<32x96xbf16>, vector<128x96xf32> -> vector<128x96xf32>
    %c1_92 = arith.constant 1 : index
    %c0_93 = arith.constant 0 : index
    %c0_94 = arith.constant 0 : index
    %218 = vector.load %arg7[%c1_92, %c0_93, %c0_94] : memref<2x1x96xf32, #tpu.memory_space<vmem>>, vector<1x1x96xf32>
    %219 = vector.shape_cast %218 : vector<1x1x96xf32> to vector<1x96xf32>
    %220 = vector.broadcast %219 : vector<1x96xf32> to vector<128x96xf32>
    %221 = arith.addf %217, %220 : vector<128x96xf32>
    %222 = vector.extract_strided_slice %221 {offsets = [0, 0], sizes = [128, 32], strides = [1, 1]} : vector<128x96xf32> to vector<128x32xf32>
    %223 = vector.extract_strided_slice %221 {offsets = [0, 32], sizes = [128, 32], strides = [1, 1]} : vector<128x96xf32> to vector<128x32xf32>
    %224 = vector.extract_strided_slice %221 {offsets = [0, 64], sizes = [128, 32], strides = [1, 1]} : vector<128x96xf32> to vector<128x32xf32>
    %c1_95 = arith.constant 1 : index
    %c0_96 = arith.constant 0 : index
    %c0_97 = arith.constant 0 : index
    %225 = vector.load %arg16[%c1_95, %c0_96, %c0_97] : memref<2x64x256xbf16, #tpu.memory_space<vmem>>, vector<1x64x256xbf16>
    %226 = vector.shape_cast %225 : vector<1x64x256xbf16> to vector<64x256xbf16>
    %227 = vector.extract_strided_slice %222 {offsets = [0, 0], sizes = [64, 32], strides = [1, 1]} : vector<128x32xf32> to vector<64x32xf32>
    %228 = vector.extract_strided_slice %223 {offsets = [0, 0], sizes = [64, 32], strides = [1, 1]} : vector<128x32xf32> to vector<64x32xf32>
    %229 = vector.extract_strided_slice %224 {offsets = [0, 0], sizes = [64, 32], strides = [1, 1]} : vector<128x32xf32> to vector<64x32xf32>
    %230 = vector.broadcast %2 : vector<1x32xf32> to vector<64x32xf32>
    %231 = arith.mulf %228, %230 : vector<64x32xf32>
    %232 = vector.broadcast %4 : vector<1x32xf32> to vector<64x32xf32>
    %233 = arith.mulf %228, %232 : vector<64x32xf32>
    %234 = vector.broadcast %6 : vector<1x32xf32> to vector<64x32xf32>
    %235 = arith.mulf %228, %234 : vector<64x32xf32>
    %236 = vector.broadcast %8 : vector<1x32xf32> to vector<64x32xf32>
    %237 = arith.mulf %228, %236 : vector<64x32xf32>
    %238 = tpu.concatenate %231, %233, %235, %237 in 0 : vector<64x32xf32>, vector<64x32xf32>, vector<64x32xf32>, vector<64x32xf32> -> vector<256x32xf32>
    %239 = arith.truncf %238 : vector<256x32xf32> to vector<256x32xbf16>
    %240 = vector.broadcast %2 : vector<1x32xf32> to vector<64x32xf32>
    %241 = arith.mulf %229, %240 : vector<64x32xf32>
    %242 = vector.broadcast %4 : vector<1x32xf32> to vector<64x32xf32>
    %243 = arith.mulf %229, %242 : vector<64x32xf32>
    %244 = vector.broadcast %6 : vector<1x32xf32> to vector<64x32xf32>
    %245 = arith.mulf %229, %244 : vector<64x32xf32>
    %246 = vector.broadcast %8 : vector<1x32xf32> to vector<64x32xf32>
    %247 = arith.mulf %229, %246 : vector<64x32xf32>
    %248 = tpu.concatenate %241, %243, %245, %247 in 0 : vector<64x32xf32>, vector<64x32xf32>, vector<64x32xf32>, vector<64x32xf32> -> vector<256x32xf32>
    %249 = arith.truncf %248 : vector<256x32xf32> to vector<256x32xbf16>
    %250 = arith.truncf %227 : vector<64x32xf32> to vector<64x32xbf16>
    %cst_98 = arith.constant dense<0.000000e+00> : vector<64x256xf32>
    %251 = tpu.matmul %250, %239, %cst_98 {dimension_numbers = #tpu.dot_dimension_numbers<[1], [1], [0], [0], [0, 0, 1, 0], [], []>} : vector<64x32xbf16>, vector<256x32xbf16>, vector<64x256xf32> -> vector<64x256xf32>
    %252 = arith.extf %226 : vector<64x256xbf16> to vector<64x256xf32>
    %253 = arith.addf %251, %252 : vector<64x256xf32>
    %cst_99 = arith.constant dense<0xFF800000> : vector<64xf32>
    %254 = vector.multi_reduction <maximumf>, %253, %cst_99 [1] : vector<64x256xf32> to vector<64xf32>
    %255 = vector.shape_cast %254 : vector<64xf32> to vector<64x1xf32>
    %256 = vector.broadcast %255 : vector<64x1xf32> to vector<64x256xf32>
    %257 = arith.subf %253, %256 : vector<64x256xf32>
    %258 = math.exp %257 : vector<64x256xf32>
    %259 = arith.truncf %258 : vector<64x256xf32> to vector<64x256xbf16>
    %cst_100 = arith.constant dense<0.000000e+00> : vector<64x32xf32>
    %260 = tpu.matmul %259, %249, %cst_100 {dimension_numbers = #tpu.dot_dimension_numbers<[1], [0], [0], [1], [0, 0, 1, 1], [], []>} : vector<64x256xbf16>, vector<256x32xbf16>, vector<64x32xf32> -> vector<64x32xf32>
    %cst_101 = arith.constant dense<0.000000e+00> : vector<64x32xf32>
    %261 = tpu.matmul %259, %9, %cst_101 {dimension_numbers = #tpu.dot_dimension_numbers<[1], [0], [0], [1], [0, 0, 1, 1], [], []>} : vector<64x256xbf16>, vector<256x32xbf16>, vector<64x32xf32> -> vector<64x32xf32>
    %cst_102 = arith.constant 1.000000e-30 : f32
    %262 = vector.broadcast %cst_102 : f32 to vector<64x32xf32>
    %263 = arith.addf %261, %262 : vector<64x32xf32>
    %264 = tpu.reciprocal %263 {approx = true} : vector<64x32xf32> -> vector<64x32xf32>
    %265 = arith.mulf %260, %264 : vector<64x32xf32>
    %266 = vector.extract_strided_slice %222 {offsets = [64, 0], sizes = [64, 32], strides = [1, 1]} : vector<128x32xf32> to vector<64x32xf32>
    %267 = vector.extract_strided_slice %223 {offsets = [64, 0], sizes = [64, 32], strides = [1, 1]} : vector<128x32xf32> to vector<64x32xf32>
    %268 = vector.extract_strided_slice %224 {offsets = [64, 0], sizes = [64, 32], strides = [1, 1]} : vector<128x32xf32> to vector<64x32xf32>
    %269 = vector.broadcast %2 : vector<1x32xf32> to vector<64x32xf32>
    %270 = arith.mulf %267, %269 : vector<64x32xf32>
    %271 = vector.broadcast %4 : vector<1x32xf32> to vector<64x32xf32>
    %272 = arith.mulf %267, %271 : vector<64x32xf32>
    %273 = vector.broadcast %6 : vector<1x32xf32> to vector<64x32xf32>
    %274 = arith.mulf %267, %273 : vector<64x32xf32>
    %275 = vector.broadcast %8 : vector<1x32xf32> to vector<64x32xf32>
    %276 = arith.mulf %267, %275 : vector<64x32xf32>
    %277 = tpu.concatenate %270, %272, %274, %276 in 0 : vector<64x32xf32>, vector<64x32xf32>, vector<64x32xf32>, vector<64x32xf32> -> vector<256x32xf32>
    %278 = arith.truncf %277 : vector<256x32xf32> to vector<256x32xbf16>
    %279 = vector.broadcast %2 : vector<1x32xf32> to vector<64x32xf32>
    %280 = arith.mulf %268, %279 : vector<64x32xf32>
    %281 = vector.broadcast %4 : vector<1x32xf32> to vector<64x32xf32>
    %282 = arith.mulf %268, %281 : vector<64x32xf32>
    %283 = vector.broadcast %6 : vector<1x32xf32> to vector<64x32xf32>
    %284 = arith.mulf %268, %283 : vector<64x32xf32>
    %285 = vector.broadcast %8 : vector<1x32xf32> to vector<64x32xf32>
    %286 = arith.mulf %268, %285 : vector<64x32xf32>
    %287 = tpu.concatenate %280, %282, %284, %286 in 0 : vector<64x32xf32>, vector<64x32xf32>, vector<64x32xf32>, vector<64x32xf32> -> vector<256x32xf32>
    %288 = arith.truncf %287 : vector<256x32xf32> to vector<256x32xbf16>
    %289 = arith.truncf %266 : vector<64x32xf32> to vector<64x32xbf16>
    %cst_103 = arith.constant dense<0.000000e+00> : vector<64x256xf32>
    %290 = tpu.matmul %289, %278, %cst_103 {dimension_numbers = #tpu.dot_dimension_numbers<[1], [1], [0], [0], [0, 0, 1, 0], [], []>} : vector<64x32xbf16>, vector<256x32xbf16>, vector<64x256xf32> -> vector<64x256xf32>
    %291 = arith.extf %226 : vector<64x256xbf16> to vector<64x256xf32>
    %292 = arith.addf %290, %291 : vector<64x256xf32>
    %cst_104 = arith.constant dense<0xFF800000> : vector<64xf32>
    %293 = vector.multi_reduction <maximumf>, %292, %cst_104 [1] : vector<64x256xf32> to vector<64xf32>
    %294 = vector.shape_cast %293 : vector<64xf32> to vector<64x1xf32>
    %295 = vector.broadcast %294 : vector<64x1xf32> to vector<64x256xf32>
    %296 = arith.subf %292, %295 : vector<64x256xf32>
    %297 = math.exp %296 : vector<64x256xf32>
    %298 = arith.truncf %297 : vector<64x256xf32> to vector<64x256xbf16>
    %cst_105 = arith.constant dense<0.000000e+00> : vector<64x32xf32>
    %299 = tpu.matmul %298, %288, %cst_105 {dimension_numbers = #tpu.dot_dimension_numbers<[1], [0], [0], [1], [0, 0, 1, 1], [], []>} : vector<64x256xbf16>, vector<256x32xbf16>, vector<64x32xf32> -> vector<64x32xf32>
    %cst_106 = arith.constant dense<0.000000e+00> : vector<64x32xf32>
    %300 = tpu.matmul %298, %9, %cst_106 {dimension_numbers = #tpu.dot_dimension_numbers<[1], [0], [0], [1], [0, 0, 1, 1], [], []>} : vector<64x256xbf16>, vector<256x32xbf16>, vector<64x32xf32> -> vector<64x32xf32>
    %cst_107 = arith.constant 1.000000e-30 : f32
    %301 = vector.broadcast %cst_107 : f32 to vector<64x32xf32>
    %302 = arith.addf %300, %301 : vector<64x32xf32>
    %303 = tpu.reciprocal %302 {approx = true} : vector<64x32xf32> -> vector<64x32xf32>
    %304 = arith.mulf %299, %303 : vector<64x32xf32>
    %305 = tpu.concatenate %265, %304 in 0 : vector<64x32xf32>, vector<64x32xf32> -> vector<128x32xf32>
    %306 = arith.truncf %305 : vector<128x32xf32> to vector<128x32xbf16>
    %c1_108 = arith.constant 1 : index
    %c0_109 = arith.constant 0 : index
    %c0_110 = arith.constant 0 : index
    %307 = vector.load %arg8[%c1_108, %c0_109, %c0_110] : memref<2x32x32xbf16, #tpu.memory_space<vmem>>, vector<1x32x32xbf16>
    %308 = vector.shape_cast %307 : vector<1x32x32xbf16> to vector<32x32xbf16>
    %cst_111 = arith.constant dense<0.000000e+00> : vector<128x32xf32>
    %309 = tpu.matmul %306, %308, %cst_111 {dimension_numbers = #tpu.dot_dimension_numbers<[1], [0], [0], [1], [0, 0, 1, 1], [], []>} : vector<128x32xbf16>, vector<32x32xbf16>, vector<128x32xf32> -> vector<128x32xf32>
    %c1_112 = arith.constant 1 : index
    %c0_113 = arith.constant 0 : index
    %c0_114 = arith.constant 0 : index
    %310 = vector.load %arg9[%c1_112, %c0_113, %c0_114] : memref<2x1x32xf32, #tpu.memory_space<vmem>>, vector<1x1x32xf32>
    %311 = vector.shape_cast %310 : vector<1x1x32xf32> to vector<1x32xf32>
    %312 = vector.broadcast %311 : vector<1x32xf32> to vector<128x32xf32>
    %313 = arith.addf %309, %312 : vector<128x32xf32>
    %314 = arith.addf %187, %313 : vector<128x32xf32>
    %cst_115 = arith.constant dense<0.000000e+00> : vector<128xf32>
    %315 = vector.multi_reduction <add>, %314, %cst_115 [1] : vector<128x32xf32> to vector<128xf32>
    %316 = vector.shape_cast %315 : vector<128xf32> to vector<128x1xf32>
    %cst_116 = arith.constant 3.200000e+01 : f32
    %317 = vector.broadcast %cst_116 : f32 to vector<128x1xf32>
    %318 = arith.divf %316, %317 : vector<128x1xf32>
    %319 = vector.broadcast %318 : vector<128x1xf32> to vector<128x32xf32>
    %320 = arith.subf %314, %319 : vector<128x32xf32>
    %321 = arith.mulf %320, %320 : vector<128x32xf32>
    %cst_117 = arith.constant dense<0.000000e+00> : vector<128xf32>
    %322 = vector.multi_reduction <add>, %321, %cst_117 [1] : vector<128x32xf32> to vector<128xf32>
    %323 = vector.shape_cast %322 : vector<128xf32> to vector<128x1xf32>
    %cst_118 = arith.constant 3.200000e+01 : f32
    %324 = vector.broadcast %cst_118 : f32 to vector<128x1xf32>
    %325 = arith.divf %323, %324 : vector<128x1xf32>
    %326 = vector.broadcast %318 : vector<128x1xf32> to vector<128x32xf32>
    %327 = arith.subf %314, %326 : vector<128x32xf32>
    %cst_119 = arith.constant 9.99999974E-6 : f32
    %328 = vector.broadcast %cst_119 : f32 to vector<128x1xf32>
    %329 = arith.addf %325, %328 : vector<128x1xf32>
    %330 = math.rsqrt %329 : vector<128x1xf32>
    %331 = vector.broadcast %330 : vector<128x1xf32> to vector<128x32xf32>
    %332 = arith.mulf %327, %331 : vector<128x32xf32>
    %c1_120 = arith.constant 1 : index
    %c0_121 = arith.constant 0 : index
    %c0_122 = arith.constant 0 : index
    %333 = vector.load %arg10[%c1_120, %c0_121, %c0_122] : memref<2x1x32xf32, #tpu.memory_space<vmem>>, vector<1x1x32xf32>
    %334 = vector.shape_cast %333 : vector<1x1x32xf32> to vector<1x32xf32>
    %335 = vector.broadcast %334 : vector<1x32xf32> to vector<128x32xf32>
    %336 = arith.mulf %332, %335 : vector<128x32xf32>
    %c1_123 = arith.constant 1 : index
    %c0_124 = arith.constant 0 : index
    %c0_125 = arith.constant 0 : index
    %337 = vector.load %arg11[%c1_123, %c0_124, %c0_125] : memref<2x1x32xf32, #tpu.memory_space<vmem>>, vector<1x1x32xf32>
    %338 = vector.shape_cast %337 : vector<1x1x32xf32> to vector<1x32xf32>
    %339 = vector.broadcast %338 : vector<1x32xf32> to vector<128x32xf32>
    %340 = arith.addf %336, %339 : vector<128x32xf32>
    %341 = arith.truncf %340 : vector<128x32xf32> to vector<128x32xbf16>
    %c1_126 = arith.constant 1 : index
    %c0_127 = arith.constant 0 : index
    %c0_128 = arith.constant 0 : index
    %342 = vector.load %arg12[%c1_126, %c0_127, %c0_128] : memref<2x32x128xbf16, #tpu.memory_space<vmem>>, vector<1x32x128xbf16>
    %343 = vector.shape_cast %342 : vector<1x32x128xbf16> to vector<32x128xbf16>
    %cst_129 = arith.constant dense<0.000000e+00> : vector<128x128xf32>
    %344 = tpu.matmul %341, %343, %cst_129 {dimension_numbers = #tpu.dot_dimension_numbers<[1], [0], [0], [1], [0, 0, 1, 1], [], []>} : vector<128x32xbf16>, vector<32x128xbf16>, vector<128x128xf32> -> vector<128x128xf32>
    %c1_130 = arith.constant 1 : index
    %c0_131 = arith.constant 0 : index
    %c0_132 = arith.constant 0 : index
    %345 = vector.load %arg13[%c1_130, %c0_131, %c0_132] : memref<2x1x128xf32, #tpu.memory_space<vmem>>, vector<1x1x128xf32>
    %346 = vector.shape_cast %345 : vector<1x1x128xf32> to vector<1x128xf32>
    %347 = vector.broadcast %346 : vector<1x128xf32> to vector<128x128xf32>
    %348 = arith.addf %344, %347 : vector<128x128xf32>
    %cst_133 = arith.constant 5.000000e-01 : f32
    %349 = vector.broadcast %cst_133 : f32 to vector<128x128xf32>
    %350 = arith.mulf %349, %348 : vector<128x128xf32>
    %cst_134 = arith.constant 0.707106769 : f32
    %351 = vector.broadcast %cst_134 : f32 to vector<128x128xf32>
    %352 = arith.mulf %348, %351 : vector<128x128xf32>
    %353 = math.erf %352 : vector<128x128xf32>
    %cst_135 = arith.constant 1.000000e+00 : f32
    %354 = vector.broadcast %cst_135 : f32 to vector<128x128xf32>
    %355 = arith.addf %354, %353 : vector<128x128xf32>
    %356 = arith.mulf %350, %355 : vector<128x128xf32>
    %357 = arith.truncf %356 : vector<128x128xf32> to vector<128x128xbf16>
    %c1_136 = arith.constant 1 : index
    %c0_137 = arith.constant 0 : index
    %c0_138 = arith.constant 0 : index
    %358 = vector.load %arg14[%c1_136, %c0_137, %c0_138] : memref<2x128x32xbf16, #tpu.memory_space<vmem>>, vector<1x128x32xbf16>
    %359 = vector.shape_cast %358 : vector<1x128x32xbf16> to vector<128x32xbf16>
    %cst_139 = arith.constant dense<0.000000e+00> : vector<128x32xf32>
    %360 = tpu.matmul %357, %359, %cst_139 {dimension_numbers = #tpu.dot_dimension_numbers<[1], [0], [0], [1], [0, 0, 1, 1], [], []>} : vector<128x128xbf16>, vector<128x32xbf16>, vector<128x32xf32> -> vector<128x32xf32>
    %361 = arith.addf %314, %360 : vector<128x32xf32>
    %c1_140 = arith.constant 1 : index
    %c0_141 = arith.constant 0 : index
    %c0_142 = arith.constant 0 : index
    %362 = vector.load %arg15[%c1_140, %c0_141, %c0_142] : memref<2x1x32xf32, #tpu.memory_space<vmem>>, vector<1x1x32xf32>
    %363 = vector.shape_cast %362 : vector<1x1x32xf32> to vector<1x32xf32>
    %364 = vector.broadcast %363 : vector<1x32xf32> to vector<128x32xf32>
    %365 = arith.addf %361, %364 : vector<128x32xf32>
    %c0_143 = arith.constant 0 : index
    %c0_144 = arith.constant 0 : index
    %366 = vector.load %arg17[%c0_143, %c0_144] : memref<128x32xf32, #tpu.memory_space<vmem>>, vector<128x32xf32>
    tpu.vector_store %arg17[%c0_143, %c0_144], %365 {strides = array<i32>} : memref<128x32xf32, #tpu.memory_space<vmem>>, vector<128x32xf32>,
    return
  }
  func.func @transform_0(%arg0: i32) -> (i32, i32) {
    %c0_i32 = arith.constant 0 : i32
    %c0_i32_0 = arith.constant 0 : i32
    %c0_i32_1 = arith.constant 0 : i32
    return %c0_i32, %c0_i32_0 : i32, i32
  }
  func.func @transform_1(%arg0: i32) -> (i32, i32, i32) {
    %c0_i32 = arith.constant 0 : i32
    %c0_i32_0 = arith.constant 0 : i32
    %c0_i32_1 = arith.constant 0 : i32
    %c0_i32_2 = arith.constant 0 : i32
    return %c0_i32, %c0_i32_0, %c0_i32_1 : i32, i32, i32
  }
  func.func @transform_2(%arg0: i32) -> (i32, i32) {
    %c0_i32 = arith.constant 0 : i32
    %c0_i32_0 = arith.constant 0 : i32
    %c0_i32_1 = arith.constant 0 : i32
    return %c0_i32, %c0_i32_0 : i32, i32
  }
  func.func @transform_3(%arg0: i32) -> (i32, i32, i32) {
    %c0_i32 = arith.constant 0 : i32
    %c0_i32_0 = arith.constant 0 : i32
    %c0_i32_1 = arith.constant 0 : i32
    %c0_i32_2 = arith.constant 0 : i32
    return %c0_i32, %c0_i32_0, %c0_i32_1 : i32, i32, i32
  }
  func.func @transform_4(%arg0: i32) -> (i32, i32, i32) {
    %c0_i32 = arith.constant 0 : i32
    %c0_i32_0 = arith.constant 0 : i32
    %c0_i32_1 = arith.constant 0 : i32
    %c0_i32_2 = arith.constant 0 : i32
    return %c0_i32, %c0_i32_0, %c0_i32_1 : i32, i32, i32
  }
  func.func @transform_5(%arg0: i32) -> (i32, i32, i32) {
    %c0_i32 = arith.constant 0 : i32
    %c0_i32_0 = arith.constant 0 : i32
    %c0_i32_1 = arith.constant 0 : i32
    %c0_i32_2 = arith.constant 0 : i32
    return %c0_i32, %c0_i32_0, %c0_i32_1 : i32, i32, i32
  }
  func.func @transform_6(%arg0: i32) -> (i32, i32, i32) {
    %c0_i32 = arith.constant 0 : i32
    %c0_i32_0 = arith.constant 0 : i32
    %c0_i32_1 = arith.constant 0 : i32
    %c0_i32_2 = arith.constant 0 : i32
    return %c0_i32, %c0_i32_0, %c0_i32_1 : i32, i32, i32
  }
  func.func @transform_7(%arg0: i32) -> (i32, i32, i32) {
    %c0_i32 = arith.constant 0 : i32
    %c0_i32_0 = arith.constant 0 : i32
    %c0_i32_1 = arith.constant 0 : i32
    %c0_i32_2 = arith.constant 0 : i32
    return %c0_i32, %c0_i32_0, %c0_i32_1 : i32, i32, i32
  }
  func.func @transform_8(%arg0: i32) -> (i32, i32, i32) {
    %c0_i32 = arith.constant 0 : i32
    %c0_i32_0 = arith.constant 0 : i32
    %c0_i32_1 = arith.constant 0 : i32
    %c0_i32_2 = arith.constant 0 : i32
    return %c0_i32, %c0_i32_0, %c0_i32_1 : i32, i32, i32
  }
  func.func @transform_9(%arg0: i32) -> (i32, i32, i32) {
    %c0_i32 = arith.constant 0 : i32
    %c0_i32_0 = arith.constant 0 : i32
    %c0_i32_1 = arith.constant 0 : i32
    %c0_i32_2 = arith.constant 0 : i32
    return %c0_i32, %c0_i32_0, %c0_i32_1 : i32, i32, i32
  }
  func.func @transform_10(%arg0: i32) -> (i32, i32, i32) {
    %c0_i32 = arith.constant 0 : i32
    %c0_i32_0 = arith.constant 0 : i32
    %c0_i32_1 = arith.constant 0 : i32
    %c0_i32_2 = arith.constant 0 : i32
    return %c0_i32, %c0_i32_0, %c0_i32_1 : i32, i32, i32
  }
  func.func @transform_11(%arg0: i32) -> (i32, i32, i32) {
    %c0_i32 = arith.constant 0 : i32
    %c0_i32_0 = arith.constant 0 : i32
    %c0_i32_1 = arith.constant 0 : i32
    %c0_i32_2 = arith.constant 0 : i32
    return %c0_i32, %c0_i32_0, %c0_i32_1 : i32, i32, i32
  }
  func.func @transform_12(%arg0: i32) -> (i32, i32, i32) {
    %c0_i32 = arith.constant 0 : i32
    %c0_i32_0 = arith.constant 0 : i32
    %c0_i32_1 = arith.constant 0 : i32
    %c0_i32_2 = arith.constant 0 : i32
    return %c0_i32, %c0_i32_0, %c0_i32_1 : i32, i32, i32
  }
  func.func @transform_13(%arg0: i32) -> (i32, i32, i32) {
    %c0_i32 = arith.constant 0 : i32
    %c0_i32_0 = arith.constant 0 : i32
    %c0_i32_1 = arith.constant 0 : i32
    %c0_i32_2 = arith.constant 0 : i32
    return %c0_i32, %c0_i32_0, %c0_i32_1 : i32, i32, i32
  }
  func.func @transform_14(%arg0: i32) -> (i32, i32, i32) {
    %c0_i32 = arith.constant 0 : i32
    %c0_i32_0 = arith.constant 0 : i32
    %c0_i32_1 = arith.constant 0 : i32
    %c0_i32_2 = arith.constant 0 : i32
    return %c0_i32, %c0_i32_0, %c0_i32_1 : i32, i32, i32
  }
  func.func @transform_15(%arg0: i32) -> (i32, i32, i32) {
    %c0_i32 = arith.constant 0 : i32
    %c0_i32_0 = arith.constant 0 : i32
    %c0_i32_1 = arith.constant 0 : i32
    %c0_i32_2 = arith.constant 0 : i32
    return %c0_i32, %c0_i32_0, %c0_i32_1 : i32, i32, i32
  }
  func.func @transform_16(%arg0: i32) -> (i32, i32) {
    %c0_i32 = arith.constant 0 : i32
    %c0_i32_0 = arith.constant 0 : i32
    %c0_i32_1 = arith.constant 0 : i32
    return %c0_i32, %c0_i32_0 : i32, i32
  }
}

</mosaic_0001>

<llo_original>
// kernel: tile.19
$region0: #{tile.19}
  %s0 = inlined_call_operand.vmem [shape: f32[4,4,16,4,16], index: 0, kind: input, shape index: {}]
  %s1 = inlined_call_operand.vmem [shape: f32[4,64,64], index: 1, kind: output, shape index: {}]
  $region1: #{tile.19} parent=0
    #allocation0 [shape = 'u8[1048576]{0}', space=vmem, size = 0x100000, scoped, tag = 'scoped mem for input reshape']
    %s3 = sshllo.u32 0, 4
    %s4 = smul.addr 4, 255
    %s5 = scalar_lea.vmem %s0, %s4
    %v6 = vld [vmem:[%s5] sm:%s3]
    %s7 = scalar_lea.vmem [#allocation0], 2040
    %8 = vst [vmem:[%s7] sm:%s3] %v6
    %s9 = smul.addr 4, 254
    %s10 = scalar_lea.vmem %s0, %s9
    %v11 = vld [vmem:[%s10] sm:%s3]
    %s12 = scalar_lea.vmem [#allocation0], 2032
    %13 = vst [vmem:[%s12] sm:%s3] %v11
    %s14 = smul.addr 4, 253
    %s15 = scalar_lea.vmem %s0, %s14
    %v16 = vld [vmem:[%s15] sm:%s3]
    %s17 = scalar_lea.vmem [#allocation0], 2024
    %18 = vst [vmem:[%s17] sm:%s3] %v16
    %s19 = smul.addr 4, 252
    %s20 = scalar_lea.vmem %s0, %s19
    %v21 = vld [vmem:[%s20] sm:%s3]
    %s22 = scalar_lea.vmem [#allocation0], 2016
    %23 = vst [vmem:[%s22] sm:%s3] %v21
    %s24 = smul.addr 4, 251
    %s25 = scalar_lea.vmem %s0, %s24
    %v26 = vld [vmem:[%s25] sm:%s3]
    %s27 = scalar_lea.vmem [#allocation0], 2008
    %28 = vst [vmem:[%s27] sm:%s3] %v26
    %s29 = smul.addr 4, 250
    %s30 = scalar_lea.vmem %s0, %s29
    %v31 = vld [vmem:[%s30] sm:%s3]
    %s32 = scalar_lea.vmem [#allocation0], 2000
    %33 = vst [vmem:[%s32] sm:%s3] %v31
    %s34 = smul.addr 4, 249
    %s35 = scalar_lea.vmem %s0, %s34
    %v36 = vld [vmem:[%s35] sm:%s3]
    %s37 = scalar_lea.vmem [#allocation0], 1992
    %38 = vst [vmem:[%s37] sm:%s3] %v36
    %s39 = smul.addr 4, 248
    %s40 = scalar_lea.vmem %s0, %s39
    %v41 = vld [vmem:[%s40] sm:%s3]
    %s42 = scalar_lea.vmem [#allocation0], 1984
    %43 = vst [vmem:[%s42] sm:%s3] %v41
    %s44 = smul.addr 4, 247
    %s45 = scalar_lea.vmem %s0, %s44
    %v46 = vld [vmem:[%s45] sm:%s3]
    %s47 = scalar_lea.vmem [#allocation0], 1976
    %48 = vst [vmem:[%s47] sm:%s3] %v46
    %s49 = smul.addr 4, 246
    %s50 = scalar_lea.vmem %s0, %s49
    %v51 = vld [vmem:[%s50] sm:%s3]
    %s52 = scalar_lea.vmem [#allocation0], 1968
    %53 = vst [vmem:[%s52] sm:%s3] %v51
    %s54 = smul.addr 4, 245
    %s55 = scalar_lea.vmem %s0, %s54
    %v56 = vld [vmem:[%s55] sm:%s3]
    %s57 = scalar_lea.vmem [#allocation0], 1960
    %58 = vst [vmem:[%s57] sm:%s3] %v56
    %s59 = smul.addr 4, 244
    %s60 = scalar_lea.vmem %s0, %s59
    %v61 = vld [vmem:[%s60] sm:%s3]
    %s62 = scalar_lea.vmem [#allocation0], 1952
    %63 = vst [vmem:[%s62] sm:%s3] %v61
    %s64 = smul.addr 4, 243
    %s65 = scalar_lea.vmem %s0, %s64
    %v66 = vld [vmem:[%s65] sm:%s3]
    %s67 = scalar_lea.vmem [#allocation0], 1944
    %68 = vst [vmem:[%s67] sm:%s3] %v66
    %s69 = smul.addr 4, 242
    %s70 = scalar_lea.vmem %s0, %s69
    %v71 = vld [vmem:[%s70] sm:%s3]
    %s72 = scalar_lea.vmem [#allocation0], 1936
    %73 = vst [vmem:[%s72] sm:%s3] %v71
    %s74 = smul.addr 4, 241
    %s75 = scalar_lea.vmem %s0, %s74
    %v76 = vld [vmem:[%s75] sm:%s3]
    %s77 = scalar_lea.vmem [#allocation0], 1928
    %78 = vst [vmem:[%s77] sm:%s3] %v76
    %s79 = smul.addr 4, 240
    %s80 = scalar_lea.vmem %s0, %s79
    %v81 = vld [vmem:[%s80] sm:%s3]
    %s82 = scalar_lea.vmem [#allocation0], 1920
    %83 = vst [vmem:[%s82] sm:%s3] %v81
    %s84 = smul.addr 4, 239
    %s85 = scalar_lea.vmem %s0, %s84
    %v86 = vld [vmem:[%s85] sm:%s3]
    %s87 = scalar_lea.vmem [#allocation0], 1912
    %88 = vst [vmem:[%s87] sm:%s3] %v86
    %s89 = smul.addr 4, 238
    %s90 = scalar_lea.vmem %s0, %s89
    %v91 = vld [vmem:[%s90] sm:%s3]
    %s92 = scalar_lea.vmem [#allocation0], 1904
    %93 = vst [vmem:[%s92] sm:%s3] %v91
    %s94 = smul.addr 4, 237
    %s95 = scalar_lea.vmem %s0, %s94
    %v96 = vld [vmem:[%s95] sm:%s3]
    %s97 = scalar_lea.vmem [#allocation0], 1896
    %98 = vst [vmem:[%s97] sm:%s3] %v96
    %s99 = smul.addr 4, 236
    %s100 = scalar_lea.vmem %s0, %s99
    %v101 = vld [vmem:[%s100] sm:%s3]
    %s102 = scalar_lea.vmem [#allocation0], 1888
    %103 = vst [vmem:[%s102] sm:%s3] %v101
    %s104 = smul.addr 4, 235
    %s105 = scalar_lea.vmem %s0, %s104
    %v106 = vld [vmem:[%s105] sm:%s3]
    %s107 = scalar_lea.vmem [#allocation0], 1880
    %108 = vst [vmem:[%s107] sm:%s3] %v106
    %s109 = smul.addr 4, 234
    %s110 = scalar_lea.vmem %s0, %s109
    %v111 = vld [vmem:[%s110] sm:%s3]
    %s112 = scalar_lea.vmem [#allocation0], 1872
    %113 = vst [vmem:[%s112] sm:%s3] %v111
    %s114 = smul.addr 4, 233
    %s115 = scalar_lea.vmem %s0, %s114
    %v116 = vld [vmem:[%s115] sm:%s3]
    %s117 = scalar_lea.vmem [#allocation0], 1864
    %118 = vst [vmem:[%s117] sm:%s3] %v116
    %s119 = smul.addr 4, 232
    %s120 = scalar_lea.vmem %s0, %s119
    %v121 = vld [vmem:[%s120] sm:%s3]
    %s122 = scalar_lea.vmem [#allocation0], 1856
    %123 = vst [vmem:[%s122] sm:%s3] %v121
    %s124 = smul.addr 4, 231
    %s125 = scalar_lea.vmem %s0, %s124
    %v126 = vld [vmem:[%s125] sm:%s3]
    %s127 = scalar_lea.vmem [#allocation0], 1848
    %128 = vst [vmem:[%s127] sm:%s3] %v126
    %s129 = smul.addr 4, 230
    %s130 = scalar_lea.vmem %s0, %s129
    %v131 = vld [vmem:[%s130] sm:%s3]
    %s132 = scalar_lea.vmem [#allocation0], 1840
    %133 = vst [vmem:[%s132] sm:%s3] %v131
    %s134 = smul.addr 4, 229
    %s135 = scalar_lea.vmem %s0, %s134
    %v136 = vld [vmem:[%s135] sm:%s3]
    %s137 = scalar_lea.vmem [#allocation0], 1832
    %138 = vst [vmem:[%s137] sm:%s3] %v136
    %s139 = smul.addr 4, 228
    %s140 = scalar_lea.vmem %s0, %s139
    %v141 = vld [vmem:[%s140] sm:%s3]
    %s142 = scalar_lea.vmem [#allocation0], 1824
    %143 = vst [vmem:[%s142] sm:%s3] %v141
    %s144 = smul.addr 4, 227
    %s145 = scalar_lea.vmem %s0, %s144
    %v146 = vld [vmem:[%s145] sm:%s3]
    %s147 = scalar_lea.vmem [#allocation0], 1816
    %148 = vst [vmem:[%s147] sm:%s3] %v146
    %s149 = smul.addr 4, 226
    %s150 = scalar_lea.vmem %s0, %s149
    %v151 = vld [vmem:[%s150] sm:%s3]
    %s152 = scalar_lea.vmem [#allocation0], 1808
    %153 = vst [vmem:[%s152] sm:%s3] %v151
    %s154 = smul.addr 4, 225
    %s155 = scalar_lea.vmem %s0, %s154
    %v156 = vld [vmem:[%s155] sm:%s3]
    %s157 = scalar_lea.vmem [#allocation0], 1800
    %158 = vst [vmem:[%s157] sm:%s3] %v156
    %s159 = smul.addr 4, 224
    %s160 = scalar_lea.vmem %s0, %s159
    %v161 = vld [vmem:[%s160] sm:%s3]
    %s162 = scalar_lea.vmem [#allocation0], 1792
    %163 = vst [vmem:[%s162] sm:%s3] %v161
    %s164 = smul.addr 4, 223
    %s165 = scalar_lea.vmem %s0, %s164
    %v166 = vld [vmem:[%s165] sm:%s3]
    %s167 = scalar_lea.vmem [#allocation0], 1784
    %168 = vst [vmem:[%s167] sm:%s3] %v166
    %s169 = smul.addr 4, 222
    %s170 = scalar_lea.vmem %s0, %s169
    %v171 = vld [vmem:[%s170] sm:%s3]
    %s172 = scalar_lea.vmem [#allocation0], 1776
    %173 = vst [vmem:[%s172] sm:%s3] %v171
    %s174 = smul.addr 4, 221
    %s175 = scalar_lea.vmem %s0, %s174
    %v176 = vld [vmem:[%s175] sm:%s3]
    %s177 = scalar_lea.vmem [#allocation0], 1768
    %178 = vst [vmem:[%s177] sm:%s3] %v176
    %s179 = smul.addr 4, 220
    %s180 = scalar_lea.vmem %s0, %s179
    %v181 = vld [vmem:[%s180] sm:%s3]
    %s182 = scalar_lea.vmem [#allocation0], 1760
    %183 = vst [vmem:[%s182] sm:%s3] %v181
    %s184 = smul.addr 4, 219
    %s185 = scalar_lea.vmem %s0, %s184
    %v186 = vld [vmem:[%s185] sm:%s3]
    %s187 = scalar_lea.vmem [#allocation0], 1752
    %188 = vst [vmem:[%s187] sm:%s3] %v186
    %s189 = smul.addr 4, 218
    %s190 = scalar_lea.vmem %s0, %s189
    %v191 = vld [vmem:[%s190] sm:%s3]
    %s192 = scalar_lea.vmem [#allocation0], 1744
    %193 = vst [vmem:[%s192] sm:%s3] %v191
    %s194 = smul.addr 4, 217
    %s195 = scalar_lea.vmem %s0, %s194
    %v196 = vld [vmem:[%s195] sm:%s3]
    %s197 = scalar_lea.vmem [#allocation0], 1736
    %198 = vst [vmem:[%s197] sm:%s3] %v196
    %s199 = smul.addr 4, 216
    %s200 = scalar_lea.vmem %s0, %s199
    %v201 = vld [vmem:[%s200] sm:%s3]
    %s202 = scalar_lea.vmem [#allocation0], 1728
    %203 = vst [vmem:[%s202] sm:%s3] %v201
    %s204 = smul.addr 4, 215
    %s205 = scalar_lea.vmem %s0, %s204
    %v206 = vld [vmem:[%s205] sm:%s3]
    %s207 = scalar_lea.vmem [#allocation0], 1720
    %208 = vst [vmem:[%s207] sm:%s3] %v206
    %s209 = smul.addr 4, 214
    %s210 = scalar_lea.vmem %s0, %s209
    %v211 = vld [vmem:[%s210] sm:%s3]
    %s212 = scalar_lea.vmem [#allocation0], 1712
    %213 = vst [vmem:[%s212] sm:%s3] %v211
    %s214 = smul.addr 4, 213
    %s215 = scalar_lea.vmem %s0, %s214
    %v216 = vld [vmem:[%s215] sm:%s3]
    %s217 = scalar_lea.vmem [#allocation0], 1704
    %218 = vst [vmem:[%s217] sm:%s3] %v216
    %s219 = smul.addr 4, 212
    %s220 = scalar_lea.vmem %s0, %s219
    %v221 = vld [vmem:[%s220] sm:%s3]
    %s222 = scalar_lea.vmem [#allocation0], 1696
    %223 = vst [vmem:[%s222] sm:%s3] %v221
    %s224 = smul.addr 4, 211
    %s225 = scalar_lea.vmem %s0, %s224
    %v226 = vld [vmem:[%s225] sm:%s3]
    %s227 = scalar_lea.vmem [#allocation0], 1688
    %228 = vst [vmem:[%s227] sm:%s3] %v226
    %s229 = smul.addr 4, 210
    %s230 = scalar_lea.vmem %s0, %s229
    %v231 = vld [vmem:[%s230] sm:%s3]
    %s232 = scalar_lea.vmem [#allocation0], 1680
    %233 = vst [vmem:[%s232] sm:%s3] %v231
    %s234 = smul.addr 4, 209
    %s235 = scalar_lea.vmem %s0, %s234
    %v236 = vld [vmem:[%s235] sm:%s3]
    %s237 = scalar_lea.vmem [#allocation0], 1672
    %238 = vst [vmem:[%s237] sm:%s3] %v236
    %s239 = smul.addr 4, 208
    %s240 = scalar_lea.vmem %s0, %s239
    %v241 = vld [vmem:[%s240] sm:%s3]
    %s242 = scalar_lea.vmem [#allocation0], 1664
    %243 = vst [vmem:[%s242] sm:%s3] %v241
    %s244 = smul.addr 4, 207
    %s245 = scalar_lea.vmem %s0, %s244
    %v246 = vld [vmem:[%s245] sm:%s3]
    %s247 = scalar_lea.vmem [#allocation0], 1656
    %248 = vst [vmem:[%s247] sm:%s3] %v246
    %s249 = smul.addr 4, 206
    %s250 = scalar_lea.vmem %s0, %s249
    %v251 = vld [vmem:[%s250] sm:%s3]
    %s252 = scalar_lea.vmem [#allocation0], 1648
    %253 = vst [vmem:[%s252] sm:%s3] %v251
    %s254 = smul.addr 4, 205
    %s255 = scalar_lea.vmem %s0, %s254
    %v256 = vld [vmem:[%s255] sm:%s3]
    %s257 = scalar_lea.vmem [#allocation0], 1640
    %258 = vst [vmem:[%s257] sm:%s3] %v256
    %s259 = smul.addr 4, 204
    %s260 = scalar_lea.vmem %s0, %s259
    %v261 = vld [vmem:[%s260] sm:%s3]
    %s262 = scalar_lea.vmem [#allocation0], 1632
    %263 = vst [vmem:[%s262] sm:%s3] %v261
    %s264 = smul.addr 4, 203
    %s265 = scalar_lea.vmem %s0, %s264
    %v266 = vld [vmem:[%s265] sm:%s3]
    %s267 = scalar_lea.vmem [#allocation0], 1624
    %268 = vst [vmem:[%s267] sm:%s3] %v266
    %s269 = smul.addr 4, 202
    %s270 = scalar_lea.vmem %s0, %s269
    %v271 = vld [vmem:[%s270] sm:%s3]
    %s272 = scalar_lea.vmem [#allocation0], 1616
    %273 = vst [vmem:[%s272] sm:%s3] %v271
    %s274 = smul.addr 4, 201
    %s275 = scalar_lea.vmem %s0, %s274
    %v276 = vld [vmem:[%s275] sm:%s3]
    %s277 = scalar_lea.vmem [#allocation0], 1608
    %278 = vst [vmem:[%s277] sm:%s3] %v276
    %s279 = smul.addr 4, 200
    %s280 = scalar_lea.vmem %s0, %s279
    %v281 = vld [vmem:[%s280] sm:%s3]
    %s282 = scalar_lea.vmem [#allocation0], 1600
    %283 = vst [vmem:[%s282] sm:%s3] %v281
    %s284 = smul.addr 4, 199
    %s285 = scalar_lea.vmem %s0, %s284
    %v286 = vld [vmem:[%s285] sm:%s3]
    %s287 = scalar_lea.vmem [#allocation0], 1592
    %288 = vst [vmem:[%s287] sm:%s3] %v286
    %s289 = smul.addr 4, 198
    %s290 = scalar_lea.vmem %s0, %s289
    %v291 = vld [vmem:[%s290] sm:%s3]
    %s292 = scalar_lea.vmem [#allocation0], 1584
    %293 = vst [vmem:[%s292] sm:%s3] %v291
    %s294 = smul.addr 4, 197
    %s295 = scalar_lea.vmem %s0, %s294
    %v296 = vld [vmem:[%s295] sm:%s3]
    %s297 = scalar_lea.vmem [#allocation0], 1576
    %298 = vst [vmem:[%s297] sm:%s3] %v296
    %s299 = smul.addr 4, 196
    %s300 = scalar_lea.vmem %s0, %s299
    %v301 = vld [vmem:[%s300] sm:%s3]
    %s302 = scalar_lea.vmem [#allocation0], 1568
    %303 = vst [vmem:[%s302] sm:%s3] %v301
    %s304 = smul.addr 4, 195
    %s305 = scalar_lea.vmem %s0, %s304
    %v306 = vld [vmem:[%s305] sm:%s3]
    %s307 = scalar_lea.vmem [#allocation0], 1560
    %308 = vst [vmem:[%s307] sm:%s3] %v306
    %s309 = smul.addr 4, 194
    %s310 = scalar_lea.vmem %s0, %s309
    %v311 = vld [vmem:[%s310] sm:%s3]
    %s312 = scalar_lea.vmem [#allocation0], 1552
    %313 = vst [vmem:[%s312] sm:%s3] %v311
    %s314 = smul.addr 4, 193
    %s315 = scalar_lea.vmem %s0, %s314
    %v316 = vld [vmem:[%s315] sm:%s3]
    %s317 = scalar_lea.vmem [#allocation0], 1544
    %318 = vst [vmem:[%s317] sm:%s3] %v316
    %s319 = smul.addr 4, 192
    %s320 = scalar_lea.vmem %s0, %s319
    %v321 = vld [vmem:[%s320] sm:%s3]
    %s322 = scalar_lea.vmem [#allocation0], 1536
    %323 = vst [vmem:[%s322] sm:%s3] %v321
    %s324 = smul.addr 4, 191
    %s325 = scalar_lea.vmem %s0, %s324
    %v326 = vld [vmem:[%s325] sm:%s3]
    %s327 = scalar_lea.vmem [#allocation0], 1528
    %328 = vst [vmem:[%s327] sm:%s3] %v326
    %s329 = smul.addr 4, 190
    %s330 = scalar_lea.vmem %s0, %s329
    %v331 = vld [vmem:[%s330] sm:%s3]
    %s332 = scalar_lea.vmem [#allocation0], 1520
    %333 = vst [vmem:[%s332] sm:%s3] %v331
    %s334 = smul.addr 4, 189
    %s335 = scalar_lea.vmem %s0, %s334
    %v336 = vld [vmem:[%s335] sm:%s3]
    %s337 = scalar_lea.vmem [#allocation0], 1512
    %338 = vst [vmem:[%s337] sm:%s3] %v336
    %s339 = smul.addr 4, 188
    %s340 = scalar_lea.vmem %s0, %s339
    %v341 = vld [vmem:[%s340] sm:%s3]
    %s342 = scalar_lea.vmem [#allocation0], 1504
    %343 = vst [vmem:[%s342] sm:%s3] %v341
    %s344 = smul.addr 4, 187
    %s345 = scalar_lea.vmem %s0, %s344
    %v346 = vld [vmem:[%s345] sm:%s3]
    %s347 = scalar_lea.vmem [#allocation0], 1496
    %348 = vst [vmem:[%s347] sm:%s3] %v346
    %s349 = smul.addr 4, 186
    %s350 = scalar_lea.vmem %s0, %s349
    %v351 = vld [vmem:[%s350] sm:%s3]
    %s352 = scalar_lea.vmem [#allocation0], 1488
    %353 = vst [vmem:[%s352] sm:%s3] %v351
    %s354 = smul.addr 4, 185
    %s355 = scalar_lea.vmem %s0, %s354
    %v356 = vld [vmem:[%s355] sm:%s3]
    %s357 = scalar_lea.vmem [#allocation0], 1480
    %358 = vst [vmem:[%s357] sm:%s3] %v356
    %s359 = smul.addr 4, 184
    %s360 = scalar_lea.vmem %s0, %s359
    %v361 = vld [vmem:[%s360] sm:%s3]
    %s362 = scalar_lea.vmem [#allocation0], 1472
    %363 = vst [vmem:[%s362] sm:%s3] %v361
    %s364 = smul.addr 4, 183
    %s365 = scalar_lea.vmem %s0, %s364
    %v366 = vld [vmem:[%s365] sm:%s3]
    %s367 = scalar_lea.vmem [#allocation0], 1464
    %368 = vst [vmem:[%s367] sm:%s3] %v366
    %s369 = smul.addr 4, 182
    %s370 = scalar_lea.vmem %s0, %s369
    %v371 = vld [vmem:[%s370] sm:%s3]
    %s372 = scalar_lea.vmem [#allocation0], 1456
    %373 = vst [vmem:[%s372] sm:%s3] %v371
    %s374 = smul.addr 4, 181
    %s375 = scalar_lea.vmem %s0, %s374
    %v376 = vld [vmem:[%s375] sm:%s3]
    %s377 = scalar_lea.vmem [#allocation0], 1448
    %378 = vst [vmem:[%s377] sm:%s3] %v376
    %s379 = smul.addr 4, 180
    %s380 = scalar_lea.vmem %s0, %s379
    %v381 = vld [vmem:[%s380] sm:%s3]
    %s382 = scalar_lea.vmem [#allocation0], 1440
    %383 = vst [vmem:[%s382] sm:%s3] %v381
    %s384 = smul.addr 4, 179
    %s385 = scalar_lea.vmem %s0, %s384
    %v386 = vld [vmem:[%s385] sm:%s3]
    %s387 = scalar_lea.vmem [#allocation0], 1432
    %388 = vst [vmem:[%s387] sm:%s3] %v386
    %s389 = smul.addr 4, 178
    %s390 = scalar_lea.vmem %s0, %s389
    %v391 = vld [vmem:[%s390] sm:%s3]
    %s392 = scalar_lea.vmem [#allocation0], 1424
    %393 = vst [vmem:[%s392] sm:%s3] %v391
    %s394 = smul.addr 4, 177
    %s395 = scalar_lea.vmem %s0, %s394
    %v396 = vld [vmem:[%s395] sm:%s3]
    %s397 = scalar_lea.vmem [#allocation0], 1416
    %398 = vst [vmem:[%s397] sm:%s3] %v396
    %s399 = smul.addr 4, 176
    %s400 = scalar_lea.vmem %s0, %s399
    %v401 = vld [vmem:[%s400] sm:%s3]
    %s402 = scalar_lea.vmem [#allocation0], 1408
    %403 = vst [vmem:[%s402] sm:%s3] %v401
    %s404 = smul.addr 4, 175
    %s405 = scalar_lea.vmem %s0, %s404
    %v406 = vld [vmem:[%s405] sm:%s3]
    %s407 = scalar_lea.vmem [#allocation0], 1400
    %408 = vst [vmem:[%s407] sm:%s3] %v406
    %s409 = smul.addr 4, 174
    %s410 = scalar_lea.vmem %s0, %s409
    %v411 = vld [vmem:[%s410] sm:%s3]
    %s412 = scalar_lea.vmem [#allocation0], 1392
    %413 = vst [vmem:[%s412] sm:%s3] %v411
    %s414 = smul.addr 4, 173
    %s415 = scalar_lea.vmem %s0, %s414
    %v416 = vld [vmem:[%s415] sm:%s3]
    %s417 = scalar_lea.vmem [#allocation0], 1384
    %418 = vst [vmem:[%s417] sm:%s3] %v416
    %s419 = smul.addr 4, 172
    %s420 = scalar_lea.vmem %s0, %s419
    %v421 = vld [vmem:[%s420] sm:%s3]
    %s422 = scalar_lea.vmem [#allocation0], 1376
    %423 = vst [vmem:[%s422] sm:%s3] %v421
    %s424 = smul.addr 4, 171
    %s425 = scalar_lea.vmem %s0, %s424
    %v426 = vld [vmem:[%s425] sm:%s3]
    %s427 = scalar_lea.vmem [#allocation0], 1368
    %428 = vst [vmem:[%s427] sm:%s3] %v426
    %s429 = smul.addr 4, 170
    %s430 = scalar_lea.vmem %s0, %s429
    %v431 = vld [vmem:[%s430] sm:%s3]
    %s432 = scalar_lea.vmem [#allocation0], 1360
    %433 = vst [vmem:[%s432] sm:%s3] %v431
    %s434 = smul.addr 4, 169
    %s435 = scalar_lea.vmem %s0, %s434
    %v436 = vld [vmem:[%s435] sm:%s3]
    %s437 = scalar_lea.vmem [#allocation0], 1352
    %438 = vst [vmem:[%s437] sm:%s3] %v436
    %s439 = smul.addr 4, 168
    %s440 = scalar_lea.vmem %s0, %s439
    %v441 = vld [vmem:[%s440] sm:%s3]
    %s442 = scalar_lea.vmem [#allocation0], 1344
    %443 = vst [vmem:[%s442] sm:%s3] %v441
    %s444 = smul.addr 4, 167
    %s445 = scalar_lea.vmem %s0, %s444
    %v446 = vld [vmem:[%s445] sm:%s3]
    %s447 = scalar_lea.vmem [#allocation0], 1336
    %448 = vst [vmem:[%s447] sm:%s3] %v446
    %s449 = smul.addr 4, 166
    %s450 = scalar_lea.vmem %s0, %s449
    %v451 = vld [vmem:[%s450] sm:%s3]
    %s452 = scalar_lea.vmem [#allocation0], 1328
    %453 = vst [vmem:[%s452] sm:%s3] %v451
    %s454 = smul.addr 4, 165
    %s455 = scalar_lea.vmem %s0, %s454
    %v456 = vld [vmem:[%s455] sm:%s3]
    %s457 = scalar_lea.vmem [#allocation0], 1320
    %458 = vst [vmem:[%s457] sm:%s3] %v456
    %s459 = smul.addr 4, 164
    %s460 = scalar_lea.vmem %s0, %s459
    %v461 = vld [vmem:[%s460] sm:%s3]
    %s462 = scalar_lea.vmem [#allocation0], 1312
    %463 = vst [vmem:[%s462] sm:%s3] %v461
    %s464 = smul.addr 4, 163
    %s465 = scalar_lea.vmem %s0, %s464
    %v466 = vld [vmem:[%s465] sm:%s3]
    %s467 = scalar_lea.vmem [#allocation0], 1304
    %468 = vst [vmem:[%s467] sm:%s3] %v466
    %s469 = smul.addr 4, 162
    %s470 = scalar_lea.vmem %s0, %s469
    %v471 = vld [vmem:[%s470] sm:%s3]
    %s472 = scalar_lea.vmem [#allocation0], 1296
    %473 = vst [vmem:[%s472] sm:%s3] %v471
    %s474 = smul.addr 4, 161
    %s475 = scalar_lea.vmem %s0, %s474
    %v476 = vld [vmem:[%s475] sm:%s3]
    %s477 = scalar_lea.vmem [#allocation0], 1288
    %478 = vst [vmem:[%s477] sm:%s3] %v476
    %s479 = smul.addr 4, 160
    %s480 = scalar_lea.vmem %s0, %s479
    %v481 = vld [vmem:[%s480] sm:%s3]
    %s482 = scalar_lea.vmem [#allocation0], 1280
    %483 = vst [vmem:[%s482] sm:%s3] %v481
    %s484 = smul.addr 4, 159
    %s485 = scalar_lea.vmem %s0, %s484
    %v486 = vld [vmem:[%s485] sm:%s3]
    %s487 = scalar_lea.vmem [#allocation0], 1272
    %488 = vst [vmem:[%s487] sm:%s3] %v486
    %s489 = smul.addr 4, 158
    %s490 = scalar_lea.vmem %s0, %s489
    %v491 = vld [vmem:[%s490] sm:%s3]
    %s492 = scalar_lea.vmem [#allocation0], 1264
    %493 = vst [vmem:[%s492] sm:%s3] %v491
    %s494 = smul.addr 4, 157
    %s495 = scalar_lea.vmem %s0, %s494
    %v496 = vld [vmem:[%s495] sm:%s3]
    %s497 = scalar_lea.vmem [#allocation0], 1256
    %498 = vst [vmem:[%s497] sm:%s3] %v496
    %s499 = smul.addr 4, 156
    %s500 = scalar_lea.vmem %s0, %s499
    %v501 = vld [vmem:[%s500] sm:%s3]
    %s502 = scalar_lea.vmem [#allocation0], 1248
    %503 = vst [vmem:[%s502] sm:%s3] %v501
    %s504 = smul.addr 4, 155
    %s505 = scalar_lea.vmem %s0, %s504
    %v506 = vld [vmem:[%s505] sm:%s3]
    %s507 = scalar_lea.vmem [#allocation0], 1240
    %508 = vst [vmem:[%s507] sm:%s3] %v506
    %s509 = smul.addr 4, 154
    %s510 = scalar_lea.vmem %s0, %s509
    %v511 = vld [vmem:[%s510] sm:%s3]
    %s512 = scalar_lea.vmem [#allocation0], 1232
    %513 = vst [vmem:[%s512] sm:%s3] %v511
    %s514 = smul.addr 4, 153
    %s515 = scalar_lea.vmem %s0, %s514
    %v516 = vld [vmem:[%s515] sm:%s3]
    %s517 = scalar_lea.vmem [#allocation0], 1224
    %518 = vst [vmem:[%s517] sm:%s3] %v516
    %s519 = smul.addr 4, 152
    %s520 = scalar_lea.vmem %s0, %s519
    %v521 = vld [vmem:[%s520] sm:%s3]
    %s522 = scalar_lea.vmem [#allocation0], 1216
    %523 = vst [vmem:[%s522] sm:%s3] %v521
    %s524 = smul.addr 4, 151
    %s525 = scalar_lea.vmem %s0, %s524
    %v526 = vld [vmem:[%s525] sm:%s3]
    %s527 = scalar_lea.vmem [#allocation0], 1208
    %528 = vst [vmem:[%s527] sm:%s3] %v526
    %s529 = smul.addr 4, 150
    %s530 = scalar_lea.vmem %s0, %s529
    %v531 = vld [vmem:[%s530] sm:%s3]
    %s532 = scalar_lea.vmem [#allocation0], 1200
    %533 = vst [vmem:[%s532] sm:%s3] %v531
    %s534 = smul.addr 4, 149
    %s535 = scalar_lea.vmem %s0, %s534
    %v536 = vld [vmem:[%s535] sm:%s3]
    %s537 = scalar_lea.vmem [#allocation0], 1192
    %538 = vst [vmem:[%s537] sm:%s3] %v536
    %s539 = smul.addr 4, 148
    %s540 = scalar_lea.vmem %s0, %s539
    %v541 = vld [vmem:[%s540] sm:%s3]
    %s542 = scalar_lea.vmem [#allocation0], 1184
    %543 = vst [vmem:[%s542] sm:%s3] %v541
    %s544 = smul.addr 4, 147
    %s545 = scalar_lea.vmem %s0, %s544
    %v546 = vld [vmem:[%s545] sm:%s3]
    %s547 = scalar_lea.vmem [#allocation0], 1176
    %548 = vst [vmem:[%s547] sm:%s3] %v546
    %s549 = smul.addr 4, 146
    %s550 = scalar_lea.vmem %s0, %s549
    %v551 = vld [vmem:[%s550] sm:%s3]
    %s552 = scalar_lea.vmem [#allocation0], 1168
    %553 = vst [vmem:[%s552] sm:%s3] %v551
    %s554 = smul.addr 4, 145
    %s555 = scalar_lea.vmem %s0, %s554
    %v556 = vld [vmem:[%s555] sm:%s3]
    %s557 = scalar_lea.vmem [#allocation0], 1160
    %558 = vst [vmem:[%s557] sm:%s3] %v556
    %s559 = smul.addr 4, 144
    %s560 = scalar_lea.vmem %s0, %s559
    %v561 = vld [vmem:[%s560] sm:%s3]
    %s562 = scalar_lea.vmem [#allocation0], 1152
    %563 = vst [vmem:[%s562] sm:%s3] %v561
    %s564 = smul.addr 4, 143
    %s565 = scalar_lea.vmem %s0, %s564
    %v566 = vld [vmem:[%s565] sm:%s3]
    %s567 = scalar_lea.vmem [#allocation0], 1144
    %568 = vst [vmem:[%s567] sm:%s3] %v566
    %s569 = smul.addr 4, 142
    %s570 = scalar_lea.vmem %s0, %s569
    %v571 = vld [vmem:[%s570] sm:%s3]
    %s572 = scalar_lea.vmem [#allocation0], 1136
    %573 = vst [vmem:[%s572] sm:%s3] %v571
    %s574 = smul.addr 4, 141
    %s575 = scalar_lea.vmem %s0, %s574
    %v576 = vld [vmem:[%s575] sm:%s3]
    %s577 = scalar_lea.vmem [#allocation0], 1128
    %578 = vst [vmem:[%s577] sm:%s3] %v576
    %s579 = smul.addr 4, 140
    %s580 = scalar_lea.vmem %s0, %s579
    %v581 = vld [vmem:[%s580] sm:%s3]
    %s582 = scalar_lea.vmem [#allocation0], 1120
    %583 = vst [vmem:[%s582] sm:%s3] %v581
    %s584 = smul.addr 4, 139
    %s585 = scalar_lea.vmem %s0, %s584
    %v586 = vld [vmem:[%s585] sm:%s3]
    %s587 = scalar_lea.vmem [#allocation0], 1112
    %588 = vst [vmem:[%s587] sm:%s3] %v586
    %s589 = smul.addr 4, 138
    %s590 = scalar_lea.vmem %s0, %s589
    %v591 = vld [vmem:[%s590] sm:%s3]
    %s592 = scalar_lea.vmem [#allocation0], 1104
    %593 = vst [vmem:[%s592] sm:%s3] %v591
    %s594 = smul.addr 4, 137
    %s595 = scalar_lea.vmem %s0, %s594
    %v596 = vld [vmem:[%s595] sm:%s3]
    %s597 = scalar_lea.vmem [#allocation0], 1096
    %598 = vst [vmem:[%s597] sm:%s3] %v596
    %s599 = smul.addr 4, 136
    %s600 = scalar_lea.vmem %s0, %s599
    %v601 = vld [vmem:[%s600] sm:%s3]
    %s602 = scalar_lea.vmem [#allocation0], 1088
    %603 = vst [vmem:[%s602] sm:%s3] %v601
    %s604 = smul.addr 4, 135
    %s605 = scalar_lea.vmem %s0, %s604
    %v606 = vld [vmem:[%s605] sm:%s3]
    %s607 = scalar_lea.vmem [#allocation0], 1080
    %608 = vst [vmem:[%s607] sm:%s3] %v606
    %s609 = smul.addr 4, 134
    %s610 = scalar_lea.vmem %s0, %s609
    %v611 = vld [vmem:[%s610] sm:%s3]
    %s612 = scalar_lea.vmem [#allocation0], 1072
    %613 = vst [vmem:[%s612] sm:%s3] %v611
    %s614 = smul.addr 4, 133
    %s615 = scalar_lea.vmem %s0, %s614
    %v616 = vld [vmem:[%s615] sm:%s3]
    %s617 = scalar_lea.vmem [#allocation0], 1064
    %618 = vst [vmem:[%s617] sm:%s3] %v616
    %s619 = smul.addr 4, 132
    %s620 = scalar_lea.vmem %s0, %s619
    %v621 = vld [vmem:[%s620] sm:%s3]
    %s622 = scalar_lea.vmem [#allocation0], 1056
    %623 = vst [vmem:[%s622] sm:%s3] %v621
    %s624 = smul.addr 4, 131
    %s625 = scalar_lea.vmem %s0, %s624
    %v626 = vld [vmem:[%s625] sm:%s3]
    %s627 = scalar_lea.vmem [#allocation0], 1048
    %628 = vst [vmem:[%s627] sm:%s3] %v626
    %s629 = smul.addr 4, 130
    %s630 = scalar_lea.vmem %s0, %s629
    %v631 = vld [vmem:[%s630] sm:%s3]
    %s632 = scalar_lea.vmem [#allocation0], 1040
    %633 = vst [vmem:[%s632] sm:%s3] %v631
    %s634 = smul.addr 4, 129
    %s635 = scalar_lea.vmem %s0, %s634
    %v636 = vld [vmem:[%s635] sm:%s3]
    %s637 = scalar_lea.vmem [#allocation0], 1032
    %638 = vst [vmem:[%s637] sm:%s3] %v636
    %s639 = smul.addr 4, 128
    %s640 = scalar_lea.vmem %s0, %s639
    %v641 = vld [vmem:[%s640] sm:%s3]
    %s642 = scalar_lea.vmem [#allocation0], 1024
    %643 = vst [vmem:[%s642] sm:%s3] %v641
    %s644 = smul.addr 4, 127
    %s645 = scalar_lea.vmem %s0, %s644
    %v646 = vld [vmem:[%s645] sm:%s3]
    %s647 = scalar_lea.vmem [#allocation0], 1016
    %648 = vst [vmem:[%s647] sm:%s3] %v646
    %s649 = smul.addr 4, 126
    %s650 = scalar_lea.vmem %s0, %s649
    %v651 = vld [vmem:[%s650] sm:%s3]
    %s652 = scalar_lea.vmem [#allocation0], 1008
    %653 = vst [vmem:[%s652] sm:%s3] %v651
    %s654 = smul.addr 4, 125
    %s655 = scalar_lea.vmem %s0, %s654
    %v656 = vld [vmem:[%s655] sm:%s3]
    %s657 = scalar_lea.vmem [#allocation0], 1000
    %658 = vst [vmem:[%s657] sm:%s3] %v656
    %s659 = smul.addr 4, 124
    %s660 = scalar_lea.vmem %s0, %s659
    %v661 = vld [vmem:[%s660] sm:%s3]
    %s662 = scalar_lea.vmem [#allocation0], 992
    %663 = vst [vmem:[%s662] sm:%s3] %v661
    %s664 = smul.addr 4, 123
    %s665 = scalar_lea.vmem %s0, %s664
    %v666 = vld [vmem:[%s665] sm:%s3]
    %s667 = scalar_lea.vmem [#allocation0], 984
    %668 = vst [vmem:[%s667] sm:%s3] %v666
    %s669 = smul.addr 4, 122
    %s670 = scalar_lea.vmem %s0, %s669
    %v671 = vld [vmem:[%s670] sm:%s3]
    %s672 = scalar_lea.vmem [#allocation0], 976
    %673 = vst [vmem:[%s672] sm:%s3] %v671
    %s674 = smul.addr 4, 121
    %s675 = scalar_lea.vmem %s0, %s674
    %v676 = vld [vmem:[%s675] sm:%s3]
    %s677 = scalar_lea.vmem [#allocation0], 968
    %678 = vst [vmem:[%s677] sm:%s3] %v676
    %s679 = smul.addr 4, 120
    %s680 = scalar_lea.vmem %s0, %s679
    %v681 = vld [vmem:[%s680] sm:%s3]
    %s682 = scalar_lea.vmem [#allocation0], 960
    %683 = vst [vmem:[%s682] sm:%s3] %v681
    %s684 = smul.addr 4, 119
    %s685 = scalar_lea.vmem %s0, %s684
    %v686 = vld [vmem:[%s685] sm:%s3]
    %s687 = scalar_lea.vmem [#allocation0], 952
    %688 = vst [vmem:[%s687] sm:%s3] %v686
    %s689 = smul.addr 4, 118
    %s690 = scalar_lea.vmem %s0, %s689
    %v691 = vld [vmem:[%s690] sm:%s3]
    %s692 = scalar_lea.vmem [#allocation0], 944
    %693 = vst [vmem:[%s692] sm:%s3] %v691
    %s694 = smul.addr 4, 117
    %s695 = scalar_lea.vmem %s0, %s694
    %v696 = vld [vmem:[%s695] sm:%s3]
    %s697 = scalar_lea.vmem [#allocation0], 936
    %698 = vst [vmem:[%s697] sm:%s3] %v696
    %s699 = smul.addr 4, 116
    %s700 = scalar_lea.vmem %s0, %s699
    %v701 = vld [vmem:[%s700] sm:%s3]
    %s702 = scalar_lea.vmem [#allocation0], 928
    %703 = vst [vmem:[%s702] sm:%s3] %v701
    %s704 = smul.addr 4, 115
    %s705 = scalar_lea.vmem %s0, %s704
    %v706 = vld [vmem:[%s705] sm:%s3]
    %s707 = scalar_lea.vmem [#allocation0], 920
    %708 = vst [vmem:[%s707] sm:%s3] %v706
    %s709 = smul.addr 4, 114
    %s710 = scalar_lea.vmem %s0, %s709
    %v711 = vld [vmem:[%s710] sm:%s3]
    %s712 = scalar_lea.vmem [#allocation0], 912
    %713 = vst [vmem:[%s712] sm:%s3] %v711
    %s714 = smul.addr 4, 113
    %s715 = scalar_lea.vmem %s0, %s714
    %v716 = vld [vmem:[%s715] sm:%s3]
    %s717 = scalar_lea.vmem [#allocation0], 904
    %718 = vst [vmem:[%s717] sm:%s3] %v716
    %s719 = smul.addr 4, 112
    %s720 = scalar_lea.vmem %s0, %s719
    %v721 = vld [vmem:[%s720] sm:%s3]
    %s722 = scalar_lea.vmem [#allocation0], 896
    %723 = vst [vmem:[%s722] sm:%s3] %v721
    %s724 = smul.addr 4, 111
    %s725 = scalar_lea.vmem %s0, %s724
    %v726 = vld [vmem:[%s725] sm:%s3]
    %s727 = scalar_lea.vmem [#allocation0], 888
    %728 = vst [vmem:[%s727] sm:%s3] %v726
    %s729 = smul.addr 4, 110
    %s730 = scalar_lea.vmem %s0, %s729
    %v731 = vld [vmem:[%s730] sm:%s3]
    %s732 = scalar_lea.vmem [#allocation0], 880
    %733 = vst [vmem:[%s732] sm:%s3] %v731
    %s734 = smul.addr 4, 109
    %s735 = scalar_lea.vmem %s0, %s734
    %v736 = vld [vmem:[%s735] sm:%s3]
    %s737 = scalar_lea.vmem [#allocation0], 872
    %738 = vst [vmem:[%s737] sm:%s3] %v736
    %s739 = smul.addr 4, 108
    %s740 = scalar_lea.vmem %s0, %s739
    %v741 = vld [vmem:[%s740] sm:%s3]
    %s742 = scalar_lea.vmem [#allocation0], 864
    %743 = vst [vmem:[%s742] sm:%s3] %v741
    %s744 = smul.addr 4, 107
    %s745 = scalar_lea.vmem %s0, %s744
    %v746 = vld [vmem:[%s745] sm:%s3]
    %s747 = scalar_lea.vmem [#allocation0], 856
    %748 = vst [vmem:[%s747] sm:%s3] %v746
    %s749 = smul.addr 4, 106
    %s750 = scalar_lea.vmem %s0, %s749
    %v751 = vld [vmem:[%s750] sm:%s3]
    %s752 = scalar_lea.vmem [#allocation0], 848
    %753 = vst [vmem:[%s752] sm:%s3] %v751
    %s754 = smul.addr 4, 105
    %s755 = scalar_lea.vmem %s0, %s754
    %v756 = vld [vmem:[%s755] sm:%s3]
    %s757 = scalar_lea.vmem [#allocation0], 840
    %758 = vst [vmem:[%s757] sm:%s3] %v756
    %s759 = smul.addr 4, 104
    %s760 = scalar_lea.vmem %s0, %s759
    %v761 = vld [vmem:[%s760] sm:%s3]
    %s762 = scalar_lea.vmem [#allocation0], 832
    %763 = vst [vmem:[%s762] sm:%s3] %v761
    %s764 = smul.addr 4, 103
    %s765 = scalar_lea.vmem %s0, %s764
    %v766 = vld [vmem:[%s765] sm:%s3]
    %s767 = scalar_lea.vmem [#allocation0], 824
    %768 = vst [vmem:[%s767] sm:%s3] %v766
    %s769 = smul.addr 4, 102
    %s770 = scalar_lea.vmem %s0, %s769
    %v771 = vld [vmem:[%s770] sm:%s3]
    %s772 = scalar_lea.vmem [#allocation0], 816
    %773 = vst [vmem:[%s772] sm:%s3] %v771
    %s774 = smul.addr 4, 101
    %s775 = scalar_lea.vmem %s0, %s774
    %v776 = vld [vmem:[%s775] sm:%s3]
    %s777 = scalar_lea.vmem [#allocation0], 808
    %778 = vst [vmem:[%s777] sm:%s3] %v776
    %s779 = smul.addr 4, 100
    %s780 = scalar_lea.vmem %s0, %s779
    %v781 = vld [vmem:[%s780] sm:%s3]
    %s782 = scalar_lea.vmem [#allocation0], 800
    %783 = vst [vmem:[%s782] sm:%s3] %v781
    %s784 = smul.addr 4, 99
    %s785 = scalar_lea.vmem %s0, %s784
    %v786 = vld [vmem:[%s785] sm:%s3]
    %s787 = scalar_lea.vmem [#allocation0], 792
    %788 = vst [vmem:[%s787] sm:%s3] %v786
    %s789 = smul.addr 4, 98
    %s790 = scalar_lea.vmem %s0, %s789
    %v791 = vld [vmem:[%s790] sm:%s3]
    %s792 = scalar_lea.vmem [#allocation0], 784
    %793 = vst [vmem:[%s792] sm:%s3] %v791
    %s794 = smul.addr 4, 97
    %s795 = scalar_lea.vmem %s0, %s794
    %v796 = vld [vmem:[%s795] sm:%s3]
    %s797 = scalar_lea.vmem [#allocation0], 776
    %798 = vst [vmem:[%s797] sm:%s3] %v796
    %s799 = smul.addr 4, 96
    %s800 = scalar_lea.vmem %s0, %s799
    %v801 = vld [vmem:[%s800] sm:%s3]
    %s802 = scalar_lea.vmem [#allocation0], 768
    %803 = vst [vmem:[%s802] sm:%s3] %v801
    %s804 = smul.addr 4, 95
    %s805 = scalar_lea.vmem %s0, %s804
    %v806 = vld [vmem:[%s805] sm:%s3]
    %s807 = scalar_lea.vmem [#allocation0], 760
    %808 = vst [vmem:[%s807] sm:%s3] %v806
    %s809 = smul.addr 4, 94
    %s810 = scalar_lea.vmem %s0, %s809
    %v811 = vld [vmem:[%s810] sm:%s3]
    %s812 = scalar_lea.vmem [#allocation0], 752
    %813 = vst [vmem:[%s812] sm:%s3] %v811
    %s814 = smul.addr 4, 93
    %s815 = scalar_lea.vmem %s0, %s814
    %v816 = vld [vmem:[%s815] sm:%s3]
    %s817 = scalar_lea.vmem [#allocation0], 744
    %818 = vst [vmem:[%s817] sm:%s3] %v816
    %s819 = smul.addr 4, 92
    %s820 = scalar_lea.vmem %s0, %s819
    %v821 = vld [vmem:[%s820] sm:%s3]
    %s822 = scalar_lea.vmem [#allocation0], 736
    %823 = vst [vmem:[%s822] sm:%s3] %v821
    %s824 = smul.addr 4, 91
    %s825 = scalar_lea.vmem %s0, %s824
    %v826 = vld [vmem:[%s825] sm:%s3]
    %s827 = scalar_lea.vmem [#allocation0], 728
    %828 = vst [vmem:[%s827] sm:%s3] %v826
    %s829 = smul.addr 4, 90
    %s830 = scalar_lea.vmem %s0, %s829
    %v831 = vld [vmem:[%s830] sm:%s3]
    %s832 = scalar_lea.vmem [#allocation0], 720
    %833 = vst [vmem:[%s832] sm:%s3] %v831
    %s834 = smul.addr 4, 89
    %s835 = scalar_lea.vmem %s0, %s834
    %v836 = vld [vmem:[%s835] sm:%s3]
    %s837 = scalar_lea.vmem [#allocation0], 712
    %838 = vst [vmem:[%s837] sm:%s3] %v836
    %s839 = smul.addr 4, 88
    %s840 = scalar_lea.vmem %s0, %s839
    %v841 = vld [vmem:[%s840] sm:%s3]
    %s842 = scalar_lea.vmem [#allocation0], 704
    %843 = vst [vmem:[%s842] sm:%s3] %v841
    %s844 = smul.addr 4, 87
    %s845 = scalar_lea.vmem %s0, %s844
    %v846 = vld [vmem:[%s845] sm:%s3]
    %s847 = scalar_lea.vmem [#allocation0], 696
    %848 = vst [vmem:[%s847] sm:%s3] %v846
    %s849 = smul.addr 4, 86
    %s850 = scalar_lea.vmem %s0, %s849
    %v851 = vld [vmem:[%s850] sm:%s3]
    %s852 = scalar_lea.vmem [#allocation0], 688
    %853 = vst [vmem:[%s852] sm:%s3] %v851
    %s854 = smul.addr 4, 85
    %s855 = scalar_lea.vmem %s0, %s854
    %v856 = vld [vmem:[%s855] sm:%s3]
    %s857 = scalar_lea.vmem [#allocation0], 680
    %858 = vst [vmem:[%s857] sm:%s3] %v856
    %s859 = smul.addr 4, 84
    %s860 = scalar_lea.vmem %s0, %s859
    %v861 = vld [vmem:[%s860] sm:%s3]
    %s862 = scalar_lea.vmem [#allocation0], 672
    %863 = vst [vmem:[%s862] sm:%s3] %v861
    %s864 = smul.addr 4, 83
    %s865 = scalar_lea.vmem %s0, %s864
    %v866 = vld [vmem:[%s865] sm:%s3]
    %s867 = scalar_lea.vmem [#allocation0], 664
    %868 = vst [vmem:[%s867] sm:%s3] %v866
    %s869 = smul.addr 4, 82
    %s870 = scalar_lea.vmem %s0, %s869
    %v871 = vld [vmem:[%s870] sm:%s3]
    %s872 = scalar_lea.vmem [#allocation0], 656
    %873 = vst [vmem:[%s872] sm:%s3] %v871
    %s874 = smul.addr 4, 81
    %s875 = scalar_lea.vmem %s0, %s874
    %v876 = vld [vmem:[%s875] sm:%s3]
    %s877 = scalar_lea.vmem [#allocation0], 648
    %878 = vst [vmem:[%s877] sm:%s3] %v876
    %s879 = smul.addr 4, 80
    %s880 = scalar_lea.vmem %s0, %s879
    %v881 = vld [vmem:[%s880] sm:%s3]
    %s882 = scalar_lea.vmem [#allocation0], 640
    %883 = vst [vmem:[%s882] sm:%s3] %v881
    %s884 = smul.addr 4, 79
    %s885 = scalar_lea.vmem %s0, %s884
    %v886 = vld [vmem:[%s885] sm:%s3]
    %s887 = scalar_lea.vmem [#allocation0], 632
    %888 = vst [vmem:[%s887] sm:%s3] %v886
    %s889 = smul.addr 4, 78
    %s890 = scalar_lea.vmem %s0, %s889
    %v891 = vld [vmem:[%s890] sm:%s3]
    %s892 = scalar_lea.vmem [#allocation0], 624
    %893 = vst [vmem:[%s892] sm:%s3] %v891
    %s894 = smul.addr 4, 77
    %s895 = scalar_lea.vmem %s0, %s894
    %v896 = vld [vmem:[%s895] sm:%s3]
    %s897 = scalar_lea.vmem [#allocation0], 616
    %898 = vst [vmem:[%s897] sm:%s3] %v896
    %s899 = smul.addr 4, 76
    %s900 = scalar_lea.vmem %s0, %s899
    %v901 = vld [vmem:[%s900] sm:%s3]
    %s902 = scalar_lea.vmem [#allocation0], 608
    %903 = vst [vmem:[%s902] sm:%s3] %v901
    %s904 = smul.addr 4, 75
    %s905 = scalar_lea.vmem %s0, %s904
    %v906 = vld [vmem:[%s905] sm:%s3]
    %s907 = scalar_lea.vmem [#allocation0], 600
    %908 = vst [vmem:[%s907] sm:%s3] %v906
    %s909 = smul.addr 4, 74
    %s910 = scalar_lea.vmem %s0, %s909
    %v911 = vld [vmem:[%s910] sm:%s3]
    %s912 = scalar_lea.vmem [#allocation0], 592
    %913 = vst [vmem:[%s912] sm:%s3] %v911
    %s914 = smul.addr 4, 73
    %s915 = scalar_lea.vmem %s0, %s914
    %v916 = vld [vmem:[%s915] sm:%s3]
    %s917 = scalar_lea.vmem [#allocation0], 584
    %918 = vst [vmem:[%s917] sm:%s3] %v916
    %s919 = smul.addr 4, 72
    %s920 = scalar_lea.vmem %s0, %s919
    %v921 = vld [vmem:[%s920] sm:%s3]
    %s922 = scalar_lea.vmem [#allocation0], 576
    %923 = vst [vmem:[%s922] sm:%s3] %v921
    %s924 = smul.addr 4, 71
    %s925 = scalar_lea.vmem %s0, %s924
    %v926 = vld [vmem:[%s925] sm:%s3]
    %s927 = scalar_lea.vmem [#allocation0], 568
    %928 = vst [vmem:[%s927] sm:%s3] %v926
    %s929 = smul.addr 4, 70
    %s930 = scalar_lea.vmem %s0, %s929
    %v931 = vld [vmem:[%s930] sm:%s3]
    %s932 = scalar_lea.vmem [#allocation0], 560
    %933 = vst [vmem:[%s932] sm:%s3] %v931
    %s934 = smul.addr 4, 69
    %s935 = scalar_lea.vmem %s0, %s934
    %v936 = vld [vmem:[%s935] sm:%s3]
    %s937 = scalar_lea.vmem [#allocation0], 552
    %938 = vst [vmem:[%s937] sm:%s3] %v936
    %s939 = smul.addr 4, 68
    %s940 = scalar_lea.vmem %s0, %s939
    %v941 = vld [vmem:[%s940] sm:%s3]
    %s942 = scalar_lea.vmem [#allocation0], 544
    %943 = vst [vmem:[%s942] sm:%s3] %v941
    %s944 = smul.addr 4, 67
    %s945 = scalar_lea.vmem %s0, %s944
    %v946 = vld [vmem:[%s945] sm:%s3]
    %s947 = scalar_lea.vmem [#allocation0], 536
    %948 = vst [vmem:[%s947] sm:%s3] %v946
    %s949 = smul.addr 4, 66
    %s950 = scalar_lea.vmem %s0, %s949
    %v951 = vld [vmem:[%s950] sm:%s3]
    %s952 = scalar_lea.vmem [#allocation0], 528
    %953 = vst [vmem:[%s952] sm:%s3] %v951
    %s954 = smul.addr 4, 65
    %s955 = scalar_lea.vmem %s0, %s954
    %v956 = vld [vmem:[%s955] sm:%s3]
    %s957 = scalar_lea.vmem [#allocation0], 520
    %958 = vst [vmem:[%s957] sm:%s3] %v956
    %s959 = smul.addr 4, 64
    %s960 = scalar_lea.vmem %s0, %s959
    %v961 = vld [vmem:[%s960] sm:%s3]
    %s962 = scalar_lea.vmem [#allocation0], 512
    %963 = vst [vmem:[%s962] sm:%s3] %v961
    %s964 = smul.addr 4, 63
    %s965 = scalar_lea.vmem %s0, %s964
    %v966 = vld [vmem:[%s965] sm:%s3]
    %s967 = scalar_lea.vmem [#allocation0], 504
    %968 = vst [vmem:[%s967] sm:%s3] %v966
    %s969 = smul.addr 4, 62
    %s970 = scalar_lea.vmem %s0, %s969
    %v971 = vld [vmem:[%s970] sm:%s3]
    %s972 = scalar_lea.vmem [#allocation0], 496
    %973 = vst [vmem:[%s972] sm:%s3] %v971
    %s974 = smul.addr 4, 61
    %s975 = scalar_lea.vmem %s0, %s974
    %v976 = vld [vmem:[%s975] sm:%s3]
    %s977 = scalar_lea.vmem [#allocation0], 488
    %978 = vst [vmem:[%s977] sm:%s3] %v976
    %s979 = smul.addr 4, 60
    %s980 = scalar_lea.vmem %s0, %s979
    %v981 = vld [vmem:[%s980] sm:%s3]
    %s982 = scalar_lea.vmem [#allocation0], 480
    %983 = vst [vmem:[%s982] sm:%s3] %v981
    %s984 = smul.addr 4, 59
    %s985 = scalar_lea.vmem %s0, %s984
    %v986 = vld [vmem:[%s985] sm:%s3]
    %s987 = scalar_lea.vmem [#allocation0], 472
    %988 = vst [vmem:[%s987] sm:%s3] %v986
    %s989 = smul.addr 4, 58
    %s990 = scalar_lea.vmem %s0, %s989
    %v991 = vld [vmem:[%s990] sm:%s3]
    %s992 = scalar_lea.vmem [#allocation0], 464
    %993 = vst [vmem:[%s992] sm:%s3] %v991
    %s994 = smul.addr 4, 57
    %s995 = scalar_lea.vmem %s0, %s994
    %v996 = vld [vmem:[%s995] sm:%s3]
    %s997 = scalar_lea.vmem [#allocation0], 456
    %998 = vst [vmem:[%s997] sm:%s3] %v996
    %s999 = smul.addr 4, 56
    %s1000 = scalar_lea.vmem %s0, %s999
    %v1001 = vld [vmem:[%s1000] sm:%s3]
    %s1002 = scalar_lea.vmem [#allocation0], 448
    %1003 = vst [vmem:[%s1002] sm:%s3] %v1001
    %s1004 = smul.addr 4, 55
    %s1005 = scalar_lea.vmem %s0, %s1004
    %v1006 = vld [vmem:[%s1005] sm:%s3]
    %s1007 = scalar_lea.vmem [#allocation0], 440
    %1008 = vst [vmem:[%s1007] sm:%s3] %v1006
    %s1009 = smul.addr 4, 54
    %s1010 = scalar_lea.vmem %s0, %s1009
    %v1011 = vld [vmem:[%s1010] sm:%s3]
    %s1012 = scalar_lea.vmem [#allocation0], 432
    %1013 = vst [vmem:[%s1012] sm:%s3] %v1011
    %s1014 = smul.addr 4, 53
    %s1015 = scalar_lea.vmem %s0, %s1014
    %v1016 = vld [vmem:[%s1015] sm:%s3]
    %s1017 = scalar_lea.vmem [#allocation0], 424
    %1018 = vst [vmem:[%s1017] sm:%s3] %v1016
    %s1019 = smul.addr 4, 52
    %s1020 = scalar_lea.vmem %s0, %s1019
    %v1021 = vld [vmem:[%s1020] sm:%s3]
    %s1022 = scalar_lea.vmem [#allocation0], 416
    %1023 = vst [vmem:[%s1022] sm:%s3] %v1021
    %s1024 = smul.addr 4, 51
    %s1025 = scalar_lea.vmem %s0, %s1024
    %v1026 = vld [vmem:[%s1025] sm:%s3]
    %s1027 = scalar_lea.vmem [#allocation0], 408
    %1028 = vst [vmem:[%s1027] sm:%s3] %v1026
    %s1029 = smul.addr 4, 50
    %s1030 = scalar_lea.vmem %s0, %s1029
    %v1031 = vld [vmem:[%s1030] sm:%s3]
    %s1032 = scalar_lea.vmem [#allocation0], 400
    %1033 = vst [vmem:[%s1032] sm:%s3] %v1031
    %s1034 = smul.addr 4, 49
    %s1035 = scalar_lea.vmem %s0, %s1034
    %v1036 = vld [vmem:[%s1035] sm:%s3]
    %s1037 = scalar_lea.vmem [#allocation0], 392
    %1038 = vst [vmem:[%s1037] sm:%s3] %v1036
    %s1039 = smul.addr 4, 48
    %s1040 = scalar_lea.vmem %s0, %s1039
    %v1041 = vld [vmem:[%s1040] sm:%s3]
    %s1042 = scalar_lea.vmem [#allocation0], 384
    %1043 = vst [vmem:[%s1042] sm:%s3] %v1041
    %s1044 = smul.addr 4, 47
    %s1045 = scalar_lea.vmem %s0, %s1044
    %v1046 = vld [vmem:[%s1045] sm:%s3]
    %s1047 = scalar_lea.vmem [#allocation0], 376
    %1048 = vst [vmem:[%s1047] sm:%s3] %v1046
    %s1049 = smul.addr 4, 46
    %s1050 = scalar_lea.vmem %s0, %s1049
    %v1051 = vld [vmem:[%s1050] sm:%s3]
    %s1052 = scalar_lea.vmem [#allocation0], 368
    %1053 = vst [vmem:[%s1052] sm:%s3] %v1051
    %s1054 = smul.addr 4, 45
    %s1055 = scalar_lea.vmem %s0, %s1054
    %v1056 = vld [vmem:[%s1055] sm:%s3]
    %s1057 = scalar_lea.vmem [#allocation0], 360
    %1058 = vst [vmem:[%s1057] sm:%s3] %v1056
    %s1059 = smul.addr 4, 44
    %s1060 = scalar_lea.vmem %s0, %s1059
    %v1061 = vld [vmem:[%s1060] sm:%s3]
    %s1062 = scalar_lea.vmem [#allocation0], 352
    %1063 = vst [vmem:[%s1062] sm:%s3] %v1061
    %s1064 = smul.addr 4, 43
    %s1065 = scalar_lea.vmem %s0, %s1064
    %v1066 = vld [vmem:[%s1065] sm:%s3]
    %s1067 = scalar_lea.vmem [#allocation0], 344
    %1068 = vst [vmem:[%s1067] sm:%s3] %v1066
    %s1069 = smul.addr 4, 42
    %s1070 = scalar_lea.vmem %s0, %s1069
    %v1071 = vld [vmem:[%s1070] sm:%s3]
    %s1072 = scalar_lea.vmem [#allocation0], 336
    %1073 = vst [vmem:[%s1072] sm:%s3] %v1071
    %s1074 = smul.addr 4, 41
    %s1075 = scalar_lea.vmem %s0, %s1074
    %v1076 = vld [vmem:[%s1075] sm:%s3]
    %s1077 = scalar_lea.vmem [#allocation0], 328
    %1078 = vst [vmem:[%s1077] sm:%s3] %v1076
    %s1079 = smul.addr 4, 40
    %s1080 = scalar_lea.vmem %s0, %s1079
    %v1081 = vld [vmem:[%s1080] sm:%s3]
    %s1082 = scalar_lea.vmem [#allocation0], 320
    %1083 = vst [vmem:[%s1082] sm:%s3] %v1081
    %s1084 = smul.addr 4, 39
    %s1085 = scalar_lea.vmem %s0, %s1084
    %v1086 = vld [vmem:[%s1085] sm:%s3]
    %s1087 = scalar_lea.vmem [#allocation0], 312
    %1088 = vst [vmem:[%s1087] sm:%s3] %v1086
    %s1089 = smul.addr 4, 38
    %s1090 = scalar_lea.vmem %s0, %s1089
    %v1091 = vld [vmem:[%s1090] sm:%s3]
    %s1092 = scalar_lea.vmem [#allocation0], 304
    %1093 = vst [vmem:[%s1092] sm:%s3] %v1091
    %s1094 = smul.addr 4, 37
    %s1095 = scalar_lea.vmem %s0, %s1094
    %v1096 = vld [vmem:[%s1095] sm:%s3]
    %s1097 = scalar_lea.vmem [#allocation0], 296
    %1098 = vst [vmem:[%s1097] sm:%s3] %v1096
    %s1099 = smul.addr 4, 36
    %s1100 = scalar_lea.vmem %s0, %s1099
    %v1101 = vld [vmem:[%s1100] sm:%s3]
    %s1102 = scalar_lea.vmem [#allocation0], 288
    %1103 = vst [vmem:[%s1102] sm:%s3] %v1101
    %s1104 = smul.addr 4, 35
    %s1105 = scalar_lea.vmem %s0, %s1104
    %v1106 = vld [vmem:[%s1105] sm:%s3]
    %s1107 = scalar_lea.vmem [#allocation0], 280
    %1108 = vst [vmem:[%s1107] sm:%s3] %v1106
    %s1109 = smul.addr 4, 34
    %s1110 = scalar_lea.vmem %s0, %s1109
    %v1111 = vld [vmem:[%s1110] sm:%s3]
    %s1112 = scalar_lea.vmem [#allocation0], 272
    %1113 = vst [vmem:[%s1112] sm:%s3] %v1111
    %s1114 = smul.addr 4, 33
    %s1115 = scalar_lea.vmem %s0, %s1114
    %v1116 = vld [vmem:[%s1115] sm:%s3]
    %s1117 = scalar_lea.vmem [#allocation0], 264
    %1118 = vst [vmem:[%s1117] sm:%s3] %v1116
    %s1119 = smul.addr 4, 32
    %s1120 = scalar_lea.vmem %s0, %s1119
    %v1121 = vld [vmem:[%s1120] sm:%s3]
    %s1122 = scalar_lea.vmem [#allocation0], 256
    %1123 = vst [vmem:[%s1122] sm:%s3] %v1121
    %s1124 = smul.addr 4, 31
    %s1125 = scalar_lea.vmem %s0, %s1124
    %v1126 = vld [vmem:[%s1125] sm:%s3]
    %s1127 = scalar_lea.vmem [#allocation0], 248
    %1128 = vst [vmem:[%s1127] sm:%s3] %v1126
    %s1129 = smul.addr 4, 30
    %s1130 = scalar_lea.vmem %s0, %s1129
    %v1131 = vld [vmem:[%s1130] sm:%s3]
    %s1132 = scalar_lea.vmem [#allocation0], 240
    %1133 = vst [vmem:[%s1132] sm:%s3] %v1131
    %s1134 = smul.addr 4, 29
    %s1135 = scalar_lea.vmem %s0, %s1134
    %v1136 = vld [vmem:[%s1135] sm:%s3]
    %s1137 = scalar_lea.vmem [#allocation0], 232
    %1138 = vst [vmem:[%s1137] sm:%s3] %v1136
    %s1139 = smul.addr 4, 28
    %s1140 = scalar_lea.vmem %s0, %s1139
    %v1141 = vld [vmem:[%s1140] sm:%s3]
    %s1142 = scalar_lea.vmem [#allocation0], 224
    %1143 = vst [vmem:[%s1142] sm:%s3] %v1141
    %s1144 = smul.addr 4, 27
    %s1145 = scalar_lea.vmem %s0, %s1144
    %v1146 = vld [vmem:[%s1145] sm:%s3]
    %s1147 = scalar_lea.vmem [#allocation0], 216
    %1148 = vst [vmem:[%s1147] sm:%s3] %v1146
    %s1149 = smul.addr 4, 26
    %s1150 = scalar_lea.vmem %s0, %s1149
    %v1151 = vld [vmem:[%s1150] sm:%s3]
    %s1152 = scalar_lea.vmem [#allocation0], 208
    %1153 = vst [vmem:[%s1152] sm:%s3] %v1151
    %s1154 = smul.addr 4, 25
    %s1155 = scalar_lea.vmem %s0, %s1154
    %v1156 = vld [vmem:[%s1155] sm:%s3]
    %s1157 = scalar_lea.vmem [#allocation0], 200
    %1158 = vst [vmem:[%s1157] sm:%s3] %v1156
    %s1159 = smul.addr 4, 24
    %s1160 = scalar_lea.vmem %s0, %s1159
    %v1161 = vld [vmem:[%s1160] sm:%s3]
    %s1162 = scalar_lea.vmem [#allocation0], 192
    %1163 = vst [vmem:[%s1162] sm:%s3] %v1161
    %s1164 = smul.addr 4, 23
    %s1165 = scalar_lea.vmem %s0, %s1164
    %v1166 = vld [vmem:[%s1165] sm:%s3]
    %s1167 = scalar_lea.vmem [#allocation0], 184
    %1168 = vst [vmem:[%s1167] sm:%s3] %v1166
    %s1169 = smul.addr 4, 22
    %s1170 = scalar_lea.vmem %s0, %s1169
    %v1171 = vld [vmem:[%s1170] sm:%s3]
    %s1172 = scalar_lea.vmem [#allocation0], 176
    %1173 = vst [vmem:[%s1172] sm:%s3] %v1171
    %s1174 = smul.addr 4, 21
    %s1175 = scalar_lea.vmem %s0, %s1174
    %v1176 = vld [vmem:[%s1175] sm:%s3]
    %s1177 = scalar_lea.vmem [#allocation0], 168
    %1178 = vst [vmem:[%s1177] sm:%s3] %v1176
    %s1179 = smul.addr 4, 20
    %s1180 = scalar_lea.vmem %s0, %s1179
    %v1181 = vld [vmem:[%s1180] sm:%s3]
    %s1182 = scalar_lea.vmem [#allocation0], 160
    %1183 = vst [vmem:[%s1182] sm:%s3] %v1181
    %s1184 = smul.addr 4, 19
    %s1185 = scalar_lea.vmem %s0, %s1184
    %v1186 = vld [vmem:[%s1185] sm:%s3]
    %s1187 = scalar_lea.vmem [#allocation0], 152
    %1188 = vst [vmem:[%s1187] sm:%s3] %v1186
    %s1189 = smul.addr 4, 18
    %s1190 = scalar_lea.vmem %s0, %s1189
    %v1191 = vld [vmem:[%s1190] sm:%s3]
    %s1192 = scalar_lea.vmem [#allocation0], 144
    %1193 = vst [vmem:[%s1192] sm:%s3] %v1191
    %s1194 = smul.addr 4, 17
    %s1195 = scalar_lea.vmem %s0, %s1194
    %v1196 = vld [vmem:[%s1195] sm:%s3]
    %s1197 = scalar_lea.vmem [#allocation0], 136
    %1198 = vst [vmem:[%s1197] sm:%s3] %v1196
    %s1199 = smul.addr 4, 16
    %s1200 = scalar_lea.vmem %s0, %s1199
    %v1201 = vld [vmem:[%s1200] sm:%s3]
    %s1202 = scalar_lea.vmem [#allocation0], 128
    %1203 = vst [vmem:[%s1202] sm:%s3] %v1201
    %s1204 = smul.addr 4, 15
    %s1205 = scalar_lea.vmem %s0, %s1204
    %v1206 = vld [vmem:[%s1205] sm:%s3]
    %s1207 = scalar_lea.vmem [#allocation0], 120
    %1208 = vst [vmem:[%s1207] sm:%s3] %v1206
    %s1209 = smul.addr 4, 14
    %s1210 = scalar_lea.vmem %s0, %s1209
    %v1211 = vld [vmem:[%s1210] sm:%s3]
    %s1212 = scalar_lea.vmem [#allocation0], 112
    %1213 = vst [vmem:[%s1212] sm:%s3] %v1211
    %s1214 = smul.addr 4, 13
    %s1215 = scalar_lea.vmem %s0, %s1214
    %v1216 = vld [vmem:[%s1215] sm:%s3]
    %s1217 = scalar_lea.vmem [#allocation0], 104
    %1218 = vst [vmem:[%s1217] sm:%s3] %v1216
    %s1219 = smul.addr 4, 12
    %s1220 = scalar_lea.vmem %s0, %s1219
    %v1221 = vld [vmem:[%s1220] sm:%s3]
    %s1222 = scalar_lea.vmem [#allocation0], 96
    %1223 = vst [vmem:[%s1222] sm:%s3] %v1221
    %s1224 = smul.addr 4, 11
    %s1225 = scalar_lea.vmem %s0, %s1224
    %v1226 = vld [vmem:[%s1225] sm:%s3]
    %s1227 = scalar_lea.vmem [#allocation0], 88
    %1228 = vst [vmem:[%s1227] sm:%s3] %v1226
    %s1229 = smul.addr 4, 10
    %s1230 = scalar_lea.vmem %s0, %s1229
    %v1231 = vld [vmem:[%s1230] sm:%s3]
    %s1232 = scalar_lea.vmem [#allocation0], 80
    %1233 = vst [vmem:[%s1232] sm:%s3] %v1231
    %s1234 = smul.addr 4, 9
    %s1235 = scalar_lea.vmem %s0, %s1234
    %v1236 = vld [vmem:[%s1235] sm:%s3]
    %s1237 = scalar_lea.vmem [#allocation0], 72
    %1238 = vst [vmem:[%s1237] sm:%s3] %v1236
    %s1239 = smul.addr 4, 8
    %s1240 = scalar_lea.vmem %s0, %s1239
    %v1241 = vld [vmem:[%s1240] sm:%s3]
    %s1242 = scalar_lea.vmem [#allocation0], 64
    %1243 = vst [vmem:[%s1242] sm:%s3] %v1241
    %s1244 = smul.addr 4, 7
    %s1245 = scalar_lea.vmem %s0, %s1244
    %v1246 = vld [vmem:[%s1245] sm:%s3]
    %s1247 = scalar_lea.vmem [#allocation0], 56
    %1248 = vst [vmem:[%s1247] sm:%s3] %v1246
    %s1249 = smul.addr 4, 6
    %s1250 = scalar_lea.vmem %s0, %s1249
    %v1251 = vld [vmem:[%s1250] sm:%s3]
    %s1252 = scalar_lea.vmem [#allocation0], 48
    %1253 = vst [vmem:[%s1252] sm:%s3] %v1251
    %s1254 = smul.addr 4, 5
    %s1255 = scalar_lea.vmem %s0, %s1254
    %v1256 = vld [vmem:[%s1255] sm:%s3]
    %s1257 = scalar_lea.vmem [#allocation0], 40
    %1258 = vst [vmem:[%s1257] sm:%s3] %v1256
    %s1259 = smul.addr 4, 4
    %s1260 = scalar_lea.vmem %s0, %s1259
    %v1261 = vld [vmem:[%s1260] sm:%s3]
    %s1262 = scalar_lea.vmem [#allocation0], 32
    %1263 = vst [vmem:[%s1262] sm:%s3] %v1261
    %s1264 = smul.addr 4, 3
    %s1265 = scalar_lea.vmem %s0, %s1264
    %v1266 = vld [vmem:[%s1265] sm:%s3]
    %s1267 = scalar_lea.vmem [#allocation0], 24
    %1268 = vst [vmem:[%s1267] sm:%s3] %v1266
    %s1269 = smul.addr 4, 2
    %s1270 = scalar_lea.vmem %s0, %s1269
    %v1271 = vld [vmem:[%s1270] sm:%s3]
    %s1272 = scalar_lea.vmem [#allocation0], 16
    %1273 = vst [vmem:[%s1272] sm:%s3] %v1271
    %s1274 = scalar_lea.vmem %s0, 4
    %v1275 = vld [vmem:[%s1274] sm:%s3]
    %s1276 = scalar_lea.vmem [#allocation0], 8
    %1277 = vst [vmem:[%s1276] sm:%s3] %v1275
    %v1278 = vld [vmem:[%s0] sm:%s3]
    %1279 = vst [vmem:[#allocation0] sm:%s3] %v1278
    %v1280 = vld [vmem:[#allocation0] ss:$8 sm:$0xf]
    %v1281 = vld [vmem:[#allocation0] ss:$8 sm:$0xf0]
    %vm1282 = vcmask 1047556
    %v1283 = vsel %vm1282, %v1281, %v1280
    %vm1284 = vcmask 130048
    %1285 = vst.msk [vmem:[%s1] sm:$0xff] %vm1284, %v1283
    %s1286 = scalar_lea.vmem [#allocation0], 64
    %v1287 = vld [vmem:[%s1286] ss:$8 sm:$0xf]
    %s1288 = scalar_lea.vmem [#allocation0], 64
    %v1289 = vld [vmem:[%s1288] ss:$8 sm:$0xf0]
    %vm1290 = vcmask 1047556
    %v1291 = vsel %vm1290, %v1289, %v1287
    %vm1292 = vcmask 130048
    %s1293 = scalar_lea.vmem %s1, 8
    %1294 = vst.msk [vmem:[%s1293] sm:$0xff] %vm1292, %v1291
    %s1295 = scalar_lea.vmem [#allocation0], 128
    %v1296 = vld [vmem:[%s1295] ss:$8 sm:$0xf]
    %s1297 = scalar_lea.vmem [#allocation0], 128
    %v1298 = vld [vmem:[%s1297] ss:$8 sm:$0xf0]
    %vm1299 = vcmask 1047556
    %v1300 = vsel %vm1299, %v1298, %v1296
    %vm1301 = vcmask 130048
    %s1302 = scalar_lea.vmem %s1, 16
    %1303 = vst.msk [vmem:[%s1302] sm:$0xff] %vm1301, %v1300
    %s1304 = scalar_lea.vmem [#allocation0], 192
    %v1305 = vld [vmem:[%s1304] ss:$8 sm:$0xf]
    %s1306 = scalar_lea.vmem [#allocation0], 192
    %v1307 = vld [vmem:[%s1306] ss:$8 sm:$0xf0]
    %vm1308 = vcmask 1047556
    %v1309 = vsel %vm1308, %v1307, %v1305
    %vm1310 = vcmask 130048
    %s1311 = scalar_lea.vmem %s1, 24
    %1312 = vst.msk [vmem:[%s1311] sm:$0xff] %vm1310, %v1309
    %s1313 = scalar_lea.vmem [#allocation0], 256
    %v1314 = vld [vmem:[%s1313] ss:$8 sm:$0xf]
    %s1315 = scalar_lea.vmem [#allocation0], 256
    %v1316 = vld [vmem:[%s1315] ss:$8 sm:$0xf0]
    %vm1317 = vcmask 1047556
    %v1318 = vsel %vm1317, %v1316, %v1314
    %vm1319 = vcmask 130048
    %s1320 = scalar_lea.vmem %s1, 32
    %1321 = vst.msk [vmem:[%s1320] sm:$0xff] %vm1319, %v1318
    %s1322 = scalar_lea.vmem [#allocation0], 320
    %v1323 = vld [vmem:[%s1322] ss:$8 sm:$0xf]
    %s1324 = scalar_lea.vmem [#allocation0], 320
    %v1325 = vld [vmem:[%s1324] ss:$8 sm:$0xf0]
    %vm1326 = vcmask 1047556
    %v1327 = vsel %vm1326, %v1325, %v1323
    %vm1328 = vcmask 130048
    %s1329 = scalar_lea.vmem %s1, 40
    %1330 = vst.msk [vmem:[%s1329] sm:$0xff] %vm1328, %v1327
    %s1331 = scalar_lea.vmem [#allocation0], 384
    %v1332 = vld [vmem:[%s1331] ss:$8 sm:$0xf]
    %s1333 = scalar_lea.vmem [#allocation0], 384
    %v1334 = vld [vmem:[%s1333] ss:$8 sm:$0xf0]
    %vm1335 = vcmask 1047556
    %v1336 = vsel %vm1335, %v1334, %v1332
    %vm1337 = vcmask 130048
    %s1338 = scalar_lea.vmem %s1, 48
    %1339 = vst.msk [vmem:[%s1338] sm:$0xff] %vm1337, %v1336
    %s1340 = scalar_lea.vmem [#allocation0], 448
    %v1341 = vld [vmem:[%s1340] ss:$8 sm:$0xf]
    %s1342 = scalar_lea.vmem [#allocation0], 448
    %v1343 = vld [vmem:[%s1342] ss:$8 sm:$0xf0]
    %vm1344 = vcmask 1047556
    %v1345 = vsel %vm1344, %v1343, %v1341
    %vm1346 = vcmask 130048
    %s1347 = scalar_lea.vmem %s1, 56
    %1348 = vst.msk [vmem:[%s1347] sm:$0xff] %vm1346, %v1345
    %s1349 = scalar_lea.vmem [#allocation0], 512
    %v1350 = vld [vmem:[%s1349] ss:$8 sm:$0xf]
    %s1351 = scalar_lea.vmem [#allocation0], 512
    %v1352 = vld [vmem:[%s1351] ss:$8 sm:$0xf0]
    %vm1353 = vcmask 1047556
    %v1354 = vsel %vm1353, %v1352, %v1350
    %vm1355 = vcmask 130048
    %s1356 = scalar_lea.vmem %s1, 64
    %1357 = vst.msk [vmem:[%s1356] sm:$0xff] %vm1355, %v1354
    %s1358 = scalar_lea.vmem [#allocation0], 576
    %v1359 = vld [vmem:[%s1358] ss:$8 sm:$0xf]
    %s1360 = scalar_lea.vmem [#allocation0], 576
    %v1361 = vld [vmem:[%s1360] ss:$8 sm:$0xf0]
    %vm1362 = vcmask 1047556
    %v1363 = vsel %vm1362, %v1361, %v1359
    %vm1364 = vcmask 130048
    %s1365 = scalar_lea.vmem %s1, 72
    %1366 = vst.msk [vmem:[%s1365] sm:$0xff] %vm1364, %v1363
    %s1367 = scalar_lea.vmem [#allocation0], 640
    %v1368 = vld [vmem:[%s1367] ss:$8 sm:$0xf]
    %s1369 = scalar_lea.vmem [#allocation0], 640
    %v1370 = vld [vmem:[%s1369] ss:$8 sm:$0xf0]
    %vm1371 = vcmask 1047556
    %v1372 = vsel %vm1371, %v1370, %v1368
    %vm1373 = vcmask 130048
    %s1374 = scalar_lea.vmem %s1, 80
    %1375 = vst.msk [vmem:[%s1374] sm:$0xff] %vm1373, %v1372
    %s1376 = scalar_lea.vmem [#allocation0], 704
    %v1377 = vld [vmem:[%s1376] ss:$8 sm:$0xf]
    %s1378 = scalar_lea.vmem [#allocation0], 704
    %v1379 = vld [vmem:[%s1378] ss:$8 sm:$0xf0]
    %vm1380 = vcmask 1047556
    %v1381 = vsel %vm1380, %v1379, %v1377
    %vm1382 = vcmask 130048
    %s1383 = scalar_lea.vmem %s1, 88
    %1384 = vst.msk [vmem:[%s1383] sm:$0xff] %vm1382, %v1381
    %s1385 = scalar_lea.vmem [#allocation0], 768
    %v1386 = vld [vmem:[%s1385] ss:$8 sm:$0xf]
    %s1387 = scalar_lea.vmem [#allocation0], 768
    %v1388 = vld [vmem:[%s1387] ss:$8 sm:$0xf0]
    %vm1389 = vcmask 1047556
    %v1390 = vsel %vm1389, %v1388, %v1386
    %vm1391 = vcmask 130048
    %s1392 = scalar_lea.vmem %s1, 96
    %1393 = vst.msk [vmem:[%s1392] sm:$0xff] %vm1391, %v1390
    %s1394 = scalar_lea.vmem [#allocation0], 832
    %v1395 = vld [vmem:[%s1394] ss:$8 sm:$0xf]
    %s1396 = scalar_lea.vmem [#allocation0], 832
    %v1397 = vld [vmem:[%s1396] ss:$8 sm:$0xf0]
    %vm1398 = vcmask 1047556
    %v1399 = vsel %vm1398, %v1397, %v1395
    %vm1400 = vcmask 130048
    %s1401 = scalar_lea.vmem %s1, 104
    %1402 = vst.msk [vmem:[%s1401] sm:$0xff] %vm1400, %v1399
    %s1403 = scalar_lea.vmem [#allocation0], 896
    %v1404 = vld [vmem:[%s1403] ss:$8 sm:$0xf]
    %s1405 = scalar_lea.vmem [#allocation0], 896
    %v1406 = vld [vmem:[%s1405] ss:$8 sm:$0xf0]
    %vm1407 = vcmask 1047556
    %v1408 = vsel %vm1407, %v1406, %v1404
    %vm1409 = vcmask 130048
    %s1410 = scalar_lea.vmem %s1, 112
    %1411 = vst.msk [vmem:[%s1410] sm:$0xff] %vm1409, %v1408
    %s1412 = scalar_lea.vmem [#allocation0], 960
    %v1413 = vld [vmem:[%s1412] ss:$8 sm:$0xf]
    %s1414 = scalar_lea.vmem [#allocation0], 960
    %v1415 = vld [vmem:[%s1414] ss:$8 sm:$0xf0]
    %vm1416 = vcmask 1047556
    %v1417 = vsel %vm1416, %v1415, %v1413
    %vm1418 = vcmask 130048
    %s1419 = scalar_lea.vmem %s1, 120
    %1420 = vst.msk [vmem:[%s1419] sm:$0xff] %vm1418, %v1417
    %s1421 = scalar_lea.vmem [#allocation0], 1024
    %v1422 = vld [vmem:[%s1421] ss:$8 sm:$0xf]
    %s1423 = scalar_lea.vmem [#allocation0], 1024
    %v1424 = vld [vmem:[%s1423] ss:$8 sm:$0xf0]
    %vm1425 = vcmask 1047556
    %v1426 = vsel %vm1425, %v1424, %v1422
    %vm1427 = vcmask 130048
    %s1428 = scalar_lea.vmem %s1, 128
    %1429 = vst.msk [vmem:[%s1428] sm:$0xff] %vm1427, %v1426
    %s1430 = scalar_lea.vmem [#allocation0], 1088
    %v1431 = vld [vmem:[%s1430] ss:$8 sm:$0xf]
    %s1432 = scalar_lea.vmem [#allocation0], 1088
    %v1433 = vld [vmem:[%s1432] ss:$8 sm:$0xf0]
    %vm1434 = vcmask 1047556
    %v1435 = vsel %vm1434, %v1433, %v1431
    %vm1436 = vcmask 130048
    %s1437 = scalar_lea.vmem %s1, 136
    %1438 = vst.msk [vmem:[%s1437] sm:$0xff] %vm1436, %v1435
    %s1439 = scalar_lea.vmem [#allocation0], 1152
    %v1440 = vld [vmem:[%s1439] ss:$8 sm:$0xf]
    %s1441 = scalar_lea.vmem [#allocation0], 1152
    %v1442 = vld [vmem:[%s1441] ss:$8 sm:$0xf0]
    %vm1443 = vcmask 1047556
    %v1444 = vsel %vm1443, %v1442, %v1440
    %vm1445 = vcmask 130048
    %s1446 = scalar_lea.vmem %s1, 144
    %1447 = vst.msk [vmem:[%s1446] sm:$0xff] %vm1445, %v1444
    %s1448 = scalar_lea.vmem [#allocation0], 1216
    %v1449 = vld [vmem:[%s1448] ss:$8 sm:$0xf]
    %s1450 = scalar_lea.vmem [#allocation0], 1216
    %v1451 = vld [vmem:[%s1450] ss:$8 sm:$0xf0]
    %vm1452 = vcmask 1047556
    %v1453 = vsel %vm1452, %v1451, %v1449
    %vm1454 = vcmask 130048
    %s1455 = scalar_lea.vmem %s1, 152
    %1456 = vst.msk [vmem:[%s1455] sm:$0xff] %vm1454, %v1453
    %s1457 = scalar_lea.vmem [#allocation0], 1280
    %v1458 = vld [vmem:[%s1457] ss:$8 sm:$0xf]
    %s1459 = scalar_lea.vmem [#allocation0], 1280
    %v1460 = vld [vmem:[%s1459] ss:$8 sm:$0xf0]
    %vm1461 = vcmask 1047556
    %v1462 = vsel %vm1461, %v1460, %v1458
    %vm1463 = vcmask 130048
    %s1464 = scalar_lea.vmem %s1, 160
    %1465 = vst.msk [vmem:[%s1464] sm:$0xff] %vm1463, %v1462
    %s1466 = scalar_lea.vmem [#allocation0], 1344
    %v1467 = vld [vmem:[%s1466] ss:$8 sm:$0xf]
    %s1468 = scalar_lea.vmem [#allocation0], 1344
    %v1469 = vld [vmem:[%s1468] ss:$8 sm:$0xf0]
    %vm1470 = vcmask 1047556
    %v1471 = vsel %vm1470, %v1469, %v1467
    %vm1472 = vcmask 130048
    %s1473 = scalar_lea.vmem %s1, 168
    %1474 = vst.msk [vmem:[%s1473] sm:$0xff] %vm1472, %v1471
    %s1475 = scalar_lea.vmem [#allocation0], 1408
    %v1476 = vld [vmem:[%s1475] ss:$8 sm:$0xf]
    %s1477 = scalar_lea.vmem [#allocation0], 1408
    %v1478 = vld [vmem:[%s1477] ss:$8 sm:$0xf0]
    %vm1479 = vcmask 1047556
    %v1480 = vsel %vm1479, %v1478, %v1476
    %vm1481 = vcmask 130048
    %s1482 = scalar_lea.vmem %s1, 176
    %1483 = vst.msk [vmem:[%s1482] sm:$0xff] %vm1481, %v1480
    %s1484 = scalar_lea.vmem [#allocation0], 1472
    %v1485 = vld [vmem:[%s1484] ss:$8 sm:$0xf]
    %s1486 = scalar_lea.vmem [#allocation0], 1472
    %v1487 = vld [vmem:[%s1486] ss:$8 sm:$0xf0]
    %vm1488 = vcmask 1047556
    %v1489 = vsel %vm1488, %v1487, %v1485
    %vm1490 = vcmask 130048
    %s1491 = scalar_lea.vmem %s1, 184
    %1492 = vst.msk [vmem:[%s1491] sm:$0xff] %vm1490, %v1489
    %s1493 = scalar_lea.vmem [#allocation0], 1536
    %v1494 = vld [vmem:[%s1493] ss:$8 sm:$0xf]
    %s1495 = scalar_lea.vmem [#allocation0], 1536
    %v1496 = vld [vmem:[%s1495] ss:$8 sm:$0xf0]
    %vm1497 = vcmask 1047556
    %v1498 = vsel %vm1497, %v1496, %v1494
    %vm1499 = vcmask 130048
    %s1500 = scalar_lea.vmem %s1, 192
    %1501 = vst.msk [vmem:[%s1500] sm:$0xff] %vm1499, %v1498
    %s1502 = scalar_lea.vmem [#allocation0], 1600
    %v1503 = vld [vmem:[%s1502] ss:$8 sm:$0xf]
    %s1504 = scalar_lea.vmem [#allocation0], 1600
    %v1505 = vld [vmem:[%s1504] ss:$8 sm:$0xf0]
    %vm1506 = vcmask 1047556
    %v1507 = vsel %vm1506, %v1505, %v1503
    %vm1508 = vcmask 130048
    %s1509 = scalar_lea.vmem %s1, 200
    %1510 = vst.msk [vmem:[%s1509] sm:$0xff] %vm1508, %v1507
    %s1511 = scalar_lea.vmem [#allocation0], 1664
    %v1512 = vld [vmem:[%s1511] ss:$8 sm:$0xf]
    %s1513 = scalar_lea.vmem [#allocation0], 1664
    %v1514 = vld [vmem:[%s1513] ss:$8 sm:$0xf0]
    %vm1515 = vcmask 1047556
    %v1516 = vsel %vm1515, %v1514, %v1512
    %vm1517 = vcmask 130048
    %s1518 = scalar_lea.vmem %s1, 208
    %1519 = vst.msk [vmem:[%s1518] sm:$0xff] %vm1517, %v1516
    %s1520 = scalar_lea.vmem [#allocation0], 1728
    %v1521 = vld [vmem:[%s1520] ss:$8 sm:$0xf]
    %s1522 = scalar_lea.vmem [#allocation0], 1728
    %v1523 = vld [vmem:[%s1522] ss:$8 sm:$0xf0]
    %vm1524 = vcmask 1047556
    %v1525 = vsel %vm1524, %v1523, %v1521
    %vm1526 = vcmask 130048
    %s1527 = scalar_lea.vmem %s1, 216
    %1528 = vst.msk [vmem:[%s1527] sm:$0xff] %vm1526, %v1525
    %s1529 = scalar_lea.vmem [#allocation0], 1792
    %v1530 = vld [vmem:[%s1529] ss:$8 sm:$0xf]
    %s1531 = scalar_lea.vmem [#allocation0], 1792
    %v1532 = vld [vmem:[%s1531] ss:$8 sm:$0xf0]
    %vm1533 = vcmask 1047556
    %v1534 = vsel %vm1533, %v1532, %v1530
    %vm1535 = vcmask 130048
    %s1536 = scalar_lea.vmem %s1, 224
    %1537 = vst.msk [vmem:[%s1536] sm:$0xff] %vm1535, %v1534
    %s1538 = scalar_lea.vmem [#allocation0], 1856
    %v1539 = vld [vmem:[%s1538] ss:$8 sm:$0xf]
    %s1540 = scalar_lea.vmem [#allocation0], 1856
    %v1541 = vld [vmem:[%s1540] ss:$8 sm:$0xf0]
    %vm1542 = vcmask 1047556
    %v1543 = vsel %vm1542, %v1541, %v1539
    %vm1544 = vcmask 130048
    %s1545 = scalar_lea.vmem %s1, 232
    %1546 = vst.msk [vmem:[%s1545] sm:$0xff] %vm1544, %v1543
    %s1547 = scalar_lea.vmem [#allocation0], 1920
    %v1548 = vld [vmem:[%s1547] ss:$8 sm:$0xf]
    %s1549 = scalar_lea.vmem [#allocation0], 1920
    %v1550 = vld [vmem:[%s1549] ss:$8 sm:$0xf0]
    %vm1551 = vcmask 1047556
    %v1552 = vsel %vm1551, %v1550, %v1548
    %vm1553 = vcmask 130048
    %s1554 = scalar_lea.vmem %s1, 240
    %1555 = vst.msk [vmem:[%s1554] sm:$0xff] %vm1553, %v1552
    %s1556 = scalar_lea.vmem [#allocation0], 1984
    %v1557 = vld [vmem:[%s1556] ss:$8 sm:$0xf]
    %s1558 = scalar_lea.vmem [#allocation0], 1984
    %v1559 = vld [vmem:[%s1558] ss:$8 sm:$0xf0]
    %vm1560 = vcmask 1047556
    %v1561 = vsel %vm1560, %v1559, %v1557
    %vm1562 = vcmask 130048
    %s1563 = scalar_lea.vmem %s1, 248
    %1564 = vst.msk [vmem:[%s1563] sm:$0xff] %vm1562, %v1561
    %s1565 = scalar_lea.vmem [#allocation0], 3
    %v1566 = vld [vmem:[%s1565] ss:$8 sm:$0xf]
    %s1567 = scalar_lea.vmem [#allocation0], 3
    %v1568 = vld [vmem:[%s1567] ss:$8 sm:$0xf0]
    %vm1569 = vcmask 1047556
    %v1570 = vsel %vm1569, %v1568, %v1566
    %1571 = vrot.lane.b32.xlu0 %v1570, 48
    %v1572 = vpop.permute.xlu0 %1571
    %vm1573 = vcmask 523648
    %1574 = vst.msk [vmem:[%s1] sm:$0xff] %vm1573, %v1572
    %s1575 = scalar_lea.vmem [#allocation0], 259
    %v1576 = vld [vmem:[%s1575] ss:$8 sm:$0xf]
    %s1577 = scalar_lea.vmem [#allocation0], 259
    %v1578 = vld [vmem:[%s1577] ss:$8 sm:$0xf0]
    %vm1579 = vcmask 1047556
    %v1580 = vsel %vm1579, %v1578, %v1576
    %1581 = vrot.lane.b32.xlu0 %v1580, 48
    %v1582 = vpop.permute.xlu0 %1581
    %vm1583 = vcmask 523648
    %s1584 = scalar_lea.vmem %s1, 32
    %1585 = vst.msk [vmem:[%s1584] sm:$0xff] %vm1583, %v1582
    %s1586 = scalar_lea.vmem [#allocation0], 515
    %v1587 = vld [vmem:[%s1586] ss:$8 sm:$0xf]
    %s1588 = scalar_lea.vmem [#allocation0], 515
    %v1589 = vld [vmem:[%s1588] ss:$8 sm:$0xf0]
    %vm1590 = vcmask 1047556
    %v1591 = vsel %vm1590, %v1589, %v1587
    %1592 = vrot.lane.b32.xlu0 %v1591, 48
    %v1593 = vpop.permute.xlu0 %1592
    %vm1594 = vcmask 523648
    %s1595 = scalar_lea.vmem %s1, 64
    %1596 = vst.msk [vmem:[%s1595] sm:$0xff] %vm1594, %v1593
    %s1597 = scalar_lea.vmem [#allocation0], 771
    %v1598 = vld [vmem:[%s1597] ss:$8 sm:$0xf]
    %s1599 = scalar_lea.vmem [#allocation0], 771
    %v1600 = vld [vmem:[%s1599] ss:$8 sm:$0xf0]
    %vm1601 = vcmask 1047556
    %v1602 = vsel %vm1601, %v1600, %v1598
    %1603 = vrot.lane.b32.xlu0 %v1602, 48
    %v1604 = vpop.permute.xlu0 %1603
    %vm1605 = vcmask 523648
    %s1606 = scalar_lea.vmem %s1, 96
    %1607 = vst.msk [vmem:[%s1606] sm:$0xff] %vm1605, %v1604
    %s1608 = scalar_lea.vmem [#allocation0], 1027
    %v1609 = vld [vmem:[%s1608] ss:$8 sm:$0xf]
    %s1610 = scalar_lea.vmem [#allocation0], 1027
    %v1611 = vld [vmem:[%s1610] ss:$8 sm:$0xf0]
    %vm1612 = vcmask 1047556
    %v1613 = vsel %vm1612, %v1611, %v1609
    %1614 = vrot.lane.b32.xlu0 %v1613, 48
    %v1615 = vpop.permute.xlu0 %1614
    %vm1616 = vcmask 523648
    %s1617 = scalar_lea.vmem %s1, 128
    %1618 = vst.msk [vmem:[%s1617] sm:$0xff] %vm1616, %v1615
    %s1619 = scalar_lea.vmem [#allocation0], 1283
    %v1620 = vld [vmem:[%s1619] ss:$8 sm:$0xf]
    %s1621 = scalar_lea.vmem [#allocation0], 1283
    %v1622 = vld [vmem:[%s1621] ss:$8 sm:$0xf0]
    %vm1623 = vcmask 1047556
    %v1624 = vsel %vm1623, %v1622, %v1620
    %1625 = vrot.lane.b32.xlu0 %v1624, 48
    %v1626 = vpop.permute.xlu0 %1625
    %vm1627 = vcmask 523648
    %s1628 = scalar_lea.vmem %s1, 160
    %1629 = vst.msk [vmem:[%s1628] sm:$0xff] %vm1627, %v1626
    %s1630 = scalar_lea.vmem [#allocation0], 1539
    %v1631 = vld [vmem:[%s1630] ss:$8 sm:$0xf]
    %s1632 = scalar_lea.vmem [#allocation0], 1539
    %v1633 = vld [vmem:[%s1632] ss:$8 sm:$0xf0]
    %vm1634 = vcmask 1047556
    %v1635 = vsel %vm1634, %v1633, %v1631
    %1636 = vrot.lane.b32.xlu0 %v1635, 48
    %v1637 = vpop.permute.xlu0 %1636
    %vm1638 = vcmask 523648
    %s1639 = scalar_lea.vmem %s1, 192
    %1640 = vst.msk [vmem:[%s1639] sm:$0xff] %vm1638, %v1637
    %s1641 = scalar_lea.vmem [#allocation0], 1795
    %v1642 = vld [vmem:[%s1641] ss:$8 sm:$0xf]
    %s1643 = scalar_lea.vmem [#allocation0], 1795
    %v1644 = vld [vmem:[%s1643] ss:$8 sm:$0xf0]
    %vm1645 = vcmask 1047556
    %v1646 = vsel %vm1645, %v1644, %v1642
    %1647 = vrot.lane.b32.xlu0 %v1646, 48
    %v1648 = vpop.permute.xlu0 %1647
    %vm1649 = vcmask 523648
    %s1650 = scalar_lea.vmem %s1, 224
    %1651 = vst.msk [vmem:[%s1650] sm:$0xff] %vm1649, %v1648
    %s1652 = scalar_lea.vmem [#allocation0], 67
    %v1653 = vld [vmem:[%s1652] ss:$8 sm:$0xf]
    %s1654 = scalar_lea.vmem [#allocation0], 67
    %v1655 = vld [vmem:[%s1654] ss:$8 sm:$0xf0]
    %vm1656 = vcmask 1047556
    %v1657 = vsel %vm1656, %v1655, %v1653
    %1658 = vrot.lane.b32.xlu0 %v1657, 48
    %v1659 = vpop.permute.xlu0 %1658
    %vm1660 = vcmask 523648
    %s1661 = scalar_lea.vmem %s1, 8
    %1662 = vst.msk [vmem:[%s1661] sm:$0xff] %vm1660, %v1659
    %s1663 = scalar_lea.vmem [#allocation0], 323
    %v1664 = vld [vmem:[%s1663] ss:$8 sm:$0xf]
    %s1665 = scalar_lea.vmem [#allocation0], 323
    %v1666 = vld [vmem:[%s1665] ss:$8 sm:$0xf0]
    %vm1667 = vcmask 1047556
    %v1668 = vsel %vm1667, %v1666, %v1664
    %1669 = vrot.lane.b32.xlu0 %v1668, 48
    %v1670 = vpop.permute.xlu0 %1669
    %vm1671 = vcmask 523648
    %s1672 = scalar_lea.vmem %s1, 40
    %1673 = vst.msk [vmem:[%s1672] sm:$0xff] %vm1671, %v1670
    %s1674 = scalar_lea.vmem [#allocation0], 579
    %v1675 = vld [vmem:[%s1674] ss:$8 sm:$0xf]
    %s1676 = scalar_lea.vmem [#allocation0], 579
    %v1677 = vld [vmem:[%s1676] ss:$8 sm:$0xf0]
    %vm1678 = vcmask 1047556
    %v1679 = vsel %vm1678, %v1677, %v1675
    %1680 = vrot.lane.b32.xlu0 %v1679, 48
    %v1681 = vpop.permute.xlu0 %1680
    %vm1682 = vcmask 523648
    %s1683 = scalar_lea.vmem %s1, 72
    %1684 = vst.msk [vmem:[%s1683] sm:$0xff] %vm1682, %v1681
    %s1685 = scalar_lea.vmem [#allocation0], 835
    %v1686 = vld [vmem:[%s1685] ss:$8 sm:$0xf]
    %s1687 = scalar_lea.vmem [#allocation0], 835
    %v1688 = vld [vmem:[%s1687] ss:$8 sm:$0xf0]
    %vm1689 = vcmask 1047556
    %v1690 = vsel %vm1689, %v1688, %v1686
    %1691 = vrot.lane.b32.xlu0 %v1690, 48
    %v1692 = vpop.permute.xlu0 %1691
    %vm1693 = vcmask 523648
    %s1694 = scalar_lea.vmem %s1, 104
    %1695 = vst.msk [vmem:[%s1694] sm:$0xff] %vm1693, %v1692
    %s1696 = scalar_lea.vmem [#allocation0], 1091
    %v1697 = vld [vmem:[%s1696] ss:$8 sm:$0xf]
    %s1698 = scalar_lea.vmem [#allocation0], 1091
    %v1699 = vld [vmem:[%s1698] ss:$8 sm:$0xf0]
    %vm1700 = vcmask 1047556
    %v1701 = vsel %vm1700, %v1699, %v1697
    %1702 = vrot.lane.b32.xlu0 %v1701, 48
    %v1703 = vpop.permute.xlu0 %1702
    %vm1704 = vcmask 523648
    %s1705 = scalar_lea.vmem %s1, 136
    %1706 = vst.msk [vmem:[%s1705] sm:$0xff] %vm1704, %v1703
    %s1707 = scalar_lea.vmem [#allocation0], 1347
    %v1708 = vld [vmem:[%s1707] ss:$8 sm:$0xf]
    %s1709 = scalar_lea.vmem [#allocation0], 1347
    %v1710 = vld [vmem:[%s1709] ss:$8 sm:$0xf0]
    %vm1711 = vcmask 1047556
    %v1712 = vsel %vm1711, %v1710, %v1708
    %1713 = vrot.lane.b32.xlu0 %v1712, 48
    %v1714 = vpop.permute.xlu0 %1713
    %vm1715 = vcmask 523648
    %s1716 = scalar_lea.vmem %s1, 168
    %1717 = vst.msk [vmem:[%s1716] sm:$0xff] %vm1715, %v1714
    %s1718 = scalar_lea.vmem [#allocation0], 1603
    %v1719 = vld [vmem:[%s1718] ss:$8 sm:$0xf]
    %s1720 = scalar_lea.vmem [#allocation0], 1603
    %v1721 = vld [vmem:[%s1720] ss:$8 sm:$0xf0]
    %vm1722 = vcmask 1047556
    %v1723 = vsel %vm1722, %v1721, %v1719
    %1724 = vrot.lane.b32.xlu0 %v1723, 48
    %v1725 = vpop.permute.xlu0 %1724
    %vm1726 = vcmask 523648
    %s1727 = scalar_lea.vmem %s1, 200
    %1728 = vst.msk [vmem:[%s1727] sm:$0xff] %vm1726, %v1725
    %s1729 = scalar_lea.vmem [#allocation0], 1859
    %v1730 = vld [vmem:[%s1729] ss:$8 sm:$0xf]
    %s1731 = scalar_lea.vmem [#allocation0], 1859
    %v1732 = vld [vmem:[%s1731] ss:$8 sm:$0xf0]
    %vm1733 = vcmask 1047556
    %v1734 = vsel %vm1733, %v1732, %v1730
    %1735 = vrot.lane.b32.xlu0 %v1734, 48
    %v1736 = vpop.permute.xlu0 %1735
    %vm1737 = vcmask 523648
    %s1738 = scalar_lea.vmem %s1, 232
    %1739 = vst.msk [vmem:[%s1738] sm:$0xff] %vm1737, %v1736
    %s1740 = scalar_lea.vmem [#allocation0], 131
    %v1741 = vld [vmem:[%s1740] ss:$8 sm:$0xf]
    %s1742 = scalar_lea.vmem [#allocation0], 131
    %v1743 = vld [vmem:[%s1742] ss:$8 sm:$0xf0]
    %vm1744 = vcmask 1047556
    %v1745 = vsel %vm1744, %v1743, %v1741
    %1746 = vrot.lane.b32.xlu0 %v1745, 48
    %v1747 = vpop.permute.xlu0 %1746
    %vm1748 = vcmask 523648
    %s1749 = scalar_lea.vmem %s1, 16
    %1750 = vst.msk [vmem:[%s1749] sm:$0xff] %vm1748, %v1747
    %s1751 = scalar_lea.vmem [#allocation0], 387
    %v1752 = vld [vmem:[%s1751] ss:$8 sm:$0xf]
    %s1753 = scalar_lea.vmem [#allocation0], 387
    %v1754 = vld [vmem:[%s1753] ss:$8 sm:$0xf0]
    %vm1755 = vcmask 1047556
    %v1756 = vsel %vm1755, %v1754, %v1752
    %1757 = vrot.lane.b32.xlu0 %v1756, 48
    %v1758 = vpop.permute.xlu0 %1757
    %vm1759 = vcmask 523648
    %s1760 = scalar_lea.vmem %s1, 48
    %1761 = vst.msk [vmem:[%s1760] sm:$0xff] %vm1759, %v1758
    %s1762 = scalar_lea.vmem [#allocation0], 643
    %v1763 = vld [vmem:[%s1762] ss:$8 sm:$0xf]
    %s1764 = scalar_lea.vmem [#allocation0], 643
    %v1765 = vld [vmem:[%s1764] ss:$8 sm:$0xf0]
    %vm1766 = vcmask 1047556
    %v1767 = vsel %vm1766, %v1765, %v1763
    %1768 = vrot.lane.b32.xlu0 %v1767, 48
    %v1769 = vpop.permute.xlu0 %1768
    %vm1770 = vcmask 523648
    %s1771 = scalar_lea.vmem %s1, 80
    %1772 = vst.msk [vmem:[%s1771] sm:$0xff] %vm1770, %v1769
    %s1773 = scalar_lea.vmem [#allocation0], 899
    %v1774 = vld [vmem:[%s1773] ss:$8 sm:$0xf]
    %s1775 = scalar_lea.vmem [#allocation0], 899
    %v1776 = vld [vmem:[%s1775] ss:$8 sm:$0xf0]
    %vm1777 = vcmask 1047556
    %v1778 = vsel %vm1777, %v1776, %v1774
    %1779 = vrot.lane.b32.xlu0 %v1778, 48
    %v1780 = vpop.permute.xlu0 %1779
    %vm1781 = vcmask 523648
    %s1782 = scalar_lea.vmem %s1, 112
    %1783 = vst.msk [vmem:[%s1782] sm:$0xff] %vm1781, %v1780
    %s1784 = scalar_lea.vmem [#allocation0], 1155
    %v1785 = vld [vmem:[%s1784] ss:$8 sm:$0xf]
    %s1786 = scalar_lea.vmem [#allocation0], 1155
    %v1787 = vld [vmem:[%s1786] ss:$8 sm:$0xf0]
    %vm1788 = vcmask 1047556
    %v1789 = vsel %vm1788, %v1787, %v1785
    %1790 = vrot.lane.b32.xlu0 %v1789, 48
    %v1791 = vpop.permute.xlu0 %1790
    %vm1792 = vcmask 523648
    %s1793 = scalar_lea.vmem %s1, 144
    %1794 = vst.msk [vmem:[%s1793] sm:$0xff] %vm1792, %v1791
    %s1795 = scalar_lea.vmem [#allocation0], 1411
    %v1796 = vld [vmem:[%s1795] ss:$8 sm:$0xf]
    %s1797 = scalar_lea.vmem [#allocation0], 1411
    %v1798 = vld [vmem:[%s1797] ss:$8 sm:$0xf0]
    %vm1799 = vcmask 1047556
    %v1800 = vsel %vm1799, %v1798, %v1796
    %1801 = vrot.lane.b32.xlu0 %v1800, 48
    %v1802 = vpop.permute.xlu0 %1801
    %vm1803 = vcmask 523648
    %s1804 = scalar_lea.vmem %s1, 176
    %1805 = vst.msk [vmem:[%s1804] sm:$0xff] %vm1803, %v1802
    %s1806 = scalar_lea.vmem [#allocation0], 1667
    %v1807 = vld [vmem:[%s1806] ss:$8 sm:$0xf]
    %s1808 = scalar_lea.vmem [#allocation0], 1667
    %v1809 = vld [vmem:[%s1808] ss:$8 sm:$0xf0]
    %vm1810 = vcmask 1047556
    %v1811 = vsel %vm1810, %v1809, %v1807
    %1812 = vrot.lane.b32.xlu0 %v1811, 48
    %v1813 = vpop.permute.xlu0 %1812
    %vm1814 = vcmask 523648
    %s1815 = scalar_lea.vmem %s1, 208
    %1816 = vst.msk [vmem:[%s1815] sm:$0xff] %vm1814, %v1813
    %s1817 = scalar_lea.vmem [#allocation0], 1923
    %v1818 = vld [vmem:[%s1817] ss:$8 sm:$0xf]
    %s1819 = scalar_lea.vmem [#allocation0], 1923
    %v1820 = vld [vmem:[%s1819] ss:$8 sm:$0xf0]
    %vm1821 = vcmask 1047556
    %v1822 = vsel %vm1821, %v1820, %v1818
    %1823 = vrot.lane.b32.xlu0 %v1822, 48
    %v1824 = vpop.permute.xlu0 %1823
    %vm1825 = vcmask 523648
    %s1826 = scalar_lea.vmem %s1, 240
    %1827 = vst.msk [vmem:[%s1826] sm:$0xff] %vm1825, %v1824
    %s1828 = scalar_lea.vmem [#allocation0], 195
    %v1829 = vld [vmem:[%s1828] ss:$8 sm:$0xf]
    %s1830 = scalar_lea.vmem [#allocation0], 195
    %v1831 = vld [vmem:[%s1830] ss:$8 sm:$0xf0]
    %vm1832 = vcmask 1047556
    %v1833 = vsel %vm1832, %v1831, %v1829
    %1834 = vrot.lane.b32.xlu0 %v1833, 48
    %v1835 = vpop.permute.xlu0 %1834
    %vm1836 = vcmask 523648
    %s1837 = scalar_lea.vmem %s1, 24
    %1838 = vst.msk [vmem:[%s1837] sm:$0xff] %vm1836, %v1835
    %s1839 = scalar_lea.vmem [#allocation0], 451
    %v1840 = vld [vmem:[%s1839] ss:$8 sm:$0xf]
    %s1841 = scalar_lea.vmem [#allocation0], 451
    %v1842 = vld [vmem:[%s1841] ss:$8 sm:$0xf0]
    %vm1843 = vcmask 1047556
    %v1844 = vsel %vm1843, %v1842, %v1840
    %1845 = vrot.lane.b32.xlu0 %v1844, 48
    %v1846 = vpop.permute.xlu0 %1845
    %vm1847 = vcmask 523648
    %s1848 = scalar_lea.vmem %s1, 56
    %1849 = vst.msk [vmem:[%s1848] sm:$0xff] %vm1847, %v1846
    %s1850 = scalar_lea.vmem [#allocation0], 707
    %v1851 = vld [vmem:[%s1850] ss:$8 sm:$0xf]
    %s1852 = scalar_lea.vmem [#allocation0], 707
    %v1853 = vld [vmem:[%s1852] ss:$8 sm:$0xf0]
    %vm1854 = vcmask 1047556
    %v1855 = vsel %vm1854, %v1853, %v1851
    %1856 = vrot.lane.b32.xlu0 %v1855, 48
    %v1857 = vpop.permute.xlu0 %1856
    %vm1858 = vcmask 523648
    %s1859 = scalar_lea.vmem %s1, 88
    %1860 = vst.msk [vmem:[%s1859] sm:$0xff] %vm1858, %v1857
    %s1861 = scalar_lea.vmem [#allocation0], 963
    %v1862 = vld [vmem:[%s1861] ss:$8 sm:$0xf]
    %s1863 = scalar_lea.vmem [#allocation0], 963
    %v1864 = vld [vmem:[%s1863] ss:$8 sm:$0xf0]
    %vm1865 = vcmask 1047556
    %v1866 = vsel %vm1865, %v1864, %v1862
    %1867 = vrot.lane.b32.xlu0 %v1866, 48
    %v1868 = vpop.permute.xlu0 %1867
    %vm1869 = vcmask 523648
    %s1870 = scalar_lea.vmem %s1, 120
    %1871 = vst.msk [vmem:[%s1870] sm:$0xff] %vm1869, %v1868
    %s1872 = scalar_lea.vmem [#allocation0], 1219
    %v1873 = vld [vmem:[%s1872] ss:$8 sm:$0xf]
    %s1874 = scalar_lea.vmem [#allocation0], 1219
    %v1875 = vld [vmem:[%s1874] ss:$8 sm:$0xf0]
    %vm1876 = vcmask 1047556
    %v1877 = vsel %vm1876, %v1875, %v1873
    %1878 = vrot.lane.b32.xlu0 %v1877, 48
    %v1879 = vpop.permute.xlu0 %1878
    %vm1880 = vcmask 523648
    %s1881 = scalar_lea.vmem %s1, 152
    %1882 = vst.msk [vmem:[%s1881] sm:$0xff] %vm1880, %v1879
    %s1883 = scalar_lea.vmem [#allocation0], 1475
    %v1884 = vld [vmem:[%s1883] ss:$8 sm:$0xf]
    %s1885 = scalar_lea.vmem [#allocation0], 1475
    %v1886 = vld [vmem:[%s1885] ss:$8 sm:$0xf0]
    %vm1887 = vcmask 1047556
    %v1888 = vsel %vm1887, %v1886, %v1884
    %1889 = vrot.lane.b32.xlu0 %v1888, 48
    %v1890 = vpop.permute.xlu0 %1889
    %vm1891 = vcmask 523648
    %s1892 = scalar_lea.vmem %s1, 184
    %1893 = vst.msk [vmem:[%s1892] sm:$0xff] %vm1891, %v1890
    %s1894 = scalar_lea.vmem [#allocation0], 1731
    %v1895 = vld [vmem:[%s1894] ss:$8 sm:$0xf]
    %s1896 = scalar_lea.vmem [#allocation0], 1731
    %v1897 = vld [vmem:[%s1896] ss:$8 sm:$0xf0]
    %vm1898 = vcmask 1047556
    %v1899 = vsel %vm1898, %v1897, %v1895
    %1900 = vrot.lane.b32.xlu0 %v1899, 48
    %v1901 = vpop.permute.xlu0 %1900
    %vm1902 = vcmask 523648
    %s1903 = scalar_lea.vmem %s1, 216
    %1904 = vst.msk [vmem:[%s1903] sm:$0xff] %vm1902, %v1901
    %s1905 = scalar_lea.vmem [#allocation0], 1987
    %v1906 = vld [vmem:[%s1905] ss:$8 sm:$0xf]
    %s1907 = scalar_lea.vmem [#allocation0], 1987
    %v1908 = vld [vmem:[%s1907] ss:$8 sm:$0xf0]
    %vm1909 = vcmask 1047556
    %v1910 = vsel %vm1909, %v1908, %v1906
    %1911 = vrot.lane.b32.xlu0 %v1910, 48
    %v1912 = vpop.permute.xlu0 %1911
    %vm1913 = vcmask 523648
    %s1914 = scalar_lea.vmem %s1, 248
    %1915 = vst.msk [vmem:[%s1914] sm:$0xff] %vm1913, %v1912
    %s1916 = scalar_lea.vmem [#allocation0], 2
    %v1917 = vld [vmem:[%s1916] ss:$8 sm:$0xf]
    %s1918 = scalar_lea.vmem [#allocation0], 2
    %v1919 = vld [vmem:[%s1918] ss:$8 sm:$0xf0]
    %vm1920 = vcmask 1047556
    %v1921 = vsel %vm1920, %v1919, %v1917
    %1922 = vrot.lane.b32.xlu0 %v1921, 32
    %v1923 = vpop.permute.xlu0 %1922
    %vm1924 = vcmask 392448
    %1925 = vst.msk [vmem:[%s1] sm:$0xff] %vm1924, %v1923
    %s1926 = scalar_lea.vmem [#allocation0], 258
    %v1927 = vld [vmem:[%s1926] ss:$8 sm:$0xf]
    %s1928 = scalar_lea.vmem [#allocation0], 258
    %v1929 = vld [vmem:[%s1928] ss:$8 sm:$0xf0]
    %vm1930 = vcmask 1047556
    %v1931 = vsel %vm1930, %v1929, %v1927
    %1932 = vrot.lane.b32.xlu0 %v1931, 32
    %v1933 = vpop.permute.xlu0 %1932
    %vm1934 = vcmask 392448
    %s1935 = scalar_lea.vmem %s1, 32
    %1936 = vst.msk [vmem:[%s1935] sm:$0xff] %vm1934, %v1933
    %s1937 = scalar_lea.vmem [#allocation0], 514
    %v1938 = vld [vmem:[%s1937] ss:$8 sm:$0xf]
    %s1939 = scalar_lea.vmem [#allocation0], 514
    %v1940 = vld [vmem:[%s1939] ss:$8 sm:$0xf0]
    %vm1941 = vcmask 1047556
    %v1942 = vsel %vm1941, %v1940, %v1938
    %1943 = vrot.lane.b32.xlu0 %v1942, 32
    %v1944 = vpop.permute.xlu0 %1943
    %vm1945 = vcmask 392448
    %s1946 = scalar_lea.vmem %s1, 64
    %1947 = vst.msk [vmem:[%s1946] sm:$0xff] %vm1945, %v1944
    %s1948 = scalar_lea.vmem [#allocation0], 770
    %v1949 = vld [vmem:[%s1948] ss:$8 sm:$0xf]
    %s1950 = scalar_lea.vmem [#allocation0], 770
    %v1951 = vld [vmem:[%s1950] ss:$8 sm:$0xf0]
    %vm1952 = vcmask 1047556
    %v1953 = vsel %vm1952, %v1951, %v1949
    %1954 = vrot.lane.b32.xlu0 %v1953, 32
    %v1955 = vpop.permute.xlu0 %1954
    %vm1956 = vcmask 392448
    %s1957 = scalar_lea.vmem %s1, 96
    %1958 = vst.msk [vmem:[%s1957] sm:$0xff] %vm1956, %v1955
    %s1959 = scalar_lea.vmem [#allocation0], 1026
    %v1960 = vld [vmem:[%s1959] ss:$8 sm:$0xf]
    %s1961 = scalar_lea.vmem [#allocation0], 1026
    %v1962 = vld [vmem:[%s1961] ss:$8 sm:$0xf0]
    %vm1963 = vcmask 1047556
    %v1964 = vsel %vm1963, %v1962, %v1960
    %1965 = vrot.lane.b32.xlu0 %v1964, 32
    %v1966 = vpop.permute.xlu0 %1965
    %vm1967 = vcmask 392448
    %s1968 = scalar_lea.vmem %s1, 128
    %1969 = vst.msk [vmem:[%s1968] sm:$0xff] %vm1967, %v1966
    %s1970 = scalar_lea.vmem [#allocation0], 1282
    %v1971 = vld [vmem:[%s1970] ss:$8 sm:$0xf]
    %s1972 = scalar_lea.vmem [#allocation0], 1282
    %v1973 = vld [vmem:[%s1972] ss:$8 sm:$0xf0]
    %vm1974 = vcmask 1047556
    %v1975 = vsel %vm1974, %v1973, %v1971
    %1976 = vrot.lane.b32.xlu0 %v1975, 32
    %v1977 = vpop.permute.xlu0 %1976
    %vm1978 = vcmask 392448
    %s1979 = scalar_lea.vmem %s1, 160
    %1980 = vst.msk [vmem:[%s1979] sm:$0xff] %vm1978, %v1977
    %s1981 = scalar_lea.vmem [#allocation0], 1538
    %v1982 = vld [vmem:[%s1981] ss:$8 sm:$0xf]
    %s1983 = scalar_lea.vmem [#allocation0], 1538
    %v1984 = vld [vmem:[%s1983] ss:$8 sm:$0xf0]
    %vm1985 = vcmask 1047556
    %v1986 = vsel %vm1985, %v1984, %v1982
    %1987 = vrot.lane.b32.xlu0 %v1986, 32
    %v1988 = vpop.permute.xlu0 %1987
    %vm1989 = vcmask 392448
    %s1990 = scalar_lea.vmem %s1, 192
    %1991 = vst.msk [vmem:[%s1990] sm:$0xff] %vm1989, %v1988
    %s1992 = scalar_lea.vmem [#allocation0], 1794
    %v1993 = vld [vmem:[%s1992] ss:$8 sm:$0xf]
    %s1994 = scalar_lea.vmem [#allocation0], 1794
    %v1995 = vld [vmem:[%s1994] ss:$8 sm:$0xf0]
    %vm1996 = vcmask 1047556
    %v1997 = vsel %vm1996, %v1995, %v1993
    %1998 = vrot.lane.b32.xlu0 %v1997, 32
    %v1999 = vpop.permute.xlu0 %1998
    %vm2000 = vcmask 392448
    %s2001 = scalar_lea.vmem %s1, 224
    %2002 = vst.msk [vmem:[%s2001] sm:$0xff] %vm2000, %v1999
    %s2003 = scalar_lea.vmem [#allocation0], 66
    %v2004 = vld [vmem:[%s2003] ss:$8 sm:$0xf]
    %s2005 = scalar_lea.vmem [#allocation0], 66
    %v2006 = vld [vmem:[%s2005] ss:$8 sm:$0xf0]
    %vm2007 = vcmask 1047556
    %v2008 = vsel %vm2007, %v2006, %v2004
    %2009 = vrot.lane.b32.xlu0 %v2008, 32
    %v2010 = vpop.permute.xlu0 %2009
    %vm2011 = vcmask 392448
    %s2012 = scalar_lea.vmem %s1, 8
    %2013 = vst.msk [vmem:[%s2012] sm:$0xff] %vm2011, %v2010
    %s2014 = scalar_lea.vmem [#allocation0], 322
    %v2015 = vld [vmem:[%s2014] ss:$8 sm:$0xf]
    %s2016 = scalar_lea.vmem [#allocation0], 322
    %v2017 = vld [vmem:[%s2016] ss:$8 sm:$0xf0]
    %vm2018 = vcmask 1047556
    %v2019 = vsel %vm2018, %v2017, %v2015
    %2020 = vrot.lane.b32.xlu0 %v2019, 32
    %v2021 = vpop.permute.xlu0 %2020
    %vm2022 = vcmask 392448
    %s2023 = scalar_lea.vmem %s1, 40
    %2024 = vst.msk [vmem:[%s2023] sm:$0xff] %vm2022, %v2021
    %s2025 = scalar_lea.vmem [#allocation0], 578
    %v2026 = vld [vmem:[%s2025] ss:$8 sm:$0xf]
    %s2027 = scalar_lea.vmem [#allocation0], 578
    %v2028 = vld [vmem:[%s2027] ss:$8 sm:$0xf0]
    %vm2029 = vcmask 1047556
    %v2030 = vsel %vm2029, %v2028, %v2026
    %2031 = vrot.lane.b32.xlu0 %v2030, 32
    %v2032 = vpop.permute.xlu0 %2031
    %vm2033 = vcmask 392448
    %s2034 = scalar_lea.vmem %s1, 72
    %2035 = vst.msk [vmem:[%s2034] sm:$0xff] %vm2033, %v2032
    %s2036 = scalar_lea.vmem [#allocation0], 834
    %v2037 = vld [vmem:[%s2036] ss:$8 sm:$0xf]
    %s2038 = scalar_lea.vmem [#allocation0], 834
    %v2039 = vld [vmem:[%s2038] ss:$8 sm:$0xf0]
    %vm2040 = vcmask 1047556
    %v2041 = vsel %vm2040, %v2039, %v2037
    %2042 = vrot.lane.b32.xlu0 %v2041, 32
    %v2043 = vpop.permute.xlu0 %2042
    %vm2044 = vcmask 392448
    %s2045 = scalar_lea.vmem %s1, 104
    %2046 = vst.msk [vmem:[%s2045] sm:$0xff] %vm2044, %v2043
    %s2047 = scalar_lea.vmem [#allocation0], 1090
    %v2048 = vld [vmem:[%s2047] ss:$8 sm:$0xf]
    %s2049 = scalar_lea.vmem [#allocation0], 1090
    %v2050 = vld [vmem:[%s2049] ss:$8 sm:$0xf0]
    %vm2051 = vcmask 1047556
    %v2052 = vsel %vm2051, %v2050, %v2048
    %2053 = vrot.lane.b32.xlu0 %v2052, 32
    %v2054 = vpop.permute.xlu0 %2053
    %vm2055 = vcmask 392448
    %s2056 = scalar_lea.vmem %s1, 136
    %2057 = vst.msk [vmem:[%s2056] sm:$0xff] %vm2055, %v2054
    %s2058 = scalar_lea.vmem [#allocation0], 1346
    %v2059 = vld [vmem:[%s2058] ss:$8 sm:$0xf]
    %s2060 = scalar_lea.vmem [#allocation0], 1346
    %v2061 = vld [vmem:[%s2060] ss:$8 sm:$0xf0]
    %vm2062 = vcmask 1047556
    %v2063 = vsel %vm2062, %v2061, %v2059
    %2064 = vrot.lane.b32.xlu0 %v2063, 32
    %v2065 = vpop.permute.xlu0 %2064
    %vm2066 = vcmask 392448
    %s2067 = scalar_lea.vmem %s1, 168
    %2068 = vst.msk [vmem:[%s2067] sm:$0xff] %vm2066, %v2065
    %s2069 = scalar_lea.vmem [#allocation0], 1602
    %v2070 = vld [vmem:[%s2069] ss:$8 sm:$0xf]
    %s2071 = scalar_lea.vmem [#allocation0], 1602
    %v2072 = vld [vmem:[%s2071] ss:$8 sm:$0xf0]
    %vm2073 = vcmask 1047556
    %v2074 = vsel %vm2073, %v2072, %v2070
    %2075 = vrot.lane.b32.xlu0 %v2074, 32
    %v2076 = vpop.permute.xlu0 %2075
    %vm2077 = vcmask 392448
    %s2078 = scalar_lea.vmem %s1, 200
    %2079 = vst.msk [vmem:[%s2078] sm:$0xff] %vm2077, %v2076
    %s2080 = scalar_lea.vmem [#allocation0], 1858
    %v2081 = vld [vmem:[%s2080] ss:$8 sm:$0xf]
    %s2082 = scalar_lea.vmem [#allocation0], 1858
    %v2083 = vld [vmem:[%s2082] ss:$8 sm:$0xf0]
    %vm2084 = vcmask 1047556
    %v2085 = vsel %vm2084, %v2083, %v2081
    %2086 = vrot.lane.b32.xlu0 %v2085, 32
    %v2087 = vpop.permute.xlu0 %2086
    %vm2088 = vcmask 392448
    %s2089 = scalar_lea.vmem %s1, 232
    %2090 = vst.msk [vmem:[%s2089] sm:$0xff] %vm2088, %v2087
    %s2091 = scalar_lea.vmem [#allocation0], 130
    %v2092 = vld [vmem:[%s2091] ss:$8 sm:$0xf]
    %s2093 = scalar_lea.vmem [#allocation0], 130
    %v2094 = vld [vmem:[%s2093] ss:$8 sm:$0xf0]
    %vm2095 = vcmask 1047556
    %v2096 = vsel %vm2095, %v2094, %v2092
    %2097 = vrot.lane.b32.xlu0 %v2096, 32
    %v2098 = vpop.permute.xlu0 %2097
    %vm2099 = vcmask 392448
    %s2100 = scalar_lea.vmem %s1, 16
    %2101 = vst.msk [vmem:[%s2100] sm:$0xff] %vm2099, %v2098
    %s2102 = scalar_lea.vmem [#allocation0], 386
    %v2103 = vld [vmem:[%s2102] ss:$8 sm:$0xf]
    %s2104 = scalar_lea.vmem [#allocation0], 386
    %v2105 = vld [vmem:[%s2104] ss:$8 sm:$0xf0]
    %vm2106 = vcmask 1047556
    %v2107 = vsel %vm2106, %v2105, %v2103
    %2108 = vrot.lane.b32.xlu0 %v2107, 32
    %v2109 = vpop.permute.xlu0 %2108
    %vm2110 = vcmask 392448
    %s2111 = scalar_lea.vmem %s1, 48
    %2112 = vst.msk [vmem:[%s2111] sm:$0xff] %vm2110, %v2109
    %s2113 = scalar_lea.vmem [#allocation0], 642
    %v2114 = vld [vmem:[%s2113] ss:$8 sm:$0xf]
    %s2115 = scalar_lea.vmem [#allocation0], 642
    %v2116 = vld [vmem:[%s2115] ss:$8 sm:$0xf0]
    %vm2117 = vcmask 1047556
    %v2118 = vsel %vm2117, %v2116, %v2114
    %2119 = vrot.lane.b32.xlu0 %v2118, 32
    %v2120 = vpop.permute.xlu0 %2119
    %vm2121 = vcmask 392448
    %s2122 = scalar_lea.vmem %s1, 80
    %2123 = vst.msk [vmem:[%s2122] sm:$0xff] %vm2121, %v2120
    %s2124 = scalar_lea.vmem [#allocation0], 898
    %v2125 = vld [vmem:[%s2124] ss:$8 sm:$0xf]
    %s2126 = scalar_lea.vmem [#allocation0], 898
    %v2127 = vld [vmem:[%s2126] ss:$8 sm:$0xf0]
    %vm2128 = vcmask 1047556
    %v2129 = vsel %vm2128, %v2127, %v2125
    %2130 = vrot.lane.b32.xlu0 %v2129, 32
    %v2131 = vpop.permute.xlu0 %2130
    %vm2132 = vcmask 392448
    %s2133 = scalar_lea.vmem %s1, 112
    %2134 = vst.msk [vmem:[%s2133] sm:$0xff] %vm2132, %v2131
    %s2135 = scalar_lea.vmem [#allocation0], 1154
    %v2136 = vld [vmem:[%s2135] ss:$8 sm:$0xf]
    %s2137 = scalar_lea.vmem [#allocation0], 1154
    %v2138 = vld [vmem:[%s2137] ss:$8 sm:$0xf0]
    %vm2139 = vcmask 1047556
    %v2140 = vsel %vm2139, %v2138, %v2136
    %2141 = vrot.lane.b32.xlu0 %v2140, 32
    %v2142 = vpop.permute.xlu0 %2141
    %vm2143 = vcmask 392448
    %s2144 = scalar_lea.vmem %s1, 144
    %2145 = vst.msk [vmem:[%s2144] sm:$0xff] %vm2143, %v2142
    %s2146 = scalar_lea.vmem [#allocation0], 1410
    %v2147 = vld [vmem:[%s2146] ss:$8 sm:$0xf]
    %s2148 = scalar_lea.vmem [#allocation0], 1410
    %v2149 = vld [vmem:[%s2148] ss:$8 sm:$0xf0]
    %vm2150 = vcmask 1047556
    %v2151 = vsel %vm2150, %v2149, %v2147
    %2152 = vrot.lane.b32.xlu0 %v2151, 32
    %v2153 = vpop.permute.xlu0 %2152
    %vm2154 = vcmask 392448
    %s2155 = scalar_lea.vmem %s1, 176
    %2156 = vst.msk [vmem:[%s2155] sm:$0xff] %vm2154, %v2153
    %s2157 = scalar_lea.vmem [#allocation0], 1666
    %v2158 = vld [vmem:[%s2157] ss:$8 sm:$0xf]
    %s2159 = scalar_lea.vmem [#allocation0], 1666
    %v2160 = vld [vmem:[%s2159] ss:$8 sm:$0xf0]
    %vm2161 = vcmask 1047556
    %v2162 = vsel %vm2161, %v2160, %v2158
    %2163 = vrot.lane.b32.xlu0 %v2162, 32
    %v2164 = vpop.permute.xlu0 %2163
    %vm2165 = vcmask 392448
    %s2166 = scalar_lea.vmem %s1, 208
    %2167 = vst.msk [vmem:[%s2166] sm:$0xff] %vm2165, %v2164
    %s2168 = scalar_lea.vmem [#allocation0], 1922
    %v2169 = vld [vmem:[%s2168] ss:$8 sm:$0xf]
    %s2170 = scalar_lea.vmem [#allocation0], 1922
    %v2171 = vld [vmem:[%s2170] ss:$8 sm:$0xf0]
    %vm2172 = vcmask 1047556
    %v2173 = vsel %vm2172, %v2171, %v2169
    %2174 = vrot.lane.b32.xlu0 %v2173, 32
    %v2175 = vpop.permute.xlu0 %2174
    %vm2176 = vcmask 392448
    %s2177 = scalar_lea.vmem %s1, 240
    %2178 = vst.msk [vmem:[%s2177] sm:$0xff] %vm2176, %v2175
    %s2179 = scalar_lea.vmem [#allocation0], 194
    %v2180 = vld [vmem:[%s2179] ss:$8 sm:$0xf]
    %s2181 = scalar_lea.vmem [#allocation0], 194
    %v2182 = vld [vmem:[%s2181] ss:$8 sm:$0xf0]
    %vm2183 = vcmask 1047556
    %v2184 = vsel %vm2183, %v2182, %v2180
    %2185 = vrot.lane.b32.xlu0 %v2184, 32
    %v2186 = vpop.permute.xlu0 %2185
    %vm2187 = vcmask 392448
    %s2188 = scalar_lea.vmem %s1, 24
    %2189 = vst.msk [vmem:[%s2188] sm:$0xff] %vm2187, %v2186
    %s2190 = scalar_lea.vmem [#allocation0], 450
    %v2191 = vld [vmem:[%s2190] ss:$8 sm:$0xf]
    %s2192 = scalar_lea.vmem [#allocation0], 450
    %v2193 = vld [vmem:[%s2192] ss:$8 sm:$0xf0]
    %vm2194 = vcmask 1047556
    %v2195 = vsel %vm2194, %v2193, %v2191
    %2196 = vrot.lane.b32.xlu0 %v2195, 32
    %v2197 = vpop.permute.xlu0 %2196
    %vm2198 = vcmask 392448
    %s2199 = scalar_lea.vmem %s1, 56
    %2200 = vst.msk [vmem:[%s2199] sm:$0xff] %vm2198, %v2197
    %s2201 = scalar_lea.vmem [#allocation0], 706
    %v2202 = vld [vmem:[%s2201] ss:$8 sm:$0xf]
    %s2203 = scalar_lea.vmem [#allocation0], 706
    %v2204 = vld [vmem:[%s2203] ss:$8 sm:$0xf0]
    %vm2205 = vcmask 1047556
    %v2206 = vsel %vm2205, %v2204, %v2202
    %2207 = vrot.lane.b32.xlu0 %v2206, 32
    %v2208 = vpop.permute.xlu0 %2207
    %vm2209 = vcmask 392448
    %s2210 = scalar_lea.vmem %s1, 88
    %2211 = vst.msk [vmem:[%s2210] sm:$0xff] %vm2209, %v2208
    %s2212 = scalar_lea.vmem [#allocation0], 962
    %v2213 = vld [vmem:[%s2212] ss:$8 sm:$0xf]
    %s2214 = scalar_lea.vmem [#allocation0], 962
    %v2215 = vld [vmem:[%s2214] ss:$8 sm:$0xf0]
    %vm2216 = vcmask 1047556
    %v2217 = vsel %vm2216, %v2215, %v2213
    %2218 = vrot.lane.b32.xlu0 %v2217, 32
    %v2219 = vpop.permute.xlu0 %2218
    %vm2220 = vcmask 392448
    %s2221 = scalar_lea.vmem %s1, 120
    %2222 = vst.msk [vmem:[%s2221] sm:$0xff] %vm2220, %v2219
    %s2223 = scalar_lea.vmem [#allocation0], 1218
    %v2224 = vld [vmem:[%s2223] ss:$8 sm:$0xf]
    %s2225 = scalar_lea.vmem [#allocation0], 1218
    %v2226 = vld [vmem:[%s2225] ss:$8 sm:$0xf0]
    %vm2227 = vcmask 1047556
    %v2228 = vsel %vm2227, %v2226, %v2224
    %2229 = vrot.lane.b32.xlu0 %v2228, 32
    %v2230 = vpop.permute.xlu0 %2229
    %vm2231 = vcmask 392448
    %s2232 = scalar_lea.vmem %s1, 152
    %2233 = vst.msk [vmem:[%s2232] sm:$0xff] %vm2231, %v2230
    %s2234 = scalar_lea.vmem [#allocation0], 1474
    %v2235 = vld [vmem:[%s2234] ss:$8 sm:$0xf]
    %s2236 = scalar_lea.vmem [#allocation0], 1474
    %v2237 = vld [vmem:[%s2236] ss:$8 sm:$0xf0]
    %vm2238 = vcmask 1047556
    %v2239 = vsel %vm2238, %v2237, %v2235
    %2240 = vrot.lane.b32.xlu0 %v2239, 32
    %v2241 = vpop.permute.xlu0 %2240
    %vm2242 = vcmask 392448
    %s2243 = scalar_lea.vmem %s1, 184
    %2244 = vst.msk [vmem:[%s2243] sm:$0xff] %vm2242, %v2241
    %s2245 = scalar_lea.vmem [#allocation0], 1730
    %v2246 = vld [vmem:[%s2245] ss:$8 sm:$0xf]
    %s2247 = scalar_lea.vmem [#allocation0], 1730
    %v2248 = vld [vmem:[%s2247] ss:$8 sm:$0xf0]
    %vm2249 = vcmask 1047556
    %v2250 = vsel %vm2249, %v2248, %v2246
    %2251 = vrot.lane.b32.xlu0 %v2250, 32
    %v2252 = vpop.permute.xlu0 %2251
    %vm2253 = vcmask 392448
    %s2254 = scalar_lea.vmem %s1, 216
    %2255 = vst.msk [vmem:[%s2254] sm:$0xff] %vm2253, %v2252
    %s2256 = scalar_lea.vmem [#allocation0], 1986
    %v2257 = vld [vmem:[%s2256] ss:$8 sm:$0xf]
    %s2258 = scalar_lea.vmem [#allocation0], 1986
    %v2259 = vld [vmem:[%s2258] ss:$8 sm:$0xf0]
    %vm2260 = vcmask 1047556
    %v2261 = vsel %vm2260, %v2259, %v2257
    %2262 = vrot.lane.b32.xlu0 %v2261, 32
    %v2263 = vpop.permute.xlu0 %2262
    %vm2264 = vcmask 392448
    %s2265 = scalar_lea.vmem %s1, 248
    %2266 = vst.msk [vmem:[%s2265] sm:$0xff] %vm2264, %v2263
    %s2267 = scalar_lea.vmem [#allocation0], 1
    %v2268 = vld [vmem:[%s2267] ss:$8 sm:$0xf]
    %s2269 = scalar_lea.vmem [#allocation0], 1
    %v2270 = vld [vmem:[%s2269] ss:$8 sm:$0xf0]
    %vm2271 = vcmask 1047556
    %v2272 = vsel %vm2271, %v2270, %v2268
    %2273 = vrot.lane.b32.xlu0 %v2272, 16
    %v2274 = vpop.permute.xlu0 %2273
    %vm2275 = vcmask 261248
    %2276 = vst.msk [vmem:[%s1] sm:$0xff] %vm2275, %v2274
    %s2277 = scalar_lea.vmem [#allocation0], 257
    %v2278 = vld [vmem:[%s2277] ss:$8 sm:$0xf]
    %s2279 = scalar_lea.vmem [#allocation0], 257
    %v2280 = vld [vmem:[%s2279] ss:$8 sm:$0xf0]
    %vm2281 = vcmask 1047556
    %v2282 = vsel %vm2281, %v2280, %v2278
    %2283 = vrot.lane.b32.xlu0 %v2282, 16
    %v2284 = vpop.permute.xlu0 %2283
    %vm2285 = vcmask 261248
    %s2286 = scalar_lea.vmem %s1, 32
    %2287 = vst.msk [vmem:[%s2286] sm:$0xff] %vm2285, %v2284
    %s2288 = scalar_lea.vmem [#allocation0], 513
    %v2289 = vld [vmem:[%s2288] ss:$8 sm:$0xf]
    %s2290 = scalar_lea.vmem [#allocation0], 513
    %v2291 = vld [vmem:[%s2290] ss:$8 sm:$0xf0]
    %vm2292 = vcmask 1047556
    %v2293 = vsel %vm2292, %v2291, %v2289
    %2294 = vrot.lane.b32.xlu0 %v2293, 16
    %v2295 = vpop.permute.xlu0 %2294
    %vm2296 = vcmask 261248
    %s2297 = scalar_lea.vmem %s1, 64
    %2298 = vst.msk [vmem:[%s2297] sm:$0xff] %vm2296, %v2295
    %s2299 = scalar_lea.vmem [#allocation0], 769
    %v2300 = vld [vmem:[%s2299] ss:$8 sm:$0xf]
    %s2301 = scalar_lea.vmem [#allocation0], 769
    %v2302 = vld [vmem:[%s2301] ss:$8 sm:$0xf0]
    %vm2303 = vcmask 1047556
    %v2304 = vsel %vm2303, %v2302, %v2300
    %2305 = vrot.lane.b32.xlu0 %v2304, 16
    %v2306 = vpop.permute.xlu0 %2305
    %vm2307 = vcmask 261248
    %s2308 = scalar_lea.vmem %s1, 96
    %2309 = vst.msk [vmem:[%s2308] sm:$0xff] %vm2307, %v2306
    %s2310 = scalar_lea.vmem [#allocation0], 1025
    %v2311 = vld [vmem:[%s2310] ss:$8 sm:$0xf]
    %s2312 = scalar_lea.vmem [#allocation0], 1025
    %v2313 = vld [vmem:[%s2312] ss:$8 sm:$0xf0]
    %vm2314 = vcmask 1047556
    %v2315 = vsel %vm2314, %v2313, %v2311
    %2316 = vrot.lane.b32.xlu0 %v2315, 16
    %v2317 = vpop.permute.xlu0 %2316
    %vm2318 = vcmask 261248
    %s2319 = scalar_lea.vmem %s1, 128
    %2320 = vst.msk [vmem:[%s2319] sm:$0xff] %vm2318, %v2317
    %s2321 = scalar_lea.vmem [#allocation0], 1281
    %v2322 = vld [vmem:[%s2321] ss:$8 sm:$0xf]
    %s2323 = scalar_lea.vmem [#allocation0], 1281
    %v2324 = vld [vmem:[%s2323] ss:$8 sm:$0xf0]
    %vm2325 = vcmask 1047556
    %v2326 = vsel %vm2325, %v2324, %v2322
    %2327 = vrot.lane.b32.xlu0 %v2326, 16
    %v2328 = vpop.permute.xlu0 %2327
    %vm2329 = vcmask 261248
    %s2330 = scalar_lea.vmem %s1, 160
    %2331 = vst.msk [vmem:[%s2330] sm:$0xff] %vm2329, %v2328
    %s2332 = scalar_lea.vmem [#allocation0], 1537
    %v2333 = vld [vmem:[%s2332] ss:$8 sm:$0xf]
    %s2334 = scalar_lea.vmem [#allocation0], 1537
    %v2335 = vld [vmem:[%s2334] ss:$8 sm:$0xf0]
    %vm2336 = vcmask 1047556
    %v2337 = vsel %vm2336, %v2335, %v2333
    %2338 = vrot.lane.b32.xlu0 %v2337, 16
    %v2339 = vpop.permute.xlu0 %2338
    %vm2340 = vcmask 261248
    %s2341 = scalar_lea.vmem %s1, 192
    %2342 = vst.msk [vmem:[%s2341] sm:$0xff] %vm2340, %v2339
    %s2343 = scalar_lea.vmem [#allocation0], 1793
    %v2344 = vld [vmem:[%s2343] ss:$8 sm:$0xf]
    %s2345 = scalar_lea.vmem [#allocation0], 1793
    %v2346 = vld [vmem:[%s2345] ss:$8 sm:$0xf0]
    %vm2347 = vcmask 1047556
    %v2348 = vsel %vm2347, %v2346, %v2344
    %2349 = vrot.lane.b32.xlu0 %v2348, 16
    %v2350 = vpop.permute.xlu0 %2349
    %vm2351 = vcmask 261248
    %s2352 = scalar_lea.vmem %s1, 224
    %2353 = vst.msk [vmem:[%s2352] sm:$0xff] %vm2351, %v2350
    %s2354 = scalar_lea.vmem [#allocation0], 65
    %v2355 = vld [vmem:[%s2354] ss:$8 sm:$0xf]
    %s2356 = scalar_lea.vmem [#allocation0], 65
    %v2357 = vld [vmem:[%s2356] ss:$8 sm:$0xf0]
    %vm2358 = vcmask 1047556
    %v2359 = vsel %vm2358, %v2357, %v2355
    %2360 = vrot.lane.b32.xlu0 %v2359, 16
    %v2361 = vpop.permute.xlu0 %2360
    %vm2362 = vcmask 261248
    %s2363 = scalar_lea.vmem %s1, 8
    %2364 = vst.msk [vmem:[%s2363] sm:$0xff] %vm2362, %v2361
    %s2365 = scalar_lea.vmem [#allocation0], 321
    %v2366 = vld [vmem:[%s2365] ss:$8 sm:$0xf]
    %s2367 = scalar_lea.vmem [#allocation0], 321
    %v2368 = vld [vmem:[%s2367] ss:$8 sm:$0xf0]
    %vm2369 = vcmask 1047556
    %v2370 = vsel %vm2369, %v2368, %v2366
    %2371 = vrot.lane.b32.xlu0 %v2370, 16
    %v2372 = vpop.permute.xlu0 %2371
    %vm2373 = vcmask 261248
    %s2374 = scalar_lea.vmem %s1, 40
    %2375 = vst.msk [vmem:[%s2374] sm:$0xff] %vm2373, %v2372
    %s2376 = scalar_lea.vmem [#allocation0], 577
    %v2377 = vld [vmem:[%s2376] ss:$8 sm:$0xf]
    %s2378 = scalar_lea.vmem [#allocation0], 577
    %v2379 = vld [vmem:[%s2378] ss:$8 sm:$0xf0]
    %vm2380 = vcmask 1047556
    %v2381 = vsel %vm2380, %v2379, %v2377
    %2382 = vrot.lane.b32.xlu0 %v2381, 16
    %v2383 = vpop.permute.xlu0 %2382
    %vm2384 = vcmask 261248
    %s2385 = scalar_lea.vmem %s1, 72
    %2386 = vst.msk [vmem:[%s2385] sm:$0xff] %vm2384, %v2383
    %s2387 = scalar_lea.vmem [#allocation0], 833
    %v2388 = vld [vmem:[%s2387] ss:$8 sm:$0xf]
    %s2389 = scalar_lea.vmem [#allocation0], 833
    %v2390 = vld [vmem:[%s2389] ss:$8 sm:$0xf0]
    %vm2391 = vcmask 1047556
    %v2392 = vsel %vm2391, %v2390, %v2388
    %2393 = vrot.lane.b32.xlu0 %v2392, 16
    %v2394 = vpop.permute.xlu0 %2393
    %vm2395 = vcmask 261248
    %s2396 = scalar_lea.vmem %s1, 104
    %2397 = vst.msk [vmem:[%s2396] sm:$0xff] %vm2395, %v2394
    %s2398 = scalar_lea.vmem [#allocation0], 1089
    %v2399 = vld [vmem:[%s2398] ss:$8 sm:$0xf]
    %s2400 = scalar_lea.vmem [#allocation0], 1089
    %v2401 = vld [vmem:[%s2400] ss:$8 sm:$0xf0]
    %vm2402 = vcmask 1047556
    %v2403 = vsel %vm2402, %v2401, %v2399
    %2404 = vrot.lane.b32.xlu0 %v2403, 16
    %v2405 = vpop.permute.xlu0 %2404
    %vm2406 = vcmask 261248
    %s2407 = scalar_lea.vmem %s1, 136
    %2408 = vst.msk [vmem:[%s2407] sm:$0xff] %vm2406, %v2405
    %s2409 = scalar_lea.vmem [#allocation0], 1345
    %v2410 = vld [vmem:[%s2409] ss:$8 sm:$0xf]
    %s2411 = scalar_lea.vmem [#allocation0], 1345
    %v2412 = vld [vmem:[%s2411] ss:$8 sm:$0xf0]
    %vm2413 = vcmask 1047556
    %v2414 = vsel %vm2413, %v2412, %v2410
    %2415 = vrot.lane.b32.xlu0 %v2414, 16
    %v2416 = vpop.permute.xlu0 %2415
    %vm2417 = vcmask 261248
    %s2418 = scalar_lea.vmem %s1, 168
    %2419 = vst.msk [vmem:[%s2418] sm:$0xff] %vm2417, %v2416
    %s2420 = scalar_lea.vmem [#allocation0], 1601
    %v2421 = vld [vmem:[%s2420] ss:$8 sm:$0xf]
    %s2422 = scalar_lea.vmem [#allocation0], 1601
    %v2423 = vld [vmem:[%s2422] ss:$8 sm:$0xf0]
    %vm2424 = vcmask 1047556
    %v2425 = vsel %vm2424, %v2423, %v2421
    %2426 = vrot.lane.b32.xlu0 %v2425, 16
    %v2427 = vpop.permute.xlu0 %2426
    %vm2428 = vcmask 261248
    %s2429 = scalar_lea.vmem %s1, 200
    %2430 = vst.msk [vmem:[%s2429] sm:$0xff] %vm2428, %v2427
    %s2431 = scalar_lea.vmem [#allocation0], 1857
    %v2432 = vld [vmem:[%s2431] ss:$8 sm:$0xf]
    %s2433 = scalar_lea.vmem [#allocation0], 1857
    %v2434 = vld [vmem:[%s2433] ss:$8 sm:$0xf0]
    %vm2435 = vcmask 1047556
    %v2436 = vsel %vm2435, %v2434, %v2432
    %2437 = vrot.lane.b32.xlu0 %v2436, 16
    %v2438 = vpop.permute.xlu0 %2437
    %vm2439 = vcmask 261248
    %s2440 = scalar_lea.vmem %s1, 232
    %2441 = vst.msk [vmem:[%s2440] sm:$0xff] %vm2439, %v2438
    %s2442 = scalar_lea.vmem [#allocation0], 129
    %v2443 = vld [vmem:[%s2442] ss:$8 sm:$0xf]
    %s2444 = scalar_lea.vmem [#allocation0], 129
    %v2445 = vld [vmem:[%s2444] ss:$8 sm:$0xf0]
    %vm2446 = vcmask 1047556
    %v2447 = vsel %vm2446, %v2445, %v2443
    %2448 = vrot.lane.b32.xlu0 %v2447, 16
    %v2449 = vpop.permute.xlu0 %2448
    %vm2450 = vcmask 261248
    %s2451 = scalar_lea.vmem %s1, 16
    %2452 = vst.msk [vmem:[%s2451] sm:$0xff] %vm2450, %v2449
    %s2453 = scalar_lea.vmem [#allocation0], 385
    %v2454 = vld [vmem:[%s2453] ss:$8 sm:$0xf]
    %s2455 = scalar_lea.vmem [#allocation0], 385
    %v2456 = vld [vmem:[%s2455] ss:$8 sm:$0xf0]
    %vm2457 = vcmask 1047556
    %v2458 = vsel %vm2457, %v2456, %v2454
    %2459 = vrot.lane.b32.xlu0 %v2458, 16
    %v2460 = vpop.permute.xlu0 %2459
    %vm2461 = vcmask 261248
    %s2462 = scalar_lea.vmem %s1, 48
    %2463 = vst.msk [vmem:[%s2462] sm:$0xff] %vm2461, %v2460
    %s2464 = scalar_lea.vmem [#allocation0], 641
    %v2465 = vld [vmem:[%s2464] ss:$8 sm:$0xf]
    %s2466 = scalar_lea.vmem [#allocation0], 641
    %v2467 = vld [vmem:[%s2466] ss:$8 sm:$0xf0]
    %vm2468 = vcmask 1047556
    %v2469 = vsel %vm2468, %v2467, %v2465
    %2470 = vrot.lane.b32.xlu0 %v2469, 16
    %v2471 = vpop.permute.xlu0 %2470
    %vm2472 = vcmask 261248
    %s2473 = scalar_lea.vmem %s1, 80
    %2474 = vst.msk [vmem:[%s2473] sm:$0xff] %vm2472, %v2471
    %s2475 = scalar_lea.vmem [#allocation0], 897
    %v2476 = vld [vmem:[%s2475] ss:$8 sm:$0xf]
    %s2477 = scalar_lea.vmem [#allocation0], 897
    %v2478 = vld [vmem:[%s2477] ss:$8 sm:$0xf0]
    %vm2479 = vcmask 1047556
    %v2480 = vsel %vm2479, %v2478, %v2476
    %2481 = vrot.lane.b32.xlu0 %v2480, 16
    %v2482 = vpop.permute.xlu0 %2481
    %vm2483 = vcmask 261248
    %s2484 = scalar_lea.vmem %s1, 112
    %2485 = vst.msk [vmem:[%s2484] sm:$0xff] %vm2483, %v2482
    %s2486 = scalar_lea.vmem [#allocation0], 1153
    %v2487 = vld [vmem:[%s2486] ss:$8 sm:$0xf]
    %s2488 = scalar_lea.vmem [#allocation0], 1153
    %v2489 = vld [vmem:[%s2488] ss:$8 sm:$0xf0]
    %vm2490 = vcmask 1047556
    %v2491 = vsel %vm2490, %v2489, %v2487
    %2492 = vrot.lane.b32.xlu0 %v2491, 16
    %v2493 = vpop.permute.xlu0 %2492
    %vm2494 = vcmask 261248
    %s2495 = scalar_lea.vmem %s1, 144
    %2496 = vst.msk [vmem:[%s2495] sm:$0xff] %vm2494, %v2493
    %s2497 = scalar_lea.vmem [#allocation0], 1409
    %v2498 = vld [vmem:[%s2497] ss:$8 sm:$0xf]
    %s2499 = scalar_lea.vmem [#allocation0], 1409
    %v2500 = vld [vmem:[%s2499] ss:$8 sm:$0xf0]
    %vm2501 = vcmask 1047556
    %v2502 = vsel %vm2501, %v2500, %v2498
    %2503 = vrot.lane.b32.xlu0 %v2502, 16
    %v2504 = vpop.permute.xlu0 %2503
    %vm2505 = vcmask 261248
    %s2506 = scalar_lea.vmem %s1, 176
    %2507 = vst.msk [vmem:[%s2506] sm:$0xff] %vm2505, %v2504
    %s2508 = scalar_lea.vmem [#allocation0], 1665
    %v2509 = vld [vmem:[%s2508] ss:$8 sm:$0xf]
    %s2510 = scalar_lea.vmem [#allocation0], 1665
    %v2511 = vld [vmem:[%s2510] ss:$8 sm:$0xf0]
    %vm2512 = vcmask 1047556
    %v2513 = vsel %vm2512, %v2511, %v2509
    %2514 = vrot.lane.b32.xlu0 %v2513, 16
    %v2515 = vpop.permute.xlu0 %2514
    %vm2516 = vcmask 261248
    %s2517 = scalar_lea.vmem %s1, 208
    %2518 = vst.msk [vmem:[%s2517] sm:$0xff] %vm2516, %v2515
    %s2519 = scalar_lea.vmem [#allocation0], 1921
    %v2520 = vld [vmem:[%s2519] ss:$8 sm:$0xf]
    %s2521 = scalar_lea.vmem [#allocation0], 1921
    %v2522 = vld [vmem:[%s2521] ss:$8 sm:$0xf0]
    %vm2523 = vcmask 1047556
    %v2524 = vsel %vm2523, %v2522, %v2520
    %2525 = vrot.lane.b32.xlu0 %v2524, 16
    %v2526 = vpop.permute.xlu0 %2525
    %vm2527 = vcmask 261248
    %s2528 = scalar_lea.vmem %s1, 240
    %2529 = vst.msk [vmem:[%s2528] sm:$0xff] %vm2527, %v2526
    %s2530 = scalar_lea.vmem [#allocation0], 193
    %v2531 = vld [vmem:[%s2530] ss:$8 sm:$0xf]
    %s2532 = scalar_lea.vmem [#allocation0], 193
    %v2533 = vld [vmem:[%s2532] ss:$8 sm:$0xf0]
    %vm2534 = vcmask 1047556
    %v2535 = vsel %vm2534, %v2533, %v2531
    %2536 = vrot.lane.b32.xlu0 %v2535, 16
    %v2537 = vpop.permute.xlu0 %2536
    %vm2538 = vcmask 261248
    %s2539 = scalar_lea.vmem %s1, 24
    %2540 = vst.msk [vmem:[%s2539] sm:$0xff] %vm2538, %v2537
    %s2541 = scalar_lea.vmem [#allocation0], 449
    %v2542 = vld [vmem:[%s2541] ss:$8 sm:$0xf]
    %s2543 = scalar_lea.vmem [#allocation0], 449
    %v2544 = vld [vmem:[%s2543] ss:$8 sm:$0xf0]
    %vm2545 = vcmask 1047556
    %v2546 = vsel %vm2545, %v2544, %v2542
    %2547 = vrot.lane.b32.xlu0 %v2546, 16
    %v2548 = vpop.permute.xlu0 %2547
    %vm2549 = vcmask 261248
    %s2550 = scalar_lea.vmem %s1, 56
    %2551 = vst.msk [vmem:[%s2550] sm:$0xff] %vm2549, %v2548
    %s2552 = scalar_lea.vmem [#allocation0], 705
    %v2553 = vld [vmem:[%s2552] ss:$8 sm:$0xf]
    %s2554 = scalar_lea.vmem [#allocation0], 705
    %v2555 = vld [vmem:[%s2554] ss:$8 sm:$0xf0]
    %vm2556 = vcmask 1047556
    %v2557 = vsel %vm2556, %v2555, %v2553
    %2558 = vrot.lane.b32.xlu0 %v2557, 16
    %v2559 = vpop.permute.xlu0 %2558
    %vm2560 = vcmask 261248
    %s2561 = scalar_lea.vmem %s1, 88
    %2562 = vst.msk [vmem:[%s2561] sm:$0xff] %vm2560, %v2559
    %s2563 = scalar_lea.vmem [#allocation0], 961
    %v2564 = vld [vmem:[%s2563] ss:$8 sm:$0xf]
    %s2565 = scalar_lea.vmem [#allocation0], 961
    %v2566 = vld [vmem:[%s2565] ss:$8 sm:$0xf0]
    %vm2567 = vcmask 1047556
    %v2568 = vsel %vm2567, %v2566, %v2564
    %2569 = vrot.lane.b32.xlu0 %v2568, 16
    %v2570 = vpop.permute.xlu0 %2569
    %vm2571 = vcmask 261248
    %s2572 = scalar_lea.vmem %s1, 120
    %2573 = vst.msk [vmem:[%s2572] sm:$0xff] %vm2571, %v2570
    %s2574 = scalar_lea.vmem [#allocation0], 1217
    %v2575 = vld [vmem:[%s2574] ss:$8 sm:$0xf]
    %s2576 = scalar_lea.vmem [#allocation0], 1217
    %v2577 = vld [vmem:[%s2576] ss:$8 sm:$0xf0]
    %vm2578 = vcmask 1047556
    %v2579 = vsel %vm2578, %v2577, %v2575
    %2580 = vrot.lane.b32.xlu0 %v2579, 16
    %v2581 = vpop.permute.xlu0 %2580
    %vm2582 = vcmask 261248
    %s2583 = scalar_lea.vmem %s1, 152
    %2584 = vst.msk [vmem:[%s2583] sm:$0xff] %vm2582, %v2581
    %s2585 = scalar_lea.vmem [#allocation0], 1473
    %v2586 = vld [vmem:[%s2585] ss:$8 sm:$0xf]
    %s2587 = scalar_lea.vmem [#allocation0], 1473
    %v2588 = vld [vmem:[%s2587] ss:$8 sm:$0xf0]
    %vm2589 = vcmask 1047556
    %v2590 = vsel %vm2589, %v2588, %v2586
    %2591 = vrot.lane.b32.xlu0 %v2590, 16
    %v2592 = vpop.permute.xlu0 %2591
    %vm2593 = vcmask 261248
    %s2594 = scalar_lea.vmem %s1, 184
    %2595 = vst.msk [vmem:[%s2594] sm:$0xff] %vm2593, %v2592
    %s2596 = scalar_lea.vmem [#allocation0], 1729
    %v2597 = vld [vmem:[%s2596] ss:$8 sm:$0xf]
    %s2598 = scalar_lea.vmem [#allocation0], 1729
    %v2599 = vld [vmem:[%s2598] ss:$8 sm:$0xf0]
    %vm2600 = vcmask 1047556
    %v2601 = vsel %vm2600, %v2599, %v2597
    %2602 = vrot.lane.b32.xlu0 %v2601, 16
    %v2603 = vpop.permute.xlu0 %2602
    %vm2604 = vcmask 261248
    %s2605 = scalar_lea.vmem %s1, 216
    %2606 = vst.msk [vmem:[%s2605] sm:$0xff] %vm2604, %v2603
    %s2607 = scalar_lea.vmem [#allocation0], 1985
    %v2608 = vld [vmem:[%s2607] ss:$8 sm:$0xf]
    %s2609 = scalar_lea.vmem [#allocation0], 1985
    %v2610 = vld [vmem:[%s2609] ss:$8 sm:$0xf0]
    %vm2611 = vcmask 1047556
    %v2612 = vsel %vm2611, %v2610, %v2608
    %2613 = vrot.lane.b32.xlu0 %v2612, 16
    %v2614 = vpop.permute.xlu0 %2613
    %vm2615 = vcmask 261248
    %s2616 = scalar_lea.vmem %s1, 248
    %2617 = vst.msk [vmem:[%s2616] sm:$0xff] %vm2615, %v2614

// kernel: _stage_forward.1
$region0: #{_stage_forward.1}
  #allocation0 [shape = 'u32[]', space=smem, size = 0x4, offset = 0x4, fixed_abs, tag = 'smem constant byte address 0x4 - core index']
  #allocation1 [shape = 'u32[144,128]{1,0:T(1,128)}', space=vmem, size = 0x12000, scoped, tag = 'internal scratch']
  %s0 = inlined_call_operand.vmem [shape: f32[128,32], index: 0, kind: input, shape index: {}]
  %s1 = inlined_call_operand.vmem [shape: f32[4,1,32], index: 1, kind: input, shape index: {}]
  %s2 = inlined_call_operand.vmem [shape: bf16[256,32], index: 2, kind: input, shape index: {}]
  %s3 = inlined_call_operand.vmem [shape: f32[2,1,32], index: 3, kind: input, shape index: {}]
  %s4 = inlined_call_operand.vmem [shape: f32[2,1,32], index: 4, kind: input, shape index: {}]
  %s5 = inlined_call_operand.vmem [shape: bf16[2,32,96], index: 5, kind: input, shape index: {}]
  %s6 = inlined_call_operand.vmem [shape: f32[2,1,96], index: 6, kind: input, shape index: {}]
  %s7 = inlined_call_operand.vmem [shape: bf16[2,32,32], index: 7, kind: input, shape index: {}]
  %s8 = inlined_call_operand.vmem [shape: f32[2,1,32], index: 8, kind: input, shape index: {}]
  %s9 = inlined_call_operand.vmem [shape: f32[2,1,32], index: 9, kind: input, shape index: {}]
  %s10 = inlined_call_operand.vmem [shape: f32[2,1,32], index: 10, kind: input, shape index: {}]
  %s11 = inlined_call_operand.vmem [shape: bf16[2,32,128], index: 11, kind: input, shape index: {}]
  %s12 = inlined_call_operand.vmem [shape: f32[2,1,128], index: 12, kind: input, shape index: {}]
  %s13 = inlined_call_operand.vmem [shape: bf16[2,128,32], index: 13, kind: input, shape index: {}]
  %s14 = inlined_call_operand.vmem [shape: f32[2,1,32], index: 14, kind: input, shape index: {}]
  %s15 = inlined_call_operand.vmem [shape: bf16[2,64,256], index: 15, kind: input, shape index: {}]
  %s16 = inlined_call_operand.vmem [shape: f32[128,32], index: 16, kind: output, shape index: {}]
  %s17 = sld [smem:[#allocation0]]
  $region74: #{_stage_forward.1} parent=0
    _
  %s19 = ssub.s32 1, %s17
  %s20 = scalar_select 0, %s19, %s17
  // Predicated region
  $region2: #{_stage_forward.1} parent=0 // pred_check
    _
  $region3: #{_stage_forward.1} parent=0 // pred_check_branch
    %22 = sbr.rel (0) target = $region5
  $region4: #{_stage_forward.1} parent=0 // pred_region
    _
  $region5: #{_stage_forward.1} parent=0 // pred_fallthru
    _
  // Predicated region
  $region6: #{_stage_forward.1} parent=0 // pred_check
    _
  $region7: #{_stage_forward.1} parent=0 // pred_check_branch
    %24 = sbr.rel (0) target = $region9
  $region8: #{_stage_forward.1} parent=0 // pred_region
    _
  $region9: #{_stage_forward.1} parent=0 // pred_fallthru
    _
  // Predicated region
  $region10: #{_stage_forward.1} parent=0 // pred_check
    _
  $region11: #{_stage_forward.1} parent=0 // pred_check_branch
    %26 = sbr.rel (0) target = $region13
  $region12: #{_stage_forward.1} parent=0 // pred_region
    _
  $region13: #{_stage_forward.1} parent=0 // pred_fallthru
    _
  // Predicated region
  $region14: #{_stage_forward.1} parent=0 // pred_check
    _
  $region15: #{_stage_forward.1} parent=0 // pred_check_branch
    %28 = sbr.rel (0) target = $region17
  $region16: #{_stage_forward.1} parent=0 // pred_region
    _
  $region17: #{_stage_forward.1} parent=0 // pred_fallthru
    _
  // Predicated region
  $region18: #{_stage_forward.1} parent=0 // pred_check
    _
  $region19: #{_stage_forward.1} parent=0 // pred_check_branch
    %30 = sbr.rel (0) target = $region21
  $region20: #{_stage_forward.1} parent=0 // pred_region
    _
  $region21: #{_stage_forward.1} parent=0 // pred_fallthru
    _
  // Predicated region
  $region22: #{_stage_forward.1} parent=0 // pred_check
    _
  $region23: #{_stage_forward.1} parent=0 // pred_check_branch
    %32 = sbr.rel (0) target = $region25
  $region24: #{_stage_forward.1} parent=0 // pred_region
    _
  $region25: #{_stage_forward.1} parent=0 // pred_fallthru
    _
  // Predicated region
  $region26: #{_stage_forward.1} parent=0 // pred_check
    _
  $region27: #{_stage_forward.1} parent=0 // pred_check_branch
    %34 = sbr.rel (0) target = $region29
  $region28: #{_stage_forward.1} parent=0 // pred_region
    _
  $region29: #{_stage_forward.1} parent=0 // pred_fallthru
    _
  // Predicated region
  $region30: #{_stage_forward.1} parent=0 // pred_check
    _
  $region31: #{_stage_forward.1} parent=0 // pred_check_branch
    %36 = sbr.rel (0) target = $region33
  $region32: #{_stage_forward.1} parent=0 // pred_region
    _
  $region33: #{_stage_forward.1} parent=0 // pred_fallthru
    _
  // Predicated region
  $region34: #{_stage_forward.1} parent=0 // pred_check
    _
  $region35: #{_stage_forward.1} parent=0 // pred_check_branch
    %38 = sbr.rel (0) target = $region37
  $region36: #{_stage_forward.1} parent=0 // pred_region
    _
  $region37: #{_stage_forward.1} parent=0 // pred_fallthru
    _
  // Predicated region
  $region38: #{_stage_forward.1} parent=0 // pred_check
    _
  $region39: #{_stage_forward.1} parent=0 // pred_check_branch
    %40 = sbr.rel (0) target = $region41
  $region40: #{_stage_forward.1} parent=0 // pred_region
    _
  $region41: #{_stage_forward.1} parent=0 // pred_fallthru
    _
  // Predicated region
  $region42: #{_stage_forward.1} parent=0 // pred_check
    _
  $region43: #{_stage_forward.1} parent=0 // pred_check_branch
    %42 = sbr.rel (0) target = $region45
  $region44: #{_stage_forward.1} parent=0 // pred_region
    _
  $region45: #{_stage_forward.1} parent=0 // pred_fallthru
    _
  // Predicated region
  $region46: #{_stage_forward.1} parent=0 // pred_check
    _
  $region47: #{_stage_forward.1} parent=0 // pred_check_branch
    %44 = sbr.rel (0) target = $region49
  $region48: #{_stage_forward.1} parent=0 // pred_region
    _
  $region49: #{_stage_forward.1} parent=0 // pred_fallthru
    _
  // Predicated region
  $region50: #{_stage_forward.1} parent=0 // pred_check
    _
  $region51: #{_stage_forward.1} parent=0 // pred_check_branch
    %46 = sbr.rel (0) target = $region53
  $region52: #{_stage_forward.1} parent=0 // pred_region
    _
  $region53: #{_stage_forward.1} parent=0 // pred_fallthru
    _
  // Predicated region
  $region54: #{_stage_forward.1} parent=0 // pred_check
    _
  $region55: #{_stage_forward.1} parent=0 // pred_check_branch
    %48 = sbr.rel (0) target = $region57
  $region56: #{_stage_forward.1} parent=0 // pred_region
    _
  $region57: #{_stage_forward.1} parent=0 // pred_fallthru
    _
  // Predicated region
  $region58: #{_stage_forward.1} parent=0 // pred_check
    _
  $region59: #{_stage_forward.1} parent=0 // pred_check_branch
    %50 = sbr.rel (0) target = $region61
  $region60: #{_stage_forward.1} parent=0 // pred_region
    _
  $region61: #{_stage_forward.1} parent=0 // pred_fallthru
    _
  // Predicated region
  $region62: #{_stage_forward.1} parent=0 // pred_check
    _
  $region63: #{_stage_forward.1} parent=0 // pred_check_branch
    %52 = sbr.rel (0) target = $region65
  $region64: #{_stage_forward.1} parent=0 // pred_region
    _
  $region65: #{_stage_forward.1} parent=0 // pred_fallthru
    _
  %v54 = vld [vmem:[%s0] sm:$0xff]
  %v55 = vld [vmem:[%s0 + $0x8] sm:$0xff]
  %v56 = vld [vmem:[%s0 + $0x10] sm:$0xff]
  %v57 = vld [vmem:[%s0 + $0x18] sm:$0xff]
  %v58 = vld [vmem:[%s0 + $0x20] sm:$0xff]
  %v59 = vld [vmem:[%s0 + $0x28] sm:$0xff]
  %v60 = vld [vmem:[%s0 + $0x30] sm:$0xff]
  %v61 = vld [vmem:[%s0 + $0x38] sm:$0xff]
  %v62 = vld [vmem:[%s0 + $0x40] sm:$0xff]
  %v63 = vld [vmem:[%s0 + $0x48] sm:$0xff]
  %v64 = vld [vmem:[%s0 + $0x50] sm:$0xff]
  %v65 = vld [vmem:[%s0 + $0x58] sm:$0xff]
  %v66 = vld [vmem:[%s0 + $0x60] sm:$0xff]
  %v67 = vld [vmem:[%s0 + $0x68] sm:$0xff]
  %v68 = vld [vmem:[%s0 + $0x70] sm:$0xff]
  %v69 = vld [vmem:[%s0 + $0x78] sm:$0xff]
  %v70 = vld [vmem:[%s1] sm:$0x1]
  %s71 = scalar_lea.vmem %s1, 1
  %v72 = vld [vmem:[%s71] sm:$0x1]
  %s73 = scalar_lea.vmem %s1, 2
  %v74 = vld [vmem:[%s73] sm:$0x1]
  %s75 = scalar_lea.vmem %s1, 3
  %v76 = vld [vmem:[%s75] sm:$0x1]
  %v77 = vld [vmem:[%s2] sm:$0xf]
  %v78 = vld [vmem:[%s2 + $0x4] sm:$0xf]
  %v79 = vld [vmem:[%s2 + $0x8] sm:$0xf]
  %v80 = vld [vmem:[%s2 + $0xc] sm:$0xf]
  %v81 = vld [vmem:[%s2 + $0x10] sm:$0xf]
  %v82 = vld [vmem:[%s2 + $0x14] sm:$0xf]
  %v83 = vld [vmem:[%s2 + $0x18] sm:$0xf]
  %v84 = vld [vmem:[%s2 + $0x1c] sm:$0xf]
  %v85 = vld [vmem:[%s2 + $0x20] sm:$0xf]
  %v86 = vld [vmem:[%s2 + $0x24] sm:$0xf]
  %v87 = vld [vmem:[%s2 + $0x28] sm:$0xf]
  %v88 = vld [vmem:[%s2 + $0x2c] sm:$0xf]
  %v89 = vld [vmem:[%s2 + $0x30] sm:$0xf]
  %v90 = vld [vmem:[%s2 + $0x34] sm:$0xf]
  %v91 = vld [vmem:[%s2 + $0x38] sm:$0xf]
  %v92 = vld [vmem:[%s2 + $0x3c] sm:$0xf]
  %v93 = vld [vmem:[%s2 + $0x40] sm:$0xf]
  %v94 = vld [vmem:[%s2 + $0x44] sm:$0xf]
  %v95 = vld [vmem:[%s2 + $0x48] sm:$0xf]
  %v96 = vld [vmem:[%s2 + $0x4c] sm:$0xf]
  %v97 = vld [vmem:[%s2 + $0x50] sm:$0xf]
  %v98 = vld [vmem:[%s2 + $0x54] sm:$0xf]
  %v99 = vld [vmem:[%s2 + $0x58] sm:$0xf]
  %v100 = vld [vmem:[%s2 + $0x5c] sm:$0xf]
  %v101 = vld [vmem:[%s2 + $0x60] sm:$0xf]
  %v102 = vld [vmem:[%s2 + $0x64] sm:$0xf]
  %v103 = vld [vmem:[%s2 + $0x68] sm:$0xf]
  %v104 = vld [vmem:[%s2 + $0x6c] sm:$0xf]
  %v105 = vld [vmem:[%s2 + $0x70] sm:$0xf]
  %v106 = vld [vmem:[%s2 + $0x74] sm:$0xf]
  %v107 = vld [vmem:[%s2 + $0x78] sm:$0xf]
  %v108 = vld [vmem:[%s2 + $0x7c] sm:$0xf]
  %vm109 = vcmask 261120
  %v110 = vsel %vm109, %v54, 0.0
  %111 = vadd.xlane.f32.xlu0 %v110
  %v112 = vpop.xlane.xlu0 %111
  %v113 = vsel %vm109, %v55, 0.0
  %114 = vadd.xlane.f32.xlu0 %v113
  %v115 = vpop.xlane.xlu0 %114
  %v116 = vsel %vm109, %v56, 0.0
  %117 = vadd.xlane.f32.xlu0 %v116
  %v118 = vpop.xlane.xlu0 %117
  %v119 = vsel %vm109, %v57, 0.0
  %120 = vadd.xlane.f32.xlu0 %v119
  %v121 = vpop.xlane.xlu0 %120
  %v122 = vsel %vm109, %v58, 0.0
  %123 = vadd.xlane.f32.xlu0 %v122
  %v124 = vpop.xlane.xlu0 %123
  %v125 = vsel %vm109, %v59, 0.0
  %126 = vadd.xlane.f32.xlu0 %v125
  %v127 = vpop.xlane.xlu0 %126
  %v128 = vsel %vm109, %v60, 0.0
  %129 = vadd.xlane.f32.xlu0 %v128
  %v130 = vpop.xlane.xlu0 %129
  %v131 = vsel %vm109, %v61, 0.0
  %132 = vadd.xlane.f32.xlu0 %v131
  %v133 = vpop.xlane.xlu0 %132
  %v134 = vsel %vm109, %v62, 0.0
  %135 = vadd.xlane.f32.xlu0 %v134
  %v136 = vpop.xlane.xlu0 %135
  %v137 = vsel %vm109, %v63, 0.0
  %138 = vadd.xlane.f32.xlu0 %v137
  %v139 = vpop.xlane.xlu0 %138
  %v140 = vsel %vm109, %v64, 0.0
  %141 = vadd.xlane.f32.xlu0 %v140
  %v142 = vpop.xlane.xlu0 %141
  %v143 = vsel %vm109, %v65, 0.0
  %144 = vadd.xlane.f32.xlu0 %v143
  %v145 = vpop.xlane.xlu0 %144
  %v146 = vsel %vm109, %v66, 0.0
  %147 = vadd.xlane.f32.xlu0 %v146
  %v148 = vpop.xlane.xlu0 %147
  %v149 = vsel %vm109, %v67, 0.0
  %150 = vadd.xlane.f32.xlu0 %v149
  %v151 = vpop.xlane.xlu0 %150
  %v152 = vsel %vm109, %v68, 0.0
  %153 = vadd.xlane.f32.xlu0 %v152
  %v154 = vpop.xlane.xlu0 %153
  %v155 = vsel %vm109, %v69, 0.0
  %156 = vadd.xlane.f32.xlu0 %v155
  %v157 = vpop.xlane.xlu0 %156
  %v158 = vrcp.pop 32.0
  %v159 = vmul.f32 %v112, %v158
  %v160 = vmul.f32 %v115, %v158
  %v161 = vmul.f32 %v118, %v158
  %v162 = vmul.f32 %v121, %v158
  %v163 = vmul.f32 %v124, %v158
  %v164 = vmul.f32 %v127, %v158
  %v165 = vmul.f32 %v130, %v158
  %v166 = vmul.f32 %v133, %v158
  %v167 = vmul.f32 %v136, %v158
  %v168 = vmul.f32 %v139, %v158
  %v169 = vmul.f32 %v142, %v158
  %v170 = vmul.f32 %v145, %v158
  %v171 = vmul.f32 %v148, %v158
  %v172 = vmul.f32 %v151, %v158
  %v173 = vmul.f32 %v154, %v158
  %v174 = vmul.f32 %v157, %v158
  %v175 = vsub.f32 %v54, %v159
  %v176 = vsub.f32 %v55, %v160
  %v177 = vsub.f32 %v56, %v161
  %v178 = vsub.f32 %v57, %v162
  %v179 = vsub.f32 %v58, %v163
  %v180 = vsub.f32 %v59, %v164
  %v181 = vsub.f32 %v60, %v165
  %v182 = vsub.f32 %v61, %v166
  %v183 = vsub.f32 %v62, %v167
  %v184 = vsub.f32 %v63, %v168
  %v185 = vsub.f32 %v64, %v169
  %v186 = vsub.f32 %v65, %v170
  %v187 = vsub.f32 %v66, %v171
  %v188 = vsub.f32 %v67, %v172
  %v189 = vsub.f32 %v68, %v173
  %v190 = vsub.f32 %v69, %v174
  %v191 = vmul.f32 %v175, %v175
  %v192 = vmul.f32 %v176, %v176
  %v193 = vmul.f32 %v177, %v177
  %v194 = vmul.f32 %v178, %v178
  %v195 = vmul.f32 %v179, %v179
  %v196 = vmul.f32 %v180, %v180
  %v197 = vmul.f32 %v181, %v181
  %v198 = vmul.f32 %v182, %v182
  %v199 = vmul.f32 %v183, %v183
  %v200 = vmul.f32 %v184, %v184
  %v201 = vmul.f32 %v185, %v185
  %v202 = vmul.f32 %v186, %v186
  %v203 = vmul.f32 %v187, %v187
  %v204 = vmul.f32 %v188, %v188
  %v205 = vmul.f32 %v189, %v189
  %v206 = vmul.f32 %v190, %v190
  %v207 = vsel %vm109, %v191, 0.0
  %208 = vadd.xlane.f32.xlu0 %v207
  %v209 = vpop.xlane.xlu0 %208
  %v210 = vsel %vm109, %v192, 0.0
  %211 = vadd.xlane.f32.xlu0 %v210
  %v212 = vpop.xlane.xlu0 %211
  %v213 = vsel %vm109, %v193, 0.0
  %214 = vadd.xlane.f32.xlu0 %v213
  %v215 = vpop.xlane.xlu0 %214
  %v216 = vsel %vm109, %v194, 0.0
  %217 = vadd.xlane.f32.xlu0 %v216
  %v218 = vpop.xlane.xlu0 %217
  %v219 = vsel %vm109, %v195, 0.0
  %220 = vadd.xlane.f32.xlu0 %v219
  %v221 = vpop.xlane.xlu0 %220
  %v222 = vsel %vm109, %v196, 0.0
  %223 = vadd.xlane.f32.xlu0 %v222
  %v224 = vpop.xlane.xlu0 %223
  %v225 = vsel %vm109, %v197, 0.0
  %226 = vadd.xlane.f32.xlu0 %v225
  %v227 = vpop.xlane.xlu0 %226
  %v228 = vsel %vm109, %v198, 0.0
  %229 = vadd.xlane.f32.xlu0 %v228
  %v230 = vpop.xlane.xlu0 %229
  %v231 = vsel %vm109, %v199, 0.0
  %232 = vadd.xlane.f32.xlu0 %v231
  %v233 = vpop.xlane.xlu0 %232
  %v234 = vsel %vm109, %v200, 0.0
  %235 = vadd.xlane.f32.xlu0 %v234
  %v236 = vpop.xlane.xlu0 %235
  %v237 = vsel %vm109, %v201, 0.0
  %238 = vadd.xlane.f32.xlu0 %v237
  %v239 = vpop.xlane.xlu0 %238
  %v240 = vsel %vm109, %v202, 0.0
  %241 = vadd.xlane.f32.xlu0 %v240
  %v242 = vpop.xlane.xlu0 %241
  %v243 = vsel %vm109, %v203, 0.0
  %244 = vadd.xlane.f32.xlu0 %v243
  %v245 = vpop.xlane.xlu0 %244
  %v246 = vsel %vm109, %v204, 0.0
  %247 = vadd.xlane.f32.xlu0 %v246
  %v248 = vpop.xlane.xlu0 %247
  %v249 = vsel %vm109, %v205, 0.0
  %250 = vadd.xlane.f32.xlu0 %v249
  %v251 = vpop.xlane.xlu0 %250
  %v252 = vsel %vm109, %v206, 0.0
  %253 = vadd.xlane.f32.xlu0 %v252
  %v254 = vpop.xlane.xlu0 %253
  %v255 = vmul.f32 %v209, %v158
  %v256 = vmul.f32 %v212, %v158
  %v257 = vmul.f32 %v215, %v158
  %v258 = vmul.f32 %v218, %v158
  %v259 = vmul.f32 %v221, %v158
  %v260 = vmul.f32 %v224, %v158
  %v261 = vmul.f32 %v227, %v158
  %v262 = vmul.f32 %v230, %v158
  %v263 = vmul.f32 %v233, %v158
  %v264 = vmul.f32 %v236, %v158
  %v265 = vmul.f32 %v239, %v158
  %v266 = vmul.f32 %v242, %v158
  %v267 = vmul.f32 %v245, %v158
  %v268 = vmul.f32 %v248, %v158
  %v269 = vmul.f32 %v251, %v158
  %v270 = vmul.f32 %v254, %v158
  %v271 = vadd.f32 %v255, 1e-05
  %v272 = vadd.f32 %v256, 1e-05
  %v273 = vadd.f32 %v257, 1e-05
  %v274 = vadd.f32 %v258, 1e-05
  %v275 = vadd.f32 %v259, 1e-05
  %v276 = vadd.f32 %v260, 1e-05
  %v277 = vadd.f32 %v261, 1e-05
  %v278 = vadd.f32 %v262, 1e-05
  %v279 = vadd.f32 %v263, 1e-05
  %v280 = vadd.f32 %v264, 1e-05
  %v281 = vadd.f32 %v265, 1e-05
  %v282 = vadd.f32 %v266, 1e-05
  %v283 = vadd.f32 %v267, 1e-05
  %v284 = vadd.f32 %v268, 1e-05
  %v285 = vadd.f32 %v269, 1e-05
  %v286 = vadd.f32 %v270, 1e-05
  %v287 = vrsqrt.pop %v271
  %v288 = vrsqrt.pop %v272
  %v289 = vrsqrt.pop %v273
  %v290 = vrsqrt.pop %v274
  %v291 = vrsqrt.pop %v275
  %v292 = vrsqrt.pop %v276
  %v293 = vrsqrt.pop %v277
  %v294 = vrsqrt.pop %v278
  %v295 = vrsqrt.pop %v279
  %v296 = vrsqrt.pop %v280
  %v297 = vrsqrt.pop %v281
  %v298 = vrsqrt.pop %v282
  %v299 = vrsqrt.pop %v283
  %v300 = vrsqrt.pop %v284
  %v301 = vrsqrt.pop %v285
  %v302 = vrsqrt.pop %v286
  %v303 = vmul.f32 %v175, %v287
  %v304 = vmul.f32 %v176, %v288
  %v305 = vmul.f32 %v177, %v289
  %v306 = vmul.f32 %v178, %v290
  %v307 = vmul.f32 %v179, %v291
  %v308 = vmul.f32 %v180, %v292
  %v309 = vmul.f32 %v181, %v293
  %v310 = vmul.f32 %v182, %v294
  %v311 = vmul.f32 %v183, %v295
  %v312 = vmul.f32 %v184, %v296
  %v313 = vmul.f32 %v185, %v297
  %v314 = vmul.f32 %v186, %v298
  %v315 = vmul.f32 %v187, %v299
  %v316 = vmul.f32 %v188, %v300
  %v317 = vmul.f32 %v189, %v301
  %v318 = vmul.f32 %v190, %v302
  %v319 = vld [vmem:[%s3] sm:$0x1]
  %v321 = vlaneseq
  %v322 = vshrl.u32 %v321, 7
  %v323 = vsub.s32 0, %v322
  %v324 = vrot.slane %v319, %v323
  %v326 = vmul.f32 %v303, %v324
  %v327 = vmul.f32 %v304, %v324
  %v328 = vmul.f32 %v305, %v324
  %v329 = vmul.f32 %v306, %v324
  %v330 = vmul.f32 %v307, %v324
  %v331 = vmul.f32 %v308, %v324
  %v332 = vmul.f32 %v309, %v324
  %v333 = vmul.f32 %v310, %v324
  %v334 = vmul.f32 %v311, %v324
  %v335 = vmul.f32 %v312, %v324
  %v336 = vmul.f32 %v313, %v324
  %v337 = vmul.f32 %v314, %v324
  %v338 = vmul.f32 %v315, %v324
  %v339 = vmul.f32 %v316, %v324
  %v340 = vmul.f32 %v317, %v324
  %v341 = vmul.f32 %v318, %v324
  %v342 = vld [vmem:[%s4] sm:$0x1]
  %v344 = vlaneseq
  %v345 = vshrl.u32 %v344, 7
  %v346 = vsub.s32 0, %v345
  %v347 = vrot.slane %v342, %v346
  %v349 = vadd.f32 %v326, %v347
  %v350 = vadd.f32 %v327, %v347
  %v351 = vadd.f32 %v328, %v347
  %v352 = vadd.f32 %v329, %v347
  %v353 = vadd.f32 %v330, %v347
  %v354 = vadd.f32 %v331, %v347
  %v355 = vadd.f32 %v332, %v347
  %v356 = vadd.f32 %v333, %v347
  %v357 = vadd.f32 %v334, %v347
  %v358 = vadd.f32 %v335, %v347
  %v359 = vadd.f32 %v336, %v347
  %v360 = vadd.f32 %v337, %v347
  %v361 = vadd.f32 %v338, %v347
  %v362 = vadd.f32 %v339, %v347
  %v363 = vadd.f32 %v340, %v347
  %v364 = vadd.f32 %v341, %v347
  %v365 = vpack.c.bf16 %v350, %v349
  %v366 = vpack.c.bf16 %v352, %v351
  %v367 = vpack.c.bf16 %v354, %v353
  %v368 = vpack.c.bf16 %v356, %v355
  %v369 = vpack.c.bf16 %v358, %v357
  %v370 = vpack.c.bf16 %v360, %v359
  %v371 = vpack.c.bf16 %v362, %v361
  %v372 = vpack.c.bf16 %v364, %v363
  %v373 = vld [vmem:[%s5] sm:$0xf]
  %v374 = vld [vmem:[%s5 + $0x4] sm:$0xf]
  %v375 = vld [vmem:[%s5 + $0x8] sm:$0xf]
  %v376 = vld [vmem:[%s5 + $0xc] sm:$0xf]
  %v377 = vld [vmem:[%s6] sm:$0x1]
  %v379 = vlaneseq
  %v380 = vshrl.u32 %v379, 7
  %v381 = vsub.s32 0, %v380
  %v382 = vrot.slane %v377, %v381
  %v388 = vunpack.c.l.b16 %v373
  %v389 = vunpack.c.l.b16 %v374
  %v390 = vunpack.c.l.b16 %v375
  %v391 = vunpack.c.l.b16 %v376
  %v392 = vpack.c.b16 %v389, %v388
  %v393 = vpack.c.b16 %v391, %v390
  %v397 = vsel %vm109, %v365, 0
  %v400 = vsel %vm109, %v366, 0
  %v403 = vsel %vm109, %v367, 0
  %v406 = vsel %vm109, %v368, 0
  %v409 = vsel %vm109, %v369, 0
  %v412 = vsel %vm109, %v370, 0
  %v415 = vsel %vm109, %v371, 0
  %v418 = vsel %vm109, %v372, 0
  %420 = vmatprep.subr.bf16.mxu0 0
  %421 = vmatpush1.bf16.msra.mxu0 %v392
  %422 = vmatprep.subr.bf16.mxu0 0
  %423 = vmatpush1.bf16.msra.mxu0 %v393
  %424 = vmatprep.subr.bf16.mxu0 0
  %425 = vmatpush1.bf16.msra.mxu0 0
  %426 = vmatprep.subr.bf16.mxu0 0
  %427 = vmatpush1.bf16.msra.mxu0 0
  %428 = vmatprep.subr.bf16.mxu0 0
  %429 = vmatpush1.bf16.msra.mxu0 0
  %430 = vmatprep.subr.bf16.mxu0 0
  %431 = vmatpush1.bf16.msra.mxu0 0
  %432 = vmatprep.subr.bf16.mxu0 0
  %433 = vmatpush1.bf16.msra.mxu0 0
  %434 = vmatprep.subr.bf16.mxu0 0
  %435 = vmatpush1.bf16.msra.mxu0 0
  %436 = vmatprep.subr.bf16.mxu0 0
  %437 = vmatpush1.bf16.msra.mxu0 0
  %438 = vmatprep.subr.bf16.mxu0 0
  %439 = vmatpush1.bf16.msra.mxu0 0
  %440 = vmatprep.subr.bf16.mxu0 0
  %441 = vmatpush1.bf16.msra.mxu0 0
  %442 = vmatprep.subr.bf16.mxu0 0
  %443 = vmatpush1.bf16.msra.mxu0 0
  %444 = vmatprep.subr.bf16.mxu0 0
  %445 = vmatpush1.bf16.msra.mxu0 0
  %446 = vmatprep.subr.bf16.mxu0 0
  %447 = vmatpush1.bf16.msra.mxu0 0
  %448 = vmatprep.subr.bf16.mxu0 0
  %449 = vmatpush1.bf16.msra.mxu0 0
  %450 = vmatprep.subr.bf16.mxu0 0
  %451 = vmatpush1.bf16.msra.mxu0 0
  %452 = vmatprep.mubr.bf16.mxu0 0
  %453 = vmatmul.mubr.bf16.gmra.mrb[0].mxu0 %v397
  %v454 = vpop.f32.mrb[0].mxu0
  %v455 = vadd.f32 %v382, %v454
  %v456 = vpop.f32.mrb[0].mxu0
  %v457 = vpop.f32.mrb[0].mxu0
  %v458 = vadd.f32 %v382, %v457
  %v459 = vpop.f32.mrb[0].mxu0
  %460 = vmatprep.mubr.bf16.mxu0 0
  %461 = vmatmul.mubr.bf16.gmra.mrb[0].mxu0 %v400
  %v462 = vpop.f32.mrb[0].mxu0
  %v463 = vadd.f32 %v382, %v462
  %v464 = vpop.f32.mrb[0].mxu0
  %v465 = vpop.f32.mrb[0].mxu0
  %v466 = vadd.f32 %v382, %v465
  %v467 = vpop.f32.mrb[0].mxu0
  %468 = vmatprep.mubr.bf16.mxu0 0
  %469 = vmatmul.mubr.bf16.gmra.mrb[0].mxu0 %v403
  %v470 = vpop.f32.mrb[0].mxu0
  %v471 = vadd.f32 %v382, %v470
  %v472 = vpop.f32.mrb[0].mxu0
  %v473 = vpop.f32.mrb[0].mxu0
  %v474 = vadd.f32 %v382, %v473
  %v475 = vpop.f32.mrb[0].mxu0
  %476 = vmatprep.mubr.bf16.mxu0 0
  %477 = vmatmul.mubr.bf16.gmra.mrb[0].mxu0 %v406
  %v478 = vpop.f32.mrb[0].mxu0
  %v479 = vadd.f32 %v382, %v478
  %v480 = vpop.f32.mrb[0].mxu0
  %v481 = vpop.f32.mrb[0].mxu0
  %v482 = vadd.f32 %v382, %v481
  %v483 = vpop.f32.mrb[0].mxu0
  %484 = vmatprep.mubr.bf16.mxu0 0
  %485 = vmatmul.mubr.bf16.gmra.mrb[0].mxu0 %v409
  %v486 = vpop.f32.mrb[0].mxu0
  %v487 = vadd.f32 %v382, %v486
  %v488 = vpop.f32.mrb[0].mxu0
  %v489 = vpop.f32.mrb[0].mxu0
  %v490 = vadd.f32 %v382, %v489
  %v491 = vpop.f32.mrb[0].mxu0
  %492 = vmatprep.mubr.bf16.mxu0 0
  %493 = vmatmul.mubr.bf16.gmra.mrb[0].mxu0 %v412
  %v494 = vpop.f32.mrb[0].mxu0
  %v495 = vadd.f32 %v382, %v494
  %v496 = vpop.f32.mrb[0].mxu0
  %v497 = vpop.f32.mrb[0].mxu0
  %v498 = vadd.f32 %v382, %v497
  %v499 = vpop.f32.mrb[0].mxu0
  %500 = vmatprep.mubr.bf16.mxu0 0
  %501 = vmatmul.mubr.bf16.gmra.mrb[0].mxu0 %v415
  %v502 = vpop.f32.mrb[0].mxu0
  %v503 = vadd.f32 %v382, %v502
  %v504 = vpop.f32.mrb[0].mxu0
  %v505 = vpop.f32.mrb[0].mxu0
  %v506 = vadd.f32 %v382, %v505
  %v507 = vpop.f32.mrb[0].mxu0
  %508 = vmatprep.mubr.bf16.mxu0 0
  %509 = vmatmul.mubr.bf16.gmra.mrb[0].mxu0 %v418
  %v510 = vpop.f32.mrb[0].mxu0
  %v511 = vadd.f32 %v382, %v510
  %v512 = vpop.f32.mrb[0].mxu0
  %v513 = vpop.f32.mrb[0].mxu0
  %v514 = vadd.f32 %v382, %v513
  %v515 = vpop.f32.mrb[0].mxu0
  %516 = vdwg.mxu0
  %v517 = vld [vmem:[%s15] sm:$0xff]
  %v518 = vld [vmem:[%s15 + $0x8] sm:$0xff]
  %v519 = vld [vmem:[%s15 + $0x10] sm:$0xff]
  %v520 = vld [vmem:[%s15 + $0x18] sm:$0xff]
  %v521 = vld [vmem:[%s15 + $0x20] sm:$0xff]
  %v522 = vld [vmem:[%s15 + $0x28] sm:$0xff]
  %v523 = vld [vmem:[%s15 + $0x30] sm:$0xff]
  %v524 = vld [vmem:[%s15 + $0x38] sm:$0xff]
  %v526 = vlaneseq
  %v527 = vshrl.u32 %v526, 7
  %v528 = vsub.s32 0, %v527
  %v529 = vrot.slane %v70, %v528
  %530 = vrot.lane.b32.xlu0 %v529, 32
  %v531 = vpop.permute.xlu0 %530
  %v533 = vmul.f32 %v455, %v531
  %v534 = vmul.f32 %v458, %v531
  %v535 = vmul.f32 %v463, %v531
  %v536 = vmul.f32 %v466, %v531
  %v537 = vmul.f32 %v471, %v531
  %v538 = vmul.f32 %v474, %v531
  %v539 = vmul.f32 %v479, %v531
  %v540 = vmul.f32 %v482, %v531
  %v542 = vlaneseq
  %v543 = vshrl.u32 %v542, 7
  %v544 = vsub.s32 0, %v543
  %v545 = vrot.slane %v72, %v544
  %546 = vrot.lane.b32.xlu0 %v545, 32
  %v547 = vpop.permute.xlu0 %546
  %v549 = vmul.f32 %v455, %v547
  %v550 = vmul.f32 %v458, %v547
  %v551 = vmul.f32 %v463, %v547
  %v552 = vmul.f32 %v466, %v547
  %v553 = vmul.f32 %v471, %v547
  %v554 = vmul.f32 %v474, %v547
  %v555 = vmul.f32 %v479, %v547
  %v556 = vmul.f32 %v482, %v547
  %v558 = vlaneseq
  %v559 = vshrl.u32 %v558, 7
  %v560 = vsub.s32 0, %v559
  %v561 = vrot.slane %v74, %v560
  %562 = vrot.lane.b32.xlu0 %v561, 32
  %v563 = vpop.permute.xlu0 %562
  %v565 = vmul.f32 %v455, %v563
  %v566 = vmul.f32 %v458, %v563
  %v567 = vmul.f32 %v463, %v563
  %v568 = vmul.f32 %v466, %v563
  %v569 = vmul.f32 %v471, %v563
  %v570 = vmul.f32 %v474, %v563
  %v571 = vmul.f32 %v479, %v563
  %v572 = vmul.f32 %v482, %v563
  %v574 = vlaneseq
  %v575 = vshrl.u32 %v574, 7
  %v576 = vsub.s32 0, %v575
  %v577 = vrot.slane %v76, %v576
  %578 = vrot.lane.b32.xlu0 %v577, 32
  %v579 = vpop.permute.xlu0 %578
  %v581 = vmul.f32 %v455, %v579
  %v582 = vmul.f32 %v458, %v579
  %v583 = vmul.f32 %v463, %v579
  %v584 = vmul.f32 %v466, %v579
  %v585 = vmul.f32 %v471, %v579
  %v586 = vmul.f32 %v474, %v579
  %v587 = vmul.f32 %v479, %v579
  %v588 = vmul.f32 %v482, %v579
  %v589 = vpack.c.bf16 %v534, %v533
  %v590 = vpack.c.bf16 %v536, %v535
  %v591 = vpack.c.bf16 %v538, %v537
  %v592 = vpack.c.bf16 %v540, %v539
  %v593 = vpack.c.bf16 %v550, %v549
  %v594 = vpack.c.bf16 %v552, %v551
  %v595 = vpack.c.bf16 %v554, %v553
  %v596 = vpack.c.bf16 %v556, %v555
  %v597 = vpack.c.bf16 %v566, %v565
  %v598 = vpack.c.bf16 %v568, %v567
  %v599 = vpack.c.bf16 %v570, %v569
  %v600 = vpack.c.bf16 %v572, %v571
  %v601 = vpack.c.bf16 %v582, %v581
  %v602 = vpack.c.bf16 %v584, %v583
  %v603 = vpack.c.bf16 %v586, %v585
  %v604 = vpack.c.bf16 %v588, %v587
  %605 = vrot.lane.b32.xlu0 %v529, 64
  %v606 = vpop.permute.xlu0 %605
  %v608 = vmul.f32 %v455, %v606
  %v609 = vmul.f32 %v458, %v606
  %v610 = vmul.f32 %v463, %v606
  %v611 = vmul.f32 %v466, %v606
  %v612 = vmul.f32 %v471, %v606
  %v613 = vmul.f32 %v474, %v606
  %v614 = vmul.f32 %v479, %v606
  %v615 = vmul.f32 %v482, %v606
  %616 = vrot.lane.b32.xlu0 %v545, 64
  %v617 = vpop.permute.xlu0 %616
  %v619 = vmul.f32 %v455, %v617
  %v620 = vmul.f32 %v458, %v617
  %v621 = vmul.f32 %v463, %v617
  %v622 = vmul.f32 %v466, %v617
  %v623 = vmul.f32 %v471, %v617
  %v624 = vmul.f32 %v474, %v617
  %v625 = vmul.f32 %v479, %v617
  %v626 = vmul.f32 %v482, %v617
  %627 = vrot.lane.b32.xlu0 %v561, 64
  %v628 = vpop.permute.xlu0 %627
  %v630 = vmul.f32 %v455, %v628
  %v631 = vmul.f32 %v458, %v628
  %v632 = vmul.f32 %v463, %v628
  %v633 = vmul.f32 %v466, %v628
  %v634 = vmul.f32 %v471, %v628
  %v635 = vmul.f32 %v474, %v628
  %v636 = vmul.f32 %v479, %v628
  %v637 = vmul.f32 %v482, %v628
  %638 = vrot.lane.b32.xlu0 %v577, 64
  %v639 = vpop.permute.xlu0 %638
  %v641 = vmul.f32 %v455, %v639
  %v642 = vmul.f32 %v458, %v639
  %v643 = vmul.f32 %v463, %v639
  %v644 = vmul.f32 %v466, %v639
  %v645 = vmul.f32 %v471, %v639
  %v646 = vmul.f32 %v474, %v639
  %v647 = vmul.f32 %v479, %v639
  %v648 = vmul.f32 %v482, %v639
  %v649 = vpack.c.bf16 %v609, %v608
  %v650 = vpack.c.bf16 %v611, %v610
  %v651 = vpack.c.bf16 %v613, %v612
  %v652 = vpack.c.bf16 %v615, %v614
  %v653 = vpack.c.bf16 %v620, %v619
  %v654 = vpack.c.bf16 %v622, %v621
  %v655 = vpack.c.bf16 %v624, %v623
  %v656 = vpack.c.bf16 %v626, %v625
  %v657 = vpack.c.bf16 %v631, %v630
  %v658 = vpack.c.bf16 %v633, %v632
  %v659 = vpack.c.bf16 %v635, %v634
  %v660 = vpack.c.bf16 %v637, %v636
  %v661 = vpack.c.bf16 %v642, %v641
  %v662 = vpack.c.bf16 %v644, %v643
  %v663 = vpack.c.bf16 %v646, %v645
  %v664 = vpack.c.bf16 %v648, %v647
  %v665 = vpack.c.bf16 %v458, %v455
  %v666 = vpack.c.bf16 %v466, %v463
  %v667 = vpack.c.bf16 %v474, %v471
  %v668 = vpack.c.bf16 %v482, %v479
  %v669 = vunpack.c.l.bf16 %v517
  %v670 = vunpack.c.h.bf16 %v517
  %v671 = vunpack.c.l.bf16 %v518
  %v672 = vunpack.c.h.bf16 %v518
  %v673 = vunpack.c.l.bf16 %v519
  %v674 = vunpack.c.h.bf16 %v519
  %v675 = vunpack.c.l.bf16 %v520
  %v676 = vunpack.c.h.bf16 %v520
  %v677 = vunpack.c.l.bf16 %v521
  %v678 = vunpack.c.h.bf16 %v521
  %v679 = vunpack.c.l.bf16 %v522
  %v680 = vunpack.c.h.bf16 %v522
  %v681 = vunpack.c.l.bf16 %v523
  %v682 = vunpack.c.h.bf16 %v523
  %v683 = vunpack.c.l.bf16 %v524
  %v684 = vunpack.c.h.bf16 %v524
  %701 = vrot.lane.b32.xlu0 %v589, 96
  %v702 = vpop.permute.xlu0 %701
  %703 = vrot.lane.b32.xlu0 %v590, 96
  %v704 = vpop.permute.xlu0 %703
  %705 = vrot.lane.b32.xlu0 %v591, 96
  %v706 = vpop.permute.xlu0 %705
  %707 = vrot.lane.b32.xlu0 %v592, 96
  %v708 = vpop.permute.xlu0 %707
  %709 = vrot.lane.b32.xlu0 %v593, 96
  %v710 = vpop.permute.xlu0 %709
  %711 = vrot.lane.b32.xlu0 %v594, 96
  %v712 = vpop.permute.xlu0 %711
  %713 = vrot.lane.b32.xlu0 %v595, 96
  %v714 = vpop.permute.xlu0 %713
  %715 = vrot.lane.b32.xlu0 %v596, 96
  %v716 = vpop.permute.xlu0 %715
  %717 = vrot.lane.b32.xlu0 %v597, 96
  %v718 = vpop.permute.xlu0 %717
  %719 = vrot.lane.b32.xlu0 %v598, 96
  %v720 = vpop.permute.xlu0 %719
  %721 = vrot.lane.b32.xlu0 %v599, 96
  %v722 = vpop.permute.xlu0 %721
  %723 = vrot.lane.b32.xlu0 %v600, 96
  %v724 = vpop.permute.xlu0 %723
  %725 = vrot.lane.b32.xlu0 %v601, 96
  %v726 = vpop.permute.xlu0 %725
  %727 = vrot.lane.b32.xlu0 %v602, 96
  %v728 = vpop.permute.xlu0 %727
  %729 = vrot.lane.b32.xlu0 %v603, 96
  %v730 = vpop.permute.xlu0 %729
  %731 = vrot.lane.b32.xlu0 %v604, 96
  %v732 = vpop.permute.xlu0 %731
  %v734 = vsel %vm109, %v665, 0
  %v737 = vsel %vm109, %v666, 0
  %v740 = vsel %vm109, %v667, 0
  %v743 = vsel %vm109, %v668, 0
  %v746 = vsel %vm109, %v702, 0
  %v749 = vsel %vm109, %v704, 0
  %v752 = vsel %vm109, %v706, 0
  %v755 = vsel %vm109, %v708, 0
  %v758 = vsel %vm109, %v710, 0
  %v761 = vsel %vm109, %v712, 0
  %v764 = vsel %vm109, %v714, 0
  %v767 = vsel %vm109, %v716, 0
  %v770 = vsel %vm109, %v718, 0
  %v773 = vsel %vm109, %v720, 0
  %v776 = vsel %vm109, %v722, 0
  %v779 = vsel %vm109, %v724, 0
  %v782 = vsel %vm109, %v726, 0
  %v785 = vsel %vm109, %v728, 0
  %v788 = vsel %vm109, %v730, 0
  %v791 = vsel %vm109, %v732, 0
  %793 = vmatprep.subr.bf16.mxu0 0
  %794 = vmatpush1.bf16.xpose.msra.mxu0 %v746
  %795 = vmatprep.subr.bf16.mxu0 0
  %796 = vmatpush1.bf16.xpose.msra.mxu0 %v749
  %797 = vmatprep.subr.bf16.mxu0 0
  %798 = vmatpush1.bf16.xpose.msra.mxu0 %v752
  %799 = vmatprep.subr.bf16.mxu0 0
  %800 = vmatpush1.bf16.xpose.msra.mxu0 %v755
  %801 = vmatprep.subr.bf16.mxu0 0
  %802 = vmatpush1.bf16.xpose.msra.mxu0 %v758
  %803 = vmatprep.subr.bf16.mxu0 0
  %804 = vmatpush1.bf16.xpose.msra.mxu0 %v761
  %805 = vmatprep.subr.bf16.mxu0 0
  %806 = vmatpush1.bf16.xpose.msra.mxu0 %v764
  %807 = vmatprep.subr.bf16.mxu0 0
  %808 = vmatpush1.bf16.xpose.msra.mxu0 %v767
  %809 = vmatprep.subr.bf16.mxu0 0
  %810 = vmatpush1.bf16.xpose.msra.mxu0 %v770
  %811 = vmatprep.subr.bf16.mxu0 0
  %812 = vmatpush1.bf16.xpose.msra.mxu0 %v773
  %813 = vmatprep.subr.bf16.mxu0 0
  %814 = vmatpush1.bf16.xpose.msra.mxu0 %v776
  %815 = vmatprep.subr.bf16.mxu0 0
  %816 = vmatpush1.bf16.xpose.msra.mxu0 %v779
  %817 = vmatprep.subr.bf16.mxu0 0
  %818 = vmatpush1.bf16.xpose.msra.mxu0 %v782
  %819 = vmatprep.subr.bf16.mxu0 0
  %820 = vmatpush1.bf16.xpose.msra.mxu0 %v785
  %821 = vmatprep.subr.bf16.mxu0 0
  %822 = vmatpush1.bf16.xpose.msra.mxu0 %v788
  %823 = vmatprep.subr.bf16.mxu0 0
  %824 = vmatpush1.bf16.xpose.msra.mxu0 %v791
  %825 = vmatprep.mubr.bf16.mxu0 0
  %826 = vmatmul.mubr.bf16.gmra.mrb[0].mxu0 %v734
  %v827 = vpop.f32.mrb[0].mxu0
  %v828 = vadd.f32 %v669, %v827
  %v829 = vpop.f32.mrb[0].mxu0
  %v830 = vadd.f32 %v670, %v829
  %v831 = vpop.f32.mrb[0].mxu0
  %v832 = vadd.f32 %v671, %v831
  %v833 = vpop.f32.mrb[0].mxu0
  %v834 = vadd.f32 %v672, %v833
  %835 = vmatprep.mubr.bf16.mxu0 0
  %836 = vmatmul.mubr.bf16.gmra.mrb[0].mxu0 %v737
  %v837 = vpop.f32.mrb[0].mxu0
  %v838 = vadd.f32 %v673, %v837
  %v839 = vpop.f32.mrb[0].mxu0
  %v840 = vadd.f32 %v674, %v839
  %v841 = vpop.f32.mrb[0].mxu0
  %v842 = vadd.f32 %v675, %v841
  %v843 = vpop.f32.mrb[0].mxu0
  %v844 = vadd.f32 %v676, %v843
  %845 = vmatprep.mubr.bf16.mxu0 0
  %846 = vmatmul.mubr.bf16.gmra.mrb[0].mxu0 %v740
  %v847 = vpop.f32.mrb[0].mxu0
  %v848 = vadd.f32 %v677, %v847
  %v849 = vpop.f32.mrb[0].mxu0
  %v850 = vadd.f32 %v678, %v849
  %v851 = vpop.f32.mrb[0].mxu0
  %v852 = vadd.f32 %v679, %v851
  %v853 = vpop.f32.mrb[0].mxu0
  %v854 = vadd.f32 %v680, %v853
  %855 = vmatprep.mubr.bf16.mxu0 0
  %856 = vmatmul.mubr.bf16.gmra.mrb[0].mxu0 %v743
  %v857 = vpop.f32.mrb[0].mxu0
  %v858 = vadd.f32 %v681, %v857
  %v859 = vpop.f32.mrb[0].mxu0
  %v860 = vadd.f32 %v682, %v859
  %v861 = vpop.f32.mrb[0].mxu0
  %v862 = vadd.f32 %v683, %v861
  %v863 = vpop.f32.mrb[0].mxu0
  %v864 = vadd.f32 %v684, %v863
  %865 = vdwg.mxu0
  %v866 = vmax.f32 %v828, %v830
  %867 = vmax.xlane.f32.xlu0 %v866
  %v868 = vpop.xlane.xlu0 %867
  %v869 = vmax.f32 %v832, %v834
  %870 = vmax.xlane.f32.xlu0 %v869
  %v871 = vpop.xlane.xlu0 %870
  %v872 = vmax.f32 %v838, %v840
  %873 = vmax.xlane.f32.xlu0 %v872
  %v874 = vpop.xlane.xlu0 %873
  %v875 = vmax.f32 %v842, %v844
  %876 = vmax.xlane.f32.xlu0 %v875
  %v877 = vpop.xlane.xlu0 %876
  %v878 = vmax.f32 %v848, %v850
  %879 = vmax.xlane.f32.xlu0 %v878
  %v880 = vpop.xlane.xlu0 %879
  %v881 = vmax.f32 %v852, %v854
  %882 = vmax.xlane.f32.xlu0 %v881
  %v883 = vpop.xlane.xlu0 %882
  %v884 = vmax.f32 %v858, %v860
  %885 = vmax.xlane.f32.xlu0 %v884
  %v886 = vpop.xlane.xlu0 %885
  %v887 = vmax.f32 %v862, %v864
  %888 = vmax.xlane.f32.xlu0 %v887
  %v889 = vpop.xlane.xlu0 %888
  %v890 = vsub.f32 %v828, %v868
  %v891 = vsub.f32 %v830, %v868
  %v892 = vsub.f32 %v832, %v871
  %v893 = vsub.f32 %v834, %v871
  %v894 = vsub.f32 %v838, %v874
  %v895 = vsub.f32 %v840, %v874
  %v896 = vsub.f32 %v842, %v877
  %v897 = vsub.f32 %v844, %v877
  %v898 = vsub.f32 %v848, %v880
  %v899 = vsub.f32 %v850, %v880
  %v900 = vsub.f32 %v852, %v883
  %v901 = vsub.f32 %v854, %v883
  %v902 = vsub.f32 %v858, %v886
  %v903 = vsub.f32 %v860, %v886
  %v904 = vsub.f32 %v862, %v889
  %v905 = vsub.f32 %v864, %v889
  %v906 = vmul.f32 %v890, 1.442695
  %v907 = vpow.pop %v906
  %v908 = vmul.f32 %v891, 1.442695
  %v909 = vpow.pop %v908
  %v910 = vmul.f32 %v892, 1.442695
  %v911 = vpow.pop %v910
  %v912 = vmul.f32 %v893, 1.442695
  %v913 = vpow.pop %v912
  %v914 = vmul.f32 %v894, 1.442695
  %v915 = vpow.pop %v914
  %v916 = vmul.f32 %v895, 1.442695
  %v917 = vpow.pop %v916
  %v918 = vmul.f32 %v896, 1.442695
  %v919 = vpow.pop %v918
  %v920 = vmul.f32 %v897, 1.442695
  %v921 = vpow.pop %v920
  %v922 = vmul.f32 %v898, 1.442695
  %v923 = vpow.pop %v922
  %v924 = vmul.f32 %v899, 1.442695
  %v925 = vpow.pop %v924
  %v926 = vmul.f32 %v900, 1.442695
  %v927 = vpow.pop %v926
  %v928 = vmul.f32 %v901, 1.442695
  %v929 = vpow.pop %v928
  %v930 = vmul.f32 %v902, 1.442695
  %v931 = vpow.pop %v930
  %v932 = vmul.f32 %v903, 1.442695
  %v933 = vpow.pop %v932
  %v934 = vmul.f32 %v904, 1.442695
  %v935 = vpow.pop %v934
  %v936 = vmul.f32 %v905, 1.442695
  %v937 = vpow.pop %v936
  %v938 = vpack.c.bf16 %v911, %v907
  %v939 = vpack.c.bf16 %v913, %v909
  %v940 = vpack.c.bf16 %v919, %v915
  %v941 = vpack.c.bf16 %v921, %v917
  %v942 = vpack.c.bf16 %v927, %v923
  %v943 = vpack.c.bf16 %v929, %v925
  %v944 = vpack.c.bf16 %v935, %v931
  %v945 = vpack.c.bf16 %v937, %v933
  %962 = vrot.lane.b32.xlu0 %v649, 64
  %v963 = vpop.permute.xlu0 %962
  %964 = vrot.lane.b32.xlu0 %v650, 64
  %v965 = vpop.permute.xlu0 %964
  %966 = vrot.lane.b32.xlu0 %v651, 64
  %v967 = vpop.permute.xlu0 %966
  %968 = vrot.lane.b32.xlu0 %v652, 64
  %v969 = vpop.permute.xlu0 %968
  %970 = vrot.lane.b32.xlu0 %v653, 64
  %v971 = vpop.permute.xlu0 %970
  %972 = vrot.lane.b32.xlu0 %v654, 64
  %v973 = vpop.permute.xlu0 %972
  %974 = vrot.lane.b32.xlu0 %v655, 64
  %v975 = vpop.permute.xlu0 %974
  %976 = vrot.lane.b32.xlu0 %v656, 64
  %v977 = vpop.permute.xlu0 %976
  %978 = vrot.lane.b32.xlu0 %v657, 64
  %v979 = vpop.permute.xlu0 %978
  %980 = vrot.lane.b32.xlu0 %v658, 64
  %v981 = vpop.permute.xlu0 %980
  %982 = vrot.lane.b32.xlu0 %v659, 64
  %v983 = vpop.permute.xlu0 %982
  %984 = vrot.lane.b32.xlu0 %v660, 64
  %v985 = vpop.permute.xlu0 %984
  %986 = vrot.lane.b32.xlu0 %v661, 64
  %v987 = vpop.permute.xlu0 %986
  %988 = vrot.lane.b32.xlu0 %v662, 64
  %v989 = vpop.permute.xlu0 %988
  %990 = vrot.lane.b32.xlu0 %v663, 64
  %v991 = vpop.permute.xlu0 %990
  %992 = vrot.lane.b32.xlu0 %v664, 64
  %v993 = vpop.permute.xlu0 %992
  %1010 = vmatprep.subr.bf16.mxu0 0
  %1011 = vmatpush1.bf16.msra.mxu0 %v963
  %1012 = vmatprep.subr.bf16.mxu0 0
  %1013 = vmatpush1.bf16.msra.mxu0 %v965
  %1014 = vmatprep.subr.bf16.mxu0 0
  %1015 = vmatpush1.bf16.msra.mxu0 %v967
  %1016 = vmatprep.subr.bf16.mxu0 0
  %1017 = vmatpush1.bf16.msra.mxu0 %v969
  %1018 = vmatprep.subr.bf16.mxu0 0
  %1019 = vmatpush1.bf16.msra.mxu0 %v971
  %1020 = vmatprep.subr.bf16.mxu0 0
  %1021 = vmatpush1.bf16.msra.mxu0 %v973
  %1022 = vmatprep.subr.bf16.mxu0 0
  %1023 = vmatpush1.bf16.msra.mxu0 %v975
  %1024 = vmatprep.subr.bf16.mxu0 0
  %1025 = vmatpush1.bf16.msra.mxu0 %v977
  %1026 = vmatprep.subr.bf16.mxu0 0
  %1027 = vmatpush1.bf16.msra.mxu0 %v979
  %1028 = vmatprep.subr.bf16.mxu0 0
  %1029 = vmatpush1.bf16.msra.mxu0 %v981
  %1030 = vmatprep.subr.bf16.mxu0 0
  %1031 = vmatpush1.bf16.msra.mxu0 %v983
  %1032 = vmatprep.subr.bf16.mxu0 0
  %1033 = vmatpush1.bf16.msra.mxu0 %v985
  %1034 = vmatprep.subr.bf16.mxu0 0
  %1035 = vmatpush1.bf16.msra.mxu0 %v987
  %1036 = vmatprep.subr.bf16.mxu0 0
  %1037 = vmatpush1.bf16.msra.mxu0 %v989
  %1038 = vmatprep.subr.bf16.mxu0 0
  %1039 = vmatpush1.bf16.msra.mxu0 %v991
  %1040 = vmatprep.subr.bf16.mxu0 0
  %1041 = vmatpush1.bf16.msra.mxu0 %v993
  %1042 = vmatprep.mubr.bf16.mxu0 %v939
  %1043 = vmatmul.mubr.bf16.gmra.mrb[0].mxu0 %v938
  %v1044 = vpop.f32.mrb[0].mxu0
  %v1045 = vadd.f32 0.0, %v1044
  %v1046 = vpop.f32.mrb[0].mxu0
  %v1047 = vpop.f32.mrb[0].mxu0
  %v1048 = vadd.f32 0.0, %v1047
  %v1049 = vpop.f32.mrb[0].mxu0
  %1050 = vmatprep.mubr.bf16.mxu0 %v941
  %1051 = vmatmul.mubr.bf16.gmra.mrb[0].mxu0 %v940
  %v1052 = vpop.f32.mrb[0].mxu0
  %v1053 = vadd.f32 0.0, %v1052
  %v1054 = vpop.f32.mrb[0].mxu0
  %v1055 = vpop.f32.mrb[0].mxu0
  %v1056 = vadd.f32 0.0, %v1055
  %v1057 = vpop.f32.mrb[0].mxu0
  %1058 = vmatprep.mubr.bf16.mxu0 %v943
  %1059 = vmatmul.mubr.bf16.gmra.mrb[0].mxu0 %v942
  %v1060 = vpop.f32.mrb[0].mxu0
  %v1061 = vadd.f32 0.0, %v1060
  %v1062 = vpop.f32.mrb[0].mxu0
  %v1063 = vpop.f32.mrb[0].mxu0
  %v1064 = vadd.f32 0.0, %v1063
  %v1065 = vpop.f32.mrb[0].mxu0
  %1066 = vmatprep.mubr.bf16.mxu0 %v945
  %1067 = vmatmul.mubr.bf16.gmra.mrb[0].mxu0 %v944
  %v1068 = vpop.f32.mrb[0].mxu0
  %v1069 = vadd.f32 0.0, %v1068
  %v1070 = vpop.f32.mrb[0].mxu0
  %v1071 = vpop.f32.mrb[0].mxu0
  %v1072 = vadd.f32 0.0, %v1071
  %v1073 = vpop.f32.mrb[0].mxu0
  %1074 = vdwg.mxu0
  %v1107 = vunpack.c.l.b16 %v77
  %v1108 = vunpack.c.l.b16 %v78
  %v1109 = vunpack.c.l.b16 %v79
  %v1110 = vunpack.c.l.b16 %v80
  %v1111 = vunpack.c.l.b16 %v81
  %v1112 = vunpack.c.l.b16 %v82
  %v1113 = vunpack.c.l.b16 %v83
  %v1114 = vunpack.c.l.b16 %v84
  %v1115 = vunpack.c.l.b16 %v85
  %v1116 = vunpack.c.l.b16 %v86
  %v1117 = vunpack.c.l.b16 %v87
  %v1118 = vunpack.c.l.b16 %v88
  %v1119 = vunpack.c.l.b16 %v89
  %v1120 = vunpack.c.l.b16 %v90
  %v1121 = vunpack.c.l.b16 %v91
  %v1122 = vunpack.c.l.b16 %v92
  %v1123 = vunpack.c.l.b16 %v93
  %v1124 = vunpack.c.l.b16 %v94
  %v1125 = vunpack.c.l.b16 %v95
  %v1126 = vunpack.c.l.b16 %v96
  %v1127 = vunpack.c.l.b16 %v97
  %v1128 = vunpack.c.l.b16 %v98
  %v1129 = vunpack.c.l.b16 %v99
  %v1130 = vunpack.c.l.b16 %v100
  %v1131 = vunpack.c.l.b16 %v101
  %v1132 = vunpack.c.l.b16 %v102
  %v1133 = vunpack.c.l.b16 %v103
  %v1134 = vunpack.c.l.b16 %v104
  %v1135 = vunpack.c.l.b16 %v105
  %v1136 = vunpack.c.l.b16 %v106
  %v1137 = vunpack.c.l.b16 %v107
  %v1138 = vunpack.c.l.b16 %v108
  %v1139 = vpack.c.b16 %v1108, %v1107
  %v1140 = vpack.c.b16 %v1110, %v1109
  %v1141 = vpack.c.b16 %v1112, %v1111
  %v1142 = vpack.c.b16 %v1114, %v1113
  %v1143 = vpack.c.b16 %v1116, %v1115
  %v1144 = vpack.c.b16 %v1118, %v1117
  %v1145 = vpack.c.b16 %v1120, %v1119
  %v1146 = vpack.c.b16 %v1122, %v1121
  %v1147 = vpack.c.b16 %v1124, %v1123
  %v1148 = vpack.c.b16 %v1126, %v1125
  %v1149 = vpack.c.b16 %v1128, %v1127
  %v1150 = vpack.c.b16 %v1130, %v1129
  %v1151 = vpack.c.b16 %v1132, %v1131
  %v1152 = vpack.c.b16 %v1134, %v1133
  %v1153 = vpack.c.b16 %v1136, %v1135
  %v1154 = vpack.c.b16 %v1138, %v1137
  %1171 = vmatprep.subr.bf16.mxu0 0
  %1172 = vmatpush1.bf16.msra.mxu0 %v1139
  %1173 = vmatprep.subr.bf16.mxu0 0
  %1174 = vmatpush1.bf16.msra.mxu0 %v1140
  %1175 = vmatprep.subr.bf16.mxu0 0
  %1176 = vmatpush1.bf16.msra.mxu0 %v1141
  %1177 = vmatprep.subr.bf16.mxu0 0
  %1178 = vmatpush1.bf16.msra.mxu0 %v1142
  %1179 = vmatprep.subr.bf16.mxu0 0
  %1180 = vmatpush1.bf16.msra.mxu0 %v1143
  %1181 = vmatprep.subr.bf16.mxu0 0
  %1182 = vmatpush1.bf16.msra.mxu0 %v1144
  %1183 = vmatprep.subr.bf16.mxu0 0
  %1184 = vmatpush1.bf16.msra.mxu0 %v1145
  %1185 = vmatprep.subr.bf16.mxu0 0
  %1186 = vmatpush1.bf16.msra.mxu0 %v1146
  %1187 = vmatprep.subr.bf16.mxu0 0
  %1188 = vmatpush1.bf16.msra.mxu0 %v1147
  %1189 = vmatprep.subr.bf16.mxu0 0
  %1190 = vmatpush1.bf16.msra.mxu0 %v1148
  %1191 = vmatprep.subr.bf16.mxu0 0
  %1192 = vmatpush1.bf16.msra.mxu0 %v1149
  %1193 = vmatprep.subr.bf16.mxu0 0
  %1194 = vmatpush1.bf16.msra.mxu0 %v1150
  %1195 = vmatprep.subr.bf16.mxu0 0
  %1196 = vmatpush1.bf16.msra.mxu0 %v1151
  %1197 = vmatprep.subr.bf16.mxu0 0
  %1198 = vmatpush1.bf16.msra.mxu0 %v1152
  %1199 = vmatprep.subr.bf16.mxu0 0
  %1200 = vmatpush1.bf16.msra.mxu0 %v1153
  %1201 = vmatprep.subr.bf16.mxu0 0
  %1202 = vmatpush1.bf16.msra.mxu0 %v1154
  %1203 = vmatprep.mubr.bf16.mxu0 %v939
  %1204 = vmatmul.mubr.bf16.gmra.mrb[0].mxu0 %v938
  %v1205 = vpop.f32.mrb[0].mxu0
  %v1206 = vadd.f32 1e-30, %v1205
  %v1207 = vpop.f32.mrb[0].mxu0
  %v1208 = vpop.f32.mrb[0].mxu0
  %v1209 = vadd.f32 1e-30, %v1208
  %v1210 = vpop.f32.mrb[0].mxu0
  %1211 = vmatprep.mubr.bf16.mxu0 %v941
  %1212 = vmatmul.mubr.bf16.gmra.mrb[0].mxu0 %v940
  %v1213 = vpop.f32.mrb[0].mxu0
  %v1214 = vadd.f32 1e-30, %v1213
  %v1215 = vpop.f32.mrb[0].mxu0
  %v1216 = vpop.f32.mrb[0].mxu0
  %v1217 = vadd.f32 1e-30, %v1216
  %v1218 = vpop.f32.mrb[0].mxu0
  %1219 = vmatprep.mubr.bf16.mxu0 %v943
  %1220 = vmatmul.mubr.bf16.gmra.mrb[0].mxu0 %v942
  %v1221 = vpop.f32.mrb[0].mxu0
  %v1222 = vadd.f32 1e-30, %v1221
  %v1223 = vpop.f32.mrb[0].mxu0
  %v1224 = vpop.f32.mrb[0].mxu0
  %v1225 = vadd.f32 1e-30, %v1224
  %v1226 = vpop.f32.mrb[0].mxu0
  %1227 = vmatprep.mubr.bf16.mxu0 %v945
  %1228 = vmatmul.mubr.bf16.gmra.mrb[0].mxu0 %v944
  %v1229 = vpop.f32.mrb[0].mxu0
  %v1230 = vadd.f32 1e-30, %v1229
  %v1231 = vpop.f32.mrb[0].mxu0
  %v1232 = vpop.f32.mrb[0].mxu0
  %v1233 = vadd.f32 1e-30, %v1232
  %v1234 = vpop.f32.mrb[0].mxu0
  %1235 = vdwg.mxu0
  %v1236 = vrcp.pop %v1206
  %v1237 = vrcp.pop %v1209
  %v1238 = vrcp.pop %v1214
  %v1239 = vrcp.pop %v1217
  %v1240 = vrcp.pop %v1222
  %v1241 = vrcp.pop %v1225
  %v1242 = vrcp.pop %v1230
  %v1243 = vrcp.pop %v1233
  %v1244 = vmul.f32 %v1045, %v1236
  %v1245 = vmul.f32 %v1048, %v1237
  %v1246 = vmul.f32 %v1053, %v1238
  %v1247 = vmul.f32 %v1056, %v1239
  %v1248 = vmul.f32 %v1061, %v1240
  %v1249 = vmul.f32 %v1064, %v1241
  %v1250 = vmul.f32 %v1069, %v1242
  %v1251 = vmul.f32 %v1072, %v1243
  %v1252 = vmul.f32 %v487, %v531
  %v1253 = vmul.f32 %v490, %v531
  %v1254 = vmul.f32 %v495, %v531
  %v1255 = vmul.f32 %v498, %v531
  %v1256 = vmul.f32 %v503, %v531
  %v1257 = vmul.f32 %v506, %v531
  %v1258 = vmul.f32 %v511, %v531
  %v1259 = vmul.f32 %v514, %v531
  %v1260 = vmul.f32 %v487, %v547
  %v1261 = vmul.f32 %v490, %v547
  %v1262 = vmul.f32 %v495, %v547
  %v1263 = vmul.f32 %v498, %v547
  %v1264 = vmul.f32 %v503, %v547
  %v1265 = vmul.f32 %v506, %v547
  %v1266 = vmul.f32 %v511, %v547
  %v1267 = vmul.f32 %v514, %v547
  %v1268 = vmul.f32 %v487, %v563
  %v1269 = vmul.f32 %v490, %v563
  %v1270 = vmul.f32 %v495, %v563
  %v1271 = vmul.f32 %v498, %v563
  %v1272 = vmul.f32 %v503, %v563
  %v1273 = vmul.f32 %v506, %v563
  %v1274 = vmul.f32 %v511, %v563
  %v1275 = vmul.f32 %v514, %v563
  %v1276 = vmul.f32 %v487, %v579
  %v1277 = vmul.f32 %v490, %v579
  %v1278 = vmul.f32 %v495, %v579
  %v1279 = vmul.f32 %v498, %v579
  %v1280 = vmul.f32 %v503, %v579
  %v1281 = vmul.f32 %v506, %v579
  %v1282 = vmul.f32 %v511, %v579
  %v1283 = vmul.f32 %v514, %v579
  %v1284 = vpack.c.bf16 %v1253, %v1252
  %v1285 = vpack.c.bf16 %v1255, %v1254
  %v1286 = vpack.c.bf16 %v1257, %v1256
  %v1287 = vpack.c.bf16 %v1259, %v1258
  %v1288 = vpack.c.bf16 %v1261, %v1260
  %v1289 = vpack.c.bf16 %v1263, %v1262
  %v1290 = vpack.c.bf16 %v1265, %v1264
  %v1291 = vpack.c.bf16 %v1267, %v1266
  %v1292 = vpack.c.bf16 %v1269, %v1268
  %v1293 = vpack.c.bf16 %v1271, %v1270
  %v1294 = vpack.c.bf16 %v1273, %v1272
  %v1295 = vpack.c.bf16 %v1275, %v1274
  %v1296 = vpack.c.bf16 %v1277, %v1276
  %v1297 = vpack.c.bf16 %v1279, %v1278
  %v1298 = vpack.c.bf16 %v1281, %v1280
  %v1299 = vpack.c.bf16 %v1283, %v1282
  %v1300 = vmul.f32 %v487, %v606
  %v1301 = vmul.f32 %v490, %v606
  %v1302 = vmul.f32 %v495, %v606
  %v1303 = vmul.f32 %v498, %v606
  %v1304 = vmul.f32 %v503, %v606
  %v1305 = vmul.f32 %v506, %v606
  %v1306 = vmul.f32 %v511, %v606
  %v1307 = vmul.f32 %v514, %v606
  %v1308 = vmul.f32 %v487, %v617
  %v1309 = vmul.f32 %v490, %v617
  %v1310 = vmul.f32 %v495, %v617
  %v1311 = vmul.f32 %v498, %v617
  %v1312 = vmul.f32 %v503, %v617
  %v1313 = vmul.f32 %v506, %v617
  %v1314 = vmul.f32 %v511, %v617
  %v1315 = vmul.f32 %v514, %v617
  %v1316 = vmul.f32 %v487, %v628
  %v1317 = vmul.f32 %v490, %v628
  %v1318 = vmul.f32 %v495, %v628
  %v1319 = vmul.f32 %v498, %v628
  %v1320 = vmul.f32 %v503, %v628
  %v1321 = vmul.f32 %v506, %v628
  %v1322 = vmul.f32 %v511, %v628
  %v1323 = vmul.f32 %v514, %v628
  %v1324 = vmul.f32 %v487, %v639
  %v1325 = vmul.f32 %v490, %v639
  %v1326 = vmul.f32 %v495, %v639
  %v1327 = vmul.f32 %v498, %v639
  %v1328 = vmul.f32 %v503, %v639
  %v1329 = vmul.f32 %v506, %v639
  %v1330 = vmul.f32 %v511, %v639
  %v1331 = vmul.f32 %v514, %v639
  %v1332 = vpack.c.bf16 %v1301, %v1300
  %v1333 = vpack.c.bf16 %v1303, %v1302
  %v1334 = vpack.c.bf16 %v1305, %v1304
  %v1335 = vpack.c.bf16 %v1307, %v1306
  %v1336 = vpack.c.bf16 %v1309, %v1308
  %v1337 = vpack.c.bf16 %v1311, %v1310
  %v1338 = vpack.c.bf16 %v1313, %v1312
  %v1339 = vpack.c.bf16 %v1315, %v1314
  %v1340 = vpack.c.bf16 %v1317, %v1316
  %v1341 = vpack.c.bf16 %v1319, %v1318
  %v1342 = vpack.c.bf16 %v1321, %v1320
  %v1343 = vpack.c.bf16 %v1323, %v1322
  %v1344 = vpack.c.bf16 %v1325, %v1324
  %v1345 = vpack.c.bf16 %v1327, %v1326
  %v1346 = vpack.c.bf16 %v1329, %v1328
  %v1347 = vpack.c.bf16 %v1331, %v1330
  %v1348 = vpack.c.bf16 %v490, %v487
  %v1349 = vpack.c.bf16 %v498, %v495
  %v1350 = vpack.c.bf16 %v506, %v503
  %v1351 = vpack.c.bf16 %v514, %v511
  %1368 = vrot.lane.b32.xlu0 %v1284, 96
  %v1369 = vpop.permute.xlu0 %1368
  %1370 = vrot.lane.b32.xlu0 %v1285, 96
  %v1371 = vpop.permute.xlu0 %1370
  %1372 = vrot.lane.b32.xlu0 %v1286, 96
  %v1373 = vpop.permute.xlu0 %1372
  %1374 = vrot.lane.b32.xlu0 %v1287, 96
  %v1375 = vpop.permute.xlu0 %1374
  %1376 = vrot.lane.b32.xlu0 %v1288, 96
  %v1377 = vpop.permute.xlu0 %1376
  %1378 = vrot.lane.b32.xlu0 %v1289, 96
  %v1379 = vpop.permute.xlu0 %1378
  %1380 = vrot.lane.b32.xlu0 %v1290, 96
  %v1381 = vpop.permute.xlu0 %1380
  %1382 = vrot.lane.b32.xlu0 %v1291, 96
  %v1383 = vpop.permute.xlu0 %1382
  %1384 = vrot.lane.b32.xlu0 %v1292, 96
  %v1385 = vpop.permute.xlu0 %1384
  %1386 = vrot.lane.b32.xlu0 %v1293, 96
  %v1387 = vpop.permute.xlu0 %1386
  %1388 = vrot.lane.b32.xlu0 %v1294, 96
  %v1389 = vpop.permute.xlu0 %1388
  %1390 = vrot.lane.b32.xlu0 %v1295, 96
  %v1391 = vpop.permute.xlu0 %1390
  %1392 = vrot.lane.b32.xlu0 %v1296, 96
  %v1393 = vpop.permute.xlu0 %1392
  %1394 = vrot.lane.b32.xlu0 %v1297, 96
  %v1395 = vpop.permute.xlu0 %1394
  %1396 = vrot.lane.b32.xlu0 %v1298, 96
  %v1397 = vpop.permute.xlu0 %1396
  %1398 = vrot.lane.b32.xlu0 %v1299, 96
  %v1399 = vpop.permute.xlu0 %1398
  %v1401 = vsel %vm109, %v1348, 0
  %v1404 = vsel %vm109, %v1349, 0
  %v1407 = vsel %vm109, %v1350, 0
  %v1410 = vsel %vm109, %v1351, 0
  %v1413 = vsel %vm109, %v1369, 0
  %v1416 = vsel %vm109, %v1371, 0
  %v1419 = vsel %vm109, %v1373, 0
  %v1422 = vsel %vm109, %v1375, 0
  %v1425 = vsel %vm109, %v1377, 0
  %v1428 = vsel %vm109, %v1379, 0
  %v1431 = vsel %vm109, %v1381, 0
  %v1434 = vsel %vm109, %v1383, 0
  %v1437 = vsel %vm109, %v1385, 0
  %v1440 = vsel %vm109, %v1387, 0
  %v1443 = vsel %vm109, %v1389, 0
  %v1446 = vsel %vm109, %v1391, 0
  %v1449 = vsel %vm109, %v1393, 0
  %v1452 = vsel %vm109, %v1395, 0
  %v1455 = vsel %vm109, %v1397, 0
  %v1458 = vsel %vm109, %v1399, 0
  %1460 = vmatprep.subr.bf16.mxu0 0
  %1461 = vmatpush1.bf16.xpose.msra.mxu0 %v1413
  %1462 = vmatprep.subr.bf16.mxu0 0
  %1463 = vmatpush1.bf16.xpose.msra.mxu0 %v1416
  %1464 = vmatprep.subr.bf16.mxu0 0
  %1465 = vmatpush1.bf16.xpose.msra.mxu0 %v1419
  %1466 = vmatprep.subr.bf16.mxu0 0
  %1467 = vmatpush1.bf16.xpose.msra.mxu0 %v1422
  %1468 = vmatprep.subr.bf16.mxu0 0
  %1469 = vmatpush1.bf16.xpose.msra.mxu0 %v1425
  %1470 = vmatprep.subr.bf16.mxu0 0
  %1471 = vmatpush1.bf16.xpose.msra.mxu0 %v1428
  %1472 = vmatprep.subr.bf16.mxu0 0
  %1473 = vmatpush1.bf16.xpose.msra.mxu0 %v1431
  %1474 = vmatprep.subr.bf16.mxu0 0
  %1475 = vmatpush1.bf16.xpose.msra.mxu0 %v1434
  %1476 = vmatprep.subr.bf16.mxu0 0
  %1477 = vmatpush1.bf16.xpose.msra.mxu0 %v1437
  %1478 = vmatprep.subr.bf16.mxu0 0
  %1479 = vmatpush1.bf16.xpose.msra.mxu0 %v1440
  %1480 = vmatprep.subr.bf16.mxu0 0
  %1481 = vmatpush1.bf16.xpose.msra.mxu0 %v1443
  %1482 = vmatprep.subr.bf16.mxu0 0
  %1483 = vmatpush1.bf16.xpose.msra.mxu0 %v1446
  %1484 = vmatprep.subr.bf16.mxu0 0
  %1485 = vmatpush1.bf16.xpose.msra.mxu0 %v1449
  %1486 = vmatprep.subr.bf16.mxu0 0
  %1487 = vmatpush1.bf16.xpose.msra.mxu0 %v1452
  %1488 = vmatprep.subr.bf16.mxu0 0
  %1489 = vmatpush1.bf16.xpose.msra.mxu0 %v1455
  %1490 = vmatprep.subr.bf16.mxu0 0
  %1491 = vmatpush1.bf16.xpose.msra.mxu0 %v1458
  %1492 = vmatprep.mubr.bf16.mxu0 0
  %1493 = vmatmul.mubr.bf16.gmra.mrb[0].mxu0 %v1401
  %v1494 = vpop.f32.mrb[0].mxu0
  %v1495 = vadd.f32 %v669, %v1494
  %v1496 = vpop.f32.mrb[0].mxu0
  %v1497 = vadd.f32 %v670, %v1496
  %v1498 = vpop.f32.mrb[0].mxu0
  %v1499 = vadd.f32 %v671, %v1498
  %v1500 = vpop.f32.mrb[0].mxu0
  %v1501 = vadd.f32 %v672, %v1500
  %1502 = vmatprep.mubr.bf16.mxu0 0
  %1503 = vmatmul.mubr.bf16.gmra.mrb[0].mxu0 %v1404
  %v1504 = vpop.f32.mrb[0].mxu0
  %v1505 = vadd.f32 %v673, %v1504
  %v1506 = vpop.f32.mrb[0].mxu0
  %v1507 = vadd.f32 %v674, %v1506
  %v1508 = vpop.f32.mrb[0].mxu0
  %v1509 = vadd.f32 %v675, %v1508
  %v1510 = vpop.f32.mrb[0].mxu0
  %v1511 = vadd.f32 %v676, %v1510
  %1512 = vmatprep.mubr.bf16.mxu0 0
  %1513 = vmatmul.mubr.bf16.gmra.mrb[0].mxu0 %v1407
  %v1514 = vpop.f32.mrb[0].mxu0
  %v1515 = vadd.f32 %v677, %v1514
  %v1516 = vpop.f32.mrb[0].mxu0
  %v1517 = vadd.f32 %v678, %v1516
  %v1518 = vpop.f32.mrb[0].mxu0
  %v1519 = vadd.f32 %v679, %v1518
  %v1520 = vpop.f32.mrb[0].mxu0
  %v1521 = vadd.f32 %v680, %v1520
  %1522 = vmatprep.mubr.bf16.mxu0 0
  %1523 = vmatmul.mubr.bf16.gmra.mrb[0].mxu0 %v1410
  %v1524 = vpop.f32.mrb[0].mxu0
  %v1525 = vadd.f32 %v681, %v1524
  %v1526 = vpop.f32.mrb[0].mxu0
  %v1527 = vadd.f32 %v682, %v1526
  %v1528 = vpop.f32.mrb[0].mxu0
  %v1529 = vadd.f32 %v683, %v1528
  %v1530 = vpop.f32.mrb[0].mxu0
  %v1531 = vadd.f32 %v684, %v1530
  %1532 = vdwg.mxu0
  %v1533 = vmax.f32 %v1495, %v1497
  %1534 = vmax.xlane.f32.xlu0 %v1533
  %v1535 = vpop.xlane.xlu0 %1534
  %v1536 = vmax.f32 %v1499, %v1501
  %1537 = vmax.xlane.f32.xlu0 %v1536
  %v1538 = vpop.xlane.xlu0 %1537
  %v1539 = vmax.f32 %v1505, %v1507
  %1540 = vmax.xlane.f32.xlu0 %v1539
  %v1541 = vpop.xlane.xlu0 %1540
  %v1542 = vmax.f32 %v1509, %v1511
  %1543 = vmax.xlane.f32.xlu0 %v1542
  %v1544 = vpop.xlane.xlu0 %1543
  %v1545 = vmax.f32 %v1515, %v1517
  %1546 = vmax.xlane.f32.xlu0 %v1545
  %v1547 = vpop.xlane.xlu0 %1546
  %v1548 = vmax.f32 %v1519, %v1521
  %1549 = vmax.xlane.f32.xlu0 %v1548
  %v1550 = vpop.xlane.xlu0 %1549
  %v1551 = vmax.f32 %v1525, %v1527
  %1552 = vmax.xlane.f32.xlu0 %v1551
  %v1553 = vpop.xlane.xlu0 %1552
  %v1554 = vmax.f32 %v1529, %v1531
  %1555 = vmax.xlane.f32.xlu0 %v1554
  %v1556 = vpop.xlane.xlu0 %1555
  %v1557 = vsub.f32 %v1495, %v1535
  %v1558 = vsub.f32 %v1497, %v1535
  %v1559 = vsub.f32 %v1499, %v1538
  %v1560 = vsub.f32 %v1501, %v1538
  %v1561 = vsub.f32 %v1505, %v1541
  %v1562 = vsub.f32 %v1507, %v1541
  %v1563 = vsub.f32 %v1509, %v1544
  %v1564 = vsub.f32 %v1511, %v1544
  %v1565 = vsub.f32 %v1515, %v1547
  %v1566 = vsub.f32 %v1517, %v1547
  %v1567 = vsub.f32 %v1519, %v1550
  %v1568 = vsub.f32 %v1521, %v1550
  %v1569 = vsub.f32 %v1525, %v1553
  %v1570 = vsub.f32 %v1527, %v1553
  %v1571 = vsub.f32 %v1529, %v1556
  %v1572 = vsub.f32 %v1531, %v1556
  %v1573 = vmul.f32 %v1557, 1.442695
  %v1574 = vpow.pop %v1573
  %v1575 = vmul.f32 %v1558, 1.442695
  %v1576 = vpow.pop %v1575
  %v1577 = vmul.f32 %v1559, 1.442695
  %v1578 = vpow.pop %v1577
  %v1579 = vmul.f32 %v1560, 1.442695
  %v1580 = vpow.pop %v1579
  %v1581 = vmul.f32 %v1561, 1.442695
  %v1582 = vpow.pop %v1581
  %v1583 = vmul.f32 %v1562, 1.442695
  %v1584 = vpow.pop %v1583
  %v1585 = vmul.f32 %v1563, 1.442695
  %v1586 = vpow.pop %v1585
  %v1587 = vmul.f32 %v1564, 1.442695
  %v1588 = vpow.pop %v1587
  %v1589 = vmul.f32 %v1565, 1.442695
  %v1590 = vpow.pop %v1589
  %v1591 = vmul.f32 %v1566, 1.442695
  %v1592 = vpow.pop %v1591
  %v1593 = vmul.f32 %v1567, 1.442695
  %v1594 = vpow.pop %v1593
  %v1595 = vmul.f32 %v1568, 1.442695
  %v1596 = vpow.pop %v1595
  %v1597 = vmul.f32 %v1569, 1.442695
  %v1598 = vpow.pop %v1597
  %v1599 = vmul.f32 %v1570, 1.442695
  %v1600 = vpow.pop %v1599
  %v1601 = vmul.f32 %v1571, 1.442695
  %v1602 = vpow.pop %v1601
  %v1603 = vmul.f32 %v1572, 1.442695
  %v1604 = vpow.pop %v1603
  %v1605 = vpack.c.bf16 %v1578, %v1574
  %v1606 = vpack.c.bf16 %v1580, %v1576
  %v1607 = vpack.c.bf16 %v1586, %v1582
  %v1608 = vpack.c.bf16 %v1588, %v1584
  %v1609 = vpack.c.bf16 %v1594, %v1590
  %v1610 = vpack.c.bf16 %v1596, %v1592
  %v1611 = vpack.c.bf16 %v1602, %v1598
  %v1612 = vpack.c.bf16 %v1604, %v1600
  %1629 = vrot.lane.b32.xlu0 %v1332, 64
  %v1630 = vpop.permute.xlu0 %1629
  %1631 = vrot.lane.b32.xlu0 %v1333, 64
  %v1632 = vpop.permute.xlu0 %1631
  %1633 = vrot.lane.b32.xlu0 %v1334, 64
  %v1634 = vpop.permute.xlu0 %1633
  %1635 = vrot.lane.b32.xlu0 %v1335, 64
  %v1636 = vpop.permute.xlu0 %1635
  %1637 = vrot.lane.b32.xlu0 %v1336, 64
  %v1638 = vpop.permute.xlu0 %1637
  %1639 = vrot.lane.b32.xlu0 %v1337, 64
  %v1640 = vpop.permute.xlu0 %1639
  %1641 = vrot.lane.b32.xlu0 %v1338, 64
  %v1642 = vpop.permute.xlu0 %1641
  %1643 = vrot.lane.b32.xlu0 %v1339, 64
  %v1644 = vpop.permute.xlu0 %1643
  %1645 = vrot.lane.b32.xlu0 %v1340, 64
  %v1646 = vpop.permute.xlu0 %1645
  %1647 = vrot.lane.b32.xlu0 %v1341, 64
  %v1648 = vpop.permute.xlu0 %1647
  %1649 = vrot.lane.b32.xlu0 %v1342, 64
  %v1650 = vpop.permute.xlu0 %1649
  %1651 = vrot.lane.b32.xlu0 %v1343, 64
  %v1652 = vpop.permute.xlu0 %1651
  %1653 = vrot.lane.b32.xlu0 %v1344, 64
  %v1654 = vpop.permute.xlu0 %1653
  %1655 = vrot.lane.b32.xlu0 %v1345, 64
  %v1656 = vpop.permute.xlu0 %1655
  %1657 = vrot.lane.b32.xlu0 %v1346, 64
  %v1658 = vpop.permute.xlu0 %1657
  %1659 = vrot.lane.b32.xlu0 %v1347, 64
  %v1660 = vpop.permute.xlu0 %1659
  %1677 = vmatprep.subr.bf16.mxu0 0
  %1678 = vmatpush1.bf16.msra.mxu0 %v1630
  %1679 = vmatprep.subr.bf16.mxu0 0
  %1680 = vmatpush1.bf16.msra.mxu0 %v1632
  %1681 = vmatprep.subr.bf16.mxu0 0
  %1682 = vmatpush1.bf16.msra.mxu0 %v1634
  %1683 = vmatprep.subr.bf16.mxu0 0
  %1684 = vmatpush1.bf16.msra.mxu0 %v1636
  %1685 = vmatprep.subr.bf16.mxu0 0
  %1686 = vmatpush1.bf16.msra.mxu0 %v1638
  %1687 = vmatprep.subr.bf16.mxu0 0
  %1688 = vmatpush1.bf16.msra.mxu0 %v1640
  %1689 = vmatprep.subr.bf16.mxu0 0
  %1690 = vmatpush1.bf16.msra.mxu0 %v1642
  %1691 = vmatprep.subr.bf16.mxu0 0
  %1692 = vmatpush1.bf16.msra.mxu0 %v1644
  %1693 = vmatprep.subr.bf16.mxu0 0
  %1694 = vmatpush1.bf16.msra.mxu0 %v1646
  %1695 = vmatprep.subr.bf16.mxu0 0
  %1696 = vmatpush1.bf16.msra.mxu0 %v1648
  %1697 = vmatprep.subr.bf16.mxu0 0
  %1698 = vmatpush1.bf16.msra.mxu0 %v1650
  %1699 = vmatprep.subr.bf16.mxu0 0
  %1700 = vmatpush1.bf16.msra.mxu0 %v1652
  %1701 = vmatprep.subr.bf16.mxu0 0
  %1702 = vmatpush1.bf16.msra.mxu0 %v1654
  %1703 = vmatprep.subr.bf16.mxu0 0
  %1704 = vmatpush1.bf16.msra.mxu0 %v1656
  %1705 = vmatprep.subr.bf16.mxu0 0
  %1706 = vmatpush1.bf16.msra.mxu0 %v1658
  %1707 = vmatprep.subr.bf16.mxu0 0
  %1708 = vmatpush1.bf16.msra.mxu0 %v1660
  %1709 = vmatprep.mubr.bf16.mxu0 %v1606
  %1710 = vmatmul.mubr.bf16.gmra.mrb[0].mxu0 %v1605
  %v1711 = vpop.f32.mrb[0].mxu0
  %v1712 = vadd.f32 0.0, %v1711
  %v1713 = vpop.f32.mrb[0].mxu0
  %v1714 = vpop.f32.mrb[0].mxu0
  %v1715 = vadd.f32 0.0, %v1714
  %v1716 = vpop.f32.mrb[0].mxu0
  %1717 = vmatprep.mubr.bf16.mxu0 %v1608
  %1718 = vmatmul.mubr.bf16.gmra.mrb[0].mxu0 %v1607
  %v1719 = vpop.f32.mrb[0].mxu0
  %v1720 = vadd.f32 0.0, %v1719
  %v1721 = vpop.f32.mrb[0].mxu0
  %v1722 = vpop.f32.mrb[0].mxu0
  %v1723 = vadd.f32 0.0, %v1722
  %v1724 = vpop.f32.mrb[0].mxu0
  %1725 = vmatprep.mubr.bf16.mxu0 %v1610
  %1726 = vmatmul.mubr.bf16.gmra.mrb[0].mxu0 %v1609
  %v1727 = vpop.f32.mrb[0].mxu0
  %v1728 = vadd.f32 0.0, %v1727
  %v1729 = vpop.f32.mrb[0].mxu0
  %v1730 = vpop.f32.mrb[0].mxu0
  %v1731 = vadd.f32 0.0, %v1730
  %v1732 = vpop.f32.mrb[0].mxu0
  %1733 = vmatprep.mubr.bf16.mxu0 %v1612
  %1734 = vmatmul.mubr.bf16.gmra.mrb[0].mxu0 %v1611
  %v1735 = vpop.f32.mrb[0].mxu0
  %v1736 = vadd.f32 0.0, %v1735
  %v1737 = vpop.f32.mrb[0].mxu0
  %v1738 = vpop.f32.mrb[0].mxu0
  %v1739 = vadd.f32 0.0, %v1738
  %v1740 = vpop.f32.mrb[0].mxu0
  %1741 = vdwg.mxu0
  %1742 = vmatprep.subr.bf16.mxu0 0
  %1743 = vmatpush1.bf16.msra.mxu0 %v1139
  %1744 = vmatprep.subr.bf16.mxu0 0
  %1745 = vmatpush1.bf16.msra.mxu0 %v1140
  %1746 = vmatprep.subr.bf16.mxu0 0
  %1747 = vmatpush1.bf16.msra.mxu0 %v1141
  %1748 = vmatprep.subr.bf16.mxu0 0
  %1749 = vmatpush1.bf16.msra.mxu0 %v1142
  %1750 = vmatprep.subr.bf16.mxu0 0
  %1751 = vmatpush1.bf16.msra.mxu0 %v1143
  %1752 = vmatprep.subr.bf16.mxu0 0
  %1753 = vmatpush1.bf16.msra.mxu0 %v1144
  %1754 = vmatprep.subr.bf16.mxu0 0
  %1755 = vmatpush1.bf16.msra.mxu0 %v1145
  %1756 = vmatprep.subr.bf16.mxu0 0
  %1757 = vmatpush1.bf16.msra.mxu0 %v1146
  %1758 = vmatprep.subr.bf16.mxu0 0
  %1759 = vmatpush1.bf16.msra.mxu0 %v1147
  %1760 = vmatprep.subr.bf16.mxu0 0
  %1761 = vmatpush1.bf16.msra.mxu0 %v1148
  %1762 = vmatprep.subr.bf16.mxu0 0
  %1763 = vmatpush1.bf16.msra.mxu0 %v1149
  %1764 = vmatprep.subr.bf16.mxu0 0
  %1765 = vmatpush1.bf16.msra.mxu0 %v1150
  %1766 = vmatprep.subr.bf16.mxu0 0
  %1767 = vmatpush1.bf16.msra.mxu0 %v1151
  %1768 = vmatprep.subr.bf16.mxu0 0
  %1769 = vmatpush1.bf16.msra.mxu0 %v1152
  %1770 = vmatprep.subr.bf16.mxu0 0
  %1771 = vmatpush1.bf16.msra.mxu0 %v1153
  %1772 = vmatprep.subr.bf16.mxu0 0
  %1773 = vmatpush1.bf16.msra.mxu0 %v1154
  %1774 = vmatprep.mubr.bf16.mxu0 %v1606
  %1775 = vmatmul.mubr.bf16.gmra.mrb[0].mxu0 %v1605
  %v1776 = vpop.f32.mrb[0].mxu0
  %v1777 = vadd.f32 1e-30, %v1776
  %v1778 = vpop.f32.mrb[0].mxu0
  %v1779 = vpop.f32.mrb[0].mxu0
  %v1780 = vadd.f32 1e-30, %v1779
  %v1781 = vpop.f32.mrb[0].mxu0
  %1782 = vmatprep.mubr.bf16.mxu0 %v1608
  %1783 = vmatmul.mubr.bf16.gmra.mrb[0].mxu0 %v1607
  %v1784 = vpop.f32.mrb[0].mxu0
  %v1785 = vadd.f32 1e-30, %v1784
  %v1786 = vpop.f32.mrb[0].mxu0
  %v1787 = vpop.f32.mrb[0].mxu0
  %v1788 = vadd.f32 1e-30, %v1787
  %v1789 = vpop.f32.mrb[0].mxu0
  %1790 = vmatprep.mubr.bf16.mxu0 %v1610
  %1791 = vmatmul.mubr.bf16.gmra.mrb[0].mxu0 %v1609
  %v1792 = vpop.f32.mrb[0].mxu0
  %v1793 = vadd.f32 1e-30, %v1792
  %v1794 = vpop.f32.mrb[0].mxu0
  %v1795 = vpop.f32.mrb[0].mxu0
  %v1796 = vadd.f32 1e-30, %v1795
  %v1797 = vpop.f32.mrb[0].mxu0
  %1798 = vmatprep.mubr.bf16.mxu0 %v1612
  %1799 = vmatmul.mubr.bf16.gmra.mrb[0].mxu0 %v1611
  %v1800 = vpop.f32.mrb[0].mxu0
  %v1801 = vadd.f32 1e-30, %v1800
  %v1802 = vpop.f32.mrb[0].mxu0
  %v1803 = vpop.f32.mrb[0].mxu0
  %v1804 = vadd.f32 1e-30, %v1803
  %v1805 = vpop.f32.mrb[0].mxu0
  %1806 = vdwg.mxu0
  %v1807 = vrcp.pop %v1777
  %v1808 = vrcp.pop %v1780
  %v1809 = vrcp.pop %v1785
  %v1810 = vrcp.pop %v1788
  %v1811 = vrcp.pop %v1793
  %v1812 = vrcp.pop %v1796
  %v1813 = vrcp.pop %v1801
  %v1814 = vrcp.pop %v1804
  %v1815 = vmul.f32 %v1712, %v1807
  %v1816 = vmul.f32 %v1715, %v1808
  %v1817 = vmul.f32 %v1720, %v1809
  %v1818 = vmul.f32 %v1723, %v1810
  %v1819 = vmul.f32 %v1728, %v1811
  %v1820 = vmul.f32 %v1731, %v1812
  %v1821 = vmul.f32 %v1736, %v1813
  %v1822 = vmul.f32 %v1739, %v1814
  %v1823 = vpack.c.bf16 %v1245, %v1244
  %v1824 = vpack.c.bf16 %v1247, %v1246
  %v1825 = vpack.c.bf16 %v1249, %v1248
  %v1826 = vpack.c.bf16 %v1251, %v1250
  %v1827 = vpack.c.bf16 %v1816, %v1815
  %v1828 = vpack.c.bf16 %v1818, %v1817
  %v1829 = vpack.c.bf16 %v1820, %v1819
  %v1830 = vpack.c.bf16 %v1822, %v1821
  %v1831 = vld [vmem:[%s7] sm:$0xf]
  %v1832 = vld [vmem:[%s7 + $0x4] sm:$0xf]
  %v1833 = vld [vmem:[%s7 + $0x8] sm:$0xf]
  %v1834 = vld [vmem:[%s7 + $0xc] sm:$0xf]
  %v1835 = vld [vmem:[%s8] sm:$0x1]
  %v1837 = vlaneseq
  %v1838 = vshrl.u32 %v1837, 7
  %v1839 = vsub.s32 0, %v1838
  %v1840 = vrot.slane %v1835, %v1839
  %v1846 = vunpack.c.l.b16 %v1831
  %v1847 = vunpack.c.l.b16 %v1832
  %v1848 = vunpack.c.l.b16 %v1833
  %v1849 = vunpack.c.l.b16 %v1834
  %v1850 = vpack.c.b16 %v1847, %v1846
  %v1851 = vpack.c.b16 %v1849, %v1848
  %v1855 = vsel %vm109, %v1823, 0
  %v1858 = vsel %vm109, %v1824, 0
  %v1861 = vsel %vm109, %v1825, 0
  %v1864 = vsel %vm109, %v1826, 0
  %v1867 = vsel %vm109, %v1827, 0
  %v1870 = vsel %vm109, %v1828, 0
  %v1873 = vsel %vm109, %v1829, 0
  %v1876 = vsel %vm109, %v1830, 0
  %1878 = vmatprep.subr.bf16.mxu0 0
  %1879 = vmatpush1.bf16.msra.mxu0 %v1850
  %1880 = vmatprep.subr.bf16.mxu0 0
  %1881 = vmatpush1.bf16.msra.mxu0 %v1851
  %1882 = vmatprep.subr.bf16.mxu0 0
  %1883 = vmatpush1.bf16.msra.mxu0 0
  %1884 = vmatprep.subr.bf16.mxu0 0
  %1885 = vmatpush1.bf16.msra.mxu0 0
  %1886 = vmatprep.subr.bf16.mxu0 0
  %1887 = vmatpush1.bf16.msra.mxu0 0
  %1888 = vmatprep.subr.bf16.mxu0 0
  %1889 = vmatpush1.bf16.msra.mxu0 0
  %1890 = vmatprep.subr.bf16.mxu0 0
  %1891 = vmatpush1.bf16.msra.mxu0 0
  %1892 = vmatprep.subr.bf16.mxu0 0
  %1893 = vmatpush1.bf16.msra.mxu0 0
  %1894 = vmatprep.subr.bf16.mxu0 0
  %1895 = vmatpush1.bf16.msra.mxu0 0
  %1896 = vmatprep.subr.bf16.mxu0 0
  %1897 = vmatpush1.bf16.msra.mxu0 0
  %1898 = vmatprep.subr.bf16.mxu0 0
  %1899 = vmatpush1.bf16.msra.mxu0 0
  %1900 = vmatprep.subr.bf16.mxu0 0
  %1901 = vmatpush1.bf16.msra.mxu0 0
  %1902 = vmatprep.subr.bf16.mxu0 0
  %1903 = vmatpush1.bf16.msra.mxu0 0
  %1904 = vmatprep.subr.bf16.mxu0 0
  %1905 = vmatpush1.bf16.msra.mxu0 0
  %1906 = vmatprep.subr.bf16.mxu0 0
  %1907 = vmatpush1.bf16.msra.mxu0 0
  %1908 = vmatprep.subr.bf16.mxu0 0
  %1909 = vmatpush1.bf16.msra.mxu0 0
  %1910 = vmatprep.mubr.bf16.mxu0 0
  %1911 = vmatmul.mubr.bf16.gmra.mrb[0].mxu0 %v1855
  %v1912 = vpop.f32.mrb[0].mxu0
  %v1913 = vadd.f32 %v1840, %v1912
  %v1914 = vpop.f32.mrb[0].mxu0
  %v1915 = vpop.f32.mrb[0].mxu0
  %v1916 = vadd.f32 %v1840, %v1915
  %v1917 = vpop.f32.mrb[0].mxu0
  %1918 = vmatprep.mubr.bf16.mxu0 0
  %1919 = vmatmul.mubr.bf16.gmra.mrb[0].mxu0 %v1858
  %v1920 = vpop.f32.mrb[0].mxu0
  %v1921 = vadd.f32 %v1840, %v1920
  %v1922 = vpop.f32.mrb[0].mxu0
  %v1923 = vpop.f32.mrb[0].mxu0
  %v1924 = vadd.f32 %v1840, %v1923
  %v1925 = vpop.f32.mrb[0].mxu0
  %1926 = vmatprep.mubr.bf16.mxu0 0
  %1927 = vmatmul.mubr.bf16.gmra.mrb[0].mxu0 %v1861
  %v1928 = vpop.f32.mrb[0].mxu0
  %v1929 = vadd.f32 %v1840, %v1928
  %v1930 = vpop.f32.mrb[0].mxu0
  %v1931 = vpop.f32.mrb[0].mxu0
  %v1932 = vadd.f32 %v1840, %v1931
  %v1933 = vpop.f32.mrb[0].mxu0
  %1934 = vmatprep.mubr.bf16.mxu0 0
  %1935 = vmatmul.mubr.bf16.gmra.mrb[0].mxu0 %v1864
  %v1936 = vpop.f32.mrb[0].mxu0
  %v1937 = vadd.f32 %v1840, %v1936
  %v1938 = vpop.f32.mrb[0].mxu0
  %v1939 = vpop.f32.mrb[0].mxu0
  %v1940 = vadd.f32 %v1840, %v1939
  %v1941 = vpop.f32.mrb[0].mxu0
  %1942 = vmatprep.mubr.bf16.mxu0 0
  %1943 = vmatmul.mubr.bf16.gmra.mrb[0].mxu0 %v1867
  %v1944 = vpop.f32.mrb[0].mxu0
  %v1945 = vadd.f32 %v1840, %v1944
  %v1946 = vpop.f32.mrb[0].mxu0
  %v1947 = vpop.f32.mrb[0].mxu0
  %v1948 = vadd.f32 %v1840, %v1947
  %v1949 = vpop.f32.mrb[0].mxu0
  %1950 = vmatprep.mubr.bf16.mxu0 0
  %1951 = vmatmul.mubr.bf16.gmra.mrb[0].mxu0 %v1870
  %v1952 = vpop.f32.mrb[0].mxu0
  %v1953 = vadd.f32 %v1840, %v1952
  %v1954 = vpop.f32.mrb[0].mxu0
  %v1955 = vpop.f32.mrb[0].mxu0
  %v1956 = vadd.f32 %v1840, %v1955
  %v1957 = vpop.f32.mrb[0].mxu0
  %1958 = vmatprep.mubr.bf16.mxu0 0
  %1959 = vmatmul.mubr.bf16.gmra.mrb[0].mxu0 %v1873
  %v1960 = vpop.f32.mrb[0].mxu0
  %v1961 = vadd.f32 %v1840, %v1960
  %v1962 = vpop.f32.mrb[0].mxu0
  %v1963 = vpop.f32.mrb[0].mxu0
  %v1964 = vadd.f32 %v1840, %v1963
  %v1965 = vpop.f32.mrb[0].mxu0
  %1966 = vmatprep.mubr.bf16.mxu0 0
  %1967 = vmatmul.mubr.bf16.gmra.mrb[0].mxu0 %v1876
  %v1968 = vpop.f32.mrb[0].mxu0
  %v1969 = vadd.f32 %v1840, %v1968
  %v1970 = vpop.f32.mrb[0].mxu0
  %v1971 = vpop.f32.mrb[0].mxu0
  %v1972 = vadd.f32 %v1840, %v1971
  %v1973 = vpop.f32.mrb[0].mxu0
  %1974 = vdwg.mxu0
  %v1975 = vadd.f32 %v54, %v1913
  %v1976 = vadd.f32 %v55, %v1916
  %v1977 = vadd.f32 %v56, %v1921
  %v1978 = vadd.f32 %v57, %v1924
  %v1979 = vadd.f32 %v58, %v1929
  %v1980 = vadd.f32 %v59, %v1932
  %v1981 = vadd.f32 %v60, %v1937
  %v1982 = vadd.f32 %v61, %v1940
  %v1983 = vadd.f32 %v62, %v1945
  %v1984 = vadd.f32 %v63, %v1948
  %v1985 = vadd.f32 %v64, %v1953
  %v1986 = vadd.f32 %v65, %v1956
  %v1987 = vadd.f32 %v66, %v1961
  %v1988 = vadd.f32 %v67, %v1964
  %v1989 = vadd.f32 %v68, %v1969
  %v1990 = vadd.f32 %v69, %v1972
  %v1991 = vsel %vm109, %v1975, 0.0
  %1992 = vadd.xlane.f32.xlu0 %v1991
  %v1993 = vpop.xlane.xlu0 %1992
  %v1994 = vsel %vm109, %v1976, 0.0
  %1995 = vadd.xlane.f32.xlu0 %v1994
  %v1996 = vpop.xlane.xlu0 %1995
  %v1997 = vsel %vm109, %v1977, 0.0
  %1998 = vadd.xlane.f32.xlu0 %v1997
  %v1999 = vpop.xlane.xlu0 %1998
  %v2000 = vsel %vm109, %v1978, 0.0
  %2001 = vadd.xlane.f32.xlu0 %v2000
  %v2002 = vpop.xlane.xlu0 %2001
  %v2003 = vsel %vm109, %v1979, 0.0
  %2004 = vadd.xlane.f32.xlu0 %v2003
  %v2005 = vpop.xlane.xlu0 %2004
  %v2006 = vsel %vm109, %v1980, 0.0
  %2007 = vadd.xlane.f32.xlu0 %v2006
  %v2008 = vpop.xlane.xlu0 %2007
  %v2009 = vsel %vm109, %v1981, 0.0
  %2010 = vadd.xlane.f32.xlu0 %v2009
  %v2011 = vpop.xlane.xlu0 %2010
  %v2012 = vsel %vm109, %v1982, 0.0
  %2013 = vadd.xlane.f32.xlu0 %v2012
  %v2014 = vpop.xlane.xlu0 %2013
  %v2015 = vsel %vm109, %v1983, 0.0
  %2016 = vadd.xlane.f32.xlu0 %v2015
  %v2017 = vpop.xlane.xlu0 %2016
  %v2018 = vsel %vm109, %v1984, 0.0
  %2019 = vadd.xlane.f32.xlu0 %v2018
  %v2020 = vpop.xlane.xlu0 %2019
  %v2021 = vsel %vm109, %v1985, 0.0
  %2022 = vadd.xlane.f32.xlu0 %v2021
  %v2023 = vpop.xlane.xlu0 %2022
  %v2024 = vsel %vm109, %v1986, 0.0
  %2025 = vadd.xlane.f32.xlu0 %v2024
  %v2026 = vpop.xlane.xlu0 %2025
  %v2027 = vsel %vm109, %v1987, 0.0
  %2028 = vadd.xlane.f32.xlu0 %v2027
  %v2029 = vpop.xlane.xlu0 %2028
  %v2030 = vsel %vm109, %v1988, 0.0
  %2031 = vadd.xlane.f32.xlu0 %v2030
  %v2032 = vpop.xlane.xlu0 %2031
  %v2033 = vsel %vm109, %v1989, 0.0
  %2034 = vadd.xlane.f32.xlu0 %v2033
  %v2035 = vpop.xlane.xlu0 %2034
  %v2036 = vsel %vm109, %v1990, 0.0
  %2037 = vadd.xlane.f32.xlu0 %v2036
  %v2038 = vpop.xlane.xlu0 %2037
  %v2039 = vmul.f32 %v1993, %v158
  %v2040 = vmul.f32 %v1996, %v158
  %v2041 = vmul.f32 %v1999, %v158
  %v2042 = vmul.f32 %v2002, %v158
  %v2043 = vmul.f32 %v2005, %v158
  %v2044 = vmul.f32 %v2008, %v158
  %v2045 = vmul.f32 %v2011, %v158
  %v2046 = vmul.f32 %v2014, %v158
  %v2047 = vmul.f32 %v2017, %v158
  %v2048 = vmul.f32 %v2020, %v158
  %v2049 = vmul.f32 %v2023, %v158
  %v2050 = vmul.f32 %v2026, %v158
  %v2051 = vmul.f32 %v2029, %v158
  %v2052 = vmul.f32 %v2032, %v158
  %v2053 = vmul.f32 %v2035, %v158
  %v2054 = vmul.f32 %v2038, %v158
  %v2055 = vsub.f32 %v1975, %v2039
  %v2056 = vsub.f32 %v1976, %v2040
  %v2057 = vsub.f32 %v1977, %v2041
  %v2058 = vsub.f32 %v1978, %v2042
  %v2059 = vsub.f32 %v1979, %v2043
  %v2060 = vsub.f32 %v1980, %v2044
  %v2061 = vsub.f32 %v1981, %v2045
  %v2062 = vsub.f32 %v1982, %v2046
  %v2063 = vsub.f32 %v1983, %v2047
  %v2064 = vsub.f32 %v1984, %v2048
  %v2065 = vsub.f32 %v1985, %v2049
  %v2066 = vsub.f32 %v1986, %v2050
  %v2067 = vsub.f32 %v1987, %v2051
  %v2068 = vsub.f32 %v1988, %v2052
  %v2069 = vsub.f32 %v1989, %v2053
  %v2070 = vsub.f32 %v1990, %v2054
  %v2071 = vmul.f32 %v2055, %v2055
  %v2072 = vmul.f32 %v2056, %v2056
  %v2073 = vmul.f32 %v2057, %v2057
  %v2074 = vmul.f32 %v2058, %v2058
  %v2075 = vmul.f32 %v2059, %v2059
  %v2076 = vmul.f32 %v2060, %v2060
  %v2077 = vmul.f32 %v2061, %v2061
  %v2078 = vmul.f32 %v2062, %v2062
  %v2079 = vmul.f32 %v2063, %v2063
  %v2080 = vmul.f32 %v2064, %v2064
  %v2081 = vmul.f32 %v2065, %v2065
  %v2082 = vmul.f32 %v2066, %v2066
  %v2083 = vmul.f32 %v2067, %v2067
  %v2084 = vmul.f32 %v2068, %v2068
  %v2085 = vmul.f32 %v2069, %v2069
  %v2086 = vmul.f32 %v2070, %v2070
  %v2087 = vsel %vm109, %v2071, 0.0
  %2088 = vadd.xlane.f32.xlu0 %v2087
  %v2089 = vpop.xlane.xlu0 %2088
  %v2090 = vsel %vm109, %v2072, 0.0
  %2091 = vadd.xlane.f32.xlu0 %v2090
  %v2092 = vpop.xlane.xlu0 %2091
  %v2093 = vsel %vm109, %v2073, 0.0
  %2094 = vadd.xlane.f32.xlu0 %v2093
  %v2095 = vpop.xlane.xlu0 %2094
  %v2096 = vsel %vm109, %v2074, 0.0
  %2097 = vadd.xlane.f32.xlu0 %v2096
  %v2098 = vpop.xlane.xlu0 %2097
  %v2099 = vsel %vm109, %v2075, 0.0
  %2100 = vadd.xlane.f32.xlu0 %v2099
  %v2101 = vpop.xlane.xlu0 %2100
  %v2102 = vsel %vm109, %v2076, 0.0
  %2103 = vadd.xlane.f32.xlu0 %v2102
  %v2104 = vpop.xlane.xlu0 %2103
  %v2105 = vsel %vm109, %v2077, 0.0
  %2106 = vadd.xlane.f32.xlu0 %v2105
  %v2107 = vpop.xlane.xlu0 %2106
  %v2108 = vsel %vm109, %v2078, 0.0
  %2109 = vadd.xlane.f32.xlu0 %v2108
  %v2110 = vpop.xlane.xlu0 %2109
  %v2111 = vsel %vm109, %v2079, 0.0
  %2112 = vadd.xlane.f32.xlu0 %v2111
  %v2113 = vpop.xlane.xlu0 %2112
  %v2114 = vsel %vm109, %v2080, 0.0
  %2115 = vadd.xlane.f32.xlu0 %v2114
  %v2116 = vpop.xlane.xlu0 %2115
  %v2117 = vsel %vm109, %v2081, 0.0
  %2118 = vadd.xlane.f32.xlu0 %v2117
  %v2119 = vpop.xlane.xlu0 %2118
  %v2120 = vsel %vm109, %v2082, 0.0
  %2121 = vadd.xlane.f32.xlu0 %v2120
  %v2122 = vpop.xlane.xlu0 %2121
  %v2123 = vsel %vm109, %v2083, 0.0
  %2124 = vadd.xlane.f32.xlu0 %v2123
  %v2125 = vpop.xlane.xlu0 %2124
  %v2126 = vsel %vm109, %v2084, 0.0
  %2127 = vadd.xlane.f32.xlu0 %v2126
  %v2128 = vpop.xlane.xlu0 %2127
  %v2129 = vsel %vm109, %v2085, 0.0
  %2130 = vadd.xlane.f32.xlu0 %v2129
  %v2131 = vpop.xlane.xlu0 %2130
  %v2132 = vsel %vm109, %v2086, 0.0
  %2133 = vadd.xlane.f32.xlu0 %v2132
  %v2134 = vpop.xlane.xlu0 %2133
  %v2135 = vmul.f32 %v2089, %v158
  %v2136 = vmul.f32 %v2092, %v158
  %v2137 = vmul.f32 %v2095, %v158
  %v2138 = vmul.f32 %v2098, %v158
  %v2139 = vmul.f32 %v2101, %v158
  %v2140 = vmul.f32 %v2104, %v158
  %v2141 = vmul.f32 %v2107, %v158
  %v2142 = vmul.f32 %v2110, %v158
  %v2143 = vmul.f32 %v2113, %v158
  %v2144 = vmul.f32 %v2116, %v158
  %v2145 = vmul.f32 %v2119, %v158
  %v2146 = vmul.f32 %v2122, %v158
  %v2147 = vmul.f32 %v2125, %v158
  %v2148 = vmul.f32 %v2128, %v158
  %v2149 = vmul.f32 %v2131, %v158
  %v2150 = vmul.f32 %v2134, %v158
  %v2151 = vadd.f32 %v2135, 1e-05
  %v2152 = vadd.f32 %v2136, 1e-05
  %v2153 = vadd.f32 %v2137, 1e-05
  %v2154 = vadd.f32 %v2138, 1e-05
  %v2155 = vadd.f32 %v2139, 1e-05
  %v2156 = vadd.f32 %v2140, 1e-05
  %v2157 = vadd.f32 %v2141, 1e-05
  %v2158 = vadd.f32 %v2142, 1e-05
  %v2159 = vadd.f32 %v2143, 1e-05
  %v2160 = vadd.f32 %v2144, 1e-05
  %v2161 = vadd.f32 %v2145, 1e-05
  %v2162 = vadd.f32 %v2146, 1e-05
  %v2163 = vadd.f32 %v2147, 1e-05
  %v2164 = vadd.f32 %v2148, 1e-05
  %v2165 = vadd.f32 %v2149, 1e-05
  %v2166 = vadd.f32 %v2150, 1e-05
  %v2167 = vrsqrt.pop %v2151
  %v2168 = vrsqrt.pop %v2152
  %v2169 = vrsqrt.pop %v2153
  %v2170 = vrsqrt.pop %v2154
  %v2171 = vrsqrt.pop %v2155
  %v2172 = vrsqrt.pop %v2156
  %v2173 = vrsqrt.pop %v2157
  %v2174 = vrsqrt.pop %v2158
  %v2175 = vrsqrt.pop %v2159
  %v2176 = vrsqrt.pop %v2160
  %v2177 = vrsqrt.pop %v2161
  %v2178 = vrsqrt.pop %v2162
  %v2179 = vrsqrt.pop %v2163
  %v2180 = vrsqrt.pop %v2164
  %v2181 = vrsqrt.pop %v2165
  %v2182 = vrsqrt.pop %v2166
  %v2183 = vmul.f32 %v2055, %v2167
  %v2184 = vmul.f32 %v2056, %v2168
  %v2185 = vmul.f32 %v2057, %v2169
  %v2186 = vmul.f32 %v2058, %v2170
  %v2187 = vmul.f32 %v2059, %v2171
  %v2188 = vmul.f32 %v2060, %v2172
  %v2189 = vmul.f32 %v2061, %v2173
  %v2190 = vmul.f32 %v2062, %v2174
  %v2191 = vmul.f32 %v2063, %v2175
  %v2192 = vmul.f32 %v2064, %v2176
  %v2193 = vmul.f32 %v2065, %v2177
  %v2194 = vmul.f32 %v2066, %v2178
  %v2195 = vmul.f32 %v2067, %v2179
  %v2196 = vmul.f32 %v2068, %v2180
  %v2197 = vmul.f32 %v2069, %v2181
  %v2198 = vmul.f32 %v2070, %v2182
  %v2199 = vld [vmem:[%s9] sm:$0x1]
  %v2201 = vlaneseq
  %v2202 = vshrl.u32 %v2201, 7
  %v2203 = vsub.s32 0, %v2202
  %v2204 = vrot.slane %v2199, %v2203
  %v2206 = vmul.f32 %v2183, %v2204
  %v2207 = vmul.f32 %v2184, %v2204
  %v2208 = vmul.f32 %v2185, %v2204
  %v2209 = vmul.f32 %v2186, %v2204
  %v2210 = vmul.f32 %v2187, %v2204
  %v2211 = vmul.f32 %v2188, %v2204
  %v2212 = vmul.f32 %v2189, %v2204
  %v2213 = vmul.f32 %v2190, %v2204
  %v2214 = vmul.f32 %v2191, %v2204
  %v2215 = vmul.f32 %v2192, %v2204
  %v2216 = vmul.f32 %v2193, %v2204
  %v2217 = vmul.f32 %v2194, %v2204
  %v2218 = vmul.f32 %v2195, %v2204
  %v2219 = vmul.f32 %v2196, %v2204
  %v2220 = vmul.f32 %v2197, %v2204
  %v2221 = vmul.f32 %v2198, %v2204
  %v2222 = vld [vmem:[%s10] sm:$0x1]
  %v2224 = vlaneseq
  %v2225 = vshrl.u32 %v2224, 7
  %v2226 = vsub.s32 0, %v2225
  %v2227 = vrot.slane %v2222, %v2226
  %v2229 = vadd.f32 %v2206, %v2227
  %v2230 = vadd.f32 %v2207, %v2227
  %v2231 = vadd.f32 %v2208, %v2227
  %v2232 = vadd.f32 %v2209, %v2227
  %v2233 = vadd.f32 %v2210, %v2227
  %v2234 = vadd.f32 %v2211, %v2227
  %v2235 = vadd.f32 %v2212, %v2227
  %v2236 = vadd.f32 %v2213, %v2227
  %v2237 = vadd.f32 %v2214, %v2227
  %v2238 = vadd.f32 %v2215, %v2227
  %v2239 = vadd.f32 %v2216, %v2227
  %v2240 = vadd.f32 %v2217, %v2227
  %v2241 = vadd.f32 %v2218, %v2227
  %v2242 = vadd.f32 %v2219, %v2227
  %v2243 = vadd.f32 %v2220, %v2227
  %v2244 = vadd.f32 %v2221, %v2227
  %v2245 = vpack.c.bf16 %v2230, %v2229
  %v2246 = vpack.c.bf16 %v2232, %v2231
  %v2247 = vpack.c.bf16 %v2234, %v2233
  %v2248 = vpack.c.bf16 %v2236, %v2235
  %v2249 = vpack.c.bf16 %v2238, %v2237
  %v2250 = vpack.c.bf16 %v2240, %v2239
  %v2251 = vpack.c.bf16 %v2242, %v2241
  %v2252 = vpack.c.bf16 %v2244, %v2243
  %v2253 = vld [vmem:[%s11] sm:$0xf]
  %v2254 = vld [vmem:[%s11 + $0x4] sm:$0xf]
  %v2255 = vld [vmem:[%s11 + $0x8] sm:$0xf]
  %v2256 = vld [vmem:[%s11 + $0xc] sm:$0xf]
  %v2257 = vld [vmem:[%s12] sm:$0x1]
  %v2259 = vlaneseq
  %v2260 = vshrl.u32 %v2259, 7
  %v2261 = vsub.s32 0, %v2260
  %v2262 = vrot.slane %v2257, %v2261
  %v2268 = vunpack.c.l.b16 %v2253
  %v2269 = vunpack.c.l.b16 %v2254
  %v2270 = vunpack.c.l.b16 %v2255
  %v2271 = vunpack.c.l.b16 %v2256
  %v2272 = vpack.c.b16 %v2269, %v2268
  %v2273 = vpack.c.b16 %v2271, %v2270
  %v2277 = vsel %vm109, %v2245, 0
  %v2280 = vsel %vm109, %v2246, 0
  %v2283 = vsel %vm109, %v2247, 0
  %v2286 = vsel %vm109, %v2248, 0
  %v2289 = vsel %vm109, %v2249, 0
  %v2292 = vsel %vm109, %v2250, 0
  %v2295 = vsel %vm109, %v2251, 0
  %v2298 = vsel %vm109, %v2252, 0
  %2300 = vmatprep.subr.bf16.mxu0 0
  %2301 = vmatpush1.bf16.msra.mxu0 %v2272
  %2302 = vmatprep.subr.bf16.mxu0 0
  %2303 = vmatpush1.bf16.msra.mxu0 %v2273
  %2304 = vmatprep.subr.bf16.mxu0 0
  %2305 = vmatpush1.bf16.msra.mxu0 0
  %2306 = vmatprep.subr.bf16.mxu0 0
  %2307 = vmatpush1.bf16.msra.mxu0 0
  %2308 = vmatprep.subr.bf16.mxu0 0
  %2309 = vmatpush1.bf16.msra.mxu0 0
  %2310 = vmatprep.subr.bf16.mxu0 0
  %2311 = vmatpush1.bf16.msra.mxu0 0
  %2312 = vmatprep.subr.bf16.mxu0 0
  %2313 = vmatpush1.bf16.msra.mxu0 0
  %2314 = vmatprep.subr.bf16.mxu0 0
  %2315 = vmatpush1.bf16.msra.mxu0 0
  %2316 = vmatprep.subr.bf16.mxu0 0
  %2317 = vmatpush1.bf16.msra.mxu0 0
  %2318 = vmatprep.subr.bf16.mxu0 0
  %2319 = vmatpush1.bf16.msra.mxu0 0
  %2320 = vmatprep.subr.bf16.mxu0 0
  %2321 = vmatpush1.bf16.msra.mxu0 0
  %2322 = vmatprep.subr.bf16.mxu0 0
  %2323 = vmatpush1.bf16.msra.mxu0 0
  %2324 = vmatprep.subr.bf16.mxu0 0
  %2325 = vmatpush1.bf16.msra.mxu0 0
  %2326 = vmatprep.subr.bf16.mxu0 0
  %2327 = vmatpush1.bf16.msra.mxu0 0
  %2328 = vmatprep.subr.bf16.mxu0 0
  %2329 = vmatpush1.bf16.msra.mxu0 0
  %2330 = vmatprep.subr.bf16.mxu0 0
  %2331 = vmatpush1.bf16.msra.mxu0 0
  %2332 = vmatprep.mubr.bf16.mxu0 0
  %2333 = vmatmul.mubr.bf16.gmra.mrb[0].mxu0 %v2277
  %v2334 = vpop.f32.mrb[0].mxu0
  %v2335 = vadd.f32 %v2262, %v2334
  %v2336 = vpop.f32.mrb[0].mxu0
  %v2337 = vpop.f32.mrb[0].mxu0
  %v2338 = vadd.f32 %v2262, %v2337
  %v2339 = vpop.f32.mrb[0].mxu0
  %2340 = vmatprep.mubr.bf16.mxu0 0
  %2341 = vmatmul.mubr.bf16.gmra.mrb[0].mxu0 %v2280
  %v2342 = vpop.f32.mrb[0].mxu0
  %v2343 = vadd.f32 %v2262, %v2342
  %v2344 = vpop.f32.mrb[0].mxu0
  %v2345 = vpop.f32.mrb[0].mxu0
  %v2346 = vadd.f32 %v2262, %v2345
  %v2347 = vpop.f32.mrb[0].mxu0
  %2348 = vmatprep.mubr.bf16.mxu0 0
  %2349 = vmatmul.mubr.bf16.gmra.mrb[0].mxu0 %v2283
  %v2350 = vpop.f32.mrb[0].mxu0
  %v2351 = vadd.f32 %v2262, %v2350
  %v2352 = vpop.f32.mrb[0].mxu0
  %v2353 = vpop.f32.mrb[0].mxu0
  %v2354 = vadd.f32 %v2262, %v2353
  %v2355 = vpop.f32.mrb[0].mxu0
  %2356 = vmatprep.mubr.bf16.mxu0 0
  %2357 = vmatmul.mubr.bf16.gmra.mrb[0].mxu0 %v2286
  %v2358 = vpop.f32.mrb[0].mxu0
  %v2359 = vadd.f32 %v2262, %v2358
  %v2360 = vpop.f32.mrb[0].mxu0
  %v2361 = vpop.f32.mrb[0].mxu0
  %v2362 = vadd.f32 %v2262, %v2361
  %v2363 = vpop.f32.mrb[0].mxu0
  %2364 = vmatprep.mubr.bf16.mxu0 0
  %2365 = vmatmul.mubr.bf16.gmra.mrb[0].mxu0 %v2289
  %v2366 = vpop.f32.mrb[0].mxu0
  %v2367 = vadd.f32 %v2262, %v2366
  %v2368 = vpop.f32.mrb[0].mxu0
  %v2369 = vpop.f32.mrb[0].mxu0
  %v2370 = vadd.f32 %v2262, %v2369
  %v2371 = vpop.f32.mrb[0].mxu0
  %2372 = vmatprep.mubr.bf16.mxu0 0
  %2373 = vmatmul.mubr.bf16.gmra.mrb[0].mxu0 %v2292
  %v2374 = vpop.f32.mrb[0].mxu0
  %v2375 = vadd.f32 %v2262, %v2374
  %v2376 = vpop.f32.mrb[0].mxu0
  %v2377 = vpop.f32.mrb[0].mxu0
  %v2378 = vadd.f32 %v2262, %v2377
  %v2379 = vpop.f32.mrb[0].mxu0
  %2380 = vmatprep.mubr.bf16.mxu0 0
  %2381 = vmatmul.mubr.bf16.gmra.mrb[0].mxu0 %v2295
  %v2382 = vpop.f32.mrb[0].mxu0
  %v2383 = vadd.f32 %v2262, %v2382
  %v2384 = vpop.f32.mrb[0].mxu0
  %v2385 = vpop.f32.mrb[0].mxu0
  %v2386 = vadd.f32 %v2262, %v2385
  %v2387 = vpop.f32.mrb[0].mxu0
  %2388 = vmatprep.mubr.bf16.mxu0 0
  %2389 = vmatmul.mubr.bf16.gmra.mrb[0].mxu0 %v2298
  %v2390 = vpop.f32.mrb[0].mxu0
  %v2391 = vadd.f32 %v2262, %v2390
  %v2392 = vpop.f32.mrb[0].mxu0
  %v2393 = vpop.f32.mrb[0].mxu0
  %v2394 = vadd.f32 %v2262, %v2393
  %v2395 = vpop.f32.mrb[0].mxu0
  %2396 = vdwg.mxu0
  %v2397 = vmul.f32 %v2335, 0.5
  %v2398 = vmul.f32 %v2338, 0.5
  %v2399 = vmul.f32 %v2343, 0.5
  %v2400 = vmul.f32 %v2346, 0.5
  %v2401 = vmul.f32 %v2351, 0.5
  %v2402 = vmul.f32 %v2354, 0.5
  %v2403 = vmul.f32 %v2359, 0.5
  %v2404 = vmul.f32 %v2362, 0.5
  %v2405 = vmul.f32 %v2367, 0.5
  %v2406 = vmul.f32 %v2370, 0.5
  %v2407 = vmul.f32 %v2375, 0.5
  %v2408 = vmul.f32 %v2378, 0.5
  %v2409 = vmul.f32 %v2383, 0.5
  %v2410 = vmul.f32 %v2386, 0.5
  %v2411 = vmul.f32 %v2391, 0.5
  %v2412 = vmul.f32 %v2394, 0.5
  %v2413 = vmul.f32 %v2335, 0.70710677
  %v2414 = vmul.f32 %v2338, 0.70710677
  %v2415 = vmul.f32 %v2343, 0.70710677
  %v2416 = vmul.f32 %v2346, 0.70710677
  %v2417 = vmul.f32 %v2351, 0.70710677
  %v2418 = vmul.f32 %v2354, 0.70710677
  %v2419 = vmul.f32 %v2359, 0.70710677
  %v2420 = vmul.f32 %v2362, 0.70710677
  %v2421 = vmul.f32 %v2367, 0.70710677
  %v2422 = vmul.f32 %v2370, 0.70710677
  %v2423 = vmul.f32 %v2375, 0.70710677
  %v2424 = vmul.f32 %v2378, 0.70710677
  %v2425 = vmul.f32 %v2383, 0.70710677
  %v2426 = vmul.f32 %v2386, 0.70710677
  %v2427 = vmul.f32 %v2391, 0.70710677
  %v2428 = vmul.f32 %v2394, 0.70710677
  %v2429 = verf.f32.pop %v2413
  %v2430 = verf.f32.pop %v2414
  %v2431 = verf.f32.pop %v2415
  %v2432 = verf.f32.pop %v2416
  %v2433 = verf.f32.pop %v2417
  %v2434 = verf.f32.pop %v2418
  %v2435 = verf.f32.pop %v2419
  %v2436 = verf.f32.pop %v2420
  %v2437 = verf.f32.pop %v2421
  %v2438 = verf.f32.pop %v2422
  %v2439 = verf.f32.pop %v2423
  %v2440 = verf.f32.pop %v2424
  %v2441 = verf.f32.pop %v2425
  %v2442 = verf.f32.pop %v2426
  %v2443 = verf.f32.pop %v2427
  %v2444 = verf.f32.pop %v2428
  %v2445 = vadd.f32 %v2429, 1.0
  %v2446 = vadd.f32 %v2430, 1.0
  %v2447 = vadd.f32 %v2431, 1.0
  %v2448 = vadd.f32 %v2432, 1.0
  %v2449 = vadd.f32 %v2433, 1.0
  %v2450 = vadd.f32 %v2434, 1.0
  %v2451 = vadd.f32 %v2435, 1.0
  %v2452 = vadd.f32 %v2436, 1.0
  %v2453 = vadd.f32 %v2437, 1.0
  %v2454 = vadd.f32 %v2438, 1.0
  %v2455 = vadd.f32 %v2439, 1.0
  %v2456 = vadd.f32 %v2440, 1.0
  %v2457 = vadd.f32 %v2441, 1.0
  %v2458 = vadd.f32 %v2442, 1.0
  %v2459 = vadd.f32 %v2443, 1.0
  %v2460 = vadd.f32 %v2444, 1.0
  %v2461 = vmul.f32 %v2397, %v2445
  %v2462 = vmul.f32 %v2398, %v2446
  %v2463 = vmul.f32 %v2399, %v2447
  %v2464 = vmul.f32 %v2400, %v2448
  %v2465 = vmul.f32 %v2401, %v2449
  %v2466 = vmul.f32 %v2402, %v2450
  %v2467 = vmul.f32 %v2403, %v2451
  %v2468 = vmul.f32 %v2404, %v2452
  %v2469 = vmul.f32 %v2405, %v2453
  %v2470 = vmul.f32 %v2406, %v2454
  %v2471 = vmul.f32 %v2407, %v2455
  %v2472 = vmul.f32 %v2408, %v2456
  %v2473 = vmul.f32 %v2409, %v2457
  %v2474 = vmul.f32 %v2410, %v2458
  %v2475 = vmul.f32 %v2411, %v2459
  %v2476 = vmul.f32 %v2412, %v2460
  %v2477 = vpack.c.bf16 %v2462, %v2461
  %v2478 = vpack.c.bf16 %v2464, %v2463
  %v2479 = vpack.c.bf16 %v2466, %v2465
  %v2480 = vpack.c.bf16 %v2468, %v2467
  %v2481 = vpack.c.bf16 %v2470, %v2469
  %v2482 = vpack.c.bf16 %v2472, %v2471
  %v2483 = vpack.c.bf16 %v2474, %v2473
  %v2484 = vpack.c.bf16 %v2476, %v2475
  %v2485 = vld [vmem:[%s13] sm:$0xf]
  %v2486 = vld [vmem:[%s13 + $0x4] sm:$0xf]
  %v2487 = vld [vmem:[%s13 + $0x8] sm:$0xf]
  %v2488 = vld [vmem:[%s13 + $0xc] sm:$0xf]
  %v2489 = vld [vmem:[%s13 + $0x10] sm:$0xf]
  %v2490 = vld [vmem:[%s13 + $0x14] sm:$0xf]
  %v2491 = vld [vmem:[%s13 + $0x18] sm:$0xf]
  %v2492 = vld [vmem:[%s13 + $0x1c] sm:$0xf]
  %v2493 = vld [vmem:[%s13 + $0x20] sm:$0xf]
  %v2494 = vld [vmem:[%s13 + $0x24] sm:$0xf]
  %v2495 = vld [vmem:[%s13 + $0x28] sm:$0xf]
  %v2496 = vld [vmem:[%s13 + $0x2c] sm:$0xf]
  %v2497 = vld [vmem:[%s13 + $0x30] sm:$0xf]
  %v2498 = vld [vmem:[%s13 + $0x34] sm:$0xf]
  %v2499 = vld [vmem:[%s13 + $0x38] sm:$0xf]
  %v2500 = vld [vmem:[%s13 + $0x3c] sm:$0xf]
  %v2517 = vunpack.c.l.b16 %v2485
  %v2518 = vunpack.c.l.b16 %v2486
  %v2519 = vunpack.c.l.b16 %v2487
  %v2520 = vunpack.c.l.b16 %v2488
  %v2521 = vunpack.c.l.b16 %v2489
  %v2522 = vunpack.c.l.b16 %v2490
  %v2523 = vunpack.c.l.b16 %v2491
  %v2524 = vunpack.c.l.b16 %v2492
  %v2525 = vunpack.c.l.b16 %v2493
  %v2526 = vunpack.c.l.b16 %v2494
  %v2527 = vunpack.c.l.b16 %v2495
  %v2528 = vunpack.c.l.b16 %v2496
  %v2529 = vunpack.c.l.b16 %v2497
  %v2530 = vunpack.c.l.b16 %v2498
  %v2531 = vunpack.c.l.b16 %v2499
  %v2532 = vunpack.c.l.b16 %v2500
  %v2533 = vpack.c.b16 %v2518, %v2517
  %v2534 = vpack.c.b16 %v2520, %v2519
  %v2535 = vpack.c.b16 %v2522, %v2521
  %v2536 = vpack.c.b16 %v2524, %v2523
  %v2537 = vpack.c.b16 %v2526, %v2525
  %v2538 = vpack.c.b16 %v2528, %v2527
  %v2539 = vpack.c.b16 %v2530, %v2529
  %v2540 = vpack.c.b16 %v2532, %v2531
  %2549 = vmatprep.subr.bf16.mxu0 0
  %2550 = vmatpush1.bf16.msra.mxu0 %v2533
  %2551 = vmatprep.subr.bf16.mxu0 0
  %2552 = vmatpush1.bf16.msra.mxu0 %v2534
  %2553 = vmatprep.subr.bf16.mxu0 0
  %2554 = vmatpush1.bf16.msra.mxu0 %v2535
  %2555 = vmatprep.subr.bf16.mxu0 0
  %2556 = vmatpush1.bf16.msra.mxu0 %v2536
  %2557 = vmatprep.subr.bf16.mxu0 0
  %2558 = vmatpush1.bf16.msra.mxu0 %v2537
  %2559 = vmatprep.subr.bf16.mxu0 0
  %2560 = vmatpush1.bf16.msra.mxu0 %v2538
  %2561 = vmatprep.subr.bf16.mxu0 0
  %2562 = vmatpush1.bf16.msra.mxu0 %v2539
  %2563 = vmatprep.subr.bf16.mxu0 0
  %2564 = vmatpush1.bf16.msra.mxu0 %v2540
  %2565 = vmatprep.subr.bf16.mxu0 0
  %2566 = vmatpush1.bf16.msra.mxu0 0
  %2567 = vmatprep.subr.bf16.mxu0 0
  %2568 = vmatpush1.bf16.msra.mxu0 0
  %2569 = vmatprep.subr.bf16.mxu0 0
  %2570 = vmatpush1.bf16.msra.mxu0 0
  %2571 = vmatprep.subr.bf16.mxu0 0
  %2572 = vmatpush1.bf16.msra.mxu0 0
  %2573 = vmatprep.subr.bf16.mxu0 0
  %2574 = vmatpush1.bf16.msra.mxu0 0
  %2575 = vmatprep.subr.bf16.mxu0 0
  %2576 = vmatpush1.bf16.msra.mxu0 0
  %2577 = vmatprep.subr.bf16.mxu0 0
  %2578 = vmatpush1.bf16.msra.mxu0 0
  %2579 = vmatprep.subr.bf16.mxu0 0
  %2580 = vmatpush1.bf16.msra.mxu0 0
  %2581 = vmatprep.mubr.bf16.mxu0 0
  %2582 = vmatmul.mubr.bf16.gmra.mrb[0].mxu0 %v2477
  %v2583 = vpop.f32.mrb[0].mxu0
  %v2584 = vadd.f32 0.0, %v2583
  %v2585 = vpop.f32.mrb[0].mxu0
  %v2586 = vpop.f32.mrb[0].mxu0
  %v2587 = vadd.f32 0.0, %v2586
  %v2588 = vpop.f32.mrb[0].mxu0
  %2589 = vmatprep.mubr.bf16.mxu0 0
  %2590 = vmatmul.mubr.bf16.gmra.mrb[0].mxu0 %v2478
  %v2591 = vpop.f32.mrb[0].mxu0
  %v2592 = vadd.f32 0.0, %v2591
  %v2593 = vpop.f32.mrb[0].mxu0
  %v2594 = vpop.f32.mrb[0].mxu0
  %v2595 = vadd.f32 0.0, %v2594
  %v2596 = vpop.f32.mrb[0].mxu0
  %2597 = vmatprep.mubr.bf16.mxu0 0
  %2598 = vmatmul.mubr.bf16.gmra.mrb[0].mxu0 %v2479
  %v2599 = vpop.f32.mrb[0].mxu0
  %v2600 = vadd.f32 0.0, %v2599
  %v2601 = vpop.f32.mrb[0].mxu0
  %v2602 = vpop.f32.mrb[0].mxu0
  %v2603 = vadd.f32 0.0, %v2602
  %v2604 = vpop.f32.mrb[0].mxu0
  %2605 = vmatprep.mubr.bf16.mxu0 0
  %2606 = vmatmul.mubr.bf16.gmra.mrb[0].mxu0 %v2480
  %v2607 = vpop.f32.mrb[0].mxu0
  %v2608 = vadd.f32 0.0, %v2607
  %v2609 = vpop.f32.mrb[0].mxu0
  %v2610 = vpop.f32.mrb[0].mxu0
  %v2611 = vadd.f32 0.0, %v2610
  %v2612 = vpop.f32.mrb[0].mxu0
  %2613 = vmatprep.mubr.bf16.mxu0 0
  %2614 = vmatmul.mubr.bf16.gmra.mrb[0].mxu0 %v2481
  %v2615 = vpop.f32.mrb[0].mxu0
  %v2616 = vadd.f32 0.0, %v2615
  %v2617 = vpop.f32.mrb[0].mxu0
  %v2618 = vpop.f32.mrb[0].mxu0
  %v2619 = vadd.f32 0.0, %v2618
  %v2620 = vpop.f32.mrb[0].mxu0
  %2621 = vmatprep.mubr.bf16.mxu0 0
  %2622 = vmatmul.mubr.bf16.gmra.mrb[0].mxu0 %v2482
  %v2623 = vpop.f32.mrb[0].mxu0
  %v2624 = vadd.f32 0.0, %v2623
  %v2625 = vpop.f32.mrb[0].mxu0
  %v2626 = vpop.f32.mrb[0].mxu0
  %v2627 = vadd.f32 0.0, %v2626
  %v2628 = vpop.f32.mrb[0].mxu0
  %2629 = vmatprep.mubr.bf16.mxu0 0
  %2630 = vmatmul.mubr.bf16.gmra.mrb[0].mxu0 %v2483
  %v2631 = vpop.f32.mrb[0].mxu0
  %v2632 = vadd.f32 0.0, %v2631
  %v2633 = vpop.f32.mrb[0].mxu0
  %v2634 = vpop.f32.mrb[0].mxu0
  %v2635 = vadd.f32 0.0, %v2634
  %v2636 = vpop.f32.mrb[0].mxu0
  %2637 = vmatprep.mubr.bf16.mxu0 0
  %2638 = vmatmul.mubr.bf16.gmra.mrb[0].mxu0 %v2484
  %v2639 = vpop.f32.mrb[0].mxu0
  %v2640 = vadd.f32 0.0, %v2639
  %v2641 = vpop.f32.mrb[0].mxu0
  %v2642 = vpop.f32.mrb[0].mxu0
  %v2643 = vadd.f32 0.0, %v2642
  %v2644 = vpop.f32.mrb[0].mxu0
  %2645 = vdwg.mxu0
  %v2646 = vadd.f32 %v1975, %v2584
  %v2647 = vadd.f32 %v1976, %v2587
  %v2648 = vadd.f32 %v1977, %v2592
  %v2649 = vadd.f32 %v1978, %v2595
  %v2650 = vadd.f32 %v1979, %v2600
  %v2651 = vadd.f32 %v1980, %v2603
  %v2652 = vadd.f32 %v1981, %v2608
  %v2653 = vadd.f32 %v1982, %v2611
  %v2654 = vadd.f32 %v1983, %v2616
  %v2655 = vadd.f32 %v1984, %v2619
  %v2656 = vadd.f32 %v1985, %v2624
  %v2657 = vadd.f32 %v1986, %v2627
  %v2658 = vadd.f32 %v1987, %v2632
  %v2659 = vadd.f32 %v1988, %v2635
  %v2660 = vadd.f32 %v1989, %v2640
  %v2661 = vadd.f32 %v1990, %v2643
  %v2662 = vld [vmem:[%s14] sm:$0x1]
  %v2664 = vlaneseq
  %v2665 = vshrl.u32 %v2664, 7
  %v2666 = vsub.s32 0, %v2665
  %v2667 = vrot.slane %v2662, %v2666
  %v2669 = vadd.f32 %v2646, %v2667
  %v2670 = vadd.f32 %v2647, %v2667
  %v2671 = vadd.f32 %v2648, %v2667
  %v2672 = vadd.f32 %v2649, %v2667
  %v2673 = vadd.f32 %v2650, %v2667
  %v2674 = vadd.f32 %v2651, %v2667
  %v2675 = vadd.f32 %v2652, %v2667
  %v2676 = vadd.f32 %v2653, %v2667
  %v2677 = vadd.f32 %v2654, %v2667
  %v2678 = vadd.f32 %v2655, %v2667
  %v2679 = vadd.f32 %v2656, %v2667
  %v2680 = vadd.f32 %v2657, %v2667
  %v2681 = vadd.f32 %v2658, %v2667
  %v2682 = vadd.f32 %v2659, %v2667
  %v2683 = vadd.f32 %v2660, %v2667
  %v2684 = vadd.f32 %v2661, %v2667
  %v2685 = vsel %vm109, %v2669, 0.0
  %2686 = vadd.xlane.f32.xlu0 %v2685
  %v2687 = vpop.xlane.xlu0 %2686
  %v2688 = vsel %vm109, %v2670, 0.0
  %2689 = vadd.xlane.f32.xlu0 %v2688
  %v2690 = vpop.xlane.xlu0 %2689
  %v2691 = vsel %vm109, %v2671, 0.0
  %2692 = vadd.xlane.f32.xlu0 %v2691
  %v2693 = vpop.xlane.xlu0 %2692
  %v2694 = vsel %vm109, %v2672, 0.0
  %2695 = vadd.xlane.f32.xlu0 %v2694
  %v2696 = vpop.xlane.xlu0 %2695
  %v2697 = vsel %vm109, %v2673, 0.0
  %2698 = vadd.xlane.f32.xlu0 %v2697
  %v2699 = vpop.xlane.xlu0 %2698
  %v2700 = vsel %vm109, %v2674, 0.0
  %2701 = vadd.xlane.f32.xlu0 %v2700
  %v2702 = vpop.xlane.xlu0 %2701
  %v2703 = vsel %vm109, %v2675, 0.0
  %2704 = vadd.xlane.f32.xlu0 %v2703
  %v2705 = vpop.xlane.xlu0 %2704
  %v2706 = vsel %vm109, %v2676, 0.0
  %2707 = vadd.xlane.f32.xlu0 %v2706
  %v2708 = vpop.xlane.xlu0 %2707
  %v2709 = vsel %vm109, %v2677, 0.0
  %2710 = vadd.xlane.f32.xlu0 %v2709
  %v2711 = vpop.xlane.xlu0 %2710
  %v2712 = vsel %vm109, %v2678, 0.0
  %2713 = vadd.xlane.f32.xlu0 %v2712
  %v2714 = vpop.xlane.xlu0 %2713
  %v2715 = vsel %vm109, %v2679, 0.0
  %2716 = vadd.xlane.f32.xlu0 %v2715
  %v2717 = vpop.xlane.xlu0 %2716
  %v2718 = vsel %vm109, %v2680, 0.0
  %2719 = vadd.xlane.f32.xlu0 %v2718
  %v2720 = vpop.xlane.xlu0 %2719
  %v2721 = vsel %vm109, %v2681, 0.0
  %2722 = vadd.xlane.f32.xlu0 %v2721
  %v2723 = vpop.xlane.xlu0 %2722
  %v2724 = vsel %vm109, %v2682, 0.0
  %2725 = vadd.xlane.f32.xlu0 %v2724
  %v2726 = vpop.xlane.xlu0 %2725
  %v2727 = vsel %vm109, %v2683, 0.0
  %2728 = vadd.xlane.f32.xlu0 %v2727
  %v2729 = vpop.xlane.xlu0 %2728
  %v2730 = vsel %vm109, %v2684, 0.0
  %2731 = vadd.xlane.f32.xlu0 %v2730
  %v2732 = vpop.xlane.xlu0 %2731
  %v2733 = vmul.f32 %v2687, %v158
  %v2734 = vmul.f32 %v2690, %v158
  %v2735 = vmul.f32 %v2693, %v158
  %v2736 = vmul.f32 %v2696, %v158
  %v2737 = vmul.f32 %v2699, %v158
  %v2738 = vmul.f32 %v2702, %v158
  %v2739 = vmul.f32 %v2705, %v158
  %v2740 = vmul.f32 %v2708, %v158
  %v2741 = vmul.f32 %v2711, %v158
  %v2742 = vmul.f32 %v2714, %v158
  %v2743 = vmul.f32 %v2717, %v158
  %v2744 = vmul.f32 %v2720, %v158
  %v2745 = vmul.f32 %v2723, %v158
  %v2746 = vmul.f32 %v2726, %v158
  %v2747 = vmul.f32 %v2729, %v158
  %v2748 = vmul.f32 %v2732, %v158
  %v2749 = vsub.f32 %v2669, %v2733
  %v2750 = vsub.f32 %v2670, %v2734
  %v2751 = vsub.f32 %v2671, %v2735
  %v2752 = vsub.f32 %v2672, %v2736
  %v2753 = vsub.f32 %v2673, %v2737
  %v2754 = vsub.f32 %v2674, %v2738
  %v2755 = vsub.f32 %v2675, %v2739
  %v2756 = vsub.f32 %v2676, %v2740
  %v2757 = vsub.f32 %v2677, %v2741
  %v2758 = vsub.f32 %v2678, %v2742
  %v2759 = vsub.f32 %v2679, %v2743
  %v2760 = vsub.f32 %v2680, %v2744
  %v2761 = vsub.f32 %v2681, %v2745
  %v2762 = vsub.f32 %v2682, %v2746
  %v2763 = vsub.f32 %v2683, %v2747
  %v2764 = vsub.f32 %v2684, %v2748
  %v2765 = vmul.f32 %v2749, %v2749
  %v2766 = vmul.f32 %v2750, %v2750
  %v2767 = vmul.f32 %v2751, %v2751
  %v2768 = vmul.f32 %v2752, %v2752
  %v2769 = vmul.f32 %v2753, %v2753
  %v2770 = vmul.f32 %v2754, %v2754
  %v2771 = vmul.f32 %v2755, %v2755
  %v2772 = vmul.f32 %v2756, %v2756
  %v2773 = vmul.f32 %v2757, %v2757
  %v2774 = vmul.f32 %v2758, %v2758
  %v2775 = vmul.f32 %v2759, %v2759
  %v2776 = vmul.f32 %v2760, %v2760
  %v2777 = vmul.f32 %v2761, %v2761
  %v2778 = vmul.f32 %v2762, %v2762
  %v2779 = vmul.f32 %v2763, %v2763
  %v2780 = vmul.f32 %v2764, %v2764
  %v2781 = vsel %vm109, %v2765, 0.0
  %2782 = vadd.xlane.f32.xlu0 %v2781
  %v2783 = vpop.xlane.xlu0 %2782
  %v2784 = vsel %vm109, %v2766, 0.0
  %2785 = vadd.xlane.f32.xlu0 %v2784
  %v2786 = vpop.xlane.xlu0 %2785
  %v2787 = vsel %vm109, %v2767, 0.0
  %2788 = vadd.xlane.f32.xlu0 %v2787
  %v2789 = vpop.xlane.xlu0 %2788
  %v2790 = vsel %vm109, %v2768, 0.0
  %2791 = vadd.xlane.f32.xlu0 %v2790
  %v2792 = vpop.xlane.xlu0 %2791
  %v2793 = vsel %vm109, %v2769, 0.0
  %2794 = vadd.xlane.f32.xlu0 %v2793
  %v2795 = vpop.xlane.xlu0 %2794
  %v2796 = vsel %vm109, %v2770, 0.0
  %2797 = vadd.xlane.f32.xlu0 %v2796
  %v2798 = vpop.xlane.xlu0 %2797
  %v2799 = vsel %vm109, %v2771, 0.0
  %2800 = vadd.xlane.f32.xlu0 %v2799
  %v2801 = vpop.xlane.xlu0 %2800
  %v2802 = vsel %vm109, %v2772, 0.0
  %2803 = vadd.xlane.f32.xlu0 %v2802
  %v2804 = vpop.xlane.xlu0 %2803
  %v2805 = vsel %vm109, %v2773, 0.0
  %2806 = vadd.xlane.f32.xlu0 %v2805
  %v2807 = vpop.xlane.xlu0 %2806
  %v2808 = vsel %vm109, %v2774, 0.0
  %2809 = vadd.xlane.f32.xlu0 %v2808
  %v2810 = vpop.xlane.xlu0 %2809
  %v2811 = vsel %vm109, %v2775, 0.0
  %2812 = vadd.xlane.f32.xlu0 %v2811
  %v2813 = vpop.xlane.xlu0 %2812
  %v2814 = vsel %vm109, %v2776, 0.0
  %2815 = vadd.xlane.f32.xlu0 %v2814
  %v2816 = vpop.xlane.xlu0 %2815
  %v2817 = vsel %vm109, %v2777, 0.0
  %2818 = vadd.xlane.f32.xlu0 %v2817
  %v2819 = vpop.xlane.xlu0 %2818
  %v2820 = vsel %vm109, %v2778, 0.0
  %2821 = vadd.xlane.f32.xlu0 %v2820
  %v2822 = vpop.xlane.xlu0 %2821
  %v2823 = vsel %vm109, %v2779, 0.0
  %2824 = vadd.xlane.f32.xlu0 %v2823
  %v2825 = vpop.xlane.xlu0 %2824
  %v2826 = vsel %vm109, %v2780, 0.0
  %2827 = vadd.xlane.f32.xlu0 %v2826
  %v2828 = vpop.xlane.xlu0 %2827
  %v2829 = vmul.f32 %v2783, %v158
  %v2830 = vmul.f32 %v2786, %v158
  %v2831 = vmul.f32 %v2789, %v158
  %v2832 = vmul.f32 %v2792, %v158
  %v2833 = vmul.f32 %v2795, %v158
  %v2834 = vmul.f32 %v2798, %v158
  %v2835 = vmul.f32 %v2801, %v158
  %v2836 = vmul.f32 %v2804, %v158
  %v2837 = vmul.f32 %v2807, %v158
  %v2838 = vmul.f32 %v2810, %v158
  %v2839 = vmul.f32 %v2813, %v158
  %v2840 = vmul.f32 %v2816, %v158
  %v2841 = vmul.f32 %v2819, %v158
  %v2842 = vmul.f32 %v2822, %v158
  %v2843 = vmul.f32 %v2825, %v158
  %v2844 = vmul.f32 %v2828, %v158
  %v2845 = vadd.f32 %v2829, 1e-05
  %v2846 = vadd.f32 %v2830, 1e-05
  %v2847 = vadd.f32 %v2831, 1e-05
  %v2848 = vadd.f32 %v2832, 1e-05
  %v2849 = vadd.f32 %v2833, 1e-05
  %v2850 = vadd.f32 %v2834, 1e-05
  %v2851 = vadd.f32 %v2835, 1e-05
  %v2852 = vadd.f32 %v2836, 1e-05
  %v2853 = vadd.f32 %v2837, 1e-05
  %v2854 = vadd.f32 %v2838, 1e-05
  %v2855 = vadd.f32 %v2839, 1e-05
  %v2856 = vadd.f32 %v2840, 1e-05
  %v2857 = vadd.f32 %v2841, 1e-05
  %v2858 = vadd.f32 %v2842, 1e-05
  %v2859 = vadd.f32 %v2843, 1e-05
  %v2860 = vadd.f32 %v2844, 1e-05
  %v2861 = vrsqrt.pop %v2845
  %v2862 = vrsqrt.pop %v2846
  %v2863 = vrsqrt.pop %v2847
  %v2864 = vrsqrt.pop %v2848
  %v2865 = vrsqrt.pop %v2849
  %v2866 = vrsqrt.pop %v2850
  %v2867 = vrsqrt.pop %v2851
  %v2868 = vrsqrt.pop %v2852
  %v2869 = vrsqrt.pop %v2853
  %v2870 = vrsqrt.pop %v2854
  %v2871 = vrsqrt.pop %v2855
  %v2872 = vrsqrt.pop %v2856
  %v2873 = vrsqrt.pop %v2857
  %v2874 = vrsqrt.pop %v2858
  %v2875 = vrsqrt.pop %v2859
  %v2876 = vrsqrt.pop %v2860
  %v2877 = vmul.f32 %v2749, %v2861
  %v2878 = vmul.f32 %v2750, %v2862
  %v2879 = vmul.f32 %v2751, %v2863
  %v2880 = vmul.f32 %v2752, %v2864
  %v2881 = vmul.f32 %v2753, %v2865
  %v2882 = vmul.f32 %v2754, %v2866
  %v2883 = vmul.f32 %v2755, %v2867
  %v2884 = vmul.f32 %v2756, %v2868
  %v2885 = vmul.f32 %v2757, %v2869
  %v2886 = vmul.f32 %v2758, %v2870
  %v2887 = vmul.f32 %v2759, %v2871
  %v2888 = vmul.f32 %v2760, %v2872
  %v2889 = vmul.f32 %v2761, %v2873
  %v2890 = vmul.f32 %v2762, %v2874
  %v2891 = vmul.f32 %v2763, %v2875
  %v2892 = vmul.f32 %v2764, %v2876
  %s2893 = scalar_lea.vmem %s3, 1
  %v2894 = vld [vmem:[%s2893] sm:$0x1]
  %v2896 = vlaneseq
  %v2897 = vshrl.u32 %v2896, 7
  %v2898 = vsub.s32 0, %v2897
  %v2899 = vrot.slane %v2894, %v2898
  %v2901 = vmul.f32 %v2877, %v2899
  %v2902 = vmul.f32 %v2878, %v2899
  %v2903 = vmul.f32 %v2879, %v2899
  %v2904 = vmul.f32 %v2880, %v2899
  %v2905 = vmul.f32 %v2881, %v2899
  %v2906 = vmul.f32 %v2882, %v2899
  %v2907 = vmul.f32 %v2883, %v2899
  %v2908 = vmul.f32 %v2884, %v2899
  %v2909 = vmul.f32 %v2885, %v2899
  %v2910 = vmul.f32 %v2886, %v2899
  %v2911 = vmul.f32 %v2887, %v2899
  %v2912 = vmul.f32 %v2888, %v2899
  %v2913 = vmul.f32 %v2889, %v2899
  %v2914 = vmul.f32 %v2890, %v2899
  %v2915 = vmul.f32 %v2891, %v2899
  %v2916 = vmul.f32 %v2892, %v2899
  %s2917 = scalar_lea.vmem %s4, 1
  %v2918 = vld [vmem:[%s2917] sm:$0x1]
  %v2920 = vlaneseq
  %v2921 = vshrl.u32 %v2920, 7
  %v2922 = vsub.s32 0, %v2921
  %v2923 = vrot.slane %v2918, %v2922
  %v2925 = vadd.f32 %v2901, %v2923
  %v2926 = vadd.f32 %v2902, %v2923
  %v2927 = vadd.f32 %v2903, %v2923
  %v2928 = vadd.f32 %v2904, %v2923
  %v2929 = vadd.f32 %v2905, %v2923
  %v2930 = vadd.f32 %v2906, %v2923
  %v2931 = vadd.f32 %v2907, %v2923
  %v2932 = vadd.f32 %v2908, %v2923
  %v2933 = vadd.f32 %v2909, %v2923
  %v2934 = vadd.f32 %v2910, %v2923
  %v2935 = vadd.f32 %v2911, %v2923
  %v2936 = vadd.f32 %v2912, %v2923
  %v2937 = vadd.f32 %v2913, %v2923
  %v2938 = vadd.f32 %v2914, %v2923
  %v2939 = vadd.f32 %v2915, %v2923
  %v2940 = vadd.f32 %v2916, %v2923
  %v2941 = vpack.c.bf16 %v2926, %v2925
  %v2942 = vpack.c.bf16 %v2928, %v2927
  %v2943 = vpack.c.bf16 %v2930, %v2929
  %v2944 = vpack.c.bf16 %v2932, %v2931
  %v2945 = vpack.c.bf16 %v2934, %v2933
  %v2946 = vpack.c.bf16 %v2936, %v2935
  %v2947 = vpack.c.bf16 %v2938, %v2937
  %v2948 = vpack.c.bf16 %v2940, %v2939
  %s2949 = scalar_lea.vmem %s5, 16
  %v2950 = vld [vmem:[%s2949] sm:$0xf]
  %v2951 = vld [vmem:[%s2949 + $0x4] sm:$0xf]
  %v2952 = vld [vmem:[%s2949 + $0x8] sm:$0xf]
  %v2953 = vld [vmem:[%s2949 + $0xc] sm:$0xf]
  %s2954 = scalar_lea.vmem %s6, 1
  %v2955 = vld [vmem:[%s2954] sm:$0x1]
  %v2957 = vlaneseq
  %v2958 = vshrl.u32 %v2957, 7
  %v2959 = vsub.s32 0, %v2958
  %v2960 = vrot.slane %v2955, %v2959
  %v2966 = vunpack.c.l.b16 %v2950
  %v2967 = vunpack.c.l.b16 %v2951
  %v2968 = vunpack.c.l.b16 %v2952
  %v2969 = vunpack.c.l.b16 %v2953
  %v2970 = vpack.c.b16 %v2967, %v2966
  %v2971 = vpack.c.b16 %v2969, %v2968
  %v2975 = vsel %vm109, %v2941, 0
  %v2978 = vsel %vm109, %v2942, 0
  %v2981 = vsel %vm109, %v2943, 0
  %v2984 = vsel %vm109, %v2944, 0
  %v2987 = vsel %vm109, %v2945, 0
  %v2990 = vsel %vm109, %v2946, 0
  %v2993 = vsel %vm109, %v2947, 0
  %v2996 = vsel %vm109, %v2948, 0
  %2998 = vmatprep.subr.bf16.mxu0 0
  %2999 = vmatpush1.bf16.msra.mxu0 %v2970
  %3000 = vmatprep.subr.bf16.mxu0 0
  %3001 = vmatpush1.bf16.msra.mxu0 %v2971
  %3002 = vmatprep.subr.bf16.mxu0 0
  %3003 = vmatpush1.bf16.msra.mxu0 0
  %3004 = vmatprep.subr.bf16.mxu0 0
  %3005 = vmatpush1.bf16.msra.mxu0 0
  %3006 = vmatprep.subr.bf16.mxu0 0
  %3007 = vmatpush1.bf16.msra.mxu0 0
  %3008 = vmatprep.subr.bf16.mxu0 0
  %3009 = vmatpush1.bf16.msra.mxu0 0
  %3010 = vmatprep.subr.bf16.mxu0 0
  %3011 = vmatpush1.bf16.msra.mxu0 0
  %3012 = vmatprep.subr.bf16.mxu0 0
  %3013 = vmatpush1.bf16.msra.mxu0 0
  %3014 = vmatprep.subr.bf16.mxu0 0
  %3015 = vmatpush1.bf16.msra.mxu0 0
  %3016 = vmatprep.subr.bf16.mxu0 0
  %3017 = vmatpush1.bf16.msra.mxu0 0
  %3018 = vmatprep.subr.bf16.mxu0 0
  %3019 = vmatpush1.bf16.msra.mxu0 0
  %3020 = vmatprep.subr.bf16.mxu0 0
  %3021 = vmatpush1.bf16.msra.mxu0 0
  %3022 = vmatprep.subr.bf16.mxu0 0
  %3023 = vmatpush1.bf16.msra.mxu0 0
  %3024 = vmatprep.subr.bf16.mxu0 0
  %3025 = vmatpush1.bf16.msra.mxu0 0
  %3026 = vmatprep.subr.bf16.mxu0 0
  %3027 = vmatpush1.bf16.msra.mxu0 0
  %3028 = vmatprep.subr.bf16.mxu0 0
  %3029 = vmatpush1.bf16.msra.mxu0 0
  %3030 = vmatprep.mubr.bf16.mxu0 0
  %3031 = vmatmul.mubr.bf16.gmra.mrb[0].mxu0 %v2975
  %v3032 = vpop.f32.mrb[0].mxu0
  %v3033 = vadd.f32 %v2960, %v3032
  %v3034 = vpop.f32.mrb[0].mxu0
  %v3035 = vpop.f32.mrb[0].mxu0
  %v3036 = vadd.f32 %v2960, %v3035
  %v3037 = vpop.f32.mrb[0].mxu0
  %3038 = vmatprep.mubr.bf16.mxu0 0
  %3039 = vmatmul.mubr.bf16.gmra.mrb[0].mxu0 %v2978
  %v3040 = vpop.f32.mrb[0].mxu0
  %v3041 = vadd.f32 %v2960, %v3040
  %v3042 = vpop.f32.mrb[0].mxu0
  %v3043 = vpop.f32.mrb[0].mxu0
  %v3044 = vadd.f32 %v2960, %v3043
  %v3045 = vpop.f32.mrb[0].mxu0
  %3046 = vmatprep.mubr.bf16.mxu0 0
  %3047 = vmatmul.mubr.bf16.gmra.mrb[0].mxu0 %v2981
  %v3048 = vpop.f32.mrb[0].mxu0
  %v3049 = vadd.f32 %v2960, %v3048
  %v3050 = vpop.f32.mrb[0].mxu0
  %v3051 = vpop.f32.mrb[0].mxu0
  %v3052 = vadd.f32 %v2960, %v3051
  %v3053 = vpop.f32.mrb[0].mxu0
  %3054 = vmatprep.mubr.bf16.mxu0 0
  %3055 = vmatmul.mubr.bf16.gmra.mrb[0].mxu0 %v2984
  %v3056 = vpop.f32.mrb[0].mxu0
  %v3057 = vadd.f32 %v2960, %v3056
  %v3058 = vpop.f32.mrb[0].mxu0
  %v3059 = vpop.f32.mrb[0].mxu0
  %v3060 = vadd.f32 %v2960, %v3059
  %v3061 = vpop.f32.mrb[0].mxu0
  %3062 = vmatprep.mubr.bf16.mxu0 0
  %3063 = vmatmul.mubr.bf16.gmra.mrb[0].mxu0 %v2987
  %v3064 = vpop.f32.mrb[0].mxu0
  %v3065 = vadd.f32 %v2960, %v3064
  %v3066 = vpop.f32.mrb[0].mxu0
  %v3067 = vpop.f32.mrb[0].mxu0
  %v3068 = vadd.f32 %v2960, %v3067
  %v3069 = vpop.f32.mrb[0].mxu0
  %3070 = vmatprep.mubr.bf16.mxu0 0
  %3071 = vmatmul.mubr.bf16.gmra.mrb[0].mxu0 %v2990
  %v3072 = vpop.f32.mrb[0].mxu0
  %v3073 = vadd.f32 %v2960, %v3072
  %v3074 = vpop.f32.mrb[0].mxu0
  %v3075 = vpop.f32.mrb[0].mxu0
  %v3076 = vadd.f32 %v2960, %v3075
  %v3077 = vpop.f32.mrb[0].mxu0
  %3078 = vmatprep.mubr.bf16.mxu0 0
  %3079 = vmatmul.mubr.bf16.gmra.mrb[0].mxu0 %v2993
  %v3080 = vpop.f32.mrb[0].mxu0
  %v3081 = vadd.f32 %v2960, %v3080
  %v3082 = vpop.f32.mrb[0].mxu0
  %v3083 = vpop.f32.mrb[0].mxu0
  %v3084 = vadd.f32 %v2960, %v3083
  %v3085 = vpop.f32.mrb[0].mxu0
  %3086 = vmatprep.mubr.bf16.mxu0 0
  %3087 = vmatmul.mubr.bf16.gmra.mrb[0].mxu0 %v2996
  %v3088 = vpop.f32.mrb[0].mxu0
  %v3089 = vadd.f32 %v2960, %v3088
  %v3090 = vpop.f32.mrb[0].mxu0
  %v3091 = vpop.f32.mrb[0].mxu0
  %v3092 = vadd.f32 %v2960, %v3091
  %v3093 = vpop.f32.mrb[0].mxu0
  %3094 = vdwg.mxu0
  %s3095 = scalar_lea.vmem %s15, 64
  %v3096 = vld [vmem:[%s3095] sm:$0xff]
  %v3097 = vld [vmem:[%s3095 + $0x8] sm:$0xff]
  %v3098 = vld [vmem:[%s3095 + $0x10] sm:$0xff]
  %v3099 = vld [vmem:[%s3095 + $0x18] sm:$0xff]
  %v3100 = vld [vmem:[%s3095 + $0x20] sm:$0xff]
  %v3101 = vld [vmem:[%s3095 + $0x28] sm:$0xff]
  %v3102 = vld [vmem:[%s3095 + $0x30] sm:$0xff]
  %v3103 = vld [vmem:[%s3095 + $0x38] sm:$0xff]
  %v3104 = vmul.f32 %v3033, %v531
  %v3105 = vmul.f32 %v3036, %v531
  %v3106 = vmul.f32 %v3041, %v531
  %v3107 = vmul.f32 %v3044, %v531
  %v3108 = vmul.f32 %v3049, %v531
  %v3109 = vmul.f32 %v3052, %v531
  %v3110 = vmul.f32 %v3057, %v531
  %v3111 = vmul.f32 %v3060, %v531
  %v3112 = vmul.f32 %v3033, %v547
  %v3113 = vmul.f32 %v3036, %v547
  %v3114 = vmul.f32 %v3041, %v547
  %v3115 = vmul.f32 %v3044, %v547
  %v3116 = vmul.f32 %v3049, %v547
  %v3117 = vmul.f32 %v3052, %v547
  %v3118 = vmul.f32 %v3057, %v547
  %v3119 = vmul.f32 %v3060, %v547
  %v3120 = vmul.f32 %v3033, %v563
  %v3121 = vmul.f32 %v3036, %v563
  %v3122 = vmul.f32 %v3041, %v563
  %v3123 = vmul.f32 %v3044, %v563
  %v3124 = vmul.f32 %v3049, %v563
  %v3125 = vmul.f32 %v3052, %v563
  %v3126 = vmul.f32 %v3057, %v563
  %v3127 = vmul.f32 %v3060, %v563
  %v3128 = vmul.f32 %v3033, %v579
  %v3129 = vmul.f32 %v3036, %v579
  %v3130 = vmul.f32 %v3041, %v579
  %v3131 = vmul.f32 %v3044, %v579
  %v3132 = vmul.f32 %v3049, %v579
  %v3133 = vmul.f32 %v3052, %v579
  %v3134 = vmul.f32 %v3057, %v579
  %v3135 = vmul.f32 %v3060, %v579
  %v3136 = vpack.c.bf16 %v3105, %v3104
  %v3137 = vpack.c.bf16 %v3107, %v3106
  %v3138 = vpack.c.bf16 %v3109, %v3108
  %v3139 = vpack.c.bf16 %v3111, %v3110
  %v3140 = vpack.c.bf16 %v3113, %v3112
  %v3141 = vpack.c.bf16 %v3115, %v3114
  %v3142 = vpack.c.bf16 %v3117, %v3116
  %v3143 = vpack.c.bf16 %v3119, %v3118
  %v3144 = vpack.c.bf16 %v3121, %v3120
  %v3145 = vpack.c.bf16 %v3123, %v3122
  %v3146 = vpack.c.bf16 %v3125, %v3124
  %v3147 = vpack.c.bf16 %v3127, %v3126
  %v3148 = vpack.c.bf16 %v3129, %v3128
  %v3149 = vpack.c.bf16 %v3131, %v3130
  %v3150 = vpack.c.bf16 %v3133, %v3132
  %v3151 = vpack.c.bf16 %v3135, %v3134
  %v3152 = vmul.f32 %v3033, %v606
  %v3153 = vmul.f32 %v3036, %v606
  %v3154 = vmul.f32 %v3041, %v606
  %v3155 = vmul.f32 %v3044, %v606
  %v3156 = vmul.f32 %v3049, %v606
  %v3157 = vmul.f32 %v3052, %v606
  %v3158 = vmul.f32 %v3057, %v606
  %v3159 = vmul.f32 %v3060, %v606
  %v3160 = vmul.f32 %v3033, %v617
  %v3161 = vmul.f32 %v3036, %v617
  %v3162 = vmul.f32 %v3041, %v617
  %v3163 = vmul.f32 %v3044, %v617
  %v3164 = vmul.f32 %v3049, %v617
  %v3165 = vmul.f32 %v3052, %v617
  %v3166 = vmul.f32 %v3057, %v617
  %v3167 = vmul.f32 %v3060, %v617
  %v3168 = vmul.f32 %v3033, %v628
  %v3169 = vmul.f32 %v3036, %v628
  %v3170 = vmul.f32 %v3041, %v628
  %v3171 = vmul.f32 %v3044, %v628
  %v3172 = vmul.f32 %v3049, %v628
  %v3173 = vmul.f32 %v3052, %v628
  %v3174 = vmul.f32 %v3057, %v628
  %v3175 = vmul.f32 %v3060, %v628
  %v3176 = vmul.f32 %v3033, %v639
  %v3177 = vmul.f32 %v3036, %v639
  %v3178 = vmul.f32 %v3041, %v639
  %v3179 = vmul.f32 %v3044, %v639
  %v3180 = vmul.f32 %v3049, %v639
  %v3181 = vmul.f32 %v3052, %v639
  %v3182 = vmul.f32 %v3057, %v639
  %v3183 = vmul.f32 %v3060, %v639
  %v3184 = vpack.c.bf16 %v3153, %v3152
  %v3185 = vpack.c.bf16 %v3155, %v3154
  %v3186 = vpack.c.bf16 %v3157, %v3156
  %v3187 = vpack.c.bf16 %v3159, %v3158
  %v3188 = vpack.c.bf16 %v3161, %v3160
  %v3189 = vpack.c.bf16 %v3163, %v3162
  %v3190 = vpack.c.bf16 %v3165, %v3164
  %v3191 = vpack.c.bf16 %v3167, %v3166
  %v3192 = vpack.c.bf16 %v3169, %v3168
  %v3193 = vpack.c.bf16 %v3171, %v3170
  %v3194 = vpack.c.bf16 %v3173, %v3172
  %v3195 = vpack.c.bf16 %v3175, %v3174
  %v3196 = vpack.c.bf16 %v3177, %v3176
  %v3197 = vpack.c.bf16 %v3179, %v3178
  %v3198 = vpack.c.bf16 %v3181, %v3180
  %v3199 = vpack.c.bf16 %v3183, %v3182
  %v3200 = vpack.c.bf16 %v3036, %v3033
  %v3201 = vpack.c.bf16 %v3044, %v3041
  %v3202 = vpack.c.bf16 %v3052, %v3049
  %v3203 = vpack.c.bf16 %v3060, %v3057
  %v3204 = vunpack.c.l.bf16 %v3096
  %v3205 = vunpack.c.h.bf16 %v3096
  %v3206 = vunpack.c.l.bf16 %v3097
  %v3207 = vunpack.c.h.bf16 %v3097
  %v3208 = vunpack.c.l.bf16 %v3098
  %v3209 = vunpack.c.h.bf16 %v3098
  %v3210 = vunpack.c.l.bf16 %v3099
  %v3211 = vunpack.c.h.bf16 %v3099
  %v3212 = vunpack.c.l.bf16 %v3100
  %v3213 = vunpack.c.h.bf16 %v3100
  %v3214 = vunpack.c.l.bf16 %v3101
  %v3215 = vunpack.c.h.bf16 %v3101
  %v3216 = vunpack.c.l.bf16 %v3102
  %v3217 = vunpack.c.h.bf16 %v3102
  %v3218 = vunpack.c.l.bf16 %v3103
  %v3219 = vunpack.c.h.bf16 %v3103
  %3236 = vrot.lane.b32.xlu0 %v3136, 96
  %v3237 = vpop.permute.xlu0 %3236
  %3238 = vrot.lane.b32.xlu0 %v3137, 96
  %v3239 = vpop.permute.xlu0 %3238
  %3240 = vrot.lane.b32.xlu0 %v3138, 96
  %v3241 = vpop.permute.xlu0 %3240
  %3242 = vrot.lane.b32.xlu0 %v3139, 96
  %v3243 = vpop.permute.xlu0 %3242
  %3244 = vrot.lane.b32.xlu0 %v3140, 96
  %v3245 = vpop.permute.xlu0 %3244
  %3246 = vrot.lane.b32.xlu0 %v3141, 96
  %v3247 = vpop.permute.xlu0 %3246
  %3248 = vrot.lane.b32.xlu0 %v3142, 96
  %v3249 = vpop.permute.xlu0 %3248
  %3250 = vrot.lane.b32.xlu0 %v3143, 96
  %v3251 = vpop.permute.xlu0 %3250
  %3252 = vrot.lane.b32.xlu0 %v3144, 96
  %v3253 = vpop.permute.xlu0 %3252
  %3254 = vrot.lane.b32.xlu0 %v3145, 96
  %v3255 = vpop.permute.xlu0 %3254
  %3256 = vrot.lane.b32.xlu0 %v3146, 96
  %v3257 = vpop.permute.xlu0 %3256
  %3258 = vrot.lane.b32.xlu0 %v3147, 96
  %v3259 = vpop.permute.xlu0 %3258
  %3260 = vrot.lane.b32.xlu0 %v3148, 96
  %v3261 = vpop.permute.xlu0 %3260
  %3262 = vrot.lane.b32.xlu0 %v3149, 96
  %v3263 = vpop.permute.xlu0 %3262
  %3264 = vrot.lane.b32.xlu0 %v3150, 96
  %v3265 = vpop.permute.xlu0 %3264
  %3266 = vrot.lane.b32.xlu0 %v3151, 96
  %v3267 = vpop.permute.xlu0 %3266
  %v3269 = vsel %vm109, %v3200, 0
  %v3272 = vsel %vm109, %v3201, 0
  %v3275 = vsel %vm109, %v3202, 0
  %v3278 = vsel %vm109, %v3203, 0
  %v3281 = vsel %vm109, %v3237, 0
  %v3284 = vsel %vm109, %v3239, 0
  %v3287 = vsel %vm109, %v3241, 0
  %v3290 = vsel %vm109, %v3243, 0
  %v3293 = vsel %vm109, %v3245, 0
  %v3296 = vsel %vm109, %v3247, 0
  %v3299 = vsel %vm109, %v3249, 0
  %v3302 = vsel %vm109, %v3251, 0
  %v3305 = vsel %vm109, %v3253, 0
  %v3308 = vsel %vm109, %v3255, 0
  %v3311 = vsel %vm109, %v3257, 0
  %v3314 = vsel %vm109, %v3259, 0
  %v3317 = vsel %vm109, %v3261, 0
  %v3320 = vsel %vm109, %v3263, 0
  %v3323 = vsel %vm109, %v3265, 0
  %v3326 = vsel %vm109, %v3267, 0
  %3328 = vmatprep.subr.bf16.mxu0 0
  %3329 = vmatpush1.bf16.xpose.msra.mxu0 %v3281
  %3330 = vmatprep.subr.bf16.mxu0 0
  %3331 = vmatpush1.bf16.xpose.msra.mxu0 %v3284
  %3332 = vmatprep.subr.bf16.mxu0 0
  %3333 = vmatpush1.bf16.xpose.msra.mxu0 %v3287
  %3334 = vmatprep.subr.bf16.mxu0 0
  %3335 = vmatpush1.bf16.xpose.msra.mxu0 %v3290
  %3336 = vmatprep.subr.bf16.mxu0 0
  %3337 = vmatpush1.bf16.xpose.msra.mxu0 %v3293
  %3338 = vmatprep.subr.bf16.mxu0 0
  %3339 = vmatpush1.bf16.xpose.msra.mxu0 %v3296
  %3340 = vmatprep.subr.bf16.mxu0 0
  %3341 = vmatpush1.bf16.xpose.msra.mxu0 %v3299
  %3342 = vmatprep.subr.bf16.mxu0 0
  %3343 = vmatpush1.bf16.xpose.msra.mxu0 %v3302
  %3344 = vmatprep.subr.bf16.mxu0 0
  %3345 = vmatpush1.bf16.xpose.msra.mxu0 %v3305
  %3346 = vmatprep.subr.bf16.mxu0 0
  %3347 = vmatpush1.bf16.xpose.msra.mxu0 %v3308
  %3348 = vmatprep.subr.bf16.mxu0 0
  %3349 = vmatpush1.bf16.xpose.msra.mxu0 %v3311
  %3350 = vmatprep.subr.bf16.mxu0 0
  %3351 = vmatpush1.bf16.xpose.msra.mxu0 %v3314
  %3352 = vmatprep.subr.bf16.mxu0 0
  %3353 = vmatpush1.bf16.xpose.msra.mxu0 %v3317
  %3354 = vmatprep.subr.bf16.mxu0 0
  %3355 = vmatpush1.bf16.xpose.msra.mxu0 %v3320
  %3356 = vmatprep.subr.bf16.mxu0 0
  %3357 = vmatpush1.bf16.xpose.msra.mxu0 %v3323
  %3358 = vmatprep.subr.bf16.mxu0 0
  %3359 = vmatpush1.bf16.xpose.msra.mxu0 %v3326
  %3360 = vmatprep.mubr.bf16.mxu0 0
  %3361 = vmatmul.mubr.bf16.gmra.mrb[0].mxu0 %v3269
  %v3362 = vpop.f32.mrb[0].mxu0
  %v3363 = vadd.f32 %v3204, %v3362
  %v3364 = vpop.f32.mrb[0].mxu0
  %v3365 = vadd.f32 %v3205, %v3364
  %v3366 = vpop.f32.mrb[0].mxu0
  %v3367 = vadd.f32 %v3206, %v3366
  %v3368 = vpop.f32.mrb[0].mxu0
  %v3369 = vadd.f32 %v3207, %v3368
  %3370 = vmatprep.mubr.bf16.mxu0 0
  %3371 = vmatmul.mubr.bf16.gmra.mrb[0].mxu0 %v3272
  %v3372 = vpop.f32.mrb[0].mxu0
  %v3373 = vadd.f32 %v3208, %v3372
  %v3374 = vpop.f32.mrb[0].mxu0
  %v3375 = vadd.f32 %v3209, %v3374
  %v3376 = vpop.f32.mrb[0].mxu0
  %v3377 = vadd.f32 %v3210, %v3376
  %v3378 = vpop.f32.mrb[0].mxu0
  %v3379 = vadd.f32 %v3211, %v3378
  %3380 = vmatprep.mubr.bf16.mxu0 0
  %3381 = vmatmul.mubr.bf16.gmra.mrb[0].mxu0 %v3275
  %v3382 = vpop.f32.mrb[0].mxu0
  %v3383 = vadd.f32 %v3212, %v3382
  %v3384 = vpop.f32.mrb[0].mxu0
  %v3385 = vadd.f32 %v3213, %v3384
  %v3386 = vpop.f32.mrb[0].mxu0
  %v3387 = vadd.f32 %v3214, %v3386
  %v3388 = vpop.f32.mrb[0].mxu0
  %v3389 = vadd.f32 %v3215, %v3388
  %3390 = vmatprep.mubr.bf16.mxu0 0
  %3391 = vmatmul.mubr.bf16.gmra.mrb[0].mxu0 %v3278
  %v3392 = vpop.f32.mrb[0].mxu0
  %v3393 = vadd.f32 %v3216, %v3392
  %v3394 = vpop.f32.mrb[0].mxu0
  %v3395 = vadd.f32 %v3217, %v3394
  %v3396 = vpop.f32.mrb[0].mxu0
  %v3397 = vadd.f32 %v3218, %v3396
  %v3398 = vpop.f32.mrb[0].mxu0
  %v3399 = vadd.f32 %v3219, %v3398
  %3400 = vdwg.mxu0
  %v3401 = vmax.f32 %v3363, %v3365
  %3402 = vmax.xlane.f32.xlu0 %v3401
  %v3403 = vpop.xlane.xlu0 %3402
  %v3404 = vmax.f32 %v3367, %v3369
  %3405 = vmax.xlane.f32.xlu0 %v3404
  %v3406 = vpop.xlane.xlu0 %3405
  %v3407 = vmax.f32 %v3373, %v3375
  %3408 = vmax.xlane.f32.xlu0 %v3407
  %v3409 = vpop.xlane.xlu0 %3408
  %v3410 = vmax.f32 %v3377, %v3379
  %3411 = vmax.xlane.f32.xlu0 %v3410
  %v3412 = vpop.xlane.xlu0 %3411
  %v3413 = vmax.f32 %v3383, %v3385
  %3414 = vmax.xlane.f32.xlu0 %v3413
  %v3415 = vpop.xlane.xlu0 %3414
  %v3416 = vmax.f32 %v3387, %v3389
  %3417 = vmax.xlane.f32.xlu0 %v3416
  %v3418 = vpop.xlane.xlu0 %3417
  %v3419 = vmax.f32 %v3393, %v3395
  %3420 = vmax.xlane.f32.xlu0 %v3419
  %v3421 = vpop.xlane.xlu0 %3420
  %v3422 = vmax.f32 %v3397, %v3399
  %3423 = vmax.xlane.f32.xlu0 %v3422
  %v3424 = vpop.xlane.xlu0 %3423
  %v3425 = vsub.f32 %v3363, %v3403
  %v3426 = vsub.f32 %v3365, %v3403
  %v3427 = vsub.f32 %v3367, %v3406
  %v3428 = vsub.f32 %v3369, %v3406
  %v3429 = vsub.f32 %v3373, %v3409
  %v3430 = vsub.f32 %v3375, %v3409
  %v3431 = vsub.f32 %v3377, %v3412
  %v3432 = vsub.f32 %v3379, %v3412
  %v3433 = vsub.f32 %v3383, %v3415
  %v3434 = vsub.f32 %v3385, %v3415
  %v3435 = vsub.f32 %v3387, %v3418
  %v3436 = vsub.f32 %v3389, %v3418
  %v3437 = vsub.f32 %v3393, %v3421
  %v3438 = vsub.f32 %v3395, %v3421
  %v3439 = vsub.f32 %v3397, %v3424
  %v3440 = vsub.f32 %v3399, %v3424
  %v3441 = vmul.f32 %v3425, 1.442695
  %v3442 = vpow.pop %v3441
  %v3443 = vmul.f32 %v3426, 1.442695
  %v3444 = vpow.pop %v3443
  %v3445 = vmul.f32 %v3427, 1.442695
  %v3446 = vpow.pop %v3445
  %v3447 = vmul.f32 %v3428, 1.442695
  %v3448 = vpow.pop %v3447
  %v3449 = vmul.f32 %v3429, 1.442695
  %v3450 = vpow.pop %v3449
  %v3451 = vmul.f32 %v3430, 1.442695
  %v3452 = vpow.pop %v3451
  %v3453 = vmul.f32 %v3431, 1.442695
  %v3454 = vpow.pop %v3453
  %v3455 = vmul.f32 %v3432, 1.442695
  %v3456 = vpow.pop %v3455
  %v3457 = vmul.f32 %v3433, 1.442695
  %v3458 = vpow.pop %v3457
  %v3459 = vmul.f32 %v3434, 1.442695
  %v3460 = vpow.pop %v3459
  %v3461 = vmul.f32 %v3435, 1.442695
  %v3462 = vpow.pop %v3461
  %v3463 = vmul.f32 %v3436, 1.442695
  %v3464 = vpow.pop %v3463
  %v3465 = vmul.f32 %v3437, 1.442695
  %v3466 = vpow.pop %v3465
  %v3467 = vmul.f32 %v3438, 1.442695
  %v3468 = vpow.pop %v3467
  %v3469 = vmul.f32 %v3439, 1.442695
  %v3470 = vpow.pop %v3469
  %v3471 = vmul.f32 %v3440, 1.442695
  %v3472 = vpow.pop %v3471
  %v3473 = vpack.c.bf16 %v3446, %v3442
  %v3474 = vpack.c.bf16 %v3448, %v3444
  %v3475 = vpack.c.bf16 %v3454, %v3450
  %v3476 = vpack.c.bf16 %v3456, %v3452
  %v3477 = vpack.c.bf16 %v3462, %v3458
  %v3478 = vpack.c.bf16 %v3464, %v3460
  %v3479 = vpack.c.bf16 %v3470, %v3466
  %v3480 = vpack.c.bf16 %v3472, %v3468
  %3497 = vrot.lane.b32.xlu0 %v3184, 64
  %v3498 = vpop.permute.xlu0 %3497
  %3499 = vrot.lane.b32.xlu0 %v3185, 64
  %v3500 = vpop.permute.xlu0 %3499
  %3501 = vrot.lane.b32.xlu0 %v3186, 64
  %v3502 = vpop.permute.xlu0 %3501
  %3503 = vrot.lane.b32.xlu0 %v3187, 64
  %v3504 = vpop.permute.xlu0 %3503
  %3505 = vrot.lane.b32.xlu0 %v3188, 64
  %v3506 = vpop.permute.xlu0 %3505
  %3507 = vrot.lane.b32.xlu0 %v3189, 64
  %v3508 = vpop.permute.xlu0 %3507
  %3509 = vrot.lane.b32.xlu0 %v3190, 64
  %v3510 = vpop.permute.xlu0 %3509
  %3511 = vrot.lane.b32.xlu0 %v3191, 64
  %v3512 = vpop.permute.xlu0 %3511
  %3513 = vrot.lane.b32.xlu0 %v3192, 64
  %v3514 = vpop.permute.xlu0 %3513
  %3515 = vrot.lane.b32.xlu0 %v3193, 64
  %v3516 = vpop.permute.xlu0 %3515
  %3517 = vrot.lane.b32.xlu0 %v3194, 64
  %v3518 = vpop.permute.xlu0 %3517
  %3519 = vrot.lane.b32.xlu0 %v3195, 64
  %v3520 = vpop.permute.xlu0 %3519
  %3521 = vrot.lane.b32.xlu0 %v3196, 64
  %v3522 = vpop.permute.xlu0 %3521
  %3523 = vrot.lane.b32.xlu0 %v3197, 64
  %v3524 = vpop.permute.xlu0 %3523
  %3525 = vrot.lane.b32.xlu0 %v3198, 64
  %v3526 = vpop.permute.xlu0 %3525
  %3527 = vrot.lane.b32.xlu0 %v3199, 64
  %v3528 = vpop.permute.xlu0 %3527
  %3545 = vmatprep.subr.bf16.mxu0 0
  %3546 = vmatpush1.bf16.msra.mxu0 %v3498
  %3547 = vmatprep.subr.bf16.mxu0 0
  %3548 = vmatpush1.bf16.msra.mxu0 %v3500
  %3549 = vmatprep.subr.bf16.mxu0 0
  %3550 = vmatpush1.bf16.msra.mxu0 %v3502
  %3551 = vmatprep.subr.bf16.mxu0 0
  %3552 = vmatpush1.bf16.msra.mxu0 %v3504
  %3553 = vmatprep.subr.bf16.mxu0 0
  %3554 = vmatpush1.bf16.msra.mxu0 %v3506
  %3555 = vmatprep.subr.bf16.mxu0 0
  %3556 = vmatpush1.bf16.msra.mxu0 %v3508
  %3557 = vmatprep.subr.bf16.mxu0 0
  %3558 = vmatpush1.bf16.msra.mxu0 %v3510
  %3559 = vmatprep.subr.bf16.mxu0 0
  %3560 = vmatpush1.bf16.msra.mxu0 %v3512
  %3561 = vmatprep.subr.bf16.mxu0 0
  %3562 = vmatpush1.bf16.msra.mxu0 %v3514
  %3563 = vmatprep.subr.bf16.mxu0 0
  %3564 = vmatpush1.bf16.msra.mxu0 %v3516
  %3565 = vmatprep.subr.bf16.mxu0 0
  %3566 = vmatpush1.bf16.msra.mxu0 %v3518
  %3567 = vmatprep.subr.bf16.mxu0 0
  %3568 = vmatpush1.bf16.msra.mxu0 %v3520
  %3569 = vmatprep.subr.bf16.mxu0 0
  %3570 = vmatpush1.bf16.msra.mxu0 %v3522
  %3571 = vmatprep.subr.bf16.mxu0 0
  %3572 = vmatpush1.bf16.msra.mxu0 %v3524
  %3573 = vmatprep.subr.bf16.mxu0 0
  %3574 = vmatpush1.bf16.msra.mxu0 %v3526
  %3575 = vmatprep.subr.bf16.mxu0 0
  %3576 = vmatpush1.bf16.msra.mxu0 %v3528
  %3577 = vmatprep.mubr.bf16.mxu0 %v3474
  %3578 = vmatmul.mubr.bf16.gmra.mrb[0].mxu0 %v3473
  %v3579 = vpop.f32.mrb[0].mxu0
  %v3580 = vadd.f32 0.0, %v3579
  %v3581 = vpop.f32.mrb[0].mxu0
  %v3582 = vpop.f32.mrb[0].mxu0
  %v3583 = vadd.f32 0.0, %v3582
  %v3584 = vpop.f32.mrb[0].mxu0
  %3585 = vmatprep.mubr.bf16.mxu0 %v3476
  %3586 = vmatmul.mubr.bf16.gmra.mrb[0].mxu0 %v3475
  %v3587 = vpop.f32.mrb[0].mxu0
  %v3588 = vadd.f32 0.0, %v3587
  %v3589 = vpop.f32.mrb[0].mxu0
  %v3590 = vpop.f32.mrb[0].mxu0
  %v3591 = vadd.f32 0.0, %v3590
  %v3592 = vpop.f32.mrb[0].mxu0
  %3593 = vmatprep.mubr.bf16.mxu0 %v3478
  %3594 = vmatmul.mubr.bf16.gmra.mrb[0].mxu0 %v3477
  %v3595 = vpop.f32.mrb[0].mxu0
  %v3596 = vadd.f32 0.0, %v3595
  %v3597 = vpop.f32.mrb[0].mxu0
  %v3598 = vpop.f32.mrb[0].mxu0
  %v3599 = vadd.f32 0.0, %v3598
  %v3600 = vpop.f32.mrb[0].mxu0
  %3601 = vmatprep.mubr.bf16.mxu0 %v3480
  %3602 = vmatmul.mubr.bf16.gmra.mrb[0].mxu0 %v3479
  %v3603 = vpop.f32.mrb[0].mxu0
  %v3604 = vadd.f32 0.0, %v3603
  %v3605 = vpop.f32.mrb[0].mxu0
  %v3606 = vpop.f32.mrb[0].mxu0
  %v3607 = vadd.f32 0.0, %v3606
  %v3608 = vpop.f32.mrb[0].mxu0
  %3609 = vdwg.mxu0
  %3610 = vmatprep.subr.bf16.mxu0 0
  %3611 = vmatpush1.bf16.msra.mxu0 %v1139
  %3612 = vmatprep.subr.bf16.mxu0 0
  %3613 = vmatpush1.bf16.msra.mxu0 %v1140
  %3614 = vmatprep.subr.bf16.mxu0 0
  %3615 = vmatpush1.bf16.msra.mxu0 %v1141
  %3616 = vmatprep.subr.bf16.mxu0 0
  %3617 = vmatpush1.bf16.msra.mxu0 %v1142
  %3618 = vmatprep.subr.bf16.mxu0 0
  %3619 = vmatpush1.bf16.msra.mxu0 %v1143
  %3620 = vmatprep.subr.bf16.mxu0 0
  %3621 = vmatpush1.bf16.msra.mxu0 %v1144
  %3622 = vmatprep.subr.bf16.mxu0 0
  %3623 = vmatpush1.bf16.msra.mxu0 %v1145
  %3624 = vmatprep.subr.bf16.mxu0 0
  %3625 = vmatpush1.bf16.msra.mxu0 %v1146
  %3626 = vmatprep.subr.bf16.mxu0 0
  %3627 = vmatpush1.bf16.msra.mxu0 %v1147
  %3628 = vmatprep.subr.bf16.mxu0 0
  %3629 = vmatpush1.bf16.msra.mxu0 %v1148
  %3630 = vmatprep.subr.bf16.mxu0 0
  %3631 = vmatpush1.bf16.msra.mxu0 %v1149
  %3632 = vmatprep.subr.bf16.mxu0 0
  %3633 = vmatpush1.bf16.msra.mxu0 %v1150
  %3634 = vmatprep.subr.bf16.mxu0 0
  %3635 = vmatpush1.bf16.msra.mxu0 %v1151
  %3636 = vmatprep.subr.bf16.mxu0 0
  %3637 = vmatpush1.bf16.msra.mxu0 %v1152
  %3638 = vmatprep.subr.bf16.mxu0 0
  %3639 = vmatpush1.bf16.msra.mxu0 %v1153
  %3640 = vmatprep.subr.bf16.mxu0 0
  %3641 = vmatpush1.bf16.msra.mxu0 %v1154
  %3642 = vmatprep.mubr.bf16.mxu0 %v3474
  %3643 = vmatmul.mubr.bf16.gmra.mrb[0].mxu0 %v3473
  %v3644 = vpop.f32.mrb[0].mxu0
  %v3645 = vadd.f32 1e-30, %v3644
  %v3646 = vpop.f32.mrb[0].mxu0
  %v3647 = vpop.f32.mrb[0].mxu0
  %v3648 = vadd.f32 1e-30, %v3647
  %v3649 = vpop.f32.mrb[0].mxu0
  %3650 = vmatprep.mubr.bf16.mxu0 %v3476
  %3651 = vmatmul.mubr.bf16.gmra.mrb[0].mxu0 %v3475
  %v3652 = vpop.f32.mrb[0].mxu0
  %v3653 = vadd.f32 1e-30, %v3652
  %v3654 = vpop.f32.mrb[0].mxu0
  %v3655 = vpop.f32.mrb[0].mxu0
  %v3656 = vadd.f32 1e-30, %v3655
  %v3657 = vpop.f32.mrb[0].mxu0
  %3658 = vmatprep.mubr.bf16.mxu0 %v3478
  %3659 = vmatmul.mubr.bf16.gmra.mrb[0].mxu0 %v3477
  %v3660 = vpop.f32.mrb[0].mxu0
  %v3661 = vadd.f32 1e-30, %v3660
  %v3662 = vpop.f32.mrb[0].mxu0
  %v3663 = vpop.f32.mrb[0].mxu0
  %v3664 = vadd.f32 1e-30, %v3663
  %v3665 = vpop.f32.mrb[0].mxu0
  %3666 = vmatprep.mubr.bf16.mxu0 %v3480
  %3667 = vmatmul.mubr.bf16.gmra.mrb[0].mxu0 %v3479
  %v3668 = vpop.f32.mrb[0].mxu0
  %v3669 = vadd.f32 1e-30, %v3668
  %v3670 = vpop.f32.mrb[0].mxu0
  %v3671 = vpop.f32.mrb[0].mxu0
  %v3672 = vadd.f32 1e-30, %v3671
  %v3673 = vpop.f32.mrb[0].mxu0
  %3674 = vdwg.mxu0
  %v3675 = vrcp.pop %v3645
  %v3676 = vrcp.pop %v3648
  %v3677 = vrcp.pop %v3653
  %v3678 = vrcp.pop %v3656
  %v3679 = vrcp.pop %v3661
  %v3680 = vrcp.pop %v3664
  %v3681 = vrcp.pop %v3669
  %v3682 = vrcp.pop %v3672
  %v3683 = vmul.f32 %v3580, %v3675
  %v3684 = vmul.f32 %v3583, %v3676
  %v3685 = vmul.f32 %v3588, %v3677
  %v3686 = vmul.f32 %v3591, %v3678
  %v3687 = vmul.f32 %v3596, %v3679
  %v3688 = vmul.f32 %v3599, %v3680
  %v3689 = vmul.f32 %v3604, %v3681
  %v3690 = vmul.f32 %v3607, %v3682
  %v3691 = vmul.f32 %v3065, %v531
  %v3692 = vmul.f32 %v3068, %v531
  %v3693 = vmul.f32 %v3073, %v531
  %v3694 = vmul.f32 %v3076, %v531
  %v3695 = vmul.f32 %v3081, %v531
  %v3696 = vmul.f32 %v3084, %v531
  %v3697 = vmul.f32 %v3089, %v531
  %v3698 = vmul.f32 %v3092, %v531
  %v3699 = vmul.f32 %v3065, %v547
  %v3700 = vmul.f32 %v3068, %v547
  %v3701 = vmul.f32 %v3073, %v547
  %v3702 = vmul.f32 %v3076, %v547
  %v3703 = vmul.f32 %v3081, %v547
  %v3704 = vmul.f32 %v3084, %v547
  %v3705 = vmul.f32 %v3089, %v547
  %v3706 = vmul.f32 %v3092, %v547
  %v3707 = vmul.f32 %v3065, %v563
  %v3708 = vmul.f32 %v3068, %v563
  %v3709 = vmul.f32 %v3073, %v563
  %v3710 = vmul.f32 %v3076, %v563
  %v3711 = vmul.f32 %v3081, %v563
  %v3712 = vmul.f32 %v3084, %v563
  %v3713 = vmul.f32 %v3089, %v563
  %v3714 = vmul.f32 %v3092, %v563
  %v3715 = vmul.f32 %v3065, %v579
  %v3716 = vmul.f32 %v3068, %v579
  %v3717 = vmul.f32 %v3073, %v579
  %v3718 = vmul.f32 %v3076, %v579
  %v3719 = vmul.f32 %v3081, %v579
  %v3720 = vmul.f32 %v3084, %v579
  %v3721 = vmul.f32 %v3089, %v579
  %v3722 = vmul.f32 %v3092, %v579
  %v3723 = vpack.c.bf16 %v3692, %v3691
  %v3724 = vpack.c.bf16 %v3694, %v3693
  %v3725 = vpack.c.bf16 %v3696, %v3695
  %v3726 = vpack.c.bf16 %v3698, %v3697
  %v3727 = vpack.c.bf16 %v3700, %v3699
  %v3728 = vpack.c.bf16 %v3702, %v3701
  %v3729 = vpack.c.bf16 %v3704, %v3703
  %v3730 = vpack.c.bf16 %v3706, %v3705
  %v3731 = vpack.c.bf16 %v3708, %v3707
  %v3732 = vpack.c.bf16 %v3710, %v3709
  %v3733 = vpack.c.bf16 %v3712, %v3711
  %v3734 = vpack.c.bf16 %v3714, %v3713
  %v3735 = vpack.c.bf16 %v3716, %v3715
  %v3736 = vpack.c.bf16 %v3718, %v3717
  %v3737 = vpack.c.bf16 %v3720, %v3719
  %v3738 = vpack.c.bf16 %v3722, %v3721
  %v3739 = vmul.f32 %v3065, %v606
  %v3740 = vmul.f32 %v3068, %v606
  %v3741 = vmul.f32 %v3073, %v606
  %v3742 = vmul.f32 %v3076, %v606
  %v3743 = vmul.f32 %v3081, %v606
  %v3744 = vmul.f32 %v3084, %v606
  %v3745 = vmul.f32 %v3089, %v606
  %v3746 = vmul.f32 %v3092, %v606
  %v3747 = vmul.f32 %v3065, %v617
  %v3748 = vmul.f32 %v3068, %v617
  %v3749 = vmul.f32 %v3073, %v617
  %v3750 = vmul.f32 %v3076, %v617
  %v3751 = vmul.f32 %v3081, %v617
  %v3752 = vmul.f32 %v3084, %v617
  %v3753 = vmul.f32 %v3089, %v617
  %v3754 = vmul.f32 %v3092, %v617
  %v3755 = vmul.f32 %v3065, %v628
  %v3756 = vmul.f32 %v3068, %v628
  %v3757 = vmul.f32 %v3073, %v628
  %v3758 = vmul.f32 %v3076, %v628
  %v3759 = vmul.f32 %v3081, %v628
  %v3760 = vmul.f32 %v3084, %v628
  %v3761 = vmul.f32 %v3089, %v628
  %v3762 = vmul.f32 %v3092, %v628
  %v3763 = vmul.f32 %v3065, %v639
  %v3764 = vmul.f32 %v3068, %v639
  %v3765 = vmul.f32 %v3073, %v639
  %v3766 = vmul.f32 %v3076, %v639
  %v3767 = vmul.f32 %v3081, %v639
  %v3768 = vmul.f32 %v3084, %v639
  %v3769 = vmul.f32 %v3089, %v639
  %v3770 = vmul.f32 %v3092, %v639
  %v3771 = vpack.c.bf16 %v3740, %v3739
  %v3772 = vpack.c.bf16 %v3742, %v3741
  %v3773 = vpack.c.bf16 %v3744, %v3743
  %v3774 = vpack.c.bf16 %v3746, %v3745
  %v3775 = vpack.c.bf16 %v3748, %v3747
  %v3776 = vpack.c.bf16 %v3750, %v3749
  %v3777 = vpack.c.bf16 %v3752, %v3751
  %v3778 = vpack.c.bf16 %v3754, %v3753
  %v3779 = vpack.c.bf16 %v3756, %v3755
  %v3780 = vpack.c.bf16 %v3758, %v3757
  %v3781 = vpack.c.bf16 %v3760, %v3759
  %v3782 = vpack.c.bf16 %v3762, %v3761
  %v3783 = vpack.c.bf16 %v3764, %v3763
  %v3784 = vpack.c.bf16 %v3766, %v3765
  %v3785 = vpack.c.bf16 %v3768, %v3767
  %v3786 = vpack.c.bf16 %v3770, %v3769
  %v3787 = vpack.c.bf16 %v3068, %v3065
  %v3788 = vpack.c.bf16 %v3076, %v3073
  %v3789 = vpack.c.bf16 %v3084, %v3081
  %v3790 = vpack.c.bf16 %v3092, %v3089
  %3807 = vrot.lane.b32.xlu0 %v3723, 96
  %v3808 = vpop.permute.xlu0 %3807
  %3809 = vrot.lane.b32.xlu0 %v3724, 96
  %v3810 = vpop.permute.xlu0 %3809
  %3811 = vrot.lane.b32.xlu0 %v3725, 96
  %v3812 = vpop.permute.xlu0 %3811
  %3813 = vrot.lane.b32.xlu0 %v3726, 96
  %v3814 = vpop.permute.xlu0 %3813
  %3815 = vrot.lane.b32.xlu0 %v3727, 96
  %v3816 = vpop.permute.xlu0 %3815
  %3817 = vrot.lane.b32.xlu0 %v3728, 96
  %v3818 = vpop.permute.xlu0 %3817
  %3819 = vrot.lane.b32.xlu0 %v3729, 96
  %v3820 = vpop.permute.xlu0 %3819
  %3821 = vrot.lane.b32.xlu0 %v3730, 96
  %v3822 = vpop.permute.xlu0 %3821
  %3823 = vrot.lane.b32.xlu0 %v3731, 96
  %v3824 = vpop.permute.xlu0 %3823
  %3825 = vrot.lane.b32.xlu0 %v3732, 96
  %v3826 = vpop.permute.xlu0 %3825
  %3827 = vrot.lane.b32.xlu0 %v3733, 96
  %v3828 = vpop.permute.xlu0 %3827
  %3829 = vrot.lane.b32.xlu0 %v3734, 96
  %v3830 = vpop.permute.xlu0 %3829
  %3831 = vrot.lane.b32.xlu0 %v3735, 96
  %v3832 = vpop.permute.xlu0 %3831
  %3833 = vrot.lane.b32.xlu0 %v3736, 96
  %v3834 = vpop.permute.xlu0 %3833
  %3835 = vrot.lane.b32.xlu0 %v3737, 96
  %v3836 = vpop.permute.xlu0 %3835
  %3837 = vrot.lane.b32.xlu0 %v3738, 96
  %v3838 = vpop.permute.xlu0 %3837
  %v3840 = vsel %vm109, %v3787, 0
  %v3843 = vsel %vm109, %v3788, 0
  %v3846 = vsel %vm109, %v3789, 0
  %v3849 = vsel %vm109, %v3790, 0
  %v3852 = vsel %vm109, %v3808, 0
  %v3855 = vsel %vm109, %v3810, 0
  %v3858 = vsel %vm109, %v3812, 0
  %v3861 = vsel %vm109, %v3814, 0
  %v3864 = vsel %vm109, %v3816, 0
  %v3867 = vsel %vm109, %v3818, 0
  %v3870 = vsel %vm109, %v3820, 0
  %v3873 = vsel %vm109, %v3822, 0
  %v3876 = vsel %vm109, %v3824, 0
  %v3879 = vsel %vm109, %v3826, 0
  %v3882 = vsel %vm109, %v3828, 0
  %v3885 = vsel %vm109, %v3830, 0
  %v3888 = vsel %vm109, %v3832, 0
  %v3891 = vsel %vm109, %v3834, 0
  %v3894 = vsel %vm109, %v3836, 0
  %v3897 = vsel %vm109, %v3838, 0
  %3899 = vmatprep.subr.bf16.mxu0 0
  %3900 = vmatpush1.bf16.xpose.msra.mxu0 %v3852
  %3901 = vmatprep.subr.bf16.mxu0 0
  %3902 = vmatpush1.bf16.xpose.msra.mxu0 %v3855
  %3903 = vmatprep.subr.bf16.mxu0 0
  %3904 = vmatpush1.bf16.xpose.msra.mxu0 %v3858
  %3905 = vmatprep.subr.bf16.mxu0 0
  %3906 = vmatpush1.bf16.xpose.msra.mxu0 %v3861
  %3907 = vmatprep.subr.bf16.mxu0 0
  %3908 = vmatpush1.bf16.xpose.msra.mxu0 %v3864
  %3909 = vmatprep.subr.bf16.mxu0 0
  %3910 = vmatpush1.bf16.xpose.msra.mxu0 %v3867
  %3911 = vmatprep.subr.bf16.mxu0 0
  %3912 = vmatpush1.bf16.xpose.msra.mxu0 %v3870
  %3913 = vmatprep.subr.bf16.mxu0 0
  %3914 = vmatpush1.bf16.xpose.msra.mxu0 %v3873
  %3915 = vmatprep.subr.bf16.mxu0 0
  %3916 = vmatpush1.bf16.xpose.msra.mxu0 %v3876
  %3917 = vmatprep.subr.bf16.mxu0 0
  %3918 = vmatpush1.bf16.xpose.msra.mxu0 %v3879
  %3919 = vmatprep.subr.bf16.mxu0 0
  %3920 = vmatpush1.bf16.xpose.msra.mxu0 %v3882
  %3921 = vmatprep.subr.bf16.mxu0 0
  %3922 = vmatpush1.bf16.xpose.msra.mxu0 %v3885
  %3923 = vmatprep.subr.bf16.mxu0 0
  %3924 = vmatpush1.bf16.xpose.msra.mxu0 %v3888
  %3925 = vmatprep.subr.bf16.mxu0 0
  %3926 = vmatpush1.bf16.xpose.msra.mxu0 %v3891
  %3927 = vmatprep.subr.bf16.mxu0 0
  %3928 = vmatpush1.bf16.xpose.msra.mxu0 %v3894
  %3929 = vmatprep.subr.bf16.mxu0 0
  %3930 = vmatpush1.bf16.xpose.msra.mxu0 %v3897
  %3931 = vmatprep.mubr.bf16.mxu0 0
  %3932 = vmatmul.mubr.bf16.gmra.mrb[0].mxu0 %v3840
  %v3933 = vpop.f32.mrb[0].mxu0
  %v3934 = vadd.f32 %v3204, %v3933
  %v3935 = vpop.f32.mrb[0].mxu0
  %v3936 = vadd.f32 %v3205, %v3935
  %v3937 = vpop.f32.mrb[0].mxu0
  %v3938 = vadd.f32 %v3206, %v3937
  %v3939 = vpop.f32.mrb[0].mxu0
  %v3940 = vadd.f32 %v3207, %v3939
  %3941 = vmatprep.mubr.bf16.mxu0 0
  %3942 = vmatmul.mubr.bf16.gmra.mrb[0].mxu0 %v3843
  %v3943 = vpop.f32.mrb[0].mxu0
  %v3944 = vadd.f32 %v3208, %v3943
  %v3945 = vpop.f32.mrb[0].mxu0
  %v3946 = vadd.f32 %v3209, %v3945
  %v3947 = vpop.f32.mrb[0].mxu0
  %v3948 = vadd.f32 %v3210, %v3947
  %v3949 = vpop.f32.mrb[0].mxu0
  %v3950 = vadd.f32 %v3211, %v3949
  %3951 = vmatprep.mubr.bf16.mxu0 0
  %3952 = vmatmul.mubr.bf16.gmra.mrb[0].mxu0 %v3846
  %v3953 = vpop.f32.mrb[0].mxu0
  %v3954 = vadd.f32 %v3212, %v3953
  %v3955 = vpop.f32.mrb[0].mxu0
  %v3956 = vadd.f32 %v3213, %v3955
  %v3957 = vpop.f32.mrb[0].mxu0
  %v3958 = vadd.f32 %v3214, %v3957
  %v3959 = vpop.f32.mrb[0].mxu0
  %v3960 = vadd.f32 %v3215, %v3959
  %3961 = vmatprep.mubr.bf16.mxu0 0
  %3962 = vmatmul.mubr.bf16.gmra.mrb[0].mxu0 %v3849
  %v3963 = vpop.f32.mrb[0].mxu0
  %v3964 = vadd.f32 %v3216, %v3963
  %v3965 = vpop.f32.mrb[0].mxu0
  %v3966 = vadd.f32 %v3217, %v3965
  %v3967 = vpop.f32.mrb[0].mxu0
  %v3968 = vadd.f32 %v3218, %v3967
  %v3969 = vpop.f32.mrb[0].mxu0
  %v3970 = vadd.f32 %v3219, %v3969
  %3971 = vdwg.mxu0
  %v3972 = vmax.f32 %v3934, %v3936
  %3973 = vmax.xlane.f32.xlu0 %v3972
  %v3974 = vpop.xlane.xlu0 %3973
  %v3975 = vmax.f32 %v3938, %v3940
  %3976 = vmax.xlane.f32.xlu0 %v3975
  %v3977 = vpop.xlane.xlu0 %3976
  %v3978 = vmax.f32 %v3944, %v3946
  %3979 = vmax.xlane.f32.xlu0 %v3978
  %v3980 = vpop.xlane.xlu0 %3979
  %v3981 = vmax.f32 %v3948, %v3950
  %3982 = vmax.xlane.f32.xlu0 %v3981
  %v3983 = vpop.xlane.xlu0 %3982
  %v3984 = vmax.f32 %v3954, %v3956
  %3985 = vmax.xlane.f32.xlu0 %v3984
  %v3986 = vpop.xlane.xlu0 %3985
  %v3987 = vmax.f32 %v3958, %v3960
  %3988 = vmax.xlane.f32.xlu0 %v3987
  %v3989 = vpop.xlane.xlu0 %3988
  %v3990 = vmax.f32 %v3964, %v3966
  %3991 = vmax.xlane.f32.xlu0 %v3990
  %v3992 = vpop.xlane.xlu0 %3991
  %v3993 = vmax.f32 %v3968, %v3970
  %3994 = vmax.xlane.f32.xlu0 %v3993
  %v3995 = vpop.xlane.xlu0 %3994
  %v3996 = vsub.f32 %v3934, %v3974
  %v3997 = vsub.f32 %v3936, %v3974
  %v3998 = vsub.f32 %v3938, %v3977
  %v3999 = vsub.f32 %v3940, %v3977
  %v4000 = vsub.f32 %v3944, %v3980
  %v4001 = vsub.f32 %v3946, %v3980
  %v4002 = vsub.f32 %v3948, %v3983
  %v4003 = vsub.f32 %v3950, %v3983
  %v4004 = vsub.f32 %v3954, %v3986
  %v4005 = vsub.f32 %v3956, %v3986
  %v4006 = vsub.f32 %v3958, %v3989
  %v4007 = vsub.f32 %v3960, %v3989
  %v4008 = vsub.f32 %v3964, %v3992
  %v4009 = vsub.f32 %v3966, %v3992
  %v4010 = vsub.f32 %v3968, %v3995
  %v4011 = vsub.f32 %v3970, %v3995
  %v4012 = vmul.f32 %v3996, 1.442695
  %v4013 = vpow.pop %v4012
  %v4014 = vmul.f32 %v3997, 1.442695
  %v4015 = vpow.pop %v4014
  %v4016 = vmul.f32 %v3998, 1.442695
  %v4017 = vpow.pop %v4016
  %v4018 = vmul.f32 %v3999, 1.442695
  %v4019 = vpow.pop %v4018
  %v4020 = vmul.f32 %v4000, 1.442695
  %v4021 = vpow.pop %v4020
  %v4022 = vmul.f32 %v4001, 1.442695
  %v4023 = vpow.pop %v4022
  %v4024 = vmul.f32 %v4002, 1.442695
  %v4025 = vpow.pop %v4024
  %v4026 = vmul.f32 %v4003, 1.442695
  %v4027 = vpow.pop %v4026
  %v4028 = vmul.f32 %v4004, 1.442695
  %v4029 = vpow.pop %v4028
  %v4030 = vmul.f32 %v4005, 1.442695
  %v4031 = vpow.pop %v4030
  %v4032 = vmul.f32 %v4006, 1.442695
  %v4033 = vpow.pop %v4032
  %v4034 = vmul.f32 %v4007, 1.442695
  %v4035 = vpow.pop %v4034
  %v4036 = vmul.f32 %v4008, 1.442695
  %v4037 = vpow.pop %v4036
  %v4038 = vmul.f32 %v4009, 1.442695
  %v4039 = vpow.pop %v4038
  %v4040 = vmul.f32 %v4010, 1.442695
  %v4041 = vpow.pop %v4040
  %v4042 = vmul.f32 %v4011, 1.442695
  %v4043 = vpow.pop %v4042
  %v4044 = vpack.c.bf16 %v4017, %v4013
  %v4045 = vpack.c.bf16 %v4019, %v4015
  %v4046 = vpack.c.bf16 %v4025, %v4021
  %v4047 = vpack.c.bf16 %v4027, %v4023
  %v4048 = vpack.c.bf16 %v4033, %v4029
  %v4049 = vpack.c.bf16 %v4035, %v4031
  %v4050 = vpack.c.bf16 %v4041, %v4037
  %v4051 = vpack.c.bf16 %v4043, %v4039
  %4068 = vrot.lane.b32.xlu0 %v3771, 64
  %v4069 = vpop.permute.xlu0 %4068
  %4070 = vrot.lane.b32.xlu0 %v3772, 64
  %v4071 = vpop.permute.xlu0 %4070
  %4072 = vrot.lane.b32.xlu0 %v3773, 64
  %v4073 = vpop.permute.xlu0 %4072
  %4074 = vrot.lane.b32.xlu0 %v3774, 64
  %v4075 = vpop.permute.xlu0 %4074
  %4076 = vrot.lane.b32.xlu0 %v3775, 64
  %v4077 = vpop.permute.xlu0 %4076
  %4078 = vrot.lane.b32.xlu0 %v3776, 64
  %v4079 = vpop.permute.xlu0 %4078
  %4080 = vrot.lane.b32.xlu0 %v3777, 64
  %v4081 = vpop.permute.xlu0 %4080
  %4082 = vrot.lane.b32.xlu0 %v3778, 64
  %v4083 = vpop.permute.xlu0 %4082
  %4084 = vrot.lane.b32.xlu0 %v3779, 64
  %v4085 = vpop.permute.xlu0 %4084
  %4086 = vrot.lane.b32.xlu0 %v3780, 64
  %v4087 = vpop.permute.xlu0 %4086
  %4088 = vrot.lane.b32.xlu0 %v3781, 64
  %v4089 = vpop.permute.xlu0 %4088
  %4090 = vrot.lane.b32.xlu0 %v3782, 64
  %v4091 = vpop.permute.xlu0 %4090
  %4092 = vrot.lane.b32.xlu0 %v3783, 64
  %v4093 = vpop.permute.xlu0 %4092
  %4094 = vrot.lane.b32.xlu0 %v3784, 64
  %v4095 = vpop.permute.xlu0 %4094
  %4096 = vrot.lane.b32.xlu0 %v3785, 64
  %v4097 = vpop.permute.xlu0 %4096
  %4098 = vrot.lane.b32.xlu0 %v3786, 64
  %v4099 = vpop.permute.xlu0 %4098
  %4116 = vmatprep.subr.bf16.mxu0 0
  %4117 = vmatpush1.bf16.msra.mxu0 %v4069
  %4118 = vmatprep.subr.bf16.mxu0 0
  %4119 = vmatpush1.bf16.msra.mxu0 %v4071
  %4120 = vmatprep.subr.bf16.mxu0 0
  %4121 = vmatpush1.bf16.msra.mxu0 %v4073
  %4122 = vmatprep.subr.bf16.mxu0 0
  %4123 = vmatpush1.bf16.msra.mxu0 %v4075
  %4124 = vmatprep.subr.bf16.mxu0 0
  %4125 = vmatpush1.bf16.msra.mxu0 %v4077
  %4126 = vmatprep.subr.bf16.mxu0 0
  %4127 = vmatpush1.bf16.msra.mxu0 %v4079
  %4128 = vmatprep.subr.bf16.mxu0 0
  %4129 = vmatpush1.bf16.msra.mxu0 %v4081
  %4130 = vmatprep.subr.bf16.mxu0 0
  %4131 = vmatpush1.bf16.msra.mxu0 %v4083
  %4132 = vmatprep.subr.bf16.mxu0 0
  %4133 = vmatpush1.bf16.msra.mxu0 %v4085
  %4134 = vmatprep.subr.bf16.mxu0 0
  %4135 = vmatpush1.bf16.msra.mxu0 %v4087
  %4136 = vmatprep.subr.bf16.mxu0 0
  %4137 = vmatpush1.bf16.msra.mxu0 %v4089
  %4138 = vmatprep.subr.bf16.mxu0 0
  %4139 = vmatpush1.bf16.msra.mxu0 %v4091
  %4140 = vmatprep.subr.bf16.mxu0 0
  %4141 = vmatpush1.bf16.msra.mxu0 %v4093
  %4142 = vmatprep.subr.bf16.mxu0 0
  %4143 = vmatpush1.bf16.msra.mxu0 %v4095
  %4144 = vmatprep.subr.bf16.mxu0 0
  %4145 = vmatpush1.bf16.msra.mxu0 %v4097
  %4146 = vmatprep.subr.bf16.mxu0 0
  %4147 = vmatpush1.bf16.msra.mxu0 %v4099
  %4148 = vmatprep.mubr.bf16.mxu0 %v4045
  %4149 = vmatmul.mubr.bf16.gmra.mrb[0].mxu0 %v4044
  %v4150 = vpop.f32.mrb[0].mxu0
  %v4151 = vadd.f32 0.0, %v4150
  %v4152 = vpop.f32.mrb[0].mxu0
  %v4153 = vpop.f32.mrb[0].mxu0
  %v4154 = vadd.f32 0.0, %v4153
  %v4155 = vpop.f32.mrb[0].mxu0
  %4156 = vmatprep.mubr.bf16.mxu0 %v4047
  %4157 = vmatmul.mubr.bf16.gmra.mrb[0].mxu0 %v4046
  %v4158 = vpop.f32.mrb[0].mxu0
  %v4159 = vadd.f32 0.0, %v4158
  %v4160 = vpop.f32.mrb[0].mxu0
  %v4161 = vpop.f32.mrb[0].mxu0
  %v4162 = vadd.f32 0.0, %v4161
  %v4163 = vpop.f32.mrb[0].mxu0
  %4164 = vmatprep.mubr.bf16.mxu0 %v4049
  %4165 = vmatmul.mubr.bf16.gmra.mrb[0].mxu0 %v4048
  %v4166 = vpop.f32.mrb[0].mxu0
  %v4167 = vadd.f32 0.0, %v4166
  %v4168 = vpop.f32.mrb[0].mxu0
  %v4169 = vpop.f32.mrb[0].mxu0
  %v4170 = vadd.f32 0.0, %v4169
  %v4171 = vpop.f32.mrb[0].mxu0
  %4172 = vmatprep.mubr.bf16.mxu0 %v4051
  %4173 = vmatmul.mubr.bf16.gmra.mrb[0].mxu0 %v4050
  %v4174 = vpop.f32.mrb[0].mxu0
  %v4175 = vadd.f32 0.0, %v4174
  %v4176 = vpop.f32.mrb[0].mxu0
  %v4177 = vpop.f32.mrb[0].mxu0
  %v4178 = vadd.f32 0.0, %v4177
  %v4179 = vpop.f32.mrb[0].mxu0
  %4180 = vdwg.mxu0
  %4181 = vmatprep.subr.bf16.mxu0 0
  %4182 = vmatpush1.bf16.msra.mxu0 %v1139
  %4183 = vmatprep.subr.bf16.mxu0 0
  %4184 = vmatpush1.bf16.msra.mxu0 %v1140
  %4185 = vmatprep.subr.bf16.mxu0 0
  %4186 = vmatpush1.bf16.msra.mxu0 %v1141
  %4187 = vmatprep.subr.bf16.mxu0 0
  %4188 = vmatpush1.bf16.msra.mxu0 %v1142
  %4189 = vmatprep.subr.bf16.mxu0 0
  %4190 = vmatpush1.bf16.msra.mxu0 %v1143
  %4191 = vmatprep.subr.bf16.mxu0 0
  %4192 = vmatpush1.bf16.msra.mxu0 %v1144
  %4193 = vmatprep.subr.bf16.mxu0 0
  %4194 = vmatpush1.bf16.msra.mxu0 %v1145
  %4195 = vmatprep.subr.bf16.mxu0 0
  %4196 = vmatpush1.bf16.msra.mxu0 %v1146
  %4197 = vmatprep.subr.bf16.mxu0 0
  %4198 = vmatpush1.bf16.msra.mxu0 %v1147
  %4199 = vmatprep.subr.bf16.mxu0 0
  %4200 = vmatpush1.bf16.msra.mxu0 %v1148
  %4201 = vmatprep.subr.bf16.mxu0 0
  %4202 = vmatpush1.bf16.msra.mxu0 %v1149
  %4203 = vmatprep.subr.bf16.mxu0 0
  %4204 = vmatpush1.bf16.msra.mxu0 %v1150
  %4205 = vmatprep.subr.bf16.mxu0 0
  %4206 = vmatpush1.bf16.msra.mxu0 %v1151
  %4207 = vmatprep.subr.bf16.mxu0 0
  %4208 = vmatpush1.bf16.msra.mxu0 %v1152
  %4209 = vmatprep.subr.bf16.mxu0 0
  %4210 = vmatpush1.bf16.msra.mxu0 %v1153
  %4211 = vmatprep.subr.bf16.mxu0 0
  %4212 = vmatpush1.bf16.msra.mxu0 %v1154
  %4213 = vmatprep.mubr.bf16.mxu0 %v4045
  %4214 = vmatmul.mubr.bf16.gmra.mrb[0].mxu0 %v4044
  %v4215 = vpop.f32.mrb[0].mxu0
  %v4216 = vadd.f32 1e-30, %v4215
  %v4217 = vpop.f32.mrb[0].mxu0
  %v4218 = vpop.f32.mrb[0].mxu0
  %v4219 = vadd.f32 1e-30, %v4218
  %v4220 = vpop.f32.mrb[0].mxu0
  %4221 = vmatprep.mubr.bf16.mxu0 %v4047
  %4222 = vmatmul.mubr.bf16.gmra.mrb[0].mxu0 %v4046
  %v4223 = vpop.f32.mrb[0].mxu0
  %v4224 = vadd.f32 1e-30, %v4223
  %v4225 = vpop.f32.mrb[0].mxu0
  %v4226 = vpop.f32.mrb[0].mxu0
  %v4227 = vadd.f32 1e-30, %v4226
  %v4228 = vpop.f32.mrb[0].mxu0
  %4229 = vmatprep.mubr.bf16.mxu0 %v4049
  %4230 = vmatmul.mubr.bf16.gmra.mrb[0].mxu0 %v4048
  %v4231 = vpop.f32.mrb[0].mxu0
  %v4232 = vadd.f32 1e-30, %v4231
  %v4233 = vpop.f32.mrb[0].mxu0
  %v4234 = vpop.f32.mrb[0].mxu0
  %v4235 = vadd.f32 1e-30, %v4234
  %v4236 = vpop.f32.mrb[0].mxu0
  %4237 = vmatprep.mubr.bf16.mxu0 %v4051
  %4238 = vmatmul.mubr.bf16.gmra.mrb[0].mxu0 %v4050
  %v4239 = vpop.f32.mrb[0].mxu0
  %v4240 = vadd.f32 1e-30, %v4239
  %v4241 = vpop.f32.mrb[0].mxu0
  %v4242 = vpop.f32.mrb[0].mxu0
  %v4243 = vadd.f32 1e-30, %v4242
  %v4244 = vpop.f32.mrb[0].mxu0
  %4245 = vdwg.mxu0
  %v4246 = vrcp.pop %v4216
  %v4247 = vrcp.pop %v4219
  %v4248 = vrcp.pop %v4224
  %v4249 = vrcp.pop %v4227
  %v4250 = vrcp.pop %v4232
  %v4251 = vrcp.pop %v4235
  %v4252 = vrcp.pop %v4240
  %v4253 = vrcp.pop %v4243
  %v4254 = vmul.f32 %v4151, %v4246
  %v4255 = vmul.f32 %v4154, %v4247
  %v4256 = vmul.f32 %v4159, %v4248
  %v4257 = vmul.f32 %v4162, %v4249
  %v4258 = vmul.f32 %v4167, %v4250
  %v4259 = vmul.f32 %v4170, %v4251
  %v4260 = vmul.f32 %v4175, %v4252
  %v4261 = vmul.f32 %v4178, %v4253
  %v4262 = vpack.c.bf16 %v3684, %v3683
  %v4263 = vpack.c.bf16 %v3686, %v3685
  %v4264 = vpack.c.bf16 %v3688, %v3687
  %v4265 = vpack.c.bf16 %v3690, %v3689
  %v4266 = vpack.c.bf16 %v4255, %v4254
  %v4267 = vpack.c.bf16 %v4257, %v4256
  %v4268 = vpack.c.bf16 %v4259, %v4258
  %v4269 = vpack.c.bf16 %v4261, %v4260
  %s4270 = scalar_lea.vmem %s7, 16
  %v4271 = vld [vmem:[%s4270] sm:$0xf]
  %v4272 = vld [vmem:[%s4270 + $0x4] sm:$0xf]
  %v4273 = vld [vmem:[%s4270 + $0x8] sm:$0xf]
  %v4274 = vld [vmem:[%s4270 + $0xc] sm:$0xf]
  %s4275 = scalar_lea.vmem %s8, 1
  %v4276 = vld [vmem:[%s4275] sm:$0x1]
  %v4278 = vlaneseq
  %v4279 = vshrl.u32 %v4278, 7
  %v4280 = vsub.s32 0, %v4279
  %v4281 = vrot.slane %v4276, %v4280
  %v4287 = vunpack.c.l.b16 %v4271
  %v4288 = vunpack.c.l.b16 %v4272
  %v4289 = vunpack.c.l.b16 %v4273
  %v4290 = vunpack.c.l.b16 %v4274
  %v4291 = vpack.c.b16 %v4288, %v4287
  %v4292 = vpack.c.b16 %v4290, %v4289
  %v4296 = vsel %vm109, %v4262, 0
  %v4299 = vsel %vm109, %v4263, 0
  %v4302 = vsel %vm109, %v4264, 0
  %v4305 = vsel %vm109, %v4265, 0
  %v4308 = vsel %vm109, %v4266, 0
  %v4311 = vsel %vm109, %v4267, 0
  %v4314 = vsel %vm109, %v4268, 0
  %v4317 = vsel %vm109, %v4269, 0
  %4319 = vmatprep.subr.bf16.mxu0 0
  %4320 = vmatpush1.bf16.msra.mxu0 %v4291
  %4321 = vmatprep.subr.bf16.mxu0 0
  %4322 = vmatpush1.bf16.msra.mxu0 %v4292
  %4323 = vmatprep.subr.bf16.mxu0 0
  %4324 = vmatpush1.bf16.msra.mxu0 0
  %4325 = vmatprep.subr.bf16.mxu0 0
  %4326 = vmatpush1.bf16.msra.mxu0 0
  %4327 = vmatprep.subr.bf16.mxu0 0
  %4328 = vmatpush1.bf16.msra.mxu0 0
  %4329 = vmatprep.subr.bf16.mxu0 0
  %4330 = vmatpush1.bf16.msra.mxu0 0
  %4331 = vmatprep.subr.bf16.mxu0 0
  %4332 = vmatpush1.bf16.msra.mxu0 0
  %4333 = vmatprep.subr.bf16.mxu0 0
  %4334 = vmatpush1.bf16.msra.mxu0 0
  %4335 = vmatprep.subr.bf16.mxu0 0
  %4336 = vmatpush1.bf16.msra.mxu0 0
  %4337 = vmatprep.subr.bf16.mxu0 0
  %4338 = vmatpush1.bf16.msra.mxu0 0
  %4339 = vmatprep.subr.bf16.mxu0 0
  %4340 = vmatpush1.bf16.msra.mxu0 0
  %4341 = vmatprep.subr.bf16.mxu0 0
  %4342 = vmatpush1.bf16.msra.mxu0 0
  %4343 = vmatprep.subr.bf16.mxu0 0
  %4344 = vmatpush1.bf16.msra.mxu0 0
  %4345 = vmatprep.subr.bf16.mxu0 0
  %4346 = vmatpush1.bf16.msra.mxu0 0
  %4347 = vmatprep.subr.bf16.mxu0 0
  %4348 = vmatpush1.bf16.msra.mxu0 0
  %4349 = vmatprep.subr.bf16.mxu0 0
  %4350 = vmatpush1.bf16.msra.mxu0 0
  %4351 = vmatprep.mubr.bf16.mxu0 0
  %4352 = vmatmul.mubr.bf16.gmra.mrb[0].mxu0 %v4296
  %v4353 = vpop.f32.mrb[0].mxu0
  %v4354 = vadd.f32 %v4281, %v4353
  %v4355 = vpop.f32.mrb[0].mxu0
  %v4356 = vpop.f32.mrb[0].mxu0
  %v4357 = vadd.f32 %v4281, %v4356
  %v4358 = vpop.f32.mrb[0].mxu0
  %4359 = vmatprep.mubr.bf16.mxu0 0
  %4360 = vmatmul.mubr.bf16.gmra.mrb[0].mxu0 %v4299
  %v4361 = vpop.f32.mrb[0].mxu0
  %v4362 = vadd.f32 %v4281, %v4361
  %v4363 = vpop.f32.mrb[0].mxu0
  %v4364 = vpop.f32.mrb[0].mxu0
  %v4365 = vadd.f32 %v4281, %v4364
  %v4366 = vpop.f32.mrb[0].mxu0
  %4367 = vmatprep.mubr.bf16.mxu0 0
  %4368 = vmatmul.mubr.bf16.gmra.mrb[0].mxu0 %v4302
  %v4369 = vpop.f32.mrb[0].mxu0
  %v4370 = vadd.f32 %v4281, %v4369
  %v4371 = vpop.f32.mrb[0].mxu0
  %v4372 = vpop.f32.mrb[0].mxu0
  %v4373 = vadd.f32 %v4281, %v4372
  %v4374 = vpop.f32.mrb[0].mxu0
  %4375 = vmatprep.mubr.bf16.mxu0 0
  %4376 = vmatmul.mubr.bf16.gmra.mrb[0].mxu0 %v4305
  %v4377 = vpop.f32.mrb[0].mxu0
  %v4378 = vadd.f32 %v4281, %v4377
  %v4379 = vpop.f32.mrb[0].mxu0
  %v4380 = vpop.f32.mrb[0].mxu0
  %v4381 = vadd.f32 %v4281, %v4380
  %v4382 = vpop.f32.mrb[0].mxu0
  %4383 = vmatprep.mubr.bf16.mxu0 0
  %4384 = vmatmul.mubr.bf16.gmra.mrb[0].mxu0 %v4308
  %v4385 = vpop.f32.mrb[0].mxu0
  %v4386 = vadd.f32 %v4281, %v4385
  %v4387 = vpop.f32.mrb[0].mxu0
  %v4388 = vpop.f32.mrb[0].mxu0
  %v4389 = vadd.f32 %v4281, %v4388
  %v4390 = vpop.f32.mrb[0].mxu0
  %4391 = vmatprep.mubr.bf16.mxu0 0
  %4392 = vmatmul.mubr.bf16.gmra.mrb[0].mxu0 %v4311
  %v4393 = vpop.f32.mrb[0].mxu0
  %v4394 = vadd.f32 %v4281, %v4393
  %v4395 = vpop.f32.mrb[0].mxu0
  %v4396 = vpop.f32.mrb[0].mxu0
  %v4397 = vadd.f32 %v4281, %v4396
  %v4398 = vpop.f32.mrb[0].mxu0
  %4399 = vmatprep.mubr.bf16.mxu0 0
  %4400 = vmatmul.mubr.bf16.gmra.mrb[0].mxu0 %v4314
  %v4401 = vpop.f32.mrb[0].mxu0
  %v4402 = vadd.f32 %v4281, %v4401
  %v4403 = vpop.f32.mrb[0].mxu0
  %v4404 = vpop.f32.mrb[0].mxu0
  %v4405 = vadd.f32 %v4281, %v4404
  %v4406 = vpop.f32.mrb[0].mxu0
  %4407 = vmatprep.mubr.bf16.mxu0 0
  %4408 = vmatmul.mubr.bf16.gmra.mrb[0].mxu0 %v4317
  %v4409 = vpop.f32.mrb[0].mxu0
  %v4410 = vadd.f32 %v4281, %v4409
  %v4411 = vpop.f32.mrb[0].mxu0
  %v4412 = vpop.f32.mrb[0].mxu0
  %v4413 = vadd.f32 %v4281, %v4412
  %v4414 = vpop.f32.mrb[0].mxu0
  %4415 = vdwg.mxu0
  %v4416 = vadd.f32 %v2669, %v4354
  %v4417 = vadd.f32 %v2670, %v4357
  %v4418 = vadd.f32 %v2671, %v4362
  %v4419 = vadd.f32 %v2672, %v4365
  %v4420 = vadd.f32 %v2673, %v4370
  %v4421 = vadd.f32 %v2674, %v4373
  %v4422 = vadd.f32 %v2675, %v4378
  %v4423 = vadd.f32 %v2676, %v4381
  %v4424 = vadd.f32 %v2677, %v4386
  %v4425 = vadd.f32 %v2678, %v4389
  %v4426 = vadd.f32 %v2679, %v4394
  %v4427 = vadd.f32 %v2680, %v4397
  %v4428 = vadd.f32 %v2681, %v4402
  %v4429 = vadd.f32 %v2682, %v4405
  %v4430 = vadd.f32 %v2683, %v4410
  %v4431 = vadd.f32 %v2684, %v4413
  %v4432 = vsel %vm109, %v4416, 0.0
  %4433 = vadd.xlane.f32.xlu0 %v4432
  %v4434 = vpop.xlane.xlu0 %4433
  %v4435 = vsel %vm109, %v4417, 0.0
  %4436 = vadd.xlane.f32.xlu0 %v4435
  %v4437 = vpop.xlane.xlu0 %4436
  %v4438 = vsel %vm109, %v4418, 0.0
  %4439 = vadd.xlane.f32.xlu0 %v4438
  %v4440 = vpop.xlane.xlu0 %4439
  %v4441 = vsel %vm109, %v4419, 0.0
  %4442 = vadd.xlane.f32.xlu0 %v4441
  %v4443 = vpop.xlane.xlu0 %4442
  %v4444 = vsel %vm109, %v4420, 0.0
  %4445 = vadd.xlane.f32.xlu0 %v4444
  %v4446 = vpop.xlane.xlu0 %4445
  %v4447 = vsel %vm109, %v4421, 0.0
  %4448 = vadd.xlane.f32.xlu0 %v4447
  %v4449 = vpop.xlane.xlu0 %4448
  %v4450 = vsel %vm109, %v4422, 0.0
  %4451 = vadd.xlane.f32.xlu0 %v4450
  %v4452 = vpop.xlane.xlu0 %4451
  %v4453 = vsel %vm109, %v4423, 0.0
  %4454 = vadd.xlane.f32.xlu0 %v4453
  %v4455 = vpop.xlane.xlu0 %4454
  %v4456 = vsel %vm109, %v4424, 0.0
  %4457 = vadd.xlane.f32.xlu0 %v4456
  %v4458 = vpop.xlane.xlu0 %4457
  %v4459 = vsel %vm109, %v4425, 0.0
  %4460 = vadd.xlane.f32.xlu0 %v4459
  %v4461 = vpop.xlane.xlu0 %4460
  %v4462 = vsel %vm109, %v4426, 0.0
  %4463 = vadd.xlane.f32.xlu0 %v4462
  %v4464 = vpop.xlane.xlu0 %4463
  %v4465 = vsel %vm109, %v4427, 0.0
  %4466 = vadd.xlane.f32.xlu0 %v4465
  %v4467 = vpop.xlane.xlu0 %4466
  %v4468 = vsel %vm109, %v4428, 0.0
  %4469 = vadd.xlane.f32.xlu0 %v4468
  %v4470 = vpop.xlane.xlu0 %4469
  %v4471 = vsel %vm109, %v4429, 0.0
  %4472 = vadd.xlane.f32.xlu0 %v4471
  %v4473 = vpop.xlane.xlu0 %4472
  %v4474 = vsel %vm109, %v4430, 0.0
  %4475 = vadd.xlane.f32.xlu0 %v4474
  %v4476 = vpop.xlane.xlu0 %4475
  %v4477 = vsel %vm109, %v4431, 0.0
  %4478 = vadd.xlane.f32.xlu0 %v4477
  %v4479 = vpop.xlane.xlu0 %4478
  %v4480 = vmul.f32 %v4434, %v158
  %v4481 = vmul.f32 %v4437, %v158
  %v4482 = vmul.f32 %v4440, %v158
  %v4483 = vmul.f32 %v4443, %v158
  %v4484 = vmul.f32 %v4446, %v158
  %v4485 = vmul.f32 %v4449, %v158
  %v4486 = vmul.f32 %v4452, %v158
  %v4487 = vmul.f32 %v4455, %v158
  %v4488 = vmul.f32 %v4458, %v158
  %v4489 = vmul.f32 %v4461, %v158
  %v4490 = vmul.f32 %v4464, %v158
  %v4491 = vmul.f32 %v4467, %v158
  %v4492 = vmul.f32 %v4470, %v158
  %v4493 = vmul.f32 %v4473, %v158
  %v4494 = vmul.f32 %v4476, %v158
  %v4495 = vmul.f32 %v4479, %v158
  %v4496 = vsub.f32 %v4416, %v4480
  %v4497 = vsub.f32 %v4417, %v4481
  %v4498 = vsub.f32 %v4418, %v4482
  %v4499 = vsub.f32 %v4419, %v4483
  %v4500 = vsub.f32 %v4420, %v4484
  %v4501 = vsub.f32 %v4421, %v4485
  %v4502 = vsub.f32 %v4422, %v4486
  %v4503 = vsub.f32 %v4423, %v4487
  %v4504 = vsub.f32 %v4424, %v4488
  %v4505 = vsub.f32 %v4425, %v4489
  %v4506 = vsub.f32 %v4426, %v4490
  %v4507 = vsub.f32 %v4427, %v4491
  %v4508 = vsub.f32 %v4428, %v4492
  %v4509 = vsub.f32 %v4429, %v4493
  %v4510 = vsub.f32 %v4430, %v4494
  %v4511 = vsub.f32 %v4431, %v4495
  %v4512 = vmul.f32 %v4496, %v4496
  %v4513 = vmul.f32 %v4497, %v4497
  %v4514 = vmul.f32 %v4498, %v4498
  %v4515 = vmul.f32 %v4499, %v4499
  %v4516 = vmul.f32 %v4500, %v4500
  %v4517 = vmul.f32 %v4501, %v4501
  %v4518 = vmul.f32 %v4502, %v4502
  %v4519 = vmul.f32 %v4503, %v4503
  %v4520 = vmul.f32 %v4504, %v4504
  %v4521 = vmul.f32 %v4505, %v4505
  %v4522 = vmul.f32 %v4506, %v4506
  %v4523 = vmul.f32 %v4507, %v4507
  %v4524 = vmul.f32 %v4508, %v4508
  %v4525 = vmul.f32 %v4509, %v4509
  %v4526 = vmul.f32 %v4510, %v4510
  %v4527 = vmul.f32 %v4511, %v4511
  %v4528 = vsel %vm109, %v4512, 0.0
  %4529 = vadd.xlane.f32.xlu0 %v4528
  %v4530 = vpop.xlane.xlu0 %4529
  %v4531 = vsel %vm109, %v4513, 0.0
  %4532 = vadd.xlane.f32.xlu0 %v4531
  %v4533 = vpop.xlane.xlu0 %4532
  %v4534 = vsel %vm109, %v4514, 0.0
  %4535 = vadd.xlane.f32.xlu0 %v4534
  %v4536 = vpop.xlane.xlu0 %4535
  %v4537 = vsel %vm109, %v4515, 0.0
  %4538 = vadd.xlane.f32.xlu0 %v4537
  %v4539 = vpop.xlane.xlu0 %4538
  %v4540 = vsel %vm109, %v4516, 0.0
  %4541 = vadd.xlane.f32.xlu0 %v4540
  %v4542 = vpop.xlane.xlu0 %4541
  %v4543 = vsel %vm109, %v4517, 0.0
  %4544 = vadd.xlane.f32.xlu0 %v4543
  %v4545 = vpop.xlane.xlu0 %4544
  %v4546 = vsel %vm109, %v4518, 0.0
  %4547 = vadd.xlane.f32.xlu0 %v4546
  %v4548 = vpop.xlane.xlu0 %4547
  %v4549 = vsel %vm109, %v4519, 0.0
  %4550 = vadd.xlane.f32.xlu0 %v4549
  %v4551 = vpop.xlane.xlu0 %4550
  %v4552 = vsel %vm109, %v4520, 0.0
  %4553 = vadd.xlane.f32.xlu0 %v4552
  %v4554 = vpop.xlane.xlu0 %4553
  %v4555 = vsel %vm109, %v4521, 0.0
  %4556 = vadd.xlane.f32.xlu0 %v4555
  %v4557 = vpop.xlane.xlu0 %4556
  %v4558 = vsel %vm109, %v4522, 0.0
  %4559 = vadd.xlane.f32.xlu0 %v4558
  %v4560 = vpop.xlane.xlu0 %4559
  %v4561 = vsel %vm109, %v4523, 0.0
  %4562 = vadd.xlane.f32.xlu0 %v4561
  %v4563 = vpop.xlane.xlu0 %4562
  %v4564 = vsel %vm109, %v4524, 0.0
  %4565 = vadd.xlane.f32.xlu0 %v4564
  %v4566 = vpop.xlane.xlu0 %4565
  %v4567 = vsel %vm109, %v4525, 0.0
  %4568 = vadd.xlane.f32.xlu0 %v4567
  %v4569 = vpop.xlane.xlu0 %4568
  %v4570 = vsel %vm109, %v4526, 0.0
  %4571 = vadd.xlane.f32.xlu0 %v4570
  %v4572 = vpop.xlane.xlu0 %4571
  %v4573 = vsel %vm109, %v4527, 0.0
  %4574 = vadd.xlane.f32.xlu0 %v4573
  %v4575 = vpop.xlane.xlu0 %4574
  %v4576 = vmul.f32 %v4530, %v158
  %v4577 = vmul.f32 %v4533, %v158
  %v4578 = vmul.f32 %v4536, %v158
  %v4579 = vmul.f32 %v4539, %v158
  %v4580 = vmul.f32 %v4542, %v158
  %v4581 = vmul.f32 %v4545, %v158
  %v4582 = vmul.f32 %v4548, %v158
  %v4583 = vmul.f32 %v4551, %v158
  %v4584 = vmul.f32 %v4554, %v158
  %v4585 = vmul.f32 %v4557, %v158
  %v4586 = vmul.f32 %v4560, %v158
  %v4587 = vmul.f32 %v4563, %v158
  %v4588 = vmul.f32 %v4566, %v158
  %v4589 = vmul.f32 %v4569, %v158
  %v4590 = vmul.f32 %v4572, %v158
  %v4591 = vmul.f32 %v4575, %v158
  %v4592 = vadd.f32 %v4576, 1e-05
  %v4593 = vadd.f32 %v4577, 1e-05
  %v4594 = vadd.f32 %v4578, 1e-05
  %v4595 = vadd.f32 %v4579, 1e-05
  %v4596 = vadd.f32 %v4580, 1e-05
  %v4597 = vadd.f32 %v4581, 1e-05
  %v4598 = vadd.f32 %v4582, 1e-05
  %v4599 = vadd.f32 %v4583, 1e-05
  %v4600 = vadd.f32 %v4584, 1e-05
  %v4601 = vadd.f32 %v4585, 1e-05
  %v4602 = vadd.f32 %v4586, 1e-05
  %v4603 = vadd.f32 %v4587, 1e-05
  %v4604 = vadd.f32 %v4588, 1e-05
  %v4605 = vadd.f32 %v4589, 1e-05
  %v4606 = vadd.f32 %v4590, 1e-05
  %v4607 = vadd.f32 %v4591, 1e-05
  %v4608 = vrsqrt.pop %v4592
  %v4609 = vrsqrt.pop %v4593
  %v4610 = vrsqrt.pop %v4594
  %v4611 = vrsqrt.pop %v4595
  %v4612 = vrsqrt.pop %v4596
  %v4613 = vrsqrt.pop %v4597
  %v4614 = vrsqrt.pop %v4598
  %v4615 = vrsqrt.pop %v4599
  %v4616 = vrsqrt.pop %v4600
  %v4617 = vrsqrt.pop %v4601
  %v4618 = vrsqrt.pop %v4602
  %v4619 = vrsqrt.pop %v4603
  %v4620 = vrsqrt.pop %v4604
  %v4621 = vrsqrt.pop %v4605
  %v4622 = vrsqrt.pop %v4606
  %v4623 = vrsqrt.pop %v4607
  %v4624 = vmul.f32 %v4496, %v4608
  %v4625 = vmul.f32 %v4497, %v4609
  %v4626 = vmul.f32 %v4498, %v4610
  %v4627 = vmul.f32 %v4499, %v4611
  %v4628 = vmul.f32 %v4500, %v4612
  %v4629 = vmul.f32 %v4501, %v4613
  %v4630 = vmul.f32 %v4502, %v4614
  %v4631 = vmul.f32 %v4503, %v4615
  %v4632 = vmul.f32 %v4504, %v4616
  %v4633 = vmul.f32 %v4505, %v4617
  %v4634 = vmul.f32 %v4506, %v4618
  %v4635 = vmul.f32 %v4507, %v4619
  %v4636 = vmul.f32 %v4508, %v4620
  %v4637 = vmul.f32 %v4509, %v4621
  %v4638 = vmul.f32 %v4510, %v4622
  %v4639 = vmul.f32 %v4511, %v4623
  %s4640 = scalar_lea.vmem %s9, 1
  %v4641 = vld [vmem:[%s4640] sm:$0x1]
  %v4643 = vlaneseq
  %v4644 = vshrl.u32 %v4643, 7
  %v4645 = vsub.s32 0, %v4644
  %v4646 = vrot.slane %v4641, %v4645
  %v4648 = vmul.f32 %v4624, %v4646
  %v4649 = vmul.f32 %v4625, %v4646
  %v4650 = vmul.f32 %v4626, %v4646
  %v4651 = vmul.f32 %v4627, %v4646
  %v4652 = vmul.f32 %v4628, %v4646
  %v4653 = vmul.f32 %v4629, %v4646
  %v4654 = vmul.f32 %v4630, %v4646
  %v4655 = vmul.f32 %v4631, %v4646
  %v4656 = vmul.f32 %v4632, %v4646
  %v4657 = vmul.f32 %v4633, %v4646
  %v4658 = vmul.f32 %v4634, %v4646
  %v4659 = vmul.f32 %v4635, %v4646
  %v4660 = vmul.f32 %v4636, %v4646
  %v4661 = vmul.f32 %v4637, %v4646
  %v4662 = vmul.f32 %v4638, %v4646
  %v4663 = vmul.f32 %v4639, %v4646
  %s4664 = scalar_lea.vmem %s10, 1
  %v4665 = vld [vmem:[%s4664] sm:$0x1]
  %v4667 = vlaneseq
  %v4668 = vshrl.u32 %v4667, 7
  %v4669 = vsub.s32 0, %v4668
  %v4670 = vrot.slane %v4665, %v4669
  %v4672 = vadd.f32 %v4648, %v4670
  %v4673 = vadd.f32 %v4649, %v4670
  %v4674 = vadd.f32 %v4650, %v4670
  %v4675 = vadd.f32 %v4651, %v4670
  %v4676 = vadd.f32 %v4652, %v4670
  %v4677 = vadd.f32 %v4653, %v4670
  %v4678 = vadd.f32 %v4654, %v4670
  %v4679 = vadd.f32 %v4655, %v4670
  %v4680 = vadd.f32 %v4656, %v4670
  %v4681 = vadd.f32 %v4657, %v4670
  %v4682 = vadd.f32 %v4658, %v4670
  %v4683 = vadd.f32 %v4659, %v4670
  %v4684 = vadd.f32 %v4660, %v4670
  %v4685 = vadd.f32 %v4661, %v4670
  %v4686 = vadd.f32 %v4662, %v4670
  %v4687 = vadd.f32 %v4663, %v4670
  %v4688 = vpack.c.bf16 %v4673, %v4672
  %v4689 = vpack.c.bf16 %v4675, %v4674
  %v4690 = vpack.c.bf16 %v4677, %v4676
  %v4691 = vpack.c.bf16 %v4679, %v4678
  %v4692 = vpack.c.bf16 %v4681, %v4680
  %v4693 = vpack.c.bf16 %v4683, %v4682
  %v4694 = vpack.c.bf16 %v4685, %v4684
  %v4695 = vpack.c.bf16 %v4687, %v4686
  %s4696 = scalar_lea.vmem %s11, 16
  %v4697 = vld [vmem:[%s4696] sm:$0xf]
  %v4698 = vld [vmem:[%s4696 + $0x4] sm:$0xf]
  %v4699 = vld [vmem:[%s4696 + $0x8] sm:$0xf]
  %v4700 = vld [vmem:[%s4696 + $0xc] sm:$0xf]
  %s4701 = scalar_lea.vmem %s12, 1
  %v4702 = vld [vmem:[%s4701] sm:$0x1]
  %v4704 = vlaneseq
  %v4705 = vshrl.u32 %v4704, 7
  %v4706 = vsub.s32 0, %v4705
  %v4707 = vrot.slane %v4702, %v4706
  %v4713 = vunpack.c.l.b16 %v4697
  %v4714 = vunpack.c.l.b16 %v4698
  %v4715 = vunpack.c.l.b16 %v4699
  %v4716 = vunpack.c.l.b16 %v4700
  %v4717 = vpack.c.b16 %v4714, %v4713
  %v4718 = vpack.c.b16 %v4716, %v4715
  %v4722 = vsel %vm109, %v4688, 0
  %v4725 = vsel %vm109, %v4689, 0
  %v4728 = vsel %vm109, %v4690, 0
  %v4731 = vsel %vm109, %v4691, 0
  %v4734 = vsel %vm109, %v4692, 0
  %v4737 = vsel %vm109, %v4693, 0
  %v4740 = vsel %vm109, %v4694, 0
  %v4743 = vsel %vm109, %v4695, 0
  %4745 = vmatprep.subr.bf16.mxu0 0
  %4746 = vmatpush1.bf16.msra.mxu0 %v4717
  %4747 = vmatprep.subr.bf16.mxu0 0
  %4748 = vmatpush1.bf16.msra.mxu0 %v4718
  %4749 = vmatprep.subr.bf16.mxu0 0
  %4750 = vmatpush1.bf16.msra.mxu0 0
  %4751 = vmatprep.subr.bf16.mxu0 0
  %4752 = vmatpush1.bf16.msra.mxu0 0
  %4753 = vmatprep.subr.bf16.mxu0 0
  %4754 = vmatpush1.bf16.msra.mxu0 0
  %4755 = vmatprep.subr.bf16.mxu0 0
  %4756 = vmatpush1.bf16.msra.mxu0 0
  %4757 = vmatprep.subr.bf16.mxu0 0
  %4758 = vmatpush1.bf16.msra.mxu0 0
  %4759 = vmatprep.subr.bf16.mxu0 0
  %4760 = vmatpush1.bf16.msra.mxu0 0
  %4761 = vmatprep.subr.bf16.mxu0 0
  %4762 = vmatpush1.bf16.msra.mxu0 0
  %4763 = vmatprep.subr.bf16.mxu0 0
  %4764 = vmatpush1.bf16.msra.mxu0 0
  %4765 = vmatprep.subr.bf16.mxu0 0
  %4766 = vmatpush1.bf16.msra.mxu0 0
  %4767 = vmatprep.subr.bf16.mxu0 0
  %4768 = vmatpush1.bf16.msra.mxu0 0
  %4769 = vmatprep.subr.bf16.mxu0 0
  %4770 = vmatpush1.bf16.msra.mxu0 0
  %4771 = vmatprep.subr.bf16.mxu0 0
  %4772 = vmatpush1.bf16.msra.mxu0 0
  %4773 = vmatprep.subr.bf16.mxu0 0
  %4774 = vmatpush1.bf16.msra.mxu0 0
  %4775 = vmatprep.subr.bf16.mxu0 0
  %4776 = vmatpush1.bf16.msra.mxu0 0
  %4777 = vmatprep.mubr.bf16.mxu0 0
  %4778 = vmatmul.mubr.bf16.gmra.mrb[0].mxu0 %v4722
  %v4779 = vpop.f32.mrb[0].mxu0
  %v4780 = vadd.f32 %v4707, %v4779
  %v4781 = vpop.f32.mrb[0].mxu0
  %v4782 = vpop.f32.mrb[0].mxu0
  %v4783 = vadd.f32 %v4707, %v4782
  %v4784 = vpop.f32.mrb[0].mxu0
  %4785 = vmatprep.mubr.bf16.mxu0 0
  %4786 = vmatmul.mubr.bf16.gmra.mrb[0].mxu0 %v4725
  %v4787 = vpop.f32.mrb[0].mxu0
  %v4788 = vadd.f32 %v4707, %v4787
  %v4789 = vpop.f32.mrb[0].mxu0
  %v4790 = vpop.f32.mrb[0].mxu0
  %v4791 = vadd.f32 %v4707, %v4790
  %v4792 = vpop.f32.mrb[0].mxu0
  %4793 = vmatprep.mubr.bf16.mxu0 0
  %4794 = vmatmul.mubr.bf16.gmra.mrb[0].mxu0 %v4728
  %v4795 = vpop.f32.mrb[0].mxu0
  %v4796 = vadd.f32 %v4707, %v4795
  %v4797 = vpop.f32.mrb[0].mxu0
  %v4798 = vpop.f32.mrb[0].mxu0
  %v4799 = vadd.f32 %v4707, %v4798
  %v4800 = vpop.f32.mrb[0].mxu0
  %4801 = vmatprep.mubr.bf16.mxu0 0
  %4802 = vmatmul.mubr.bf16.gmra.mrb[0].mxu0 %v4731
  %v4803 = vpop.f32.mrb[0].mxu0
  %v4804 = vadd.f32 %v4707, %v4803
  %v4805 = vpop.f32.mrb[0].mxu0
  %v4806 = vpop.f32.mrb[0].mxu0
  %v4807 = vadd.f32 %v4707, %v4806
  %v4808 = vpop.f32.mrb[0].mxu0
  %4809 = vmatprep.mubr.bf16.mxu0 0
  %4810 = vmatmul.mubr.bf16.gmra.mrb[0].mxu0 %v4734
  %v4811 = vpop.f32.mrb[0].mxu0
  %v4812 = vadd.f32 %v4707, %v4811
  %v4813 = vpop.f32.mrb[0].mxu0
  %v4814 = vpop.f32.mrb[0].mxu0
  %v4815 = vadd.f32 %v4707, %v4814
  %v4816 = vpop.f32.mrb[0].mxu0
  %4817 = vmatprep.mubr.bf16.mxu0 0
  %4818 = vmatmul.mubr.bf16.gmra.mrb[0].mxu0 %v4737
  %v4819 = vpop.f32.mrb[0].mxu0
  %v4820 = vadd.f32 %v4707, %v4819
  %v4821 = vpop.f32.mrb[0].mxu0
  %v4822 = vpop.f32.mrb[0].mxu0
  %v4823 = vadd.f32 %v4707, %v4822
  %v4824 = vpop.f32.mrb[0].mxu0
  %4825 = vmatprep.mubr.bf16.mxu0 0
  %4826 = vmatmul.mubr.bf16.gmra.mrb[0].mxu0 %v4740
  %v4827 = vpop.f32.mrb[0].mxu0
  %v4828 = vadd.f32 %v4707, %v4827
  %v4829 = vpop.f32.mrb[0].mxu0
  %v4830 = vpop.f32.mrb[0].mxu0
  %v4831 = vadd.f32 %v4707, %v4830
  %v4832 = vpop.f32.mrb[0].mxu0
  %4833 = vmatprep.mubr.bf16.mxu0 0
  %4834 = vmatmul.mubr.bf16.gmra.mrb[0].mxu0 %v4743
  %v4835 = vpop.f32.mrb[0].mxu0
  %v4836 = vadd.f32 %v4707, %v4835
  %v4837 = vpop.f32.mrb[0].mxu0
  %v4838 = vpop.f32.mrb[0].mxu0
  %v4839 = vadd.f32 %v4707, %v4838
  %v4840 = vpop.f32.mrb[0].mxu0
  %4841 = vdwg.mxu0
  %v4842 = vmul.f32 %v4780, 0.5
  %v4843 = vmul.f32 %v4783, 0.5
  %v4844 = vmul.f32 %v4788, 0.5
  %v4845 = vmul.f32 %v4791, 0.5
  %v4846 = vmul.f32 %v4796, 0.5
  %v4847 = vmul.f32 %v4799, 0.5
  %v4848 = vmul.f32 %v4804, 0.5
  %v4849 = vmul.f32 %v4807, 0.5
  %v4850 = vmul.f32 %v4812, 0.5
  %v4851 = vmul.f32 %v4815, 0.5
  %v4852 = vmul.f32 %v4820, 0.5
  %v4853 = vmul.f32 %v4823, 0.5
  %v4854 = vmul.f32 %v4828, 0.5
  %v4855 = vmul.f32 %v4831, 0.5
  %v4856 = vmul.f32 %v4836, 0.5
  %v4857 = vmul.f32 %v4839, 0.5
  %v4858 = vmul.f32 %v4780, 0.70710677
  %v4859 = vmul.f32 %v4783, 0.70710677
  %v4860 = vmul.f32 %v4788, 0.70710677
  %v4861 = vmul.f32 %v4791, 0.70710677
  %v4862 = vmul.f32 %v4796, 0.70710677
  %v4863 = vmul.f32 %v4799, 0.70710677
  %v4864 = vmul.f32 %v4804, 0.70710677
  %v4865 = vmul.f32 %v4807, 0.70710677
  %v4866 = vmul.f32 %v4812, 0.70710677
  %v4867 = vmul.f32 %v4815, 0.70710677
  %v4868 = vmul.f32 %v4820, 0.70710677
  %v4869 = vmul.f32 %v4823, 0.70710677
  %v4870 = vmul.f32 %v4828, 0.70710677
  %v4871 = vmul.f32 %v4831, 0.70710677
  %v4872 = vmul.f32 %v4836, 0.70710677
  %v4873 = vmul.f32 %v4839, 0.70710677
  %v4874 = verf.f32.pop %v4858
  %v4875 = verf.f32.pop %v4859
  %v4876 = verf.f32.pop %v4860
  %v4877 = verf.f32.pop %v4861
  %v4878 = verf.f32.pop %v4862
  %v4879 = verf.f32.pop %v4863
  %v4880 = verf.f32.pop %v4864
  %v4881 = verf.f32.pop %v4865
  %v4882 = verf.f32.pop %v4866
  %v4883 = verf.f32.pop %v4867
  %v4884 = verf.f32.pop %v4868
  %v4885 = verf.f32.pop %v4869
  %v4886 = verf.f32.pop %v4870
  %v4887 = verf.f32.pop %v4871
  %v4888 = verf.f32.pop %v4872
  %v4889 = verf.f32.pop %v4873
  %v4890 = vadd.f32 %v4874, 1.0
  %v4891 = vadd.f32 %v4875, 1.0
  %v4892 = vadd.f32 %v4876, 1.0
  %v4893 = vadd.f32 %v4877, 1.0
  %v4894 = vadd.f32 %v4878, 1.0
  %v4895 = vadd.f32 %v4879, 1.0
  %v4896 = vadd.f32 %v4880, 1.0
  %v4897 = vadd.f32 %v4881, 1.0
  %v4898 = vadd.f32 %v4882, 1.0
  %v4899 = vadd.f32 %v4883, 1.0
  %v4900 = vadd.f32 %v4884, 1.0
  %v4901 = vadd.f32 %v4885, 1.0
  %v4902 = vadd.f32 %v4886, 1.0
  %v4903 = vadd.f32 %v4887, 1.0
  %v4904 = vadd.f32 %v4888, 1.0
  %v4905 = vadd.f32 %v4889, 1.0
  %v4906 = vmul.f32 %v4842, %v4890
  %v4907 = vmul.f32 %v4843, %v4891
  %v4908 = vmul.f32 %v4844, %v4892
  %v4909 = vmul.f32 %v4845, %v4893
  %v4910 = vmul.f32 %v4846, %v4894
  %v4911 = vmul.f32 %v4847, %v4895
  %v4912 = vmul.f32 %v4848, %v4896
  %v4913 = vmul.f32 %v4849, %v4897
  %v4914 = vmul.f32 %v4850, %v4898
  %v4915 = vmul.f32 %v4851, %v4899
  %v4916 = vmul.f32 %v4852, %v4900
  %v4917 = vmul.f32 %v4853, %v4901
  %v4918 = vmul.f32 %v4854, %v4902
  %v4919 = vmul.f32 %v4855, %v4903
  %v4920 = vmul.f32 %v4856, %v4904
  %v4921 = vmul.f32 %v4857, %v4905
  %v4922 = vpack.c.bf16 %v4907, %v4906
  %v4923 = vpack.c.bf16 %v4909, %v4908
  %v4924 = vpack.c.bf16 %v4911, %v4910
  %v4925 = vpack.c.bf16 %v4913, %v4912
  %v4926 = vpack.c.bf16 %v4915, %v4914
  %v4927 = vpack.c.bf16 %v4917, %v4916
  %v4928 = vpack.c.bf16 %v4919, %v4918
  %v4929 = vpack.c.bf16 %v4921, %v4920
  %s4930 = scalar_lea.vmem %s13, 64
  %v4931 = vld [vmem:[%s4930] sm:$0xf]
  %v4932 = vld [vmem:[%s4930 + $0x4] sm:$0xf]
  %v4933 = vld [vmem:[%s4930 + $0x8] sm:$0xf]
  %v4934 = vld [vmem:[%s4930 + $0xc] sm:$0xf]
  %v4935 = vld [vmem:[%s4930 + $0x10] sm:$0xf]
  %v4936 = vld [vmem:[%s4930 + $0x14] sm:$0xf]
  %v4937 = vld [vmem:[%s4930 + $0x18] sm:$0xf]
  %v4938 = vld [vmem:[%s4930 + $0x1c] sm:$0xf]
  %v4939 = vld [vmem:[%s4930 + $0x20] sm:$0xf]
  %v4940 = vld [vmem:[%s4930 + $0x24] sm:$0xf]
  %v4941 = vld [vmem:[%s4930 + $0x28] sm:$0xf]
  %v4942 = vld [vmem:[%s4930 + $0x2c] sm:$0xf]
  %v4943 = vld [vmem:[%s4930 + $0x30] sm:$0xf]
  %v4944 = vld [vmem:[%s4930 + $0x34] sm:$0xf]
  %v4945 = vld [vmem:[%s4930 + $0x38] sm:$0xf]
  %v4946 = vld [vmem:[%s4930 + $0x3c] sm:$0xf]
  %v4963 = vunpack.c.l.b16 %v4931
  %v4964 = vunpack.c.l.b16 %v4932
  %v4965 = vunpack.c.l.b16 %v4933
  %v4966 = vunpack.c.l.b16 %v4934
  %v4967 = vunpack.c.l.b16 %v4935
  %v4968 = vunpack.c.l.b16 %v4936
  %v4969 = vunpack.c.l.b16 %v4937
  %v4970 = vunpack.c.l.b16 %v4938
  %v4971 = vunpack.c.l.b16 %v4939
  %v4972 = vunpack.c.l.b16 %v4940
  %v4973 = vunpack.c.l.b16 %v4941
  %v4974 = vunpack.c.l.b16 %v4942
  %v4975 = vunpack.c.l.b16 %v4943
  %v4976 = vunpack.c.l.b16 %v4944
  %v4977 = vunpack.c.l.b16 %v4945
  %v4978 = vunpack.c.l.b16 %v4946
  %v4979 = vpack.c.b16 %v4964, %v4963
  %v4980 = vpack.c.b16 %v4966, %v4965
  %v4981 = vpack.c.b16 %v4968, %v4967
  %v4982 = vpack.c.b16 %v4970, %v4969
  %v4983 = vpack.c.b16 %v4972, %v4971
  %v4984 = vpack.c.b16 %v4974, %v4973
  %v4985 = vpack.c.b16 %v4976, %v4975
  %v4986 = vpack.c.b16 %v4978, %v4977
  %4995 = vmatprep.subr.bf16.mxu0 0
  %4996 = vmatpush1.bf16.msra.mxu0 %v4979
  %4997 = vmatprep.subr.bf16.mxu0 0
  %4998 = vmatpush1.bf16.msra.mxu0 %v4980
  %4999 = vmatprep.subr.bf16.mxu0 0
  %5000 = vmatpush1.bf16.msra.mxu0 %v4981
  %5001 = vmatprep.subr.bf16.mxu0 0
  %5002 = vmatpush1.bf16.msra.mxu0 %v4982
  %5003 = vmatprep.subr.bf16.mxu0 0
  %5004 = vmatpush1.bf16.msra.mxu0 %v4983
  %5005 = vmatprep.subr.bf16.mxu0 0
  %5006 = vmatpush1.bf16.msra.mxu0 %v4984
  %5007 = vmatprep.subr.bf16.mxu0 0
  %5008 = vmatpush1.bf16.msra.mxu0 %v4985
  %5009 = vmatprep.subr.bf16.mxu0 0
  %5010 = vmatpush1.bf16.msra.mxu0 %v4986
  %5011 = vmatprep.subr.bf16.mxu0 0
  %5012 = vmatpush1.bf16.msra.mxu0 0
  %5013 = vmatprep.subr.bf16.mxu0 0
  %5014 = vmatpush1.bf16.msra.mxu0 0
  %5015 = vmatprep.subr.bf16.mxu0 0
  %5016 = vmatpush1.bf16.msra.mxu0 0
  %5017 = vmatprep.subr.bf16.mxu0 0
  %5018 = vmatpush1.bf16.msra.mxu0 0
  %5019 = vmatprep.subr.bf16.mxu0 0
  %5020 = vmatpush1.bf16.msra.mxu0 0
  %5021 = vmatprep.subr.bf16.mxu0 0
  %5022 = vmatpush1.bf16.msra.mxu0 0
  %5023 = vmatprep.subr.bf16.mxu0 0
  %5024 = vmatpush1.bf16.msra.mxu0 0
  %5025 = vmatprep.subr.bf16.mxu0 0
  %5026 = vmatpush1.bf16.msra.mxu0 0
  %5027 = vmatprep.mubr.bf16.mxu0 0
  %5028 = vmatmul.mubr.bf16.gmra.mrb[0].mxu0 %v4922
  %v5029 = vpop.f32.mrb[0].mxu0
  %v5030 = vadd.f32 0.0, %v5029
  %v5031 = vpop.f32.mrb[0].mxu0
  %v5032 = vpop.f32.mrb[0].mxu0
  %v5033 = vadd.f32 0.0, %v5032
  %v5034 = vpop.f32.mrb[0].mxu0
  %5035 = vmatprep.mubr.bf16.mxu0 0
  %5036 = vmatmul.mubr.bf16.gmra.mrb[0].mxu0 %v4923
  %v5037 = vpop.f32.mrb[0].mxu0
  %v5038 = vadd.f32 0.0, %v5037
  %v5039 = vpop.f32.mrb[0].mxu0
  %v5040 = vpop.f32.mrb[0].mxu0
  %v5041 = vadd.f32 0.0, %v5040
  %v5042 = vpop.f32.mrb[0].mxu0
  %5043 = vmatprep.mubr.bf16.mxu0 0
  %5044 = vmatmul.mubr.bf16.gmra.mrb[0].mxu0 %v4924
  %v5045 = vpop.f32.mrb[0].mxu0
  %v5046 = vadd.f32 0.0, %v5045
  %v5047 = vpop.f32.mrb[0].mxu0
  %v5048 = vpop.f32.mrb[0].mxu0
  %v5049 = vadd.f32 0.0, %v5048
  %v5050 = vpop.f32.mrb[0].mxu0
  %5051 = vmatprep.mubr.bf16.mxu0 0
  %5052 = vmatmul.mubr.bf16.gmra.mrb[0].mxu0 %v4925
  %v5053 = vpop.f32.mrb[0].mxu0
  %v5054 = vadd.f32 0.0, %v5053
  %v5055 = vpop.f32.mrb[0].mxu0
  %v5056 = vpop.f32.mrb[0].mxu0
  %v5057 = vadd.f32 0.0, %v5056
  %v5058 = vpop.f32.mrb[0].mxu0
  %5059 = vmatprep.mubr.bf16.mxu0 0
  %5060 = vmatmul.mubr.bf16.gmra.mrb[0].mxu0 %v4926
  %v5061 = vpop.f32.mrb[0].mxu0
  %v5062 = vadd.f32 0.0, %v5061
  %v5063 = vpop.f32.mrb[0].mxu0
  %v5064 = vpop.f32.mrb[0].mxu0
  %v5065 = vadd.f32 0.0, %v5064
  %v5066 = vpop.f32.mrb[0].mxu0
  %5067 = vmatprep.mubr.bf16.mxu0 0
  %5068 = vmatmul.mubr.bf16.gmra.mrb[0].mxu0 %v4927
  %v5069 = vpop.f32.mrb[0].mxu0
  %v5070 = vadd.f32 0.0, %v5069
  %v5071 = vpop.f32.mrb[0].mxu0
  %v5072 = vpop.f32.mrb[0].mxu0
  %v5073 = vadd.f32 0.0, %v5072
  %v5074 = vpop.f32.mrb[0].mxu0
  %5075 = vmatprep.mubr.bf16.mxu0 0
  %5076 = vmatmul.mubr.bf16.gmra.mrb[0].mxu0 %v4928
  %v5077 = vpop.f32.mrb[0].mxu0
  %v5078 = vadd.f32 0.0, %v5077
  %v5079 = vpop.f32.mrb[0].mxu0
  %v5080 = vpop.f32.mrb[0].mxu0
  %v5081 = vadd.f32 0.0, %v5080
  %v5082 = vpop.f32.mrb[0].mxu0
  %5083 = vmatprep.mubr.bf16.mxu0 0
  %5084 = vmatmul.mubr.bf16.gmra.mrb[0].mxu0 %v4929
  %v5085 = vpop.f32.mrb[0].mxu0
  %v5086 = vadd.f32 0.0, %v5085
  %v5087 = vpop.f32.mrb[0].mxu0
  %v5088 = vpop.f32.mrb[0].mxu0
  %v5089 = vadd.f32 0.0, %v5088
  %v5090 = vpop.f32.mrb[0].mxu0
  %5091 = vdwg.mxu0
  %v5092 = vadd.f32 %v4416, %v5030
  %v5093 = vadd.f32 %v4417, %v5033
  %v5094 = vadd.f32 %v4418, %v5038
  %v5095 = vadd.f32 %v4419, %v5041
  %v5096 = vadd.f32 %v4420, %v5046
  %v5097 = vadd.f32 %v4421, %v5049
  %v5098 = vadd.f32 %v4422, %v5054
  %v5099 = vadd.f32 %v4423, %v5057
  %v5100 = vadd.f32 %v4424, %v5062
  %v5101 = vadd.f32 %v4425, %v5065
  %v5102 = vadd.f32 %v4426, %v5070
  %v5103 = vadd.f32 %v4427, %v5073
  %v5104 = vadd.f32 %v4428, %v5078
  %v5105 = vadd.f32 %v4429, %v5081
  %v5106 = vadd.f32 %v4430, %v5086
  %v5107 = vadd.f32 %v4431, %v5089
  %s5108 = scalar_lea.vmem %s14, 1
  %v5109 = vld [vmem:[%s5108] sm:$0x1]
  %v5111 = vlaneseq
  %v5112 = vshrl.u32 %v5111, 7
  %v5113 = vsub.s32 0, %v5112
  %v5114 = vrot.slane %v5109, %v5113
  %v5116 = vadd.f32 %v5092, %v5114
  %v5117 = vadd.f32 %v5093, %v5114
  %v5118 = vadd.f32 %v5094, %v5114
  %v5119 = vadd.f32 %v5095, %v5114
  %v5120 = vadd.f32 %v5096, %v5114
  %v5121 = vadd.f32 %v5097, %v5114
  %v5122 = vadd.f32 %v5098, %v5114
  %v5123 = vadd.f32 %v5099, %v5114
  %v5124 = vadd.f32 %v5100, %v5114
  %v5125 = vadd.f32 %v5101, %v5114
  %v5126 = vadd.f32 %v5102, %v5114
  %v5127 = vadd.f32 %v5103, %v5114
  %v5128 = vadd.f32 %v5104, %v5114
  %v5129 = vadd.f32 %v5105, %v5114
  %v5130 = vadd.f32 %v5106, %v5114
  %v5131 = vadd.f32 %v5107, %v5114
  %5132 = vst.msk [vmem:[%s16] sm:$0xff] %vm109, %v5116
  %5133 = vst.msk [vmem:[%s16 + $0x8] sm:$0xff] %vm109, %v5117
  %5134 = vst.msk [vmem:[%s16 + $0x10] sm:$0xff] %vm109, %v5118
  %5135 = vst.msk [vmem:[%s16 + $0x18] sm:$0xff] %vm109, %v5119
  %5136 = vst.msk [vmem:[%s16 + $0x20] sm:$0xff] %vm109, %v5120
  %5137 = vst.msk [vmem:[%s16 + $0x28] sm:$0xff] %vm109, %v5121
  %5138 = vst.msk [vmem:[%s16 + $0x30] sm:$0xff] %vm109, %v5122
  %5139 = vst.msk [vmem:[%s16 + $0x38] sm:$0xff] %vm109, %v5123
  %5140 = vst.msk [vmem:[%s16 + $0x40] sm:$0xff] %vm109, %v5124
  %5141 = vst.msk [vmem:[%s16 + $0x48] sm:$0xff] %vm109, %v5125
  %5142 = vst.msk [vmem:[%s16 + $0x50] sm:$0xff] %vm109, %v5126
  %5143 = vst.msk [vmem:[%s16 + $0x58] sm:$0xff] %vm109, %v5127
  %5144 = vst.msk [vmem:[%s16 + $0x60] sm:$0xff] %vm109, %v5128
  %5145 = vst.msk [vmem:[%s16 + $0x68] sm:$0xff] %vm109, %v5129
  %5146 = vst.msk [vmem:[%s16 + $0x70] sm:$0xff] %vm109, %v5130
  %5147 = vst.msk [vmem:[%s16 + $0x78] sm:$0xff] %vm109, %v5131
  // Predicated region
  $region66: #{_stage_forward.1} parent=0 // pred_check
    _
  $region67: #{_stage_forward.1} parent=0 // pred_check_branch
    %5149 = sbr.rel (0) target = $region69
  $region68: #{_stage_forward.1} parent=0 // pred_region
    _
  $region69: #{_stage_forward.1} parent=0 // pred_fallthru
    _
  // Predicated region
  $region70: #{_stage_forward.1} parent=0 // pred_check
    _
  $region71: #{_stage_forward.1} parent=0 // pred_check_branch
    %5151 = sbr.rel (0) target = $region73
  $region72: #{_stage_forward.1} parent=0 // pred_region
    _
  $region73: #{_stage_forward.1} parent=0 // pred_fallthru
    _

</llo_original>
